<compile_context>
chip_gen: v5e
topology: v5e:2x2
jax: 0.10.0
libtpu: 0.0.40
codegen_flags: <defaults>
</compile_context>

<pallas_src>
import functools

import jax
import jax.numpy as jnp
from jax.experimental import pallas as pl
from jax.experimental.pallas import tpu as pltpu


def _round_up(x, m):
    return ((x + m - 1) // m) * m


def _pick_tile(padded_dim, candidates):
    """Largest candidate (sorted desc) that divides padded_dim."""
    for c in candidates:
        if padded_dim % c == 0:
            return c
    return candidates[-1]


# ----------------------------------------------------------------------------
# Pallas kernel 1: tiled  Y = LeakyReLU(X @ W + b)
# grid = (M/tm, N/tn, K/tk); f32 VMEM accumulator; K innermost ("arbitrary").
# ----------------------------------------------------------------------------
def _matmul_bias_act_kernel(x_ref, w_ref, b_ref, o_ref, acc_ref, *, negative_slope):
    k = pl.program_id(2)

    @pl.when(k == 0)
    def _():
        acc_ref[...] = jnp.zeros_like(acc_ref)

    acc_ref[...] += jnp.dot(x_ref[...], w_ref[...],
                            preferred_element_type=jnp.float32)

    @pl.when(k == pl.num_programs(2) - 1)
    def _():
        y = acc_ref[...] + b_ref[...]          # (1, tn) bias broadcasts over rows
        if negative_slope is not None:
            y = jnp.where(y > 0, y, negative_slope * y)
        o_ref[...] = y.astype(o_ref.dtype)


def matmul_bias_act(x, w, b, *, negative_slope=None, out_dtype=jnp.bfloat16):
    """x: (M, K), w: (K, N), b: (N,). Tiled / pipelined MXU matmul."""
    M, K = x.shape
    K2, N = w.shape
    assert K == K2

    m8 = _round_up(M, 8)
    tm = m8 if m8 <= 256 else 256
    m_pad = _round_up(M, tm)

    k_pad = _round_up(K, 128)
    tk = k_pad if k_pad <= 1024 else _pick_tile(
        k_pad, (1024, 896, 768, 640, 512, 384, 256, 128))

    n_pad = _round_up(N, 128)                  # lane-dense output tiles
    tn = n_pad if n_pad <= 512 else _pick_tile(n_pad, (512, 384, 256, 128))

    xp = jnp.pad(x.astype(jnp.bfloat16), ((0, m_pad - M), (0, k_pad - K)))
    wp = jnp.pad(w.astype(jnp.bfloat16), ((0, k_pad - K), (0, n_pad - N)))
    bp = jnp.pad(b.astype(jnp.float32), (0, n_pad - N)).reshape(1, n_pad)

    grid = (m_pad // tm, n_pad // tn, k_pad // tk)
    out = pl.pallas_call(
        functools.partial(_matmul_bias_act_kernel, negative_slope=negative_slope),
        out_shape=jax.ShapeDtypeStruct((m_pad, n_pad), out_dtype),
        grid_spec=pltpu.PrefetchScalarGridSpec(
            num_scalar_prefetch=0,
            grid=grid,
            in_specs=[
                pl.BlockSpec((tm, tk), lambda i, j, k: (i, k)),
                pl.BlockSpec((tk, tn), lambda i, j, k: (k, j)),
                pl.BlockSpec((1, tn), lambda i, j, k: (0, j)),
            ],
            out_specs=pl.BlockSpec((tm, tn), lambda i, j, k: (i, j)),
            scratch_shapes=[pltpu.VMEM((tm, tn), jnp.float32)],
        ),
        compiler_params=pltpu.CompilerParams(
            dimension_semantics=("parallel", "parallel", "arbitrary")),
    )(xp, wp, bp)
    return out[:M, :N]


# ----------------------------------------------------------------------------
# Pallas kernel 2: fused classifier tail
#   Linear(F, 1024) + LeakyReLU + Linear(1024, 1), hidden resident in VMEM.
#   grid = (F/tk,): w1 streamed K-tile by K-tile into an f32 accumulator.
# ----------------------------------------------------------------------------
def _classifier_kernel(x_ref, w1_ref, b1_ref, w2_ref, b2_ref, o_ref, acc_ref,
                       *, negative_slope):
    k = pl.program_id(0)

    @pl.when(k == 0)
    def _():
        acc_ref[...] = jnp.zeros_like(acc_ref)

    acc_ref[...] += jnp.dot(x_ref[...], w1_ref[...],
                            preferred_element_type=jnp.float32)

    @pl.when(k == pl.num_programs(0) - 1)
    def _():
        h = acc_ref[...] + b1_ref[...]
        h = jnp.where(h > 0, h, negative_slope * h)
        y = jnp.dot(h.astype(w2_ref.dtype), w2_ref[...],
                    preferred_element_type=jnp.float32)
        o_ref[...] = (y + b2_ref[...]).astype(o_ref.dtype)


def classifier_fused(x, w1_t, b1, w2_t, b2, *, negative_slope=0.2):
    """x: (B, F); w1_t: (F, H); w2_t: (H, 1) -> (B, 1) logits."""
    B, F = x.shape
    H = w1_t.shape[1]
    N2 = w2_t.shape[1]

    b_pad = _round_up(B, 8)
    f_pad = _round_up(F, 128)
    tk = f_pad if f_pad <= 512 else _pick_tile(f_pad, (512, 384, 256, 128))
    h_pad = _round_up(H, 128)
    n2_pad = _round_up(N2, 128)                # lane-dense final output

    xp = jnp.pad(x.astype(jnp.bfloat16), ((0, b_pad - B), (0, f_pad - F)))
    w1p = jnp.pad(w1_t.astype(jnp.bfloat16), ((0, f_pad - F), (0, h_pad - H)))
    b1p = jnp.pad(b1.astype(jnp.float32), (0, h_pad - H)).reshape(1, h_pad)
    w2p = jnp.pad(w2_t.astype(jnp.bfloat16), ((0, h_pad - H), (0, n2_pad - N2)))
    b2p = jnp.pad(b2.astype(jnp.float32), (0, n2_pad - N2)).reshape(1, n2_pad)

    out = pl.pallas_call(
        functools.partial(_classifier_kernel, negative_slope=negative_slope),
        out_shape=jax.ShapeDtypeStruct((b_pad, n2_pad), jnp.float32),
        grid_spec=pltpu.PrefetchScalarGridSpec(
            num_scalar_prefetch=0,
            grid=(f_pad // tk,),
            in_specs=[
                pl.BlockSpec((b_pad, tk), lambda k: (0, k)),
                pl.BlockSpec((tk, h_pad), lambda k: (k, 0)),
                pl.BlockSpec((1, h_pad), lambda k: (0, 0)),
                pl.BlockSpec((h_pad, n2_pad), lambda k: (0, 0)),
                pl.BlockSpec((1, n2_pad), lambda k: (0, 0)),
            ],
            out_specs=pl.BlockSpec((b_pad, n2_pad), lambda k: (0, 0)),
            scratch_shapes=[pltpu.VMEM((b_pad, h_pad), jnp.float32)],
        ),
        compiler_params=pltpu.CompilerParams(
            dimension_semantics=("arbitrary",)),
    )(xp, w1p, b1p, w2p, b2p)
    return out[:B, :N2]


# ----------------------------------------------------------------------------
# Glue: im2col patch extraction (pad=1, kernel=3), done in bf16.
# ----------------------------------------------------------------------------
# TODO(synk): fuse im2col into the conv kernel (in-kernel 9-tap accumulation
# over overlapping spatial windows). Blocked BlockSpecs cannot express the +-1
# halo between adjacent row tiles, so this needs pl.Element offsets or manual
# DMA; left as bf16 JAX glue for now.
def im2col_3x3(x_nhwc, stride):
    N, H, W, C = x_nhwc.shape
    xp = jnp.pad(x_nhwc, ((0, 0), (1, 1), (1, 1), (0, 0)))
    Ho = (H + 2 - 3) // stride + 1
    Wo = (W + 2 - 3) // stride + 1
    cols = []
    for kh in range(3):
        for kw in range(3):
            cols.append(
                xp[:, kh:kh + stride * Ho:stride, kw:kw + stride * Wo:stride, :])
    patches = jnp.concatenate(cols, axis=-1)          # (N, Ho, Wo, 9*C)
    return patches.reshape(N * Ho * Wo, 9 * C), (N, Ho, Wo)


def conv3x3_lrelu(x_nhwc, w_mat, b, stride):
    """3x3 conv (pad=1) + LeakyReLU(0.2); matmul+bias+act fused in Pallas."""
    patches, (N, Ho, Wo) = im2col_3x3(x_nhwc, stride)
    y = matmul_bias_act(patches, w_mat, b, negative_slope=0.2,
                        out_dtype=jnp.bfloat16)
    return y.reshape(N, Ho, Wo, -1)


# ----------------------------------------------------------------------------
# Deterministic parameter construction (mirrors the PyTorch __init__ shapes)
# ----------------------------------------------------------------------------
def conv_configs(in_channels, channel_list):
    cfgs = [(in_channels, channel_list[0], 1)]
    for i in range(len(channel_list) - 1):
        cfgs.append((channel_list[i], channel_list[i], 2))
        cfgs.append((channel_list[i], channel_list[i + 1], 1))
    return tuple(cfgs)


def build_params(key, in_channels, channel_list, flattened_size):
    convs = []
    for (cin, cout, _stride) in conv_configs(in_channels, channel_list):
        key, kw, kb = jax.random.split(key, 3)
        fan_in = cin * 9
        # PyTorch layout (Cout, Cin, 3, 3)
        w_oihw = jax.random.normal(kw, (cout, cin, 3, 3), jnp.float32) / jnp.sqrt(fan_in)
        b = jax.random.normal(kb, (cout,), jnp.float32) * 0.01
        w_hwio = jnp.transpose(w_oihw, (2, 3, 1, 0)).astype(jnp.bfloat16)  # (3,3,Cin,Cout)
        w_mat = w_hwio.reshape(9 * cin, cout)                              # im2col ordering
        convs.append(dict(w_mat=w_mat, w_hwio=w_hwio, b=b))

    key, k1, k2, k3, k4 = jax.random.split(key, 5)
    # Classifier weights stored PRE-TRANSPOSED (perf review): (F,1024), (1024,1)
    w1_t = (jax.random.normal(k1, (1024, flattened_size), jnp.float32)
            / jnp.sqrt(flattened_size)).T.astype(jnp.bfloat16)
    b1 = jax.random.normal(k2, (1024,), jnp.float32) * 0.01
    w2_t = (jax.random.normal(k3, (1, 1024), jnp.float32)
            / jnp.sqrt(1024.0)).T.astype(jnp.bfloat16)
    b2 = jax.random.normal(k4, (1,), jnp.float32) * 0.01
    return dict(convs=convs, w1_t=w1_t, b1=b1, w2_t=w2_t, b2=b2)


# ----------------------------------------------------------------------------
# Forward pass (Pallas) and matched pure-JAX reference
# ----------------------------------------------------------------------------
def make_forward(conv_cfgs):
    strides = tuple(s for (_, _, s) in conv_cfgs)

    @jax.jit
    def forward(x_nchw, params):
        x = jnp.transpose(x_nchw, (0, 2, 3, 1)).astype(jnp.bfloat16)   # NCHW -> NHWC
        for layer, stride in zip(params["convs"], strides):
            x = conv3x3_lrelu(x, layer["w_mat"], layer["b"], stride)
        N, H, W, C = x.shape
        if H * W == 1:
            xf = x.reshape(N, C)      # NCHW flatten == NHWC flatten at 1x1 spatial
        else:
            xf = jnp.transpose(x, (0, 3, 1, 2)).reshape(N, -1)
        # TODO(synk): fold the final stride-2 conv block into this fused tail to
        # drop two more kernel launches at tiny batch sizes.
        return classifier_fused(xf, params["w1_t"], params["b1"],
                                params["w2_t"], params["b2"])

    return forward


def forward_reference(x_nchw, params, conv_cfgs):
    x = jnp.transpose(x_nchw, (0, 2, 3, 1)).astype(jnp.bfloat16)
    for layer, (_, _, stride) in zip(params["convs"], conv_cfgs):
        y = jax.lax.conv_general_dilated(
            x, layer["w_hwio"], window_strides=(stride, stride),
            padding=((1, 1), (1, 1)),
            dimension_numbers=("NHWC", "HWIO", "NHWC"),
            preferred_element_type=jnp.float32)
        y = y + layer["b"]
        x = jnp.where(y > 0, y, 0.2 * y).astype(jnp.bfloat16)
    N, H, W, C = x.shape
    if H * W == 1:
        xf = x.reshape(N, C)
    else:
        xf = jnp.transpose(x, (0, 3, 1, 2)).reshape(N, -1)
    h = jnp.dot(xf.astype(jnp.float32), params["w1_t"].astype(jnp.float32)) + params["b1"]
    h = jnp.where(h > 0, h, 0.2 * h).astype(jnp.bfloat16)
    return (jnp.dot(h.astype(jnp.float32), params["w2_t"].astype(jnp.float32))
            + params["b2"])


# ----------------------------------------------------------------------------
if __name__ == "__main__":
    in_channels = 1
    channel_list = [32, 64, 128, 256, 512]
    B, H, W = 2, 16, 16                        # small shapes; 16 / 2^4 = 1

    # flattened size for this input: final channels * (H/16) * (W/16)
    flattened_size = channel_list[-1] * (H // 16) * (W // 16)

    cfgs = conv_configs(in_channels, channel_list)
    root = jax.random.PRNGKey(0)
    kx, kp = jax.random.split(root)
    x = jax.random.normal(kx, (B, in_channels, H, W), jnp.float32)
    params = build_params(kp, in_channels, channel_list, flattened_size)

    forward = make_forward(cfgs)
    out = jax.block_until_ready(forward(x, params))
    assert out.shape == (B, 1), out.shape

    ref = jax.block_until_ready(forward_reference(x, params, cfgs))
    assert jnp.allclose(out, ref, rtol=1e-2, atol=1e-2), (out, ref)

    print("KERNEL_OK")
</pallas_src>

<mosaic_0001>
module attributes {stable_mosaic.version = 11 : i64} {
  func.func @_matmul_bias_act_kernel(%arg0: i32, %arg1: i32, %arg2: i32, %arg3: memref<256x128xbf16, #tpu.memory_space<vmem>>, %arg4: memref<128x128xbf16, #tpu.memory_space<vmem>>, %arg5: memref<1x128xf32, #tpu.memory_space<vmem>>, %arg6: memref<256x128xbf16, #tpu.memory_space<vmem>>, %arg7: memref<256x128xf32, #tpu.memory_space<vmem>>) attributes {dimension_semantics = [#tpu.dimension_semantics<parallel>, #tpu.dimension_semantics<parallel>, #tpu.dimension_semantics<arbitrary>], iteration_bounds = array<i64: 2, 1, 1>, scalar_prefetch = 0 : i64, scratch_operands = 1 : i64, tpu.core_type = #tpu.core_type<tc>, window_params = [{transform_indices = @transform_0, window_bounds = array<i64: 256, 128>}, {transform_indices = @transform_1, window_bounds = array<i64: 128, 128>}, {transform_indices = @transform_2, window_bounds = array<i64: 1, 128>}, {transform_indices = @transform_3, window_bounds = array<i64: 256, 128>}]} {
    %c0_i32 = arith.constant 0 : i32
    %0 = arith.cmpi eq, %arg2, %c0_i32 : i32
    %1 = arith.extui %0 : i1 to i32
    %c0_i32_0 = arith.constant 0 : i32
    %2 = arith.cmpi ne, %1, %c0_i32_0 : i32
    scf.if %2 {
      %cst_10 = arith.constant 0.000000e+00 : f32
      %12 = vector.broadcast %cst_10 : f32 to vector<256x128xf32>
      %c0_11 = arith.constant 0 : index
      %c0_12 = arith.constant 0 : index
      %13 = vector.load %arg7[%c0_11, %c0_12] : memref<256x128xf32, #tpu.memory_space<vmem>>, vector<256x128xf32>
      tpu.vector_store %arg7[%c0_11, %c0_12], %12 {strides = array<i32>} : memref<256x128xf32, #tpu.memory_space<vmem>>, vector<256x128xf32>,
    } else {
    }
    %c0 = arith.constant 0 : index
    %c0_1 = arith.constant 0 : index
    %3 = vector.load %arg7[%c0, %c0_1] : memref<256x128xf32, #tpu.memory_space<vmem>>, vector<256x128xf32>
    %c0_2 = arith.constant 0 : index
    %c0_3 = arith.constant 0 : index
    %4 = vector.load %arg3[%c0_2, %c0_3] : memref<256x128xbf16, #tpu.memory_space<vmem>>, vector<256x128xbf16>
    %c0_4 = arith.constant 0 : index
    %c0_5 = arith.constant 0 : index
    %5 = vector.load %arg4[%c0_4, %c0_5] : memref<128x128xbf16, #tpu.memory_space<vmem>>, vector<128x128xbf16>
    %cst = arith.constant dense<0.000000e+00> : vector<256x128xf32>
    %6 = tpu.matmul %4, %5, %cst {dimension_numbers = #tpu.dot_dimension_numbers<[1], [0], [0], [1], [0, 0, 1, 1], [], []>} : vector<256x128xbf16>, vector<128x128xbf16>, vector<256x128xf32> -> vector<256x128xf32>
    %7 = arith.addf %3, %6 : vector<256x128xf32>
    %c0_6 = arith.constant 0 : index
    %c0_7 = arith.constant 0 : index
    %8 = vector.load %arg7[%c0_6, %c0_7] : memref<256x128xf32, #tpu.memory_space<vmem>>, vector<256x128xf32>
    tpu.vector_store %arg7[%c0_6, %c0_7], %7 {strides = array<i32>} : memref<256x128xf32, #tpu.memory_space<vmem>>, vector<256x128xf32>,
    %c0_i32_8 = arith.constant 0 : i32
    %9 = arith.cmpi eq, %arg2, %c0_i32_8 : i32
    %10 = arith.extui %9 : i1 to i32
    %c0_i32_9 = arith.constant 0 : i32
    %11 = arith.cmpi ne, %10, %c0_i32_9 : i32
    scf.if %11 {
      %c0_10 = arith.constant 0 : index
      %c0_11 = arith.constant 0 : index
      %12 = vector.load %arg7[%c0_10, %c0_11] : memref<256x128xf32, #tpu.memory_space<vmem>>, vector<256x128xf32>
      %c0_12 = arith.constant 0 : index
      %c0_13 = arith.constant 0 : index
      %13 = vector.load %arg5[%c0_12, %c0_13] : memref<1x128xf32, #tpu.memory_space<vmem>>, vector<1x128xf32>
      %14 = vector.broadcast %13 : vector<1x128xf32> to vector<256x128xf32>
      %15 = arith.addf %12, %14 : vector<256x128xf32>
      %cst_14 = arith.constant 0.000000e+00 : f32
      %16 = vector.broadcast %cst_14 : f32 to vector<256x128xf32>
      %17 = arith.cmpf ogt, %15, %16 : vector<256x128xf32>
      %cst_15 = arith.constant 2.000000e-01 : f32
      %18 = vector.broadcast %cst_15 : f32 to vector<256x128xf32>
      %19 = arith.mulf %18, %15 : vector<256x128xf32>
      %20 = arith.select %17, %15, %19 : vector<256x128xi1>, vector<256x128xf32>
      %21 = arith.truncf %20 : vector<256x128xf32> to vector<256x128xbf16>
      %c0_16 = arith.constant 0 : index
      %c0_17 = arith.constant 0 : index
      %22 = vector.load %arg6[%c0_16, %c0_17] : memref<256x128xbf16, #tpu.memory_space<vmem>>, vector<256x128xbf16>
      tpu.vector_store %arg6[%c0_16, %c0_17], %21 {strides = array<i32>} : memref<256x128xbf16, #tpu.memory_space<vmem>>, vector<256x128xbf16>,
    } else {
    }
    return
  }
  func.func @transform_0(%arg0: i32, %arg1: i32, %arg2: i32) -> (i32, i32) {
    %c0_i32 = arith.constant 0 : i32
    return %arg0, %arg2 : i32, i32
  }
  func.func @transform_1(%arg0: i32, %arg1: i32, %arg2: i32) -> (i32, i32) {
    %c0_i32 = arith.constant 0 : i32
    return %arg2, %arg1 : i32, i32
  }
  func.func @transform_2(%arg0: i32, %arg1: i32, %arg2: i32) -> (i32, i32) {
    %c0_i32 = arith.constant 0 : i32
    %c0_i32_0 = arith.constant 0 : i32
    return %c0_i32, %arg1 : i32, i32
  }
  func.func @transform_3(%arg0: i32, %arg1: i32, %arg2: i32) -> (i32, i32) {
    %c0_i32 = arith.constant 0 : i32
    return %arg0, %arg1 : i32, i32
  }
}

module attributes {stable_mosaic.version = 11 : i64} {
  func.func @_matmul_bias_act_kernel(%arg0: i32, %arg1: i32, %arg2: i32, %arg3: memref<128x384xbf16, #tpu.memory_space<vmem>>, %arg4: memref<384x128xbf16, #tpu.memory_space<vmem>>, %arg5: memref<1x128xf32, #tpu.memory_space<vmem>>, %arg6: memref<128x128xbf16, #tpu.memory_space<vmem>>, %arg7: memref<128x128xf32, #tpu.memory_space<vmem>>) attributes {dimension_semantics = [#tpu.dimension_semantics<parallel>, #tpu.dimension_semantics<parallel>, #tpu.dimension_semantics<arbitrary>], iteration_bounds = array<i64: 1, 1, 1>, scalar_prefetch = 0 : i64, scratch_operands = 1 : i64, tpu.core_type = #tpu.core_type<tc>, window_params = [{transform_indices = @transform_0, window_bounds = array<i64: 128, 384>}, {transform_indices = @transform_1, window_bounds = array<i64: 384, 128>}, {transform_indices = @transform_2, window_bounds = array<i64: 1, 128>}, {transform_indices = @transform_3, window_bounds = array<i64: 128, 128>}]} {
    %c0_i32 = arith.constant 0 : i32
    %0 = arith.cmpi eq, %arg2, %c0_i32 : i32
    %1 = arith.extui %0 : i1 to i32
    %c0_i32_0 = arith.constant 0 : i32
    %2 = arith.cmpi ne, %1, %c0_i32_0 : i32
    scf.if %2 {
      %cst_10 = arith.constant 0.000000e+00 : f32
      %12 = vector.broadcast %cst_10 : f32 to vector<128x128xf32>
      %c0_11 = arith.constant 0 : index
      %c0_12 = arith.constant 0 : index
      %13 = vector.load %arg7[%c0_11, %c0_12] : memref<128x128xf32, #tpu.memory_space<vmem>>, vector<128x128xf32>
      tpu.vector_store %arg7[%c0_11, %c0_12], %12 {strides = array<i32>} : memref<128x128xf32, #tpu.memory_space<vmem>>, vector<128x128xf32>,
    } else {
    }
    %c0 = arith.constant 0 : index
    %c0_1 = arith.constant 0 : index
    %3 = vector.load %arg7[%c0, %c0_1] : memref<128x128xf32, #tpu.memory_space<vmem>>, vector<128x128xf32>
    %c0_2 = arith.constant 0 : index
    %c0_3 = arith.constant 0 : index
    %4 = vector.load %arg3[%c0_2, %c0_3] : memref<128x384xbf16, #tpu.memory_space<vmem>>, vector<128x384xbf16>
    %c0_4 = arith.constant 0 : index
    %c0_5 = arith.constant 0 : index
    %5 = vector.load %arg4[%c0_4, %c0_5] : memref<384x128xbf16, #tpu.memory_space<vmem>>, vector<384x128xbf16>
    %cst = arith.constant dense<0.000000e+00> : vector<128x128xf32>
    %6 = tpu.matmul %4, %5, %cst {dimension_numbers = #tpu.dot_dimension_numbers<[1], [0], [0], [1], [0, 0, 1, 1], [], []>} : vector<128x384xbf16>, vector<384x128xbf16>, vector<128x128xf32> -> vector<128x128xf32>
    %7 = arith.addf %3, %6 : vector<128x128xf32>
    %c0_6 = arith.constant 0 : index
    %c0_7 = arith.constant 0 : index
    %8 = vector.load %arg7[%c0_6, %c0_7] : memref<128x128xf32, #tpu.memory_space<vmem>>, vector<128x128xf32>
    tpu.vector_store %arg7[%c0_6, %c0_7], %7 {strides = array<i32>} : memref<128x128xf32, #tpu.memory_space<vmem>>, vector<128x128xf32>,
    %c0_i32_8 = arith.constant 0 : i32
    %9 = arith.cmpi eq, %arg2, %c0_i32_8 : i32
    %10 = arith.extui %9 : i1 to i32
    %c0_i32_9 = arith.constant 0 : i32
    %11 = arith.cmpi ne, %10, %c0_i32_9 : i32
    scf.if %11 {
      %c0_10 = arith.constant 0 : index
      %c0_11 = arith.constant 0 : index
      %12 = vector.load %arg7[%c0_10, %c0_11] : memref<128x128xf32, #tpu.memory_space<vmem>>, vector<128x128xf32>
      %c0_12 = arith.constant 0 : index
      %c0_13 = arith.constant 0 : index
      %13 = vector.load %arg5[%c0_12, %c0_13] : memref<1x128xf32, #tpu.memory_space<vmem>>, vector<1x128xf32>
      %14 = vector.broadcast %13 : vector<1x128xf32> to vector<128x128xf32>
      %15 = arith.addf %12, %14 : vector<128x128xf32>
      %cst_14 = arith.constant 0.000000e+00 : f32
      %16 = vector.broadcast %cst_14 : f32 to vector<128x128xf32>
      %17 = arith.cmpf ogt, %15, %16 : vector<128x128xf32>
      %cst_15 = arith.constant 2.000000e-01 : f32
      %18 = vector.broadcast %cst_15 : f32 to vector<128x128xf32>
      %19 = arith.mulf %18, %15 : vector<128x128xf32>
      %20 = arith.select %17, %15, %19 : vector<128x128xi1>, vector<128x128xf32>
      %21 = arith.truncf %20 : vector<128x128xf32> to vector<128x128xbf16>
      %c0_16 = arith.constant 0 : index
      %c0_17 = arith.constant 0 : index
      %22 = vector.load %arg6[%c0_16, %c0_17] : memref<128x128xbf16, #tpu.memory_space<vmem>>, vector<128x128xbf16>
      tpu.vector_store %arg6[%c0_16, %c0_17], %21 {strides = array<i32>} : memref<128x128xbf16, #tpu.memory_space<vmem>>, vector<128x128xbf16>,
    } else {
    }
    return
  }
  func.func @transform_0(%arg0: i32, %arg1: i32, %arg2: i32) -> (i32, i32) {
    %c0_i32 = arith.constant 0 : i32
    return %arg0, %arg2 : i32, i32
  }
  func.func @transform_1(%arg0: i32, %arg1: i32, %arg2: i32) -> (i32, i32) {
    %c0_i32 = arith.constant 0 : i32
    return %arg2, %arg1 : i32, i32
  }
  func.func @transform_2(%arg0: i32, %arg1: i32, %arg2: i32) -> (i32, i32) {
    %c0_i32 = arith.constant 0 : i32
    %c0_i32_0 = arith.constant 0 : i32
    return %c0_i32, %arg1 : i32, i32
  }
  func.func @transform_3(%arg0: i32, %arg1: i32, %arg2: i32) -> (i32, i32) {
    %c0_i32 = arith.constant 0 : i32
    return %arg0, %arg1 : i32, i32
  }
}

module attributes {stable_mosaic.version = 11 : i64} {
  func.func @_matmul_bias_act_kernel(%arg0: i32, %arg1: i32, %arg2: i32, %arg3: memref<32x640xbf16, #tpu.memory_space<vmem>>, %arg4: memref<640x128xbf16, #tpu.memory_space<vmem>>, %arg5: memref<1x128xf32, #tpu.memory_space<vmem>>, %arg6: memref<32x128xbf16, #tpu.memory_space<vmem>>, %arg7: memref<32x128xf32, #tpu.memory_space<vmem>>) attributes {dimension_semantics = [#tpu.dimension_semantics<parallel>, #tpu.dimension_semantics<parallel>, #tpu.dimension_semantics<arbitrary>], iteration_bounds = array<i64: 1, 1, 1>, scalar_prefetch = 0 : i64, scratch_operands = 1 : i64, tpu.core_type = #tpu.core_type<tc>, window_params = [{transform_indices = @transform_0, window_bounds = array<i64: 32, 640>}, {transform_indices = @transform_1, window_bounds = array<i64: 640, 128>}, {transform_indices = @transform_2, window_bounds = array<i64: 1, 128>}, {transform_indices = @transform_3, window_bounds = array<i64: 32, 128>}]} {
    %c0_i32 = arith.constant 0 : i32
    %0 = arith.cmpi eq, %arg2, %c0_i32 : i32
    %1 = arith.extui %0 : i1 to i32
    %c0_i32_0 = arith.constant 0 : i32
    %2 = arith.cmpi ne, %1, %c0_i32_0 : i32
    scf.if %2 {
      %cst_10 = arith.constant 0.000000e+00 : f32
      %12 = vector.broadcast %cst_10 : f32 to vector<32x128xf32>
      %c0_11 = arith.constant 0 : index
      %c0_12 = arith.constant 0 : index
      %13 = vector.load %arg7[%c0_11, %c0_12] : memref<32x128xf32, #tpu.memory_space<vmem>>, vector<32x128xf32>
      tpu.vector_store %arg7[%c0_11, %c0_12], %12 {strides = array<i32>} : memref<32x128xf32, #tpu.memory_space<vmem>>, vector<32x128xf32>,
    } else {
    }
    %c0 = arith.constant 0 : index
    %c0_1 = arith.constant 0 : index
    %3 = vector.load %arg7[%c0, %c0_1] : memref<32x128xf32, #tpu.memory_space<vmem>>, vector<32x128xf32>
    %c0_2 = arith.constant 0 : index
    %c0_3 = arith.constant 0 : index
    %4 = vector.load %arg3[%c0_2, %c0_3] : memref<32x640xbf16, #tpu.memory_space<vmem>>, vector<32x640xbf16>
    %c0_4 = arith.constant 0 : index
    %c0_5 = arith.constant 0 : index
    %5 = vector.load %arg4[%c0_4, %c0_5] : memref<640x128xbf16, #tpu.memory_space<vmem>>, vector<640x128xbf16>
    %cst = arith.constant dense<0.000000e+00> : vector<32x128xf32>
    %6 = tpu.matmul %4, %5, %cst {dimension_numbers = #tpu.dot_dimension_numbers<[1], [0], [0], [1], [0, 0, 1, 1], [], []>} : vector<32x640xbf16>, vector<640x128xbf16>, vector<32x128xf32> -> vector<32x128xf32>
    %7 = arith.addf %3, %6 : vector<32x128xf32>
    %c0_6 = arith.constant 0 : index
    %c0_7 = arith.constant 0 : index
    %8 = vector.load %arg7[%c0_6, %c0_7] : memref<32x128xf32, #tpu.memory_space<vmem>>, vector<32x128xf32>
    tpu.vector_store %arg7[%c0_6, %c0_7], %7 {strides = array<i32>} : memref<32x128xf32, #tpu.memory_space<vmem>>, vector<32x128xf32>,
    %c0_i32_8 = arith.constant 0 : i32
    %9 = arith.cmpi eq, %arg2, %c0_i32_8 : i32
    %10 = arith.extui %9 : i1 to i32
    %c0_i32_9 = arith.constant 0 : i32
    %11 = arith.cmpi ne, %10, %c0_i32_9 : i32
    scf.if %11 {
      %c0_10 = arith.constant 0 : index
      %c0_11 = arith.constant 0 : index
      %12 = vector.load %arg7[%c0_10, %c0_11] : memref<32x128xf32, #tpu.memory_space<vmem>>, vector<32x128xf32>
      %c0_12 = arith.constant 0 : index
      %c0_13 = arith.constant 0 : index
      %13 = vector.load %arg5[%c0_12, %c0_13] : memref<1x128xf32, #tpu.memory_space<vmem>>, vector<1x128xf32>
      %14 = vector.broadcast %13 : vector<1x128xf32> to vector<32x128xf32>
      %15 = arith.addf %12, %14 : vector<32x128xf32>
      %cst_14 = arith.constant 0.000000e+00 : f32
      %16 = vector.broadcast %cst_14 : f32 to vector<32x128xf32>
      %17 = arith.cmpf ogt, %15, %16 : vector<32x128xf32>
      %cst_15 = arith.constant 2.000000e-01 : f32
      %18 = vector.broadcast %cst_15 : f32 to vector<32x128xf32>
      %19 = arith.mulf %18, %15 : vector<32x128xf32>
      %20 = arith.select %17, %15, %19 : vector<32x128xi1>, vector<32x128xf32>
      %21 = arith.truncf %20 : vector<32x128xf32> to vector<32x128xbf16>
      %c0_16 = arith.constant 0 : index
      %c0_17 = arith.constant 0 : index
      %22 = vector.load %arg6[%c0_16, %c0_17] : memref<32x128xbf16, #tpu.memory_space<vmem>>, vector<32x128xbf16>
      tpu.vector_store %arg6[%c0_16, %c0_17], %21 {strides = array<i32>} : memref<32x128xbf16, #tpu.memory_space<vmem>>, vector<32x128xbf16>,
    } else {
    }
    return
  }
  func.func @transform_0(%arg0: i32, %arg1: i32, %arg2: i32) -> (i32, i32) {
    %c0_i32 = arith.constant 0 : i32
    return %arg0, %arg2 : i32, i32
  }
  func.func @transform_1(%arg0: i32, %arg1: i32, %arg2: i32) -> (i32, i32) {
    %c0_i32 = arith.constant 0 : i32
    return %arg2, %arg1 : i32, i32
  }
  func.func @transform_2(%arg0: i32, %arg1: i32, %arg2: i32) -> (i32, i32) {
    %c0_i32 = arith.constant 0 : i32
    %c0_i32_0 = arith.constant 0 : i32
    return %c0_i32, %arg1 : i32, i32
  }
  func.func @transform_3(%arg0: i32, %arg1: i32, %arg2: i32) -> (i32, i32) {
    %c0_i32 = arith.constant 0 : i32
    return %arg0, %arg1 : i32, i32
  }
}

module attributes {stable_mosaic.version = 11 : i64} {
  func.func @_matmul_bias_act_kernel(%arg0: i32, %arg1: i32, %arg2: i32, %arg3: memref<8x384xbf16, #tpu.memory_space<vmem>>, %arg4: memref<384x128xbf16, #tpu.memory_space<vmem>>, %arg5: memref<1x128xf32, #tpu.memory_space<vmem>>, %arg6: memref<8x128xbf16, #tpu.memory_space<vmem>>, %arg7: memref<8x128xf32, #tpu.memory_space<vmem>>) attributes {dimension_semantics = [#tpu.dimension_semantics<parallel>, #tpu.dimension_semantics<parallel>, #tpu.dimension_semantics<arbitrary>], iteration_bounds = array<i64: 1, 1, 3>, scalar_prefetch = 0 : i64, scratch_operands = 1 : i64, tpu.core_type = #tpu.core_type<tc>, window_params = [{transform_indices = @transform_0, window_bounds = array<i64: 8, 384>}, {transform_indices = @transform_1, window_bounds = array<i64: 384, 128>}, {transform_indices = @transform_2, window_bounds = array<i64: 1, 128>}, {transform_indices = @transform_3, window_bounds = array<i64: 8, 128>}]} {
    %c0_i32 = arith.constant 0 : i32
    %0 = arith.cmpi eq, %arg2, %c0_i32 : i32
    %1 = arith.extui %0 : i1 to i32
    %c0_i32_0 = arith.constant 0 : i32
    %2 = arith.cmpi ne, %1, %c0_i32_0 : i32
    scf.if %2 {
      %cst_9 = arith.constant 0.000000e+00 : f32
      %12 = vector.broadcast %cst_9 : f32 to vector<8x128xf32>
      %c0_10 = arith.constant 0 : index
      %c0_11 = arith.constant 0 : index
      %13 = vector.load %arg7[%c0_10, %c0_11] : memref<8x128xf32, #tpu.memory_space<vmem>>, vector<8x128xf32>
      tpu.vector_store %arg7[%c0_10, %c0_11], %12 {strides = array<i32>} : memref<8x128xf32, #tpu.memory_space<vmem>>, vector<8x128xf32>,
    } else {
    }
    %c0 = arith.constant 0 : index
    %c0_1 = arith.constant 0 : index
    %3 = vector.load %arg7[%c0, %c0_1] : memref<8x128xf32, #tpu.memory_space<vmem>>, vector<8x128xf32>
    %c0_2 = arith.constant 0 : index
    %c0_3 = arith.constant 0 : index
    %4 = vector.load %arg3[%c0_2, %c0_3] : memref<8x384xbf16, #tpu.memory_space<vmem>>, vector<8x384xbf16>
    %c0_4 = arith.constant 0 : index
    %c0_5 = arith.constant 0 : index
    %5 = vector.load %arg4[%c0_4, %c0_5] : memref<384x128xbf16, #tpu.memory_space<vmem>>, vector<384x128xbf16>
    %cst = arith.constant dense<0.000000e+00> : vector<8x128xf32>
    %6 = tpu.matmul %4, %5, %cst {dimension_numbers = #tpu.dot_dimension_numbers<[1], [0], [0], [1], [0, 0, 1, 1], [], []>} : vector<8x384xbf16>, vector<384x128xbf16>, vector<8x128xf32> -> vector<8x128xf32>
    %7 = arith.addf %3, %6 : vector<8x128xf32>
    %c0_6 = arith.constant 0 : index
    %c0_7 = arith.constant 0 : index
    %8 = vector.load %arg7[%c0_6, %c0_7] : memref<8x128xf32, #tpu.memory_space<vmem>>, vector<8x128xf32>
    tpu.vector_store %arg7[%c0_6, %c0_7], %7 {strides = array<i32>} : memref<8x128xf32, #tpu.memory_space<vmem>>, vector<8x128xf32>,
    %c2_i32 = arith.constant 2 : i32
    %9 = arith.cmpi eq, %arg2, %c2_i32 : i32
    %10 = arith.extui %9 : i1 to i32
    %c0_i32_8 = arith.constant 0 : i32
    %11 = arith.cmpi ne, %10, %c0_i32_8 : i32
    scf.if %11 {
      %c0_9 = arith.constant 0 : index
      %c0_10 = arith.constant 0 : index
      %12 = vector.load %arg7[%c0_9, %c0_10] : memref<8x128xf32, #tpu.memory_space<vmem>>, vector<8x128xf32>
      %c0_11 = arith.constant 0 : index
      %c0_12 = arith.constant 0 : index
      %13 = vector.load %arg5[%c0_11, %c0_12] : memref<1x128xf32, #tpu.memory_space<vmem>>, vector<1x128xf32>
      %14 = vector.broadcast %13 : vector<1x128xf32> to vector<8x128xf32>
      %15 = arith.addf %12, %14 : vector<8x128xf32>
      %cst_13 = arith.constant 0.000000e+00 : f32
      %16 = vector.broadcast %cst_13 : f32 to vector<8x128xf32>
      %17 = arith.cmpf ogt, %15, %16 : vector<8x128xf32>
      %cst_14 = arith.constant 2.000000e-01 : f32
      %18 = vector.broadcast %cst_14 : f32 to vector<8x128xf32>
      %19 = arith.mulf %18, %15 : vector<8x128xf32>
      %20 = arith.select %17, %15, %19 : vector<8x128xi1>, vector<8x128xf32>
      %21 = arith.truncf %20 : vector<8x128xf32> to vector<8x128xbf16>
      %c0_15 = arith.constant 0 : index
      %c0_16 = arith.constant 0 : index
      %22 = vector.load %arg6[%c0_15, %c0_16] : memref<8x128xbf16, #tpu.memory_space<vmem>>, vector<8x128xbf16>
      tpu.vector_store %arg6[%c0_15, %c0_16], %21 {strides = array<i32>} : memref<8x128xbf16, #tpu.memory_space<vmem>>, vector<8x128xbf16>,
    } else {
    }
    return
  }
  func.func @transform_0(%arg0: i32, %arg1: i32, %arg2: i32) -> (i32, i32) {
    %c0_i32 = arith.constant 0 : i32
    return %arg0, %arg2 : i32, i32
  }
  func.func @transform_1(%arg0: i32, %arg1: i32, %arg2: i32) -> (i32, i32) {
    %c0_i32 = arith.constant 0 : i32
    return %arg2, %arg1 : i32, i32
  }
  func.func @transform_2(%arg0: i32, %arg1: i32, %arg2: i32) -> (i32, i32) {
    %c0_i32 = arith.constant 0 : i32
    %c0_i32_0 = arith.constant 0 : i32
    return %c0_i32, %arg1 : i32, i32
  }
  func.func @transform_3(%arg0: i32, %arg1: i32, %arg2: i32) -> (i32, i32) {
    %c0_i32 = arith.constant 0 : i32
    return %arg0, %arg1 : i32, i32
  }
}

module attributes {stable_mosaic.version = 11 : i64} {
  func.func @_matmul_bias_act_kernel(%arg0: i32, %arg1: i32, %arg2: i32, %arg3: memref<8x384xbf16, #tpu.memory_space<vmem>>, %arg4: memref<384x256xbf16, #tpu.memory_space<vmem>>, %arg5: memref<1x256xf32, #tpu.memory_space<vmem>>, %arg6: memref<8x256xbf16, #tpu.memory_space<vmem>>, %arg7: memref<8x256xf32, #tpu.memory_space<vmem>>) attributes {dimension_semantics = [#tpu.dimension_semantics<parallel>, #tpu.dimension_semantics<parallel>, #tpu.dimension_semantics<arbitrary>], iteration_bounds = array<i64: 1, 1, 3>, scalar_prefetch = 0 : i64, scratch_operands = 1 : i64, tpu.core_type = #tpu.core_type<tc>, window_params = [{transform_indices = @transform_0, window_bounds = array<i64: 8, 384>}, {transform_indices = @transform_1, window_bounds = array<i64: 384, 256>}, {transform_indices = @transform_2, window_bounds = array<i64: 1, 256>}, {transform_indices = @transform_3, window_bounds = array<i64: 8, 256>}]} {
    %c0_i32 = arith.constant 0 : i32
    %0 = arith.cmpi eq, %arg2, %c0_i32 : i32
    %1 = arith.extui %0 : i1 to i32
    %c0_i32_0 = arith.constant 0 : i32
    %2 = arith.cmpi ne, %1, %c0_i32_0 : i32
    scf.if %2 {
      %cst_9 = arith.constant 0.000000e+00 : f32
      %12 = vector.broadcast %cst_9 : f32 to vector<8x256xf32>
      %c0_10 = arith.constant 0 : index
      %c0_11 = arith.constant 0 : index
      %13 = vector.load %arg7[%c0_10, %c0_11] : memref<8x256xf32, #tpu.memory_space<vmem>>, vector<8x256xf32>
      tpu.vector_store %arg7[%c0_10, %c0_11], %12 {strides = array<i32>} : memref<8x256xf32, #tpu.memory_space<vmem>>, vector<8x256xf32>,
    } else {
    }
    %c0 = arith.constant 0 : index
    %c0_1 = arith.constant 0 : index
    %3 = vector.load %arg7[%c0, %c0_1] : memref<8x256xf32, #tpu.memory_space<vmem>>, vector<8x256xf32>
    %c0_2 = arith.constant 0 : index
    %c0_3 = arith.constant 0 : index
    %4 = vector.load %arg3[%c0_2, %c0_3] : memref<8x384xbf16, #tpu.memory_space<vmem>>, vector<8x384xbf16>
    %c0_4 = arith.constant 0 : index
    %c0_5 = arith.constant 0 : index
    %5 = vector.load %arg4[%c0_4, %c0_5] : memref<384x256xbf16, #tpu.memory_space<vmem>>, vector<384x256xbf16>
    %cst = arith.constant dense<0.000000e+00> : vector<8x256xf32>
    %6 = tpu.matmul %4, %5, %cst {dimension_numbers = #tpu.dot_dimension_numbers<[1], [0], [0], [1], [0, 0, 1, 1], [], []>} : vector<8x384xbf16>, vector<384x256xbf16>, vector<8x256xf32> -> vector<8x256xf32>
    %7 = arith.addf %3, %6 : vector<8x256xf32>
    %c0_6 = arith.constant 0 : index
    %c0_7 = arith.constant 0 : index
    %8 = vector.load %arg7[%c0_6, %c0_7] : memref<8x256xf32, #tpu.memory_space<vmem>>, vector<8x256xf32>
    tpu.vector_store %arg7[%c0_6, %c0_7], %7 {strides = array<i32>} : memref<8x256xf32, #tpu.memory_space<vmem>>, vector<8x256xf32>,
    %c2_i32 = arith.constant 2 : i32
    %9 = arith.cmpi eq, %arg2, %c2_i32 : i32
    %10 = arith.extui %9 : i1 to i32
    %c0_i32_8 = arith.constant 0 : i32
    %11 = arith.cmpi ne, %10, %c0_i32_8 : i32
    scf.if %11 {
      %c0_9 = arith.constant 0 : index
      %c0_10 = arith.constant 0 : index
      %12 = vector.load %arg7[%c0_9, %c0_10] : memref<8x256xf32, #tpu.memory_space<vmem>>, vector<8x256xf32>
      %c0_11 = arith.constant 0 : index
      %c0_12 = arith.constant 0 : index
      %13 = vector.load %arg5[%c0_11, %c0_12] : memref<1x256xf32, #tpu.memory_space<vmem>>, vector<1x256xf32>
      %14 = vector.broadcast %13 : vector<1x256xf32> to vector<8x256xf32>
      %15 = arith.addf %12, %14 : vector<8x256xf32>
      %cst_13 = arith.constant 0.000000e+00 : f32
      %16 = vector.broadcast %cst_13 : f32 to vector<8x256xf32>
      %17 = arith.cmpf ogt, %15, %16 : vector<8x256xf32>
      %cst_14 = arith.constant 2.000000e-01 : f32
      %18 = vector.broadcast %cst_14 : f32 to vector<8x256xf32>
      %19 = arith.mulf %18, %15 : vector<8x256xf32>
      %20 = arith.select %17, %15, %19 : vector<8x256xi1>, vector<8x256xf32>
      %21 = arith.truncf %20 : vector<8x256xf32> to vector<8x256xbf16>
      %c0_15 = arith.constant 0 : index
      %c0_16 = arith.constant 0 : index
      %22 = vector.load %arg6[%c0_15, %c0_16] : memref<8x256xbf16, #tpu.memory_space<vmem>>, vector<8x256xbf16>
      tpu.vector_store %arg6[%c0_15, %c0_16], %21 {strides = array<i32>} : memref<8x256xbf16, #tpu.memory_space<vmem>>, vector<8x256xbf16>,
    } else {
    }
    return
  }
  func.func @transform_0(%arg0: i32, %arg1: i32, %arg2: i32) -> (i32, i32) {
    %c0_i32 = arith.constant 0 : i32
    return %arg0, %arg2 : i32, i32
  }
  func.func @transform_1(%arg0: i32, %arg1: i32, %arg2: i32) -> (i32, i32) {
    %c0_i32 = arith.constant 0 : i32
    return %arg2, %arg1 : i32, i32
  }
  func.func @transform_2(%arg0: i32, %arg1: i32, %arg2: i32) -> (i32, i32) {
    %c0_i32 = arith.constant 0 : i32
    %c0_i32_0 = arith.constant 0 : i32
    return %c0_i32, %arg1 : i32, i32
  }
  func.func @transform_3(%arg0: i32, %arg1: i32, %arg2: i32) -> (i32, i32) {
    %c0_i32 = arith.constant 0 : i32
    return %arg0, %arg1 : i32, i32
  }
}

module attributes {stable_mosaic.version = 11 : i64} {
  func.func @_matmul_bias_act_kernel(%arg0: i32, %arg1: i32, %arg2: i32, %arg3: memref<8x768xbf16, #tpu.memory_space<vmem>>, %arg4: memref<768x256xbf16, #tpu.memory_space<vmem>>, %arg5: memref<1x256xf32, #tpu.memory_space<vmem>>, %arg6: memref<8x256xbf16, #tpu.memory_space<vmem>>, %arg7: memref<8x256xf32, #tpu.memory_space<vmem>>) attributes {dimension_semantics = [#tpu.dimension_semantics<parallel>, #tpu.dimension_semantics<parallel>, #tpu.dimension_semantics<arbitrary>], iteration_bounds = array<i64: 1, 1, 3>, scalar_prefetch = 0 : i64, scratch_operands = 1 : i64, tpu.core_type = #tpu.core_type<tc>, window_params = [{transform_indices = @transform_0, window_bounds = array<i64: 8, 768>}, {transform_indices = @transform_1, window_bounds = array<i64: 768, 256>}, {transform_indices = @transform_2, window_bounds = array<i64: 1, 256>}, {transform_indices = @transform_3, window_bounds = array<i64: 8, 256>}]} {
    %c0_i32 = arith.constant 0 : i32
    %0 = arith.cmpi eq, %arg2, %c0_i32 : i32
    %1 = arith.extui %0 : i1 to i32
    %c0_i32_0 = arith.constant 0 : i32
    %2 = arith.cmpi ne, %1, %c0_i32_0 : i32
    scf.if %2 {
      %cst_9 = arith.constant 0.000000e+00 : f32
      %12 = vector.broadcast %cst_9 : f32 to vector<8x256xf32>
      %c0_10 = arith.constant 0 : index
      %c0_11 = arith.constant 0 : index
      %13 = vector.load %arg7[%c0_10, %c0_11] : memref<8x256xf32, #tpu.memory_space<vmem>>, vector<8x256xf32>
      tpu.vector_store %arg7[%c0_10, %c0_11], %12 {strides = array<i32>} : memref<8x256xf32, #tpu.memory_space<vmem>>, vector<8x256xf32>,
    } else {
    }
    %c0 = arith.constant 0 : index
    %c0_1 = arith.constant 0 : index
    %3 = vector.load %arg7[%c0, %c0_1] : memref<8x256xf32, #tpu.memory_space<vmem>>, vector<8x256xf32>
    %c0_2 = arith.constant 0 : index
    %c0_3 = arith.constant 0 : index
    %4 = vector.load %arg3[%c0_2, %c0_3] : memref<8x768xbf16, #tpu.memory_space<vmem>>, vector<8x768xbf16>
    %c0_4 = arith.constant 0 : index
    %c0_5 = arith.constant 0 : index
    %5 = vector.load %arg4[%c0_4, %c0_5] : memref<768x256xbf16, #tpu.memory_space<vmem>>, vector<768x256xbf16>
    %cst = arith.constant dense<0.000000e+00> : vector<8x256xf32>
    %6 = tpu.matmul %4, %5, %cst {dimension_numbers = #tpu.dot_dimension_numbers<[1], [0], [0], [1], [0, 0, 1, 1], [], []>} : vector<8x768xbf16>, vector<768x256xbf16>, vector<8x256xf32> -> vector<8x256xf32>
    %7 = arith.addf %3, %6 : vector<8x256xf32>
    %c0_6 = arith.constant 0 : index
    %c0_7 = arith.constant 0 : index
    %8 = vector.load %arg7[%c0_6, %c0_7] : memref<8x256xf32, #tpu.memory_space<vmem>>, vector<8x256xf32>
    tpu.vector_store %arg7[%c0_6, %c0_7], %7 {strides = array<i32>} : memref<8x256xf32, #tpu.memory_space<vmem>>, vector<8x256xf32>,
    %c2_i32 = arith.constant 2 : i32
    %9 = arith.cmpi eq, %arg2, %c2_i32 : i32
    %10 = arith.extui %9 : i1 to i32
    %c0_i32_8 = arith.constant 0 : i32
    %11 = arith.cmpi ne, %10, %c0_i32_8 : i32
    scf.if %11 {
      %c0_9 = arith.constant 0 : index
      %c0_10 = arith.constant 0 : index
      %12 = vector.load %arg7[%c0_9, %c0_10] : memref<8x256xf32, #tpu.memory_space<vmem>>, vector<8x256xf32>
      %c0_11 = arith.constant 0 : index
      %c0_12 = arith.constant 0 : index
      %13 = vector.load %arg5[%c0_11, %c0_12] : memref<1x256xf32, #tpu.memory_space<vmem>>, vector<1x256xf32>
      %14 = vector.broadcast %13 : vector<1x256xf32> to vector<8x256xf32>
      %15 = arith.addf %12, %14 : vector<8x256xf32>
      %cst_13 = arith.constant 0.000000e+00 : f32
      %16 = vector.broadcast %cst_13 : f32 to vector<8x256xf32>
      %17 = arith.cmpf ogt, %15, %16 : vector<8x256xf32>
      %cst_14 = arith.constant 2.000000e-01 : f32
      %18 = vector.broadcast %cst_14 : f32 to vector<8x256xf32>
      %19 = arith.mulf %18, %15 : vector<8x256xf32>
      %20 = arith.select %17, %15, %19 : vector<8x256xi1>, vector<8x256xf32>
      %21 = arith.truncf %20 : vector<8x256xf32> to vector<8x256xbf16>
      %c0_15 = arith.constant 0 : index
      %c0_16 = arith.constant 0 : index
      %22 = vector.load %arg6[%c0_15, %c0_16] : memref<8x256xbf16, #tpu.memory_space<vmem>>, vector<8x256xbf16>
      tpu.vector_store %arg6[%c0_15, %c0_16], %21 {strides = array<i32>} : memref<8x256xbf16, #tpu.memory_space<vmem>>, vector<8x256xbf16>,
    } else {
    }
    return
  }
  func.func @transform_0(%arg0: i32, %arg1: i32, %arg2: i32) -> (i32, i32) {
    %c0_i32 = arith.constant 0 : i32
    return %arg0, %arg2 : i32, i32
  }
  func.func @transform_1(%arg0: i32, %arg1: i32, %arg2: i32) -> (i32, i32) {
    %c0_i32 = arith.constant 0 : i32
    return %arg2, %arg1 : i32, i32
  }
  func.func @transform_2(%arg0: i32, %arg1: i32, %arg2: i32) -> (i32, i32) {
    %c0_i32 = arith.constant 0 : i32
    %c0_i32_0 = arith.constant 0 : i32
    return %c0_i32, %arg1 : i32, i32
  }
  func.func @transform_3(%arg0: i32, %arg1: i32, %arg2: i32) -> (i32, i32) {
    %c0_i32 = arith.constant 0 : i32
    return %arg0, %arg1 : i32, i32
  }
}

module attributes {stable_mosaic.version = 11 : i64} {
  func.func @_matmul_bias_act_kernel(%arg0: i32, %arg1: i32, %arg2: i32, %arg3: memref<8x768xbf16, #tpu.memory_space<vmem>>, %arg4: memref<768x512xbf16, #tpu.memory_space<vmem>>, %arg5: memref<1x512xf32, #tpu.memory_space<vmem>>, %arg6: memref<8x512xbf16, #tpu.memory_space<vmem>>, %arg7: memref<8x512xf32, #tpu.memory_space<vmem>>) attributes {dimension_semantics = [#tpu.dimension_semantics<parallel>, #tpu.dimension_semantics<parallel>, #tpu.dimension_semantics<arbitrary>], iteration_bounds = array<i64: 1, 1, 3>, scalar_prefetch = 0 : i64, scratch_operands = 1 : i64, tpu.core_type = #tpu.core_type<tc>, window_params = [{transform_indices = @transform_0, window_bounds = array<i64: 8, 768>}, {transform_indices = @transform_1, window_bounds = array<i64: 768, 512>}, {transform_indices = @transform_2, window_bounds = array<i64: 1, 512>}, {transform_indices = @transform_3, window_bounds = array<i64: 8, 512>}]} {
    %c0_i32 = arith.constant 0 : i32
    %0 = arith.cmpi eq, %arg2, %c0_i32 : i32
    %1 = arith.extui %0 : i1 to i32
    %c0_i32_0 = arith.constant 0 : i32
    %2 = arith.cmpi ne, %1, %c0_i32_0 : i32
    scf.if %2 {
      %cst_9 = arith.constant 0.000000e+00 : f32
      %12 = vector.broadcast %cst_9 : f32 to vector<8x512xf32>
      %c0_10 = arith.constant 0 : index
      %c0_11 = arith.constant 0 : index
      %13 = vector.load %arg7[%c0_10, %c0_11] : memref<8x512xf32, #tpu.memory_space<vmem>>, vector<8x512xf32>
      tpu.vector_store %arg7[%c0_10, %c0_11], %12 {strides = array<i32>} : memref<8x512xf32, #tpu.memory_space<vmem>>, vector<8x512xf32>,
    } else {
    }
    %c0 = arith.constant 0 : index
    %c0_1 = arith.constant 0 : index
    %3 = vector.load %arg7[%c0, %c0_1] : memref<8x512xf32, #tpu.memory_space<vmem>>, vector<8x512xf32>
    %c0_2 = arith.constant 0 : index
    %c0_3 = arith.constant 0 : index
    %4 = vector.load %arg3[%c0_2, %c0_3] : memref<8x768xbf16, #tpu.memory_space<vmem>>, vector<8x768xbf16>
    %c0_4 = arith.constant 0 : index
    %c0_5 = arith.constant 0 : index
    %5 = vector.load %arg4[%c0_4, %c0_5] : memref<768x512xbf16, #tpu.memory_space<vmem>>, vector<768x512xbf16>
    %cst = arith.constant dense<0.000000e+00> : vector<8x512xf32>
    %6 = tpu.matmul %4, %5, %cst {dimension_numbers = #tpu.dot_dimension_numbers<[1], [0], [0], [1], [0, 0, 1, 1], [], []>} : vector<8x768xbf16>, vector<768x512xbf16>, vector<8x512xf32> -> vector<8x512xf32>
    %7 = arith.addf %3, %6 : vector<8x512xf32>
    %c0_6 = arith.constant 0 : index
    %c0_7 = arith.constant 0 : index
    %8 = vector.load %arg7[%c0_6, %c0_7] : memref<8x512xf32, #tpu.memory_space<vmem>>, vector<8x512xf32>
    tpu.vector_store %arg7[%c0_6, %c0_7], %7 {strides = array<i32>} : memref<8x512xf32, #tpu.memory_space<vmem>>, vector<8x512xf32>,
    %c2_i32 = arith.constant 2 : i32
    %9 = arith.cmpi eq, %arg2, %c2_i32 : i32
    %10 = arith.extui %9 : i1 to i32
    %c0_i32_8 = arith.constant 0 : i32
    %11 = arith.cmpi ne, %10, %c0_i32_8 : i32
    scf.if %11 {
      %c0_9 = arith.constant 0 : index
      %c0_10 = arith.constant 0 : index
      %12 = vector.load %arg7[%c0_9, %c0_10] : memref<8x512xf32, #tpu.memory_space<vmem>>, vector<8x512xf32>
      %c0_11 = arith.constant 0 : index
      %c0_12 = arith.constant 0 : index
      %13 = vector.load %arg5[%c0_11, %c0_12] : memref<1x512xf32, #tpu.memory_space<vmem>>, vector<1x512xf32>
      %14 = vector.broadcast %13 : vector<1x512xf32> to vector<8x512xf32>
      %15 = arith.addf %12, %14 : vector<8x512xf32>
      %cst_13 = arith.constant 0.000000e+00 : f32
      %16 = vector.broadcast %cst_13 : f32 to vector<8x512xf32>
      %17 = arith.cmpf ogt, %15, %16 : vector<8x512xf32>
      %cst_14 = arith.constant 2.000000e-01 : f32
      %18 = vector.broadcast %cst_14 : f32 to vector<8x512xf32>
      %19 = arith.mulf %18, %15 : vector<8x512xf32>
      %20 = arith.select %17, %15, %19 : vector<8x512xi1>, vector<8x512xf32>
      %21 = arith.truncf %20 : vector<8x512xf32> to vector<8x512xbf16>
      %c0_15 = arith.constant 0 : index
      %c0_16 = arith.constant 0 : index
      %22 = vector.load %arg6[%c0_15, %c0_16] : memref<8x512xbf16, #tpu.memory_space<vmem>>, vector<8x512xbf16>
      tpu.vector_store %arg6[%c0_15, %c0_16], %21 {strides = array<i32>} : memref<8x512xbf16, #tpu.memory_space<vmem>>, vector<8x512xbf16>,
    } else {
    }
    return
  }
  func.func @transform_0(%arg0: i32, %arg1: i32, %arg2: i32) -> (i32, i32) {
    %c0_i32 = arith.constant 0 : i32
    return %arg0, %arg2 : i32, i32
  }
  func.func @transform_1(%arg0: i32, %arg1: i32, %arg2: i32) -> (i32, i32) {
    %c0_i32 = arith.constant 0 : i32
    return %arg2, %arg1 : i32, i32
  }
  func.func @transform_2(%arg0: i32, %arg1: i32, %arg2: i32) -> (i32, i32) {
    %c0_i32 = arith.constant 0 : i32
    %c0_i32_0 = arith.constant 0 : i32
    return %c0_i32, %arg1 : i32, i32
  }
  func.func @transform_3(%arg0: i32, %arg1: i32, %arg2: i32) -> (i32, i32) {
    %c0_i32 = arith.constant 0 : i32
    return %arg0, %arg1 : i32, i32
  }
}

module attributes {stable_mosaic.version = 11 : i64} {
  func.func @_classifier_kernel(%arg0: i32, %arg1: memref<8x512xbf16, #tpu.memory_space<vmem>>, %arg2: memref<512x1024xbf16, #tpu.memory_space<vmem>>, %arg3: memref<1x1024xf32, #tpu.memory_space<vmem>>, %arg4: memref<1024x128xbf16, #tpu.memory_space<vmem>>, %arg5: memref<1x128xf32, #tpu.memory_space<vmem>>, %arg6: memref<8x128xf32, #tpu.memory_space<vmem>>, %arg7: memref<8x1024xf32, #tpu.memory_space<vmem>>) attributes {dimension_semantics = [#tpu.dimension_semantics<arbitrary>], iteration_bounds = array<i64: 1>, scalar_prefetch = 0 : i64, scratch_operands = 1 : i64, tpu.core_type = #tpu.core_type<tc>, window_params = [{transform_indices = @transform_0, window_bounds = array<i64: 8, 512>}, {transform_indices = @transform_1, window_bounds = array<i64: 512, 1024>}, {pipeline_mode = #tpu.pipeline_mode<synchronous>, transform_indices = @transform_2, window_bounds = array<i64: 1, 1024>}, {pipeline_mode = #tpu.pipeline_mode<synchronous>, transform_indices = @transform_3, window_bounds = array<i64: 1024, 128>}, {pipeline_mode = #tpu.pipeline_mode<synchronous>, transform_indices = @transform_4, window_bounds = array<i64: 1, 128>}, {pipeline_mode = #tpu.pipeline_mode<synchronous>, transform_indices = @transform_5, window_bounds = array<i64: 8, 128>}]} {
    %c0_i32 = arith.constant 0 : i32
    %0 = arith.cmpi eq, %arg0, %c0_i32 : i32
    %1 = arith.extui %0 : i1 to i32
    %c0_i32_0 = arith.constant 0 : i32
    %2 = arith.cmpi ne, %1, %c0_i32_0 : i32
    scf.if %2 {
      %cst_10 = arith.constant 0.000000e+00 : f32
      %12 = vector.broadcast %cst_10 : f32 to vector<8x1024xf32>
      %c0_11 = arith.constant 0 : index
      %c0_12 = arith.constant 0 : index
      %13 = vector.load %arg7[%c0_11, %c0_12] : memref<8x1024xf32, #tpu.memory_space<vmem>>, vector<8x1024xf32>
      tpu.vector_store %arg7[%c0_11, %c0_12], %12 {strides = array<i32>} : memref<8x1024xf32, #tpu.memory_space<vmem>>, vector<8x1024xf32>,
    } else {
    }
    %c0 = arith.constant 0 : index
    %c0_1 = arith.constant 0 : index
    %3 = vector.load %arg7[%c0, %c0_1] : memref<8x1024xf32, #tpu.memory_space<vmem>>, vector<8x1024xf32>
    %c0_2 = arith.constant 0 : index
    %c0_3 = arith.constant 0 : index
    %4 = vector.load %arg1[%c0_2, %c0_3] : memref<8x512xbf16, #tpu.memory_space<vmem>>, vector<8x512xbf16>
    %c0_4 = arith.constant 0 : index
    %c0_5 = arith.constant 0 : index
    %5 = vector.load %arg2[%c0_4, %c0_5] : memref<512x1024xbf16, #tpu.memory_space<vmem>>, vector<512x1024xbf16>
    %cst = arith.constant dense<0.000000e+00> : vector<8x1024xf32>
    %6 = tpu.matmul %4, %5, %cst {dimension_numbers = #tpu.dot_dimension_numbers<[1], [0], [0], [1], [0, 0, 1, 1], [], []>} : vector<8x512xbf16>, vector<512x1024xbf16>, vector<8x1024xf32> -> vector<8x1024xf32>
    %7 = arith.addf %3, %6 : vector<8x1024xf32>
    %c0_6 = arith.constant 0 : index
    %c0_7 = arith.constant 0 : index
    %8 = vector.load %arg7[%c0_6, %c0_7] : memref<8x1024xf32, #tpu.memory_space<vmem>>, vector<8x1024xf32>
    tpu.vector_store %arg7[%c0_6, %c0_7], %7 {strides = array<i32>} : memref<8x1024xf32, #tpu.memory_space<vmem>>, vector<8x1024xf32>,
    %c0_i32_8 = arith.constant 0 : i32
    %9 = arith.cmpi eq, %arg0, %c0_i32_8 : i32
    %10 = arith.extui %9 : i1 to i32
    %c0_i32_9 = arith.constant 0 : i32
    %11 = arith.cmpi ne, %10, %c0_i32_9 : i32
    scf.if %11 {
      %c0_10 = arith.constant 0 : index
      %c0_11 = arith.constant 0 : index
      %12 = vector.load %arg7[%c0_10, %c0_11] : memref<8x1024xf32, #tpu.memory_space<vmem>>, vector<8x1024xf32>
      %c0_12 = arith.constant 0 : index
      %c0_13 = arith.constant 0 : index
      %13 = vector.load %arg3[%c0_12, %c0_13] : memref<1x1024xf32, #tpu.memory_space<vmem>>, vector<1x1024xf32>
      %14 = vector.broadcast %13 : vector<1x1024xf32> to vector<8x1024xf32>
      %15 = arith.addf %12, %14 : vector<8x1024xf32>
      %cst_14 = arith.constant 0.000000e+00 : f32
      %16 = vector.broadcast %cst_14 : f32 to vector<8x1024xf32>
      %17 = arith.cmpf ogt, %15, %16 : vector<8x1024xf32>
      %cst_15 = arith.constant 2.000000e-01 : f32
      %18 = vector.broadcast %cst_15 : f32 to vector<8x1024xf32>
      %19 = arith.mulf %18, %15 : vector<8x1024xf32>
      %20 = arith.select %17, %15, %19 : vector<8x1024xi1>, vector<8x1024xf32>
      %21 = arith.truncf %20 : vector<8x1024xf32> to vector<8x1024xbf16>
      %c0_16 = arith.constant 0 : index
      %c0_17 = arith.constant 0 : index
      %22 = vector.load %arg4[%c0_16, %c0_17] : memref<1024x128xbf16, #tpu.memory_space<vmem>>, vector<1024x128xbf16>
      %cst_18 = arith.constant dense<0.000000e+00> : vector<8x128xf32>
      %23 = tpu.matmul %21, %22, %cst_18 {dimension_numbers = #tpu.dot_dimension_numbers<[1], [0], [0], [1], [0, 0, 1, 1], [], []>} : vector<8x1024xbf16>, vector<1024x128xbf16>, vector<8x128xf32> -> vector<8x128xf32>
      %c0_19 = arith.constant 0 : index
      %c0_20 = arith.constant 0 : index
      %24 = vector.load %arg5[%c0_19, %c0_20] : memref<1x128xf32, #tpu.memory_space<vmem>>, vector<1x128xf32>
      %25 = vector.broadcast %24 : vector<1x128xf32> to vector<8x128xf32>
      %26 = arith.addf %23, %25 : vector<8x128xf32>
      %c0_21 = arith.constant 0 : index
      %c0_22 = arith.constant 0 : index
      %27 = vector.load %arg6[%c0_21, %c0_22] : memref<8x128xf32, #tpu.memory_space<vmem>>, vector<8x128xf32>
      tpu.vector_store %arg6[%c0_21, %c0_22], %26 {strides = array<i32>} : memref<8x128xf32, #tpu.memory_space<vmem>>, vector<8x128xf32>,
    } else {
    }
    return
  }
  func.func @transform_0(%arg0: i32) -> (i32, i32) {
    %c0_i32 = arith.constant 0 : i32
    %c0_i32_0 = arith.constant 0 : i32
    return %c0_i32, %arg0 : i32, i32
  }
  func.func @transform_1(%arg0: i32) -> (i32, i32) {
    %c0_i32 = arith.constant 0 : i32
    %c0_i32_0 = arith.constant 0 : i32
    return %arg0, %c0_i32 : i32, i32
  }
  func.func @transform_2(%arg0: i32) -> (i32, i32) {
    %c0_i32 = arith.constant 0 : i32
    %c0_i32_0 = arith.constant 0 : i32
    %c0_i32_1 = arith.constant 0 : i32
    return %c0_i32, %c0_i32_0 : i32, i32
  }
  func.func @transform_3(%arg0: i32) -> (i32, i32) {
    %c0_i32 = arith.constant 0 : i32
    %c0_i32_0 = arith.constant 0 : i32
    %c0_i32_1 = arith.constant 0 : i32
    return %c0_i32, %c0_i32_0 : i32, i32
  }
  func.func @transform_4(%arg0: i32) -> (i32, i32) {
    %c0_i32 = arith.constant 0 : i32
    %c0_i32_0 = arith.constant 0 : i32
    %c0_i32_1 = arith.constant 0 : i32
    return %c0_i32, %c0_i32_0 : i32, i32
  }
  func.func @transform_5(%arg0: i32) -> (i32, i32) {
    %c0_i32 = arith.constant 0 : i32
    %c0_i32_0 = arith.constant 0 : i32
    %c0_i32_1 = arith.constant 0 : i32
    return %c0_i32, %c0_i32_0 : i32, i32
  }
}

</mosaic_0001>

<llo_original>
// kernel: forward.10
$region0: #{forward.10}
  #allocation0 [shape = 'u32[]', space=smem, size = 0x4, offset = 0x4, fixed_abs, tag = 'smem constant byte address 0x4 - core index']
  #allocation1 [shape = 'u32[72,128]{1,0:T(1,128)}', space=vmem, size = 0x9000, scoped, tag = 'internal scratch']
  #allocation2 [shape = 'f32[256,128]{1,0:T(8,128)}', space=vmem, size = 0x20000, scoped, tag = 'scratch operand']
  %s0 = inlined_call_operand.vmem [shape: bf16[512,128], index: 0, kind: input, shape index: {}]
  %s1 = inlined_call_operand.vmem [shape: bf16[128,128], index: 1, kind: input, shape index: {}]
  %s2 = inlined_call_operand.vmem [shape: f32[1,128], index: 2, kind: input, shape index: {}]
  %s3 = inlined_call_operand.vmem [shape: bf16[512,128], index: 3, kind: output, shape index: {}]
  %s4 = sld [smem:[#allocation0]]
  $region53: #{forward.10} parent=0
    _
  %s6 = ssub.s32 1, %s4
  %s7 = scalar_select 0, %s6, %s4
  loop: start=0, step=1, limit=4
  $region2: #{forward.10} parent=0 // loop_pre_header
    _
  $region3: #{forward.10} parent=0 // loop_header
    %s9 = sphi 0, %s13
    %p10 = scmp.ge.s32.totalorder %s9, 4
    %s16 = sphi 0, %s35
    %s17 = sphi 0, %s31
    %s18 = sphi 0, %s27
    %s19 = sphi 0, %s16
    %s20 = sphi 0, %s17
    %s21 = sphi 0, %s18
    %s22 = sphi 0, %s19
    %s23 = sphi 0, %s20
    %s24 = sphi 0, %s21
    %s40 = sphi 0, %s42
    %s43 = sphi 0, %s40
    %s44 = sphi 0, %s43
    %s60 = sphi 0, %s44
    %s68 = sphi 0, %s70
    %s71 = sphi 0, %s68
    %s72 = sphi 0, %s71
    %s88 = sphi 0, %s72
    %s94 = sphi 0, %s96
    %s97 = sphi 0, %s94
    %s98 = sphi 0, %s97
    %s114 = sphi 0, %s98
    %s122 = sphi 0, %s124
    %s125 = sphi 0, %s122
    %s126 = sphi 0, %s125
    %s142 = sphi 0, %s126
  $region4: #{forward.10} parent=0 // loop_header_branch
    %12 = sbr.rel (%p10) target = $region8
  $region5: #{forward.10} parent=0 // loop_body
    %s14 = ssub.s32 %s9, 1
    %s15 = ssub.s32 %s9, 2
    %s25 = sadd.s32 1, %s18
    %p26 = scmp.ge.s32.totalorder %s25, 1
    %s27 = scalar_select %p26, 0, %s25
    %s28 = sadd.s32 1, %s17
    %s29 = scalar_select %p26, %s28, %s17
    %p30 = scmp.ge.s32.totalorder %s29, 1
    %s31 = scalar_select %p30, 0, %s29
    %s32 = sadd.s32 1, %s16
    %s33 = scalar_select %p30, %s32, %s16
    %p34 = scmp.ge.s32.totalorder %s33, 2
    %s35 = scalar_select %p34, 0, %s33
    %s36 = ssub.s32 %s16, %s35
    %s37 = ssub.s32 %s18, %s27
    %s38 = sor.u32 %s36, %s37
    %p39 = scmp.eq.s32.totalorder %s38, 0
    %s41 = sadd.s32 %s40, 1
    %s42 = scalar_select %p39, %s40, %s41
    %p45 = pneg %p39
    %p46 = scmp.eq.s32.totalorder %s9, 1
    %p47 = por %p45, %p46
    %p48 = scmp.ne.s32.totalorder %s40, %s43
    %p49 = scmp.eq.s32.totalorder %s9, 0
    %p50 = por %p48, %p49
    %p51 = scmp.ne.s32.totalorder %s40, %s43
    %p52 = scmp.eq.s32.totalorder %s14, 1
    %p53 = por %p51, %p52
    %p54 = scmp.ne.s32.totalorder %s43, %s44
    %p55 = scmp.eq.s32.totalorder %s14, 0
    %p56 = por %p54, %p55
    %p57 = scmp.ne.s32.totalorder %s43, %s44
    %p58 = scmp.eq.s32.totalorder %s15, 1
    %p59 = por %p57, %p58
    %p61 = scmp.ne.s32.totalorder %s44, %s60
    %p62 = scmp.eq.s32.totalorder %s15, 0
    %p63 = por %p61, %p62
    %s64 = ssub.s32 %s18, %s27
    %s65 = ssub.s32 %s17, %s31
    %s66 = sor.u32 %s64, %s65
    %p67 = scmp.eq.s32.totalorder %s66, 0
    %s69 = sadd.s32 %s68, 1
    %s70 = scalar_select %p67, %s68, %s69
    %p73 = pneg %p67
    %p74 = scmp.eq.s32.totalorder %s9, 1
    %p75 = por %p73, %p74
    %p76 = scmp.ne.s32.totalorder %s68, %s71
    %p77 = scmp.eq.s32.totalorder %s9, 0
    %p78 = por %p76, %p77
    %p79 = scmp.ne.s32.totalorder %s68, %s71
    %p80 = scmp.eq.s32.totalorder %s14, 1
    %p81 = por %p79, %p80
    %p82 = scmp.ne.s32.totalorder %s71, %s72
    %p83 = scmp.eq.s32.totalorder %s14, 0
    %p84 = por %p82, %p83
    %p85 = scmp.ne.s32.totalorder %s71, %s72
    %p86 = scmp.eq.s32.totalorder %s15, 1
    %p87 = por %p85, %p86
    %p89 = scmp.ne.s32.totalorder %s72, %s88
    %p90 = scmp.eq.s32.totalorder %s15, 0
    %p91 = por %p89, %p90
    %s92 = ssub.s32 %s17, %s31
    %p93 = scmp.eq.s32.totalorder %s92, 0
    %s95 = sadd.s32 %s94, 1
    %s96 = scalar_select %p93, %s94, %s95
    %p99 = pneg %p93
    %p100 = scmp.eq.s32.totalorder %s9, 1
    %p101 = por %p99, %p100
    %p102 = scmp.ne.s32.totalorder %s94, %s97
    %p103 = scmp.eq.s32.totalorder %s9, 0
    %p104 = por %p102, %p103
    %p105 = scmp.ne.s32.totalorder %s94, %s97
    %p106 = scmp.eq.s32.totalorder %s14, 1
    %p107 = por %p105, %p106
    %p108 = scmp.ne.s32.totalorder %s97, %s98
    %p109 = scmp.eq.s32.totalorder %s14, 0
    %p110 = por %p108, %p109
    %p111 = scmp.ne.s32.totalorder %s97, %s98
    %p112 = scmp.eq.s32.totalorder %s15, 1
    %p113 = por %p111, %p112
    %p115 = scmp.ne.s32.totalorder %s98, %s114
    %p116 = scmp.eq.s32.totalorder %s15, 0
    %p117 = por %p115, %p116
    %s118 = ssub.s32 %s16, %s35
    %s119 = ssub.s32 %s17, %s31
    %s120 = sor.u32 %s118, %s119
    %p121 = scmp.eq.s32.totalorder %s120, 0
    %s123 = sadd.s32 %s122, 1
    %s124 = scalar_select %p121, %s122, %s123
    %p127 = pneg %p121
    %p128 = scmp.eq.s32.totalorder %s9, 1
    %p129 = por %p127, %p128
    %p130 = scmp.ne.s32.totalorder %s122, %s125
    %p131 = scmp.eq.s32.totalorder %s9, 0
    %p132 = por %p130, %p131
    %p133 = scmp.ne.s32.totalorder %s122, %s125
    %p134 = scmp.eq.s32.totalorder %s14, 1
    %p135 = por %p133, %p134
    %p136 = scmp.ne.s32.totalorder %s125, %s126
    %p137 = scmp.eq.s32.totalorder %s14, 0
    %p138 = por %p136, %p137
    %p139 = scmp.ne.s32.totalorder %s125, %s126
    %p140 = scmp.eq.s32.totalorder %s15, 1
    %p141 = por %p139, %p140
    %p143 = scmp.ne.s32.totalorder %s126, %s142
    %p144 = scmp.eq.s32.totalorder %s15, 0
    %p145 = por %p143, %p144
    %p146 = scmp.le.s32.totalorder 1, %s9
    %p147 = scmp.lt.s32.totalorder %s9, 3
    %p148 = pnand %p146, %p147
    %p149 = pneg %p148
    // Predicated region
    $region9: #{forward.10} parent=5 // pred_check
      _
    $region10: #{forward.10} parent=5 // pred_check_branch
      %151 = sbr.rel (%p148) target = $region12
    $region11: #{forward.10} parent=5 // pred_region
      %s152 = ssub.s32 %s9, 1
      // Predicated region
      $region13: #{forward.10} parent=11 // pred_check
        %p153 = pneg %p84
      $region14: #{forward.10} parent=11 // pred_check_branch
        %155 = sbr.rel (%p153) target = $region16
      $region15: #{forward.10} parent=11 // pred_region
        %s156 = smul.u32 16, %s21
        %p157 = scmp.lt.s32.totalorder %s156, 15
        %s158 = scalar_select %p157, %s156, 15
        %p159 = scmp.lt.s32.totalorder %s20, 0
        %s160 = scalar_select %p159, %s20, 0
        %s161 = sadd.s32 %s160, %s158
        %s162 = smul.addr %s161, 4
        %s163 = scalar_lea.vmem %s1, %s162
        %s164 = smul.u32 16, %s21
      $region16: #{forward.10} parent=11 // pred_fallthru
        _
      // Predicated region
      $region17: #{forward.10} parent=11 // pred_check
        %p165 = pneg %p110
      $region18: #{forward.10} parent=11 // pred_check_branch
        %167 = sbr.rel (%p165) target = $region20
      $region19: #{forward.10} parent=11 // pred_region
        %p168 = scmp.lt.s32.totalorder %s20, 0
        %s169 = scalar_select %p168, %s20, 0
        %s170 = scalar_lea.vmem %s2, %s169
      $region20: #{forward.10} parent=11 // pred_fallthru
        _
    $region12: #{forward.10} parent=5 // pred_fallthru
      _
    %p171 = scmp.lt.s32.totalorder %s9, 2
    // Predicated region
    $region21: #{forward.10} parent=5 // pred_check
      %p172 = pneg %p171
    $region22: #{forward.10} parent=5 // pred_check_branch
      %174 = sbr.rel (%p172) target = $region24
    $region23: #{forward.10} parent=5 // pred_region
      // Predicated region
      $region25: #{forward.10} parent=23 // pred_check
        %p175 = pneg %p50
      $region26: #{forward.10} parent=23 // pred_check_branch
        %177 = sbr.rel (%p175) target = $region28
      $region27: #{forward.10} parent=23 // pred_region
        %s178 = smul.u32 32, %s16
        %p179 = scmp.lt.s32.totalorder %s178, 63
        %s180 = scalar_select %p179, %s178, 63
        %p181 = scmp.lt.s32.totalorder %s18, 0
        %s182 = scalar_select %p181, %s18, 0
        %s183 = sadd.s32 %s182, %s180
        %s184 = smul.addr %s183, 4
        %s185 = scalar_lea.vmem %s0, %s184
        %s186 = smul.u32 32, %s16
      $region28: #{forward.10} parent=23 // pred_fallthru
        _
    $region24: #{forward.10} parent=5 // pred_fallthru
      _
    %p187 = scmp.le.s32.totalorder 1, %s9
    %p188 = scmp.lt.s32.totalorder %s9, 3
    %p189 = pnand %p187, %p188
    %p190 = pneg %p189
    // Predicated region
    $region29: #{forward.10} parent=5 // pred_check
      _
    $region30: #{forward.10} parent=5 // pred_check_branch
      %192 = sbr.rel (%p189) target = $region32
    $region31: #{forward.10} parent=5 // pred_region
      %s193 = ssub.s32 %s9, 1
      %s194 = smul.u32 32, %s19
      %p195 = scmp.lt.s32.totalorder %s194, 63
      %s196 = scalar_select %p195, %s194, 63
      %p197 = scmp.lt.s32.totalorder %s21, 0
      %s198 = scalar_select %p197, %s21, 0
      %s199 = sadd.s32 %s198, %s196
      %s200 = smul.addr %s199, 4
      %s201 = scalar_lea.vmem %s0, %s200
      %p202 = pneg %p56
      %p203 = pneg %p53
      %s204 = smul.u32 16, %s21
      %p205 = scmp.lt.s32.totalorder %s204, 15
      %s206 = scalar_select %p205, %s204, 15
      %p207 = scmp.lt.s32.totalorder %s20, 0
      %s208 = scalar_select %p207, %s20, 0
      %s209 = sadd.s32 %s208, %s206
      %s210 = smul.addr %s209, 4
      %s211 = scalar_lea.vmem %s1, %s210
      %p212 = pneg %p84
      %p213 = pneg %p81
      %p214 = scmp.lt.s32.totalorder %s20, 0
      %s215 = scalar_select %p214, %s20, 0
      %s216 = scalar_lea.vmem %s2, %s215
      %p217 = pneg %p110
      %p218 = pneg %p107
      %p219 = pneg %p138
      %p220 = pneg %p135
      %s221 = smul.u32 32, %s19
      %p222 = scmp.lt.s32.totalorder %s221, 63
      %s223 = scalar_select %p222, %s221, 63
      %p224 = scmp.lt.s32.totalorder %s20, 0
      %s225 = scalar_select %p224, %s20, 0
      %s226 = sadd.s32 %s225, %s223
      %s227 = smul.addr %s226, 4
      %s228 = scalar_lea.vmem %s3, %s227
      %s229 = smul.u32 32, %s19
      %p230 = scmp.lt.s32.totalorder %s229, 63
      %s231 = scalar_select %p230, %s229, 63
      %p232 = scmp.lt.s32.totalorder %s21, 0
      %s233 = scalar_select %p232, %s21, 0
      %s234 = sadd.s32 %s233, %s231
      %s235 = smul.addr %s234, 4
      %s236 = scalar_lea.vmem %s0, %s235
      %s237 = smul.u32 32, %s19
      %s238 = smul.u32 16, %s21
      %p239 = scmp.lt.s32.totalorder %s238, 15
      %s240 = scalar_select %p239, %s238, 15
      %p241 = scmp.lt.s32.totalorder %s20, 0
      %s242 = scalar_select %p241, %s20, 0
      %s243 = sadd.s32 %s242, %s240
      %s244 = smul.addr %s243, 4
      %s245 = scalar_lea.vmem %s1, %s244
      %s246 = smul.u32 16, %s21
      %p247 = scmp.lt.s32.totalorder %s20, 0
      %s248 = scalar_select %p247, %s20, 0
      %s249 = scalar_lea.vmem %s2, %s248
      %s250 = smul.u32 32, %s19
      %p251 = scmp.lt.s32.totalorder %s250, 63
      %s252 = scalar_select %p251, %s250, 63
      %p253 = scmp.lt.s32.totalorder %s20, 0
      %s254 = scalar_select %p253, %s20, 0
      %s255 = sadd.s32 %s254, %s252
      %s256 = smul.addr %s255, 4
      %s257 = scalar_lea.vmem %s3, %s256
      %s258 = smul.u32 32, %s19
      %p259 = scmp.eq.s32.totalorder %s21, 0
      // Predicated region
      $region33: #{forward.10} parent=31 // pred_check
        %p260 = pneg %p259
      $region34: #{forward.10} parent=31 // pred_check_branch
        %262 = sbr.rel (%p260) target = $region36
      $region35: #{forward.10} parent=31 // pred_region
        %263 = vst [vmem:[#allocation2] sm:$0xff] 0.0
        %264 = vst [vmem:[#allocation2 + $0x8] sm:$0xff] 0.0
        %265 = vst [vmem:[#allocation2 + $0x10] sm:$0xff] 0.0
        %266 = vst [vmem:[#allocation2 + $0x18] sm:$0xff] 0.0
        %267 = vst [vmem:[#allocation2 + $0x20] sm:$0xff] 0.0
        %268 = vst [vmem:[#allocation2 + $0x28] sm:$0xff] 0.0
        %269 = vst [vmem:[#allocation2 + $0x30] sm:$0xff] 0.0
        %270 = vst [vmem:[#allocation2 + $0x38] sm:$0xff] 0.0
        %271 = vst [vmem:[#allocation2 + $0x40] sm:$0xff] 0.0
        %272 = vst [vmem:[#allocation2 + $0x48] sm:$0xff] 0.0
        %273 = vst [vmem:[#allocation2 + $0x50] sm:$0xff] 0.0
        %274 = vst [vmem:[#allocation2 + $0x58] sm:$0xff] 0.0
        %275 = vst [vmem:[#allocation2 + $0x60] sm:$0xff] 0.0
        %276 = vst [vmem:[#allocation2 + $0x68] sm:$0xff] 0.0
        %277 = vst [vmem:[#allocation2 + $0x70] sm:$0xff] 0.0
        %278 = vst [vmem:[#allocation2 + $0x78] sm:$0xff] 0.0
        %279 = vst [vmem:[#allocation2 + $0x80] sm:$0xff] 0.0
        %280 = vst [vmem:[#allocation2 + $0x88] sm:$0xff] 0.0
        %281 = vst [vmem:[#allocation2 + $0x90] sm:$0xff] 0.0
        %282 = vst [vmem:[#allocation2 + $0x98] sm:$0xff] 0.0
        %283 = vst [vmem:[#allocation2 + $0xa0] sm:$0xff] 0.0
        %284 = vst [vmem:[#allocation2 + $0xa8] sm:$0xff] 0.0
        %285 = vst [vmem:[#allocation2 + $0xb0] sm:$0xff] 0.0
        %286 = vst [vmem:[#allocation2 + $0xb8] sm:$0xff] 0.0
        %287 = vst [vmem:[#allocation2 + $0xc0] sm:$0xff] 0.0
        %288 = vst [vmem:[#allocation2 + $0xc8] sm:$0xff] 0.0
        %289 = vst [vmem:[#allocation2 + $0xd0] sm:$0xff] 0.0
        %290 = vst [vmem:[#allocation2 + $0xd8] sm:$0xff] 0.0
        %291 = vst [vmem:[#allocation2 + $0xe0] sm:$0xff] 0.0
        %292 = vst [vmem:[#allocation2 + $0xe8] sm:$0xff] 0.0
        %293 = vst [vmem:[#allocation2 + $0xf0] sm:$0xff] 0.0
        %294 = vst [vmem:[#allocation2 + $0xf8] sm:$0xff] 0.0
      $region36: #{forward.10} parent=31 // pred_fallthru
        _
      %v295 = vld [vmem:[#allocation2] sm:$0xff]
      %v296 = vld [vmem:[#allocation2 + $0x8] sm:$0xff]
      %v297 = vld [vmem:[#allocation2 + $0x10] sm:$0xff]
      %v298 = vld [vmem:[#allocation2 + $0x18] sm:$0xff]
      %v299 = vld [vmem:[#allocation2 + $0x20] sm:$0xff]
      %v300 = vld [vmem:[#allocation2 + $0x28] sm:$0xff]
      %v301 = vld [vmem:[#allocation2 + $0x30] sm:$0xff]
      %v302 = vld [vmem:[#allocation2 + $0x38] sm:$0xff]
      %v303 = vld [vmem:[#allocation2 + $0x40] sm:$0xff]
      %v304 = vld [vmem:[#allocation2 + $0x48] sm:$0xff]
      %v305 = vld [vmem:[#allocation2 + $0x50] sm:$0xff]
      %v306 = vld [vmem:[#allocation2 + $0x58] sm:$0xff]
      %v307 = vld [vmem:[#allocation2 + $0x60] sm:$0xff]
      %v308 = vld [vmem:[#allocation2 + $0x68] sm:$0xff]
      %v309 = vld [vmem:[#allocation2 + $0x70] sm:$0xff]
      %v310 = vld [vmem:[#allocation2 + $0x78] sm:$0xff]
      %v311 = vld [vmem:[#allocation2 + $0x80] sm:$0xff]
      %v312 = vld [vmem:[#allocation2 + $0x88] sm:$0xff]
      %v313 = vld [vmem:[#allocation2 + $0x90] sm:$0xff]
      %v314 = vld [vmem:[#allocation2 + $0x98] sm:$0xff]
      %v315 = vld [vmem:[#allocation2 + $0xa0] sm:$0xff]
      %v316 = vld [vmem:[#allocation2 + $0xa8] sm:$0xff]
      %v317 = vld [vmem:[#allocation2 + $0xb0] sm:$0xff]
      %v318 = vld [vmem:[#allocation2 + $0xb8] sm:$0xff]
      %v319 = vld [vmem:[#allocation2 + $0xc0] sm:$0xff]
      %v320 = vld [vmem:[#allocation2 + $0xc8] sm:$0xff]
      %v321 = vld [vmem:[#allocation2 + $0xd0] sm:$0xff]
      %v322 = vld [vmem:[#allocation2 + $0xd8] sm:$0xff]
      %v323 = vld [vmem:[#allocation2 + $0xe0] sm:$0xff]
      %v324 = vld [vmem:[#allocation2 + $0xe8] sm:$0xff]
      %v325 = vld [vmem:[#allocation2 + $0xf0] sm:$0xff]
      %v326 = vld [vmem:[#allocation2 + $0xf8] sm:$0xff]
      %v327 = vld [vmem:[%s236] sm:$0xf]
      %v328 = vld [vmem:[%s236 + $0x4] sm:$0xf]
      %v329 = vld [vmem:[%s236 + $0x8] sm:$0xf]
      %v330 = vld [vmem:[%s236 + $0xc] sm:$0xf]
      %v331 = vld [vmem:[%s236 + $0x10] sm:$0xf]
      %v332 = vld [vmem:[%s236 + $0x14] sm:$0xf]
      %v333 = vld [vmem:[%s236 + $0x18] sm:$0xf]
      %v334 = vld [vmem:[%s236 + $0x1c] sm:$0xf]
      %v335 = vld [vmem:[%s236 + $0x20] sm:$0xf]
      %v336 = vld [vmem:[%s236 + $0x24] sm:$0xf]
      %v337 = vld [vmem:[%s236 + $0x28] sm:$0xf]
      %v338 = vld [vmem:[%s236 + $0x2c] sm:$0xf]
      %v339 = vld [vmem:[%s236 + $0x30] sm:$0xf]
      %v340 = vld [vmem:[%s236 + $0x34] sm:$0xf]
      %v341 = vld [vmem:[%s236 + $0x38] sm:$0xf]
      %v342 = vld [vmem:[%s236 + $0x3c] sm:$0xf]
      %v343 = vld [vmem:[%s236 + $0x40] sm:$0xf]
      %v344 = vld [vmem:[%s236 + $0x44] sm:$0xf]
      %v345 = vld [vmem:[%s236 + $0x48] sm:$0xf]
      %v346 = vld [vmem:[%s236 + $0x4c] sm:$0xf]
      %v347 = vld [vmem:[%s236 + $0x50] sm:$0xf]
      %v348 = vld [vmem:[%s236 + $0x54] sm:$0xf]
      %v349 = vld [vmem:[%s236 + $0x58] sm:$0xf]
      %v350 = vld [vmem:[%s236 + $0x5c] sm:$0xf]
      %v351 = vld [vmem:[%s236 + $0x60] sm:$0xf]
      %v352 = vld [vmem:[%s236 + $0x64] sm:$0xf]
      %v353 = vld [vmem:[%s236 + $0x68] sm:$0xf]
      %v354 = vld [vmem:[%s236 + $0x6c] sm:$0xf]
      %v355 = vld [vmem:[%s236 + $0x70] sm:$0xf]
      %v356 = vld [vmem:[%s236 + $0x74] sm:$0xf]
      %v357 = vld [vmem:[%s236 + $0x78] sm:$0xf]
      %v358 = vld [vmem:[%s236 + $0x7c] sm:$0xf]
      %v359 = vld [vmem:[%s245] sm:$0xf]
      %v360 = vld [vmem:[%s245 + $0x4] sm:$0xf]
      %v361 = vld [vmem:[%s245 + $0x8] sm:$0xf]
      %v362 = vld [vmem:[%s245 + $0xc] sm:$0xf]
      %v363 = vld [vmem:[%s245 + $0x10] sm:$0xf]
      %v364 = vld [vmem:[%s245 + $0x14] sm:$0xf]
      %v365 = vld [vmem:[%s245 + $0x18] sm:$0xf]
      %v366 = vld [vmem:[%s245 + $0x1c] sm:$0xf]
      %v367 = vld [vmem:[%s245 + $0x20] sm:$0xf]
      %v368 = vld [vmem:[%s245 + $0x24] sm:$0xf]
      %v369 = vld [vmem:[%s245 + $0x28] sm:$0xf]
      %v370 = vld [vmem:[%s245 + $0x2c] sm:$0xf]
      %v371 = vld [vmem:[%s245 + $0x30] sm:$0xf]
      %v372 = vld [vmem:[%s245 + $0x34] sm:$0xf]
      %v373 = vld [vmem:[%s245 + $0x38] sm:$0xf]
      %v374 = vld [vmem:[%s245 + $0x3c] sm:$0xf]
      %v407 = vunpack.c.l.b16 %v327
      %v408 = vunpack.c.l.b16 %v328
      %v409 = vunpack.c.l.b16 %v329
      %v410 = vunpack.c.l.b16 %v330
      %v411 = vunpack.c.l.b16 %v331
      %v412 = vunpack.c.l.b16 %v332
      %v413 = vunpack.c.l.b16 %v333
      %v414 = vunpack.c.l.b16 %v334
      %v415 = vunpack.c.l.b16 %v335
      %v416 = vunpack.c.l.b16 %v336
      %v417 = vunpack.c.l.b16 %v337
      %v418 = vunpack.c.l.b16 %v338
      %v419 = vunpack.c.l.b16 %v339
      %v420 = vunpack.c.l.b16 %v340
      %v421 = vunpack.c.l.b16 %v341
      %v422 = vunpack.c.l.b16 %v342
      %v423 = vunpack.c.l.b16 %v343
      %v424 = vunpack.c.l.b16 %v344
      %v425 = vunpack.c.l.b16 %v345
      %v426 = vunpack.c.l.b16 %v346
      %v427 = vunpack.c.l.b16 %v347
      %v428 = vunpack.c.l.b16 %v348
      %v429 = vunpack.c.l.b16 %v349
      %v430 = vunpack.c.l.b16 %v350
      %v431 = vunpack.c.l.b16 %v351
      %v432 = vunpack.c.l.b16 %v352
      %v433 = vunpack.c.l.b16 %v353
      %v434 = vunpack.c.l.b16 %v354
      %v435 = vunpack.c.l.b16 %v355
      %v436 = vunpack.c.l.b16 %v356
      %v437 = vunpack.c.l.b16 %v357
      %v438 = vunpack.c.l.b16 %v358
      %v439 = vpack.c.b16 %v408, %v407
      %v440 = vpack.c.b16 %v410, %v409
      %v441 = vpack.c.b16 %v412, %v411
      %v442 = vpack.c.b16 %v414, %v413
      %v443 = vpack.c.b16 %v416, %v415
      %v444 = vpack.c.b16 %v418, %v417
      %v445 = vpack.c.b16 %v420, %v419
      %v446 = vpack.c.b16 %v422, %v421
      %v447 = vpack.c.b16 %v424, %v423
      %v448 = vpack.c.b16 %v426, %v425
      %v449 = vpack.c.b16 %v428, %v427
      %v450 = vpack.c.b16 %v430, %v429
      %v451 = vpack.c.b16 %v432, %v431
      %v452 = vpack.c.b16 %v434, %v433
      %v453 = vpack.c.b16 %v436, %v435
      %v454 = vpack.c.b16 %v438, %v437
      %v487 = vunpack.c.l.b16 %v359
      %v488 = vunpack.c.l.b16 %v360
      %v489 = vunpack.c.l.b16 %v361
      %v490 = vunpack.c.l.b16 %v362
      %v491 = vunpack.c.l.b16 %v363
      %v492 = vunpack.c.l.b16 %v364
      %v493 = vunpack.c.l.b16 %v365
      %v494 = vunpack.c.l.b16 %v366
      %v495 = vunpack.c.l.b16 %v367
      %v496 = vunpack.c.l.b16 %v368
      %v497 = vunpack.c.l.b16 %v369
      %v498 = vunpack.c.l.b16 %v370
      %v499 = vunpack.c.l.b16 %v371
      %v500 = vunpack.c.l.b16 %v372
      %v501 = vunpack.c.l.b16 %v373
      %v502 = vunpack.c.l.b16 %v374
      %v503 = vpack.c.b16 %v488, %v487
      %v504 = vpack.c.b16 %v490, %v489
      %v505 = vpack.c.b16 %v492, %v491
      %v506 = vpack.c.b16 %v494, %v493
      %v507 = vpack.c.b16 %v496, %v495
      %v508 = vpack.c.b16 %v498, %v497
      %v509 = vpack.c.b16 %v500, %v499
      %v510 = vpack.c.b16 %v502, %v501
      %519 = vmatpush.bf16.msra.mxu0 %v510
      %520 = vmatpush.bf16.msra.mxu0 %v509
      %521 = vmatpush.bf16.msra.mxu0 %v508
      %522 = vmatpush.bf16.msra.mxu0 %v507
      %523 = vmatpush.bf16.msra.mxu0 %v506
      %524 = vmatpush.bf16.msra.mxu0 %v505
      %525 = vmatpush.bf16.msra.mxu0 %v504
      %526 = vmatpush.bf16.msra.mxu0 %v503
      %527 = vmatmul.bf16.gmra.mxu0 %v439
      %v528 = vpop.f32.mrf.mxu0
      %v529 = vadd.f32 0.0, %v528
      %v530 = vpop.f32.mrf.mxu0
      %v531 = vadd.f32 0.0, %v530
      %532 = vmatmul.bf16.gmra.mxu0 %v440
      %v533 = vpop.f32.mrf.mxu0
      %v534 = vadd.f32 0.0, %v533
      %v535 = vpop.f32.mrf.mxu0
      %v536 = vadd.f32 0.0, %v535
      %537 = vmatmul.bf16.gmra.mxu0 %v441
      %v538 = vpop.f32.mrf.mxu0
      %v539 = vadd.f32 0.0, %v538
      %v540 = vpop.f32.mrf.mxu0
      %v541 = vadd.f32 0.0, %v540
      %542 = vmatmul.bf16.gmra.mxu0 %v442
      %v543 = vpop.f32.mrf.mxu0
      %v544 = vadd.f32 0.0, %v543
      %v545 = vpop.f32.mrf.mxu0
      %v546 = vadd.f32 0.0, %v545
      %547 = vmatmul.bf16.gmra.mxu0 %v443
      %v548 = vpop.f32.mrf.mxu0
      %v549 = vadd.f32 0.0, %v548
      %v550 = vpop.f32.mrf.mxu0
      %v551 = vadd.f32 0.0, %v550
      %552 = vmatmul.bf16.gmra.mxu0 %v444
      %v553 = vpop.f32.mrf.mxu0
      %v554 = vadd.f32 0.0, %v553
      %v555 = vpop.f32.mrf.mxu0
      %v556 = vadd.f32 0.0, %v555
      %557 = vmatmul.bf16.gmra.mxu0 %v445
      %v558 = vpop.f32.mrf.mxu0
      %v559 = vadd.f32 0.0, %v558
      %v560 = vpop.f32.mrf.mxu0
      %v561 = vadd.f32 0.0, %v560
      %562 = vmatmul.bf16.gmra.mxu0 %v446
      %v563 = vpop.f32.mrf.mxu0
      %v564 = vadd.f32 0.0, %v563
      %v565 = vpop.f32.mrf.mxu0
      %v566 = vadd.f32 0.0, %v565
      %567 = vmatmul.bf16.gmra.mxu0 %v447
      %v568 = vpop.f32.mrf.mxu0
      %v569 = vadd.f32 0.0, %v568
      %v570 = vpop.f32.mrf.mxu0
      %v571 = vadd.f32 0.0, %v570
      %572 = vmatmul.bf16.gmra.mxu0 %v448
      %v573 = vpop.f32.mrf.mxu0
      %v574 = vadd.f32 0.0, %v573
      %v575 = vpop.f32.mrf.mxu0
      %v576 = vadd.f32 0.0, %v575
      %577 = vmatmul.bf16.gmra.mxu0 %v449
      %v578 = vpop.f32.mrf.mxu0
      %v579 = vadd.f32 0.0, %v578
      %v580 = vpop.f32.mrf.mxu0
      %v581 = vadd.f32 0.0, %v580
      %582 = vmatmul.bf16.gmra.mxu0 %v450
      %v583 = vpop.f32.mrf.mxu0
      %v584 = vadd.f32 0.0, %v583
      %v585 = vpop.f32.mrf.mxu0
      %v586 = vadd.f32 0.0, %v585
      %587 = vmatmul.bf16.gmra.mxu0 %v451
      %v588 = vpop.f32.mrf.mxu0
      %v589 = vadd.f32 0.0, %v588
      %v590 = vpop.f32.mrf.mxu0
      %v591 = vadd.f32 0.0, %v590
      %592 = vmatmul.bf16.gmra.mxu0 %v452
      %v593 = vpop.f32.mrf.mxu0
      %v594 = vadd.f32 0.0, %v593
      %v595 = vpop.f32.mrf.mxu0
      %v596 = vadd.f32 0.0, %v595
      %597 = vmatmul.bf16.gmra.mxu0 %v453
      %v598 = vpop.f32.mrf.mxu0
      %v599 = vadd.f32 0.0, %v598
      %v600 = vpop.f32.mrf.mxu0
      %v601 = vadd.f32 0.0, %v600
      %602 = vmatmul.bf16.gmra.mxu0 %v454
      %v603 = vpop.f32.mrf.mxu0
      %v604 = vadd.f32 0.0, %v603
      %v605 = vpop.f32.mrf.mxu0
      %v606 = vadd.f32 0.0, %v605
      %607 = vdwg.mxu0
      %v608 = vadd.f32 %v295, %v529
      %v609 = vadd.f32 %v296, %v531
      %v610 = vadd.f32 %v297, %v534
      %v611 = vadd.f32 %v298, %v536
      %v612 = vadd.f32 %v299, %v539
      %v613 = vadd.f32 %v300, %v541
      %v614 = vadd.f32 %v301, %v544
      %v615 = vadd.f32 %v302, %v546
      %v616 = vadd.f32 %v303, %v549
      %v617 = vadd.f32 %v304, %v551
      %v618 = vadd.f32 %v305, %v554
      %v619 = vadd.f32 %v306, %v556
      %v620 = vadd.f32 %v307, %v559
      %v621 = vadd.f32 %v308, %v561
      %v622 = vadd.f32 %v309, %v564
      %v623 = vadd.f32 %v310, %v566
      %v624 = vadd.f32 %v311, %v569
      %v625 = vadd.f32 %v312, %v571
      %v626 = vadd.f32 %v313, %v574
      %v627 = vadd.f32 %v314, %v576
      %v628 = vadd.f32 %v315, %v579
      %v629 = vadd.f32 %v316, %v581
      %v630 = vadd.f32 %v317, %v584
      %v631 = vadd.f32 %v318, %v586
      %v632 = vadd.f32 %v319, %v589
      %v633 = vadd.f32 %v320, %v591
      %v634 = vadd.f32 %v321, %v594
      %v635 = vadd.f32 %v322, %v596
      %v636 = vadd.f32 %v323, %v599
      %v637 = vadd.f32 %v324, %v601
      %v638 = vadd.f32 %v325, %v604
      %v639 = vadd.f32 %v326, %v606
      %640 = vst [vmem:[#allocation2] sm:$0xff] %v608
      %641 = vst [vmem:[#allocation2 + $0x8] sm:$0xff] %v609
      %642 = vst [vmem:[#allocation2 + $0x10] sm:$0xff] %v610
      %643 = vst [vmem:[#allocation2 + $0x18] sm:$0xff] %v611
      %644 = vst [vmem:[#allocation2 + $0x20] sm:$0xff] %v612
      %645 = vst [vmem:[#allocation2 + $0x28] sm:$0xff] %v613
      %646 = vst [vmem:[#allocation2 + $0x30] sm:$0xff] %v614
      %647 = vst [vmem:[#allocation2 + $0x38] sm:$0xff] %v615
      %648 = vst [vmem:[#allocation2 + $0x40] sm:$0xff] %v616
      %649 = vst [vmem:[#allocation2 + $0x48] sm:$0xff] %v617
      %650 = vst [vmem:[#allocation2 + $0x50] sm:$0xff] %v618
      %651 = vst [vmem:[#allocation2 + $0x58] sm:$0xff] %v619
      %652 = vst [vmem:[#allocation2 + $0x60] sm:$0xff] %v620
      %653 = vst [vmem:[#allocation2 + $0x68] sm:$0xff] %v621
      %654 = vst [vmem:[#allocation2 + $0x70] sm:$0xff] %v622
      %655 = vst [vmem:[#allocation2 + $0x78] sm:$0xff] %v623
      %656 = vst [vmem:[#allocation2 + $0x80] sm:$0xff] %v624
      %657 = vst [vmem:[#allocation2 + $0x88] sm:$0xff] %v625
      %658 = vst [vmem:[#allocation2 + $0x90] sm:$0xff] %v626
      %659 = vst [vmem:[#allocation2 + $0x98] sm:$0xff] %v627
      %660 = vst [vmem:[#allocation2 + $0xa0] sm:$0xff] %v628
      %661 = vst [vmem:[#allocation2 + $0xa8] sm:$0xff] %v629
      %662 = vst [vmem:[#allocation2 + $0xb0] sm:$0xff] %v630
      %663 = vst [vmem:[#allocation2 + $0xb8] sm:$0xff] %v631
      %664 = vst [vmem:[#allocation2 + $0xc0] sm:$0xff] %v632
      %665 = vst [vmem:[#allocation2 + $0xc8] sm:$0xff] %v633
      %666 = vst [vmem:[#allocation2 + $0xd0] sm:$0xff] %v634
      %667 = vst [vmem:[#allocation2 + $0xd8] sm:$0xff] %v635
      %668 = vst [vmem:[#allocation2 + $0xe0] sm:$0xff] %v636
      %669 = vst [vmem:[#allocation2 + $0xe8] sm:$0xff] %v637
      %670 = vst [vmem:[#allocation2 + $0xf0] sm:$0xff] %v638
      %671 = vst [vmem:[#allocation2 + $0xf8] sm:$0xff] %v639
      // Predicated region
      $region37: #{forward.10} parent=31 // pred_check
        %p672 = pneg %p259
      $region38: #{forward.10} parent=31 // pred_check_branch
        %674 = sbr.rel (%p672) target = $region40
      $region39: #{forward.10} parent=31 // pred_region
        %v675 = vld [vmem:[#allocation2] sm:$0xff]
        %v676 = vld [vmem:[#allocation2 + $0x8] sm:$0xff]
        %v677 = vld [vmem:[#allocation2 + $0x10] sm:$0xff]
        %v678 = vld [vmem:[#allocation2 + $0x18] sm:$0xff]
        %v679 = vld [vmem:[#allocation2 + $0x20] sm:$0xff]
        %v680 = vld [vmem:[#allocation2 + $0x28] sm:$0xff]
        %v681 = vld [vmem:[#allocation2 + $0x30] sm:$0xff]
        %v682 = vld [vmem:[#allocation2 + $0x38] sm:$0xff]
        %v683 = vld [vmem:[#allocation2 + $0x40] sm:$0xff]
        %v684 = vld [vmem:[#allocation2 + $0x48] sm:$0xff]
        %v685 = vld [vmem:[#allocation2 + $0x50] sm:$0xff]
        %v686 = vld [vmem:[#allocation2 + $0x58] sm:$0xff]
        %v687 = vld [vmem:[#allocation2 + $0x60] sm:$0xff]
        %v688 = vld [vmem:[#allocation2 + $0x68] sm:$0xff]
        %v689 = vld [vmem:[#allocation2 + $0x70] sm:$0xff]
        %v690 = vld [vmem:[#allocation2 + $0x78] sm:$0xff]
        %v691 = vld [vmem:[#allocation2 + $0x80] sm:$0xff]
        %v692 = vld [vmem:[#allocation2 + $0x88] sm:$0xff]
        %v693 = vld [vmem:[#allocation2 + $0x90] sm:$0xff]
        %v694 = vld [vmem:[#allocation2 + $0x98] sm:$0xff]
        %v695 = vld [vmem:[#allocation2 + $0xa0] sm:$0xff]
        %v696 = vld [vmem:[#allocation2 + $0xa8] sm:$0xff]
        %v697 = vld [vmem:[#allocation2 + $0xb0] sm:$0xff]
        %v698 = vld [vmem:[#allocation2 + $0xb8] sm:$0xff]
        %v699 = vld [vmem:[#allocation2 + $0xc0] sm:$0xff]
        %v700 = vld [vmem:[#allocation2 + $0xc8] sm:$0xff]
        %v701 = vld [vmem:[#allocation2 + $0xd0] sm:$0xff]
        %v702 = vld [vmem:[#allocation2 + $0xd8] sm:$0xff]
        %v703 = vld [vmem:[#allocation2 + $0xe0] sm:$0xff]
        %v704 = vld [vmem:[#allocation2 + $0xe8] sm:$0xff]
        %v705 = vld [vmem:[#allocation2 + $0xf0] sm:$0xff]
        %v706 = vld [vmem:[#allocation2 + $0xf8] sm:$0xff]
        %v707 = vld [vmem:[%s249] sm:$0x1]
        %v709 = vperm.slane %v707, 0
        %v711 = vadd.f32 %v675, %v709
        %v712 = vadd.f32 %v676, %v709
        %v713 = vadd.f32 %v677, %v709
        %v714 = vadd.f32 %v678, %v709
        %v715 = vadd.f32 %v679, %v709
        %v716 = vadd.f32 %v680, %v709
        %v717 = vadd.f32 %v681, %v709
        %v718 = vadd.f32 %v682, %v709
        %v719 = vadd.f32 %v683, %v709
        %v720 = vadd.f32 %v684, %v709
        %v721 = vadd.f32 %v685, %v709
        %v722 = vadd.f32 %v686, %v709
        %v723 = vadd.f32 %v687, %v709
        %v724 = vadd.f32 %v688, %v709
        %v725 = vadd.f32 %v689, %v709
        %v726 = vadd.f32 %v690, %v709
        %v727 = vadd.f32 %v691, %v709
        %v728 = vadd.f32 %v692, %v709
        %v729 = vadd.f32 %v693, %v709
        %v730 = vadd.f32 %v694, %v709
        %v731 = vadd.f32 %v695, %v709
        %v732 = vadd.f32 %v696, %v709
        %v733 = vadd.f32 %v697, %v709
        %v734 = vadd.f32 %v698, %v709
        %v735 = vadd.f32 %v699, %v709
        %v736 = vadd.f32 %v700, %v709
        %v737 = vadd.f32 %v701, %v709
        %v738 = vadd.f32 %v702, %v709
        %v739 = vadd.f32 %v703, %v709
        %v740 = vadd.f32 %v704, %v709
        %v741 = vadd.f32 %v705, %v709
        %v742 = vadd.f32 %v706, %v709
        %vm743 = vcmp.gt.f32.partialorder %v711, 0.0
        %vm744 = vcmp.gt.f32.partialorder %v712, 0.0
        %vm745 = vcmp.gt.f32.partialorder %v713, 0.0
        %vm746 = vcmp.gt.f32.partialorder %v714, 0.0
        %vm747 = vcmp.gt.f32.partialorder %v715, 0.0
        %vm748 = vcmp.gt.f32.partialorder %v716, 0.0
        %vm749 = vcmp.gt.f32.partialorder %v717, 0.0
        %vm750 = vcmp.gt.f32.partialorder %v718, 0.0
        %vm751 = vcmp.gt.f32.partialorder %v719, 0.0
        %vm752 = vcmp.gt.f32.partialorder %v720, 0.0
        %vm753 = vcmp.gt.f32.partialorder %v721, 0.0
        %vm754 = vcmp.gt.f32.partialorder %v722, 0.0
        %vm755 = vcmp.gt.f32.partialorder %v723, 0.0
        %vm756 = vcmp.gt.f32.partialorder %v724, 0.0
        %vm757 = vcmp.gt.f32.partialorder %v725, 0.0
        %vm758 = vcmp.gt.f32.partialorder %v726, 0.0
        %vm759 = vcmp.gt.f32.partialorder %v727, 0.0
        %vm760 = vcmp.gt.f32.partialorder %v728, 0.0
        %vm761 = vcmp.gt.f32.partialorder %v729, 0.0
        %vm762 = vcmp.gt.f32.partialorder %v730, 0.0
        %vm763 = vcmp.gt.f32.partialorder %v731, 0.0
        %vm764 = vcmp.gt.f32.partialorder %v732, 0.0
        %vm765 = vcmp.gt.f32.partialorder %v733, 0.0
        %vm766 = vcmp.gt.f32.partialorder %v734, 0.0
        %vm767 = vcmp.gt.f32.partialorder %v735, 0.0
        %vm768 = vcmp.gt.f32.partialorder %v736, 0.0
        %vm769 = vcmp.gt.f32.partialorder %v737, 0.0
        %vm770 = vcmp.gt.f32.partialorder %v738, 0.0
        %vm771 = vcmp.gt.f32.partialorder %v739, 0.0
        %vm772 = vcmp.gt.f32.partialorder %v740, 0.0
        %vm773 = vcmp.gt.f32.partialorder %v741, 0.0
        %vm774 = vcmp.gt.f32.partialorder %v742, 0.0
        %v775 = vmul.f32 %v711, 0.2
        %v776 = vmul.f32 %v712, 0.2
        %v777 = vmul.f32 %v713, 0.2
        %v778 = vmul.f32 %v714, 0.2
        %v779 = vmul.f32 %v715, 0.2
        %v780 = vmul.f32 %v716, 0.2
        %v781 = vmul.f32 %v717, 0.2
        %v782 = vmul.f32 %v718, 0.2
        %v783 = vmul.f32 %v719, 0.2
        %v784 = vmul.f32 %v720, 0.2
        %v785 = vmul.f32 %v721, 0.2
        %v786 = vmul.f32 %v722, 0.2
        %v787 = vmul.f32 %v723, 0.2
        %v788 = vmul.f32 %v724, 0.2
        %v789 = vmul.f32 %v725, 0.2
        %v790 = vmul.f32 %v726, 0.2
        %v791 = vmul.f32 %v727, 0.2
        %v792 = vmul.f32 %v728, 0.2
        %v793 = vmul.f32 %v729, 0.2
        %v794 = vmul.f32 %v730, 0.2
        %v795 = vmul.f32 %v731, 0.2
        %v796 = vmul.f32 %v732, 0.2
        %v797 = vmul.f32 %v733, 0.2
        %v798 = vmul.f32 %v734, 0.2
        %v799 = vmul.f32 %v735, 0.2
        %v800 = vmul.f32 %v736, 0.2
        %v801 = vmul.f32 %v737, 0.2
        %v802 = vmul.f32 %v738, 0.2
        %v803 = vmul.f32 %v739, 0.2
        %v804 = vmul.f32 %v740, 0.2
        %v805 = vmul.f32 %v741, 0.2
        %v806 = vmul.f32 %v742, 0.2
        %v807 = vsel %vm743, %v711, %v775
        %v808 = vsel %vm744, %v712, %v776
        %v809 = vsel %vm745, %v713, %v777
        %v810 = vsel %vm746, %v714, %v778
        %v811 = vsel %vm747, %v715, %v779
        %v812 = vsel %vm748, %v716, %v780
        %v813 = vsel %vm749, %v717, %v781
        %v814 = vsel %vm750, %v718, %v782
        %v815 = vsel %vm751, %v719, %v783
        %v816 = vsel %vm752, %v720, %v784
        %v817 = vsel %vm753, %v721, %v785
        %v818 = vsel %vm754, %v722, %v786
        %v819 = vsel %vm755, %v723, %v787
        %v820 = vsel %vm756, %v724, %v788
        %v821 = vsel %vm757, %v725, %v789
        %v822 = vsel %vm758, %v726, %v790
        %v823 = vsel %vm759, %v727, %v791
        %v824 = vsel %vm760, %v728, %v792
        %v825 = vsel %vm761, %v729, %v793
        %v826 = vsel %vm762, %v730, %v794
        %v827 = vsel %vm763, %v731, %v795
        %v828 = vsel %vm764, %v732, %v796
        %v829 = vsel %vm765, %v733, %v797
        %v830 = vsel %vm766, %v734, %v798
        %v831 = vsel %vm767, %v735, %v799
        %v832 = vsel %vm768, %v736, %v800
        %v833 = vsel %vm769, %v737, %v801
        %v834 = vsel %vm770, %v738, %v802
        %v835 = vsel %vm771, %v739, %v803
        %v836 = vsel %vm772, %v740, %v804
        %v837 = vsel %vm773, %v741, %v805
        %v838 = vsel %vm774, %v742, %v806
        %v839 = vpack.c.bf16 %v807, %v807
        %v840 = vpack.c.bf16 %v808, %v808
        %v841 = vpack.c.bf16 %v809, %v809
        %v842 = vpack.c.bf16 %v810, %v810
        %v843 = vpack.c.bf16 %v811, %v811
        %v844 = vpack.c.bf16 %v812, %v812
        %v845 = vpack.c.bf16 %v813, %v813
        %v846 = vpack.c.bf16 %v814, %v814
        %v847 = vpack.c.bf16 %v815, %v815
        %v848 = vpack.c.bf16 %v816, %v816
        %v849 = vpack.c.bf16 %v817, %v817
        %v850 = vpack.c.bf16 %v818, %v818
        %v851 = vpack.c.bf16 %v819, %v819
        %v852 = vpack.c.bf16 %v820, %v820
        %v853 = vpack.c.bf16 %v821, %v821
        %v854 = vpack.c.bf16 %v822, %v822
        %v855 = vpack.c.bf16 %v823, %v823
        %v856 = vpack.c.bf16 %v824, %v824
        %v857 = vpack.c.bf16 %v825, %v825
        %v858 = vpack.c.bf16 %v826, %v826
        %v859 = vpack.c.bf16 %v827, %v827
        %v860 = vpack.c.bf16 %v828, %v828
        %v861 = vpack.c.bf16 %v829, %v829
        %v862 = vpack.c.bf16 %v830, %v830
        %v863 = vpack.c.bf16 %v831, %v831
        %v864 = vpack.c.bf16 %v832, %v832
        %v865 = vpack.c.bf16 %v833, %v833
        %v866 = vpack.c.bf16 %v834, %v834
        %v867 = vpack.c.bf16 %v835, %v835
        %v868 = vpack.c.bf16 %v836, %v836
        %v869 = vpack.c.bf16 %v837, %v837
        %v870 = vpack.c.bf16 %v838, %v838
        %871 = vst [vmem:[%s257] sm:$0xf] %v839
        %872 = vst [vmem:[%s257 + $0x4] sm:$0xf] %v840
        %873 = vst [vmem:[%s257 + $0x8] sm:$0xf] %v841
        %874 = vst [vmem:[%s257 + $0xc] sm:$0xf] %v842
        %875 = vst [vmem:[%s257 + $0x10] sm:$0xf] %v843
        %876 = vst [vmem:[%s257 + $0x14] sm:$0xf] %v844
        %877 = vst [vmem:[%s257 + $0x18] sm:$0xf] %v845
        %878 = vst [vmem:[%s257 + $0x1c] sm:$0xf] %v846
        %879 = vst [vmem:[%s257 + $0x20] sm:$0xf] %v847
        %880 = vst [vmem:[%s257 + $0x24] sm:$0xf] %v848
        %881 = vst [vmem:[%s257 + $0x28] sm:$0xf] %v849
        %882 = vst [vmem:[%s257 + $0x2c] sm:$0xf] %v850
        %883 = vst [vmem:[%s257 + $0x30] sm:$0xf] %v851
        %884 = vst [vmem:[%s257 + $0x34] sm:$0xf] %v852
        %885 = vst [vmem:[%s257 + $0x38] sm:$0xf] %v853
        %886 = vst [vmem:[%s257 + $0x3c] sm:$0xf] %v854
        %887 = vst [vmem:[%s257 + $0x40] sm:$0xf] %v855
        %888 = vst [vmem:[%s257 + $0x44] sm:$0xf] %v856
        %889 = vst [vmem:[%s257 + $0x48] sm:$0xf] %v857
        %890 = vst [vmem:[%s257 + $0x4c] sm:$0xf] %v858
        %891 = vst [vmem:[%s257 + $0x50] sm:$0xf] %v859
        %892 = vst [vmem:[%s257 + $0x54] sm:$0xf] %v860
        %893 = vst [vmem:[%s257 + $0x58] sm:$0xf] %v861
        %894 = vst [vmem:[%s257 + $0x5c] sm:$0xf] %v862
        %895 = vst [vmem:[%s257 + $0x60] sm:$0xf] %v863
        %896 = vst [vmem:[%s257 + $0x64] sm:$0xf] %v864
        %897 = vst [vmem:[%s257 + $0x68] sm:$0xf] %v865
        %898 = vst [vmem:[%s257 + $0x6c] sm:$0xf] %v866
        %899 = vst [vmem:[%s257 + $0x70] sm:$0xf] %v867
        %900 = vst [vmem:[%s257 + $0x74] sm:$0xf] %v868
        %901 = vst [vmem:[%s257 + $0x78] sm:$0xf] %v869
        %902 = vst [vmem:[%s257 + $0x7c] sm:$0xf] %v870
      $region40: #{forward.10} parent=31 // pred_fallthru
        _
      %s903 = smul.u32 32, %s19
      %p904 = scmp.lt.s32.totalorder %s903, 63
      %s905 = scalar_select %p904, %s903, 63
      %p906 = scmp.lt.s32.totalorder %s20, 0
      %s907 = scalar_select %p906, %s20, 0
      %s908 = sadd.s32 %s907, %s905
      %s909 = smul.addr %s908, 4
      %s910 = scalar_lea.vmem %s3, %s909
      // Predicated region
      $region41: #{forward.10} parent=31 // pred_check
        %p911 = pneg %p135
      $region42: #{forward.10} parent=31 // pred_check_branch
        %913 = sbr.rel (%p911) target = $region44
      $region43: #{forward.10} parent=31 // pred_region
        %s914 = smul.u32 32, %s19
      $region44: #{forward.10} parent=31 // pred_fallthru
        _
    $region32: #{forward.10} parent=5 // pred_fallthru
      _
    %p915 = scmp.le.s32.totalorder 2, %s9
    // Predicated region
    $region45: #{forward.10} parent=5 // pred_check
      %p916 = pneg %p915
    $region46: #{forward.10} parent=5 // pred_check_branch
      %918 = sbr.rel (%p916) target = $region48
    $region47: #{forward.10} parent=5 // pred_region
      %s919 = ssub.s32 %s9, 2
      // Predicated region
      $region49: #{forward.10} parent=47 // pred_check
        %p920 = pneg %p141
      $region50: #{forward.10} parent=47 // pred_check_branch
        %922 = sbr.rel (%p920) target = $region52
      $region51: #{forward.10} parent=47 // pred_region
        %s923 = smul.u32 32, %s22
        %p924 = scmp.lt.s32.totalorder %s923, 63
        %s925 = scalar_select %p924, %s923, 63
        %p926 = scmp.lt.s32.totalorder %s23, 0
        %s927 = scalar_select %p926, %s23, 0
        %s928 = sadd.s32 %s927, %s925
        %s929 = smul.addr %s928, 4
        %s930 = scalar_lea.vmem %s3, %s929
      $region52: #{forward.10} parent=47 // pred_fallthru
        _
    $region48: #{forward.10} parent=5 // pred_fallthru
      _
  $region6: #{forward.10} parent=0 // loop_footer
    %s13 = sadd.s32 1, %s9
  $region7: #{forward.10} parent=0 // loop_footer_branch
    %8 = sbr.rel target = $region3
  $region8: #{forward.10} parent=0 // loop_exit
    _

// kernel: forward.11
$region0: #{forward.11}
  #allocation0 [shape = 'u32[]', space=smem, size = 0x4, offset = 0x4, fixed_abs, tag = 'smem constant byte address 0x4 - core index']
  #allocation1 [shape = 'u32[72,128]{1,0:T(1,128)}', space=vmem, size = 0x9000, scoped, tag = 'internal scratch']
  #allocation2 [shape = 'f32[128,128]{1,0:T(8,128)}', space=vmem, size = 0x10000, scoped, tag = 'scratch operand']
  %s0 = inlined_call_operand.vmem [shape: bf16[128,384], index: 0, kind: input, shape index: {}]
  %s1 = inlined_call_operand.vmem [shape: bf16[384,128], index: 1, kind: input, shape index: {}]
  %s2 = inlined_call_operand.vmem [shape: f32[1,128], index: 2, kind: input, shape index: {}]
  %s3 = inlined_call_operand.vmem [shape: bf16[128,128], index: 3, kind: output, shape index: {}]
  %s4 = sld [smem:[#allocation0]]
  $region30: #{forward.11} parent=0
    _
  %s6 = ssub.s32 1, %s4
  %s7 = scalar_select 0, %s6, %s4
  // Predicated region
  $region2: #{forward.11} parent=0 // pred_check
    _
  $region3: #{forward.11} parent=0 // pred_check_branch
    %9 = sbr.rel (0) target = $region5
  $region4: #{forward.11} parent=0 // pred_region
    _
  $region5: #{forward.11} parent=0 // pred_fallthru
    _
  // Predicated region
  $region6: #{forward.11} parent=0 // pred_check
    _
  $region7: #{forward.11} parent=0 // pred_check_branch
    %11 = sbr.rel (0) target = $region9
  $region8: #{forward.11} parent=0 // pred_region
    _
  $region9: #{forward.11} parent=0 // pred_fallthru
    _
  // Predicated region
  $region10: #{forward.11} parent=0 // pred_check
    _
  $region11: #{forward.11} parent=0 // pred_check_branch
    %13 = sbr.rel (0) target = $region13
  $region12: #{forward.11} parent=0 // pred_region
    _
  $region13: #{forward.11} parent=0 // pred_fallthru
    _
  %p14 = scmp.eq.s32.totalorder 0, 0
  // Predicated region
  $region14: #{forward.11} parent=0 // pred_check
    %p15 = pneg %p14
  $region15: #{forward.11} parent=0 // pred_check_branch
    %17 = sbr.rel (%p15) target = $region17
  $region16: #{forward.11} parent=0 // pred_region
    %18 = vst [vmem:[#allocation2] sm:$0xff] 0.0
    %19 = vst [vmem:[#allocation2 + $0x8] sm:$0xff] 0.0
    %20 = vst [vmem:[#allocation2 + $0x10] sm:$0xff] 0.0
    %21 = vst [vmem:[#allocation2 + $0x18] sm:$0xff] 0.0
    %22 = vst [vmem:[#allocation2 + $0x20] sm:$0xff] 0.0
    %23 = vst [vmem:[#allocation2 + $0x28] sm:$0xff] 0.0
    %24 = vst [vmem:[#allocation2 + $0x30] sm:$0xff] 0.0
    %25 = vst [vmem:[#allocation2 + $0x38] sm:$0xff] 0.0
    %26 = vst [vmem:[#allocation2 + $0x40] sm:$0xff] 0.0
    %27 = vst [vmem:[#allocation2 + $0x48] sm:$0xff] 0.0
    %28 = vst [vmem:[#allocation2 + $0x50] sm:$0xff] 0.0
    %29 = vst [vmem:[#allocation2 + $0x58] sm:$0xff] 0.0
    %30 = vst [vmem:[#allocation2 + $0x60] sm:$0xff] 0.0
    %31 = vst [vmem:[#allocation2 + $0x68] sm:$0xff] 0.0
    %32 = vst [vmem:[#allocation2 + $0x70] sm:$0xff] 0.0
    %33 = vst [vmem:[#allocation2 + $0x78] sm:$0xff] 0.0
  $region17: #{forward.11} parent=0 // pred_fallthru
    _
  %v34 = vld [vmem:[#allocation2] sm:$0xff]
  %v35 = vld [vmem:[#allocation2 + $0x8] sm:$0xff]
  %v36 = vld [vmem:[#allocation2 + $0x10] sm:$0xff]
  %v37 = vld [vmem:[#allocation2 + $0x18] sm:$0xff]
  %v38 = vld [vmem:[#allocation2 + $0x20] sm:$0xff]
  %v39 = vld [vmem:[#allocation2 + $0x28] sm:$0xff]
  %v40 = vld [vmem:[#allocation2 + $0x30] sm:$0xff]
  %v41 = vld [vmem:[#allocation2 + $0x38] sm:$0xff]
  %v42 = vld [vmem:[#allocation2 + $0x40] sm:$0xff]
  %v43 = vld [vmem:[#allocation2 + $0x48] sm:$0xff]
  %v44 = vld [vmem:[#allocation2 + $0x50] sm:$0xff]
  %v45 = vld [vmem:[#allocation2 + $0x58] sm:$0xff]
  %v46 = vld [vmem:[#allocation2 + $0x60] sm:$0xff]
  %v47 = vld [vmem:[#allocation2 + $0x68] sm:$0xff]
  %v48 = vld [vmem:[#allocation2 + $0x70] sm:$0xff]
  %v49 = vld [vmem:[#allocation2 + $0x78] sm:$0xff]
  %v50 = vld [vmem:[%s0] sm:$0xff]
  %v51 = vld [vmem:[%s0 + $0x8] sm:$0xf]
  %v52 = vld [vmem:[%s0 + $0xc] sm:$0xff]
  %v53 = vld [vmem:[%s0 + $0x14] sm:$0xf]
  %v54 = vld [vmem:[%s0 + $0x18] sm:$0xff]
  %v55 = vld [vmem:[%s0 + $0x20] sm:$0xf]
  %v56 = vld [vmem:[%s0 + $0x24] sm:$0xff]
  %v57 = vld [vmem:[%s0 + $0x2c] sm:$0xf]
  %v58 = vld [vmem:[%s0 + $0x30] sm:$0xff]
  %v59 = vld [vmem:[%s0 + $0x38] sm:$0xf]
  %v60 = vld [vmem:[%s0 + $0x3c] sm:$0xff]
  %v61 = vld [vmem:[%s0 + $0x44] sm:$0xf]
  %v62 = vld [vmem:[%s0 + $0x48] sm:$0xff]
  %v63 = vld [vmem:[%s0 + $0x50] sm:$0xf]
  %v64 = vld [vmem:[%s0 + $0x54] sm:$0xff]
  %v65 = vld [vmem:[%s0 + $0x5c] sm:$0xf]
  %v66 = vld [vmem:[%s0 + $0x60] sm:$0xff]
  %v67 = vld [vmem:[%s0 + $0x68] sm:$0xf]
  %v68 = vld [vmem:[%s0 + $0x6c] sm:$0xff]
  %v69 = vld [vmem:[%s0 + $0x74] sm:$0xf]
  %v70 = vld [vmem:[%s0 + $0x78] sm:$0xff]
  %v71 = vld [vmem:[%s0 + $0x80] sm:$0xf]
  %v72 = vld [vmem:[%s0 + $0x84] sm:$0xff]
  %v73 = vld [vmem:[%s0 + $0x8c] sm:$0xf]
  %v74 = vld [vmem:[%s0 + $0x90] sm:$0xff]
  %v75 = vld [vmem:[%s0 + $0x98] sm:$0xf]
  %v76 = vld [vmem:[%s0 + $0x9c] sm:$0xff]
  %v77 = vld [vmem:[%s0 + $0xa4] sm:$0xf]
  %v78 = vld [vmem:[%s0 + $0xa8] sm:$0xff]
  %v79 = vld [vmem:[%s0 + $0xb0] sm:$0xf]
  %v80 = vld [vmem:[%s0 + $0xb4] sm:$0xff]
  %v81 = vld [vmem:[%s0 + $0xbc] sm:$0xf]
  %v82 = vld [vmem:[%s1] sm:$0xf]
  %v83 = vld [vmem:[%s1 + $0x4] sm:$0xf]
  %v84 = vld [vmem:[%s1 + $0x8] sm:$0xf]
  %v85 = vld [vmem:[%s1 + $0xc] sm:$0xf]
  %v86 = vld [vmem:[%s1 + $0x10] sm:$0xf]
  %v87 = vld [vmem:[%s1 + $0x14] sm:$0xf]
  %v88 = vld [vmem:[%s1 + $0x18] sm:$0xf]
  %v89 = vld [vmem:[%s1 + $0x1c] sm:$0xf]
  %v90 = vld [vmem:[%s1 + $0x20] sm:$0xf]
  %v91 = vld [vmem:[%s1 + $0x24] sm:$0xf]
  %v92 = vld [vmem:[%s1 + $0x28] sm:$0xf]
  %v93 = vld [vmem:[%s1 + $0x2c] sm:$0xf]
  %v94 = vld [vmem:[%s1 + $0x30] sm:$0xf]
  %v95 = vld [vmem:[%s1 + $0x34] sm:$0xf]
  %v96 = vld [vmem:[%s1 + $0x38] sm:$0xf]
  %v97 = vld [vmem:[%s1 + $0x3c] sm:$0xf]
  %v98 = vld [vmem:[%s1 + $0x40] sm:$0xf]
  %v99 = vld [vmem:[%s1 + $0x44] sm:$0xf]
  %v100 = vld [vmem:[%s1 + $0x48] sm:$0xf]
  %v101 = vld [vmem:[%s1 + $0x4c] sm:$0xf]
  %v102 = vld [vmem:[%s1 + $0x50] sm:$0xf]
  %v103 = vld [vmem:[%s1 + $0x54] sm:$0xf]
  %v104 = vld [vmem:[%s1 + $0x58] sm:$0xf]
  %v105 = vld [vmem:[%s1 + $0x5c] sm:$0xf]
  %v106 = vld [vmem:[%s1 + $0x60] sm:$0xf]
  %v107 = vld [vmem:[%s1 + $0x64] sm:$0xf]
  %v108 = vld [vmem:[%s1 + $0x68] sm:$0xf]
  %v109 = vld [vmem:[%s1 + $0x6c] sm:$0xf]
  %v110 = vld [vmem:[%s1 + $0x70] sm:$0xf]
  %v111 = vld [vmem:[%s1 + $0x74] sm:$0xf]
  %v112 = vld [vmem:[%s1 + $0x78] sm:$0xf]
  %v113 = vld [vmem:[%s1 + $0x7c] sm:$0xf]
  %v114 = vld [vmem:[%s1 + $0x80] sm:$0xf]
  %v115 = vld [vmem:[%s1 + $0x84] sm:$0xf]
  %v116 = vld [vmem:[%s1 + $0x88] sm:$0xf]
  %v117 = vld [vmem:[%s1 + $0x8c] sm:$0xf]
  %v118 = vld [vmem:[%s1 + $0x90] sm:$0xf]
  %v119 = vld [vmem:[%s1 + $0x94] sm:$0xf]
  %v120 = vld [vmem:[%s1 + $0x98] sm:$0xf]
  %v121 = vld [vmem:[%s1 + $0x9c] sm:$0xf]
  %v122 = vld [vmem:[%s1 + $0xa0] sm:$0xf]
  %v123 = vld [vmem:[%s1 + $0xa4] sm:$0xf]
  %v124 = vld [vmem:[%s1 + $0xa8] sm:$0xf]
  %v125 = vld [vmem:[%s1 + $0xac] sm:$0xf]
  %v126 = vld [vmem:[%s1 + $0xb0] sm:$0xf]
  %v127 = vld [vmem:[%s1 + $0xb4] sm:$0xf]
  %v128 = vld [vmem:[%s1 + $0xb8] sm:$0xf]
  %v129 = vld [vmem:[%s1 + $0xbc] sm:$0xf]
  %v162 = vunpack.c.l.b16 %v50
  %v163 = vunpack.c.h.b16 %v50
  %v164 = vunpack.c.l.b16 %v51
  %v165 = vunpack.c.l.b16 %v52
  %v166 = vunpack.c.h.b16 %v52
  %v167 = vunpack.c.l.b16 %v53
  %v168 = vunpack.c.l.b16 %v54
  %v169 = vunpack.c.h.b16 %v54
  %v170 = vunpack.c.l.b16 %v55
  %v171 = vunpack.c.l.b16 %v56
  %v172 = vunpack.c.h.b16 %v56
  %v173 = vunpack.c.l.b16 %v57
  %v174 = vunpack.c.l.b16 %v58
  %v175 = vunpack.c.h.b16 %v58
  %v176 = vunpack.c.l.b16 %v59
  %v177 = vunpack.c.l.b16 %v60
  %v178 = vunpack.c.h.b16 %v60
  %v179 = vunpack.c.l.b16 %v61
  %v180 = vunpack.c.l.b16 %v62
  %v181 = vunpack.c.h.b16 %v62
  %v182 = vunpack.c.l.b16 %v63
  %v183 = vunpack.c.l.b16 %v64
  %v184 = vunpack.c.h.b16 %v64
  %v185 = vunpack.c.l.b16 %v65
  %v186 = vunpack.c.l.b16 %v66
  %v187 = vunpack.c.h.b16 %v66
  %v188 = vunpack.c.l.b16 %v67
  %v189 = vunpack.c.l.b16 %v68
  %v190 = vunpack.c.h.b16 %v68
  %v191 = vunpack.c.l.b16 %v69
  %v192 = vunpack.c.l.b16 %v70
  %v193 = vunpack.c.h.b16 %v70
  %v194 = vunpack.c.l.b16 %v71
  %v195 = vunpack.c.l.b16 %v72
  %v196 = vunpack.c.h.b16 %v72
  %v197 = vunpack.c.l.b16 %v73
  %v198 = vunpack.c.l.b16 %v74
  %v199 = vunpack.c.h.b16 %v74
  %v200 = vunpack.c.l.b16 %v75
  %v201 = vunpack.c.l.b16 %v76
  %v202 = vunpack.c.h.b16 %v76
  %v203 = vunpack.c.l.b16 %v77
  %v204 = vunpack.c.l.b16 %v78
  %v205 = vunpack.c.h.b16 %v78
  %v206 = vunpack.c.l.b16 %v79
  %v207 = vunpack.c.l.b16 %v80
  %v208 = vunpack.c.h.b16 %v80
  %v209 = vunpack.c.l.b16 %v81
  %v210 = vpack.c.b16 %v165, %v162
  %v211 = vpack.c.b16 %v166, %v163
  %v212 = vpack.c.b16 %v167, %v164
  %v213 = vpack.c.b16 %v171, %v168
  %v214 = vpack.c.b16 %v172, %v169
  %v215 = vpack.c.b16 %v173, %v170
  %v216 = vpack.c.b16 %v177, %v174
  %v217 = vpack.c.b16 %v178, %v175
  %v218 = vpack.c.b16 %v179, %v176
  %v219 = vpack.c.b16 %v183, %v180
  %v220 = vpack.c.b16 %v184, %v181
  %v221 = vpack.c.b16 %v185, %v182
  %v222 = vpack.c.b16 %v189, %v186
  %v223 = vpack.c.b16 %v190, %v187
  %v224 = vpack.c.b16 %v191, %v188
  %v225 = vpack.c.b16 %v195, %v192
  %v226 = vpack.c.b16 %v196, %v193
  %v227 = vpack.c.b16 %v197, %v194
  %v228 = vpack.c.b16 %v201, %v198
  %v229 = vpack.c.b16 %v202, %v199
  %v230 = vpack.c.b16 %v203, %v200
  %v231 = vpack.c.b16 %v207, %v204
  %v232 = vpack.c.b16 %v208, %v205
  %v233 = vpack.c.b16 %v209, %v206
  %v306 = vunpack.c.l.b16 %v82
  %v307 = vunpack.c.l.b16 %v83
  %v308 = vunpack.c.l.b16 %v84
  %v309 = vunpack.c.l.b16 %v85
  %v310 = vunpack.c.l.b16 %v86
  %v311 = vunpack.c.l.b16 %v87
  %v312 = vunpack.c.l.b16 %v88
  %v313 = vunpack.c.l.b16 %v89
  %v314 = vunpack.c.l.b16 %v90
  %v315 = vunpack.c.l.b16 %v91
  %v316 = vunpack.c.l.b16 %v92
  %v317 = vunpack.c.l.b16 %v93
  %v318 = vunpack.c.l.b16 %v94
  %v319 = vunpack.c.l.b16 %v95
  %v320 = vunpack.c.l.b16 %v96
  %v321 = vunpack.c.l.b16 %v97
  %v322 = vunpack.c.l.b16 %v98
  %v323 = vunpack.c.l.b16 %v99
  %v324 = vunpack.c.l.b16 %v100
  %v325 = vunpack.c.l.b16 %v101
  %v326 = vunpack.c.l.b16 %v102
  %v327 = vunpack.c.l.b16 %v103
  %v328 = vunpack.c.l.b16 %v104
  %v329 = vunpack.c.l.b16 %v105
  %v330 = vunpack.c.l.b16 %v106
  %v331 = vunpack.c.l.b16 %v107
  %v332 = vunpack.c.l.b16 %v108
  %v333 = vunpack.c.l.b16 %v109
  %v334 = vunpack.c.l.b16 %v110
  %v335 = vunpack.c.l.b16 %v111
  %v336 = vunpack.c.l.b16 %v112
  %v337 = vunpack.c.l.b16 %v113
  %v338 = vunpack.c.l.b16 %v114
  %v339 = vunpack.c.l.b16 %v115
  %v340 = vunpack.c.l.b16 %v116
  %v341 = vunpack.c.l.b16 %v117
  %v342 = vunpack.c.l.b16 %v118
  %v343 = vunpack.c.l.b16 %v119
  %v344 = vunpack.c.l.b16 %v120
  %v345 = vunpack.c.l.b16 %v121
  %v346 = vunpack.c.l.b16 %v122
  %v347 = vunpack.c.l.b16 %v123
  %v348 = vunpack.c.l.b16 %v124
  %v349 = vunpack.c.l.b16 %v125
  %v350 = vunpack.c.l.b16 %v126
  %v351 = vunpack.c.l.b16 %v127
  %v352 = vunpack.c.l.b16 %v128
  %v353 = vunpack.c.l.b16 %v129
  %v354 = vpack.c.b16 %v307, %v306
  %v355 = vpack.c.b16 %v309, %v308
  %v356 = vpack.c.b16 %v311, %v310
  %v357 = vpack.c.b16 %v313, %v312
  %v358 = vpack.c.b16 %v315, %v314
  %v359 = vpack.c.b16 %v317, %v316
  %v360 = vpack.c.b16 %v319, %v318
  %v361 = vpack.c.b16 %v321, %v320
  %v362 = vpack.c.b16 %v323, %v322
  %v363 = vpack.c.b16 %v325, %v324
  %v364 = vpack.c.b16 %v327, %v326
  %v365 = vpack.c.b16 %v329, %v328
  %v366 = vpack.c.b16 %v331, %v330
  %v367 = vpack.c.b16 %v333, %v332
  %v368 = vpack.c.b16 %v335, %v334
  %v369 = vpack.c.b16 %v337, %v336
  %v370 = vpack.c.b16 %v339, %v338
  %v371 = vpack.c.b16 %v341, %v340
  %v372 = vpack.c.b16 %v343, %v342
  %v373 = vpack.c.b16 %v345, %v344
  %v374 = vpack.c.b16 %v347, %v346
  %v375 = vpack.c.b16 %v349, %v348
  %v376 = vpack.c.b16 %v351, %v350
  %v377 = vpack.c.b16 %v353, %v352
  %402 = vmatpush.bf16.msra.mxu0 %v361
  %403 = vmatpush.bf16.msra.mxu0 %v360
  %404 = vmatpush.bf16.msra.mxu0 %v359
  %405 = vmatpush.bf16.msra.mxu0 %v358
  %406 = vmatpush.bf16.msra.mxu0 %v357
  %407 = vmatpush.bf16.msra.mxu0 %v356
  %408 = vmatpush.bf16.msra.mxu0 %v355
  %409 = vmatpush.bf16.msra.mxu0 %v354
  %410 = vmatmul.bf16.gmra.mxu0 %v210
  %v411 = vpop.f32.mrf.mxu0
  %v412 = vadd.f32 0.0, %v411
  %v413 = vpop.f32.mrf.mxu0
  %v414 = vadd.f32 0.0, %v413
  %415 = vmatmul.bf16.gmra.mxu0 %v213
  %v416 = vpop.f32.mrf.mxu0
  %v417 = vadd.f32 0.0, %v416
  %v418 = vpop.f32.mrf.mxu0
  %v419 = vadd.f32 0.0, %v418
  %420 = vmatmul.bf16.gmra.mxu0 %v216
  %v421 = vpop.f32.mrf.mxu0
  %v422 = vadd.f32 0.0, %v421
  %v423 = vpop.f32.mrf.mxu0
  %v424 = vadd.f32 0.0, %v423
  %425 = vmatmul.bf16.gmra.mxu0 %v219
  %v426 = vpop.f32.mrf.mxu0
  %v427 = vadd.f32 0.0, %v426
  %v428 = vpop.f32.mrf.mxu0
  %v429 = vadd.f32 0.0, %v428
  %430 = vmatmul.bf16.gmra.mxu0 %v222
  %v431 = vpop.f32.mrf.mxu0
  %v432 = vadd.f32 0.0, %v431
  %v433 = vpop.f32.mrf.mxu0
  %v434 = vadd.f32 0.0, %v433
  %435 = vmatmul.bf16.gmra.mxu0 %v225
  %v436 = vpop.f32.mrf.mxu0
  %v437 = vadd.f32 0.0, %v436
  %v438 = vpop.f32.mrf.mxu0
  %v439 = vadd.f32 0.0, %v438
  %440 = vmatmul.bf16.gmra.mxu0 %v228
  %v441 = vpop.f32.mrf.mxu0
  %v442 = vadd.f32 0.0, %v441
  %v443 = vpop.f32.mrf.mxu0
  %v444 = vadd.f32 0.0, %v443
  %445 = vmatmul.bf16.gmra.mxu0 %v231
  %v446 = vpop.f32.mrf.mxu0
  %v447 = vadd.f32 0.0, %v446
  %v448 = vpop.f32.mrf.mxu0
  %v449 = vadd.f32 0.0, %v448
  %450 = vdwg.mxu0
  %451 = vmatpush.bf16.msra.mxu0 %v369
  %452 = vmatpush.bf16.msra.mxu0 %v368
  %453 = vmatpush.bf16.msra.mxu0 %v367
  %454 = vmatpush.bf16.msra.mxu0 %v366
  %455 = vmatpush.bf16.msra.mxu0 %v365
  %456 = vmatpush.bf16.msra.mxu0 %v364
  %457 = vmatpush.bf16.msra.mxu0 %v363
  %458 = vmatpush.bf16.msra.mxu0 %v362
  %459 = vmatmul.bf16.gmra.mxu0 %v211
  %v460 = vpop.f32.mrf.mxu0
  %v461 = vadd.f32 %v412, %v460
  %v462 = vpop.f32.mrf.mxu0
  %v463 = vadd.f32 %v414, %v462
  %464 = vmatmul.bf16.gmra.mxu0 %v214
  %v465 = vpop.f32.mrf.mxu0
  %v466 = vadd.f32 %v417, %v465
  %v467 = vpop.f32.mrf.mxu0
  %v468 = vadd.f32 %v419, %v467
  %469 = vmatmul.bf16.gmra.mxu0 %v217
  %v470 = vpop.f32.mrf.mxu0
  %v471 = vadd.f32 %v422, %v470
  %v472 = vpop.f32.mrf.mxu0
  %v473 = vadd.f32 %v424, %v472
  %474 = vmatmul.bf16.gmra.mxu0 %v220
  %v475 = vpop.f32.mrf.mxu0
  %v476 = vadd.f32 %v427, %v475
  %v477 = vpop.f32.mrf.mxu0
  %v478 = vadd.f32 %v429, %v477
  %479 = vmatmul.bf16.gmra.mxu0 %v223
  %v480 = vpop.f32.mrf.mxu0
  %v481 = vadd.f32 %v432, %v480
  %v482 = vpop.f32.mrf.mxu0
  %v483 = vadd.f32 %v434, %v482
  %484 = vmatmul.bf16.gmra.mxu0 %v226
  %v485 = vpop.f32.mrf.mxu0
  %v486 = vadd.f32 %v437, %v485
  %v487 = vpop.f32.mrf.mxu0
  %v488 = vadd.f32 %v439, %v487
  %489 = vmatmul.bf16.gmra.mxu0 %v229
  %v490 = vpop.f32.mrf.mxu0
  %v491 = vadd.f32 %v442, %v490
  %v492 = vpop.f32.mrf.mxu0
  %v493 = vadd.f32 %v444, %v492
  %494 = vmatmul.bf16.gmra.mxu0 %v232
  %v495 = vpop.f32.mrf.mxu0
  %v496 = vadd.f32 %v447, %v495
  %v497 = vpop.f32.mrf.mxu0
  %v498 = vadd.f32 %v449, %v497
  %499 = vdwg.mxu0
  %500 = vmatpush.bf16.msra.mxu0 %v377
  %501 = vmatpush.bf16.msra.mxu0 %v376
  %502 = vmatpush.bf16.msra.mxu0 %v375
  %503 = vmatpush.bf16.msra.mxu0 %v374
  %504 = vmatpush.bf16.msra.mxu0 %v373
  %505 = vmatpush.bf16.msra.mxu0 %v372
  %506 = vmatpush.bf16.msra.mxu0 %v371
  %507 = vmatpush.bf16.msra.mxu0 %v370
  %508 = vmatmul.bf16.gmra.mxu0 %v212
  %v509 = vpop.f32.mrf.mxu0
  %v510 = vadd.f32 %v461, %v509
  %v511 = vpop.f32.mrf.mxu0
  %v512 = vadd.f32 %v463, %v511
  %513 = vmatmul.bf16.gmra.mxu0 %v215
  %v514 = vpop.f32.mrf.mxu0
  %v515 = vadd.f32 %v466, %v514
  %v516 = vpop.f32.mrf.mxu0
  %v517 = vadd.f32 %v468, %v516
  %518 = vmatmul.bf16.gmra.mxu0 %v218
  %v519 = vpop.f32.mrf.mxu0
  %v520 = vadd.f32 %v471, %v519
  %v521 = vpop.f32.mrf.mxu0
  %v522 = vadd.f32 %v473, %v521
  %523 = vmatmul.bf16.gmra.mxu0 %v221
  %v524 = vpop.f32.mrf.mxu0
  %v525 = vadd.f32 %v476, %v524
  %v526 = vpop.f32.mrf.mxu0
  %v527 = vadd.f32 %v478, %v526
  %528 = vmatmul.bf16.gmra.mxu0 %v224
  %v529 = vpop.f32.mrf.mxu0
  %v530 = vadd.f32 %v481, %v529
  %v531 = vpop.f32.mrf.mxu0
  %v532 = vadd.f32 %v483, %v531
  %533 = vmatmul.bf16.gmra.mxu0 %v227
  %v534 = vpop.f32.mrf.mxu0
  %v535 = vadd.f32 %v486, %v534
  %v536 = vpop.f32.mrf.mxu0
  %v537 = vadd.f32 %v488, %v536
  %538 = vmatmul.bf16.gmra.mxu0 %v230
  %v539 = vpop.f32.mrf.mxu0
  %v540 = vadd.f32 %v491, %v539
  %v541 = vpop.f32.mrf.mxu0
  %v542 = vadd.f32 %v493, %v541
  %543 = vmatmul.bf16.gmra.mxu0 %v233
  %v544 = vpop.f32.mrf.mxu0
  %v545 = vadd.f32 %v496, %v544
  %v546 = vpop.f32.mrf.mxu0
  %v547 = vadd.f32 %v498, %v546
  %548 = vdwg.mxu0
  %v549 = vadd.f32 %v34, %v510
  %v550 = vadd.f32 %v35, %v512
  %v551 = vadd.f32 %v36, %v515
  %v552 = vadd.f32 %v37, %v517
  %v553 = vadd.f32 %v38, %v520
  %v554 = vadd.f32 %v39, %v522
  %v555 = vadd.f32 %v40, %v525
  %v556 = vadd.f32 %v41, %v527
  %v557 = vadd.f32 %v42, %v530
  %v558 = vadd.f32 %v43, %v532
  %v559 = vadd.f32 %v44, %v535
  %v560 = vadd.f32 %v45, %v537
  %v561 = vadd.f32 %v46, %v540
  %v562 = vadd.f32 %v47, %v542
  %v563 = vadd.f32 %v48, %v545
  %v564 = vadd.f32 %v49, %v547
  %565 = vst [vmem:[#allocation2] sm:$0xff] %v549
  %566 = vst [vmem:[#allocation2 + $0x8] sm:$0xff] %v550
  %567 = vst [vmem:[#allocation2 + $0x10] sm:$0xff] %v551
  %568 = vst [vmem:[#allocation2 + $0x18] sm:$0xff] %v552
  %569 = vst [vmem:[#allocation2 + $0x20] sm:$0xff] %v553
  %570 = vst [vmem:[#allocation2 + $0x28] sm:$0xff] %v554
  %571 = vst [vmem:[#allocation2 + $0x30] sm:$0xff] %v555
  %572 = vst [vmem:[#allocation2 + $0x38] sm:$0xff] %v556
  %573 = vst [vmem:[#allocation2 + $0x40] sm:$0xff] %v557
  %574 = vst [vmem:[#allocation2 + $0x48] sm:$0xff] %v558
  %575 = vst [vmem:[#allocation2 + $0x50] sm:$0xff] %v559
  %576 = vst [vmem:[#allocation2 + $0x58] sm:$0xff] %v560
  %577 = vst [vmem:[#allocation2 + $0x60] sm:$0xff] %v561
  %578 = vst [vmem:[#allocation2 + $0x68] sm:$0xff] %v562
  %579 = vst [vmem:[#allocation2 + $0x70] sm:$0xff] %v563
  %580 = vst [vmem:[#allocation2 + $0x78] sm:$0xff] %v564
  // Predicated region
  $region18: #{forward.11} parent=0 // pred_check
    %p581 = pneg %p14
  $region19: #{forward.11} parent=0 // pred_check_branch
    %583 = sbr.rel (%p581) target = $region21
  $region20: #{forward.11} parent=0 // pred_region
    %v584 = vld [vmem:[#allocation2] sm:$0xff]
    %v585 = vld [vmem:[#allocation2 + $0x8] sm:$0xff]
    %v586 = vld [vmem:[#allocation2 + $0x10] sm:$0xff]
    %v587 = vld [vmem:[#allocation2 + $0x18] sm:$0xff]
    %v588 = vld [vmem:[#allocation2 + $0x20] sm:$0xff]
    %v589 = vld [vmem:[#allocation2 + $0x28] sm:$0xff]
    %v590 = vld [vmem:[#allocation2 + $0x30] sm:$0xff]
    %v591 = vld [vmem:[#allocation2 + $0x38] sm:$0xff]
    %v592 = vld [vmem:[#allocation2 + $0x40] sm:$0xff]
    %v593 = vld [vmem:[#allocation2 + $0x48] sm:$0xff]
    %v594 = vld [vmem:[#allocation2 + $0x50] sm:$0xff]
    %v595 = vld [vmem:[#allocation2 + $0x58] sm:$0xff]
    %v596 = vld [vmem:[#allocation2 + $0x60] sm:$0xff]
    %v597 = vld [vmem:[#allocation2 + $0x68] sm:$0xff]
    %v598 = vld [vmem:[#allocation2 + $0x70] sm:$0xff]
    %v599 = vld [vmem:[#allocation2 + $0x78] sm:$0xff]
    %v600 = vld [vmem:[%s2] sm:$0x1]
    %v602 = vperm.slane %v600, 0
    %v604 = vadd.f32 %v584, %v602
    %v605 = vadd.f32 %v585, %v602
    %v606 = vadd.f32 %v586, %v602
    %v607 = vadd.f32 %v587, %v602
    %v608 = vadd.f32 %v588, %v602
    %v609 = vadd.f32 %v589, %v602
    %v610 = vadd.f32 %v590, %v602
    %v611 = vadd.f32 %v591, %v602
    %v612 = vadd.f32 %v592, %v602
    %v613 = vadd.f32 %v593, %v602
    %v614 = vadd.f32 %v594, %v602
    %v615 = vadd.f32 %v595, %v602
    %v616 = vadd.f32 %v596, %v602
    %v617 = vadd.f32 %v597, %v602
    %v618 = vadd.f32 %v598, %v602
    %v619 = vadd.f32 %v599, %v602
    %vm620 = vcmp.gt.f32.partialorder %v604, 0.0
    %vm621 = vcmp.gt.f32.partialorder %v605, 0.0
    %vm622 = vcmp.gt.f32.partialorder %v606, 0.0
    %vm623 = vcmp.gt.f32.partialorder %v607, 0.0
    %vm624 = vcmp.gt.f32.partialorder %v608, 0.0
    %vm625 = vcmp.gt.f32.partialorder %v609, 0.0
    %vm626 = vcmp.gt.f32.partialorder %v610, 0.0
    %vm627 = vcmp.gt.f32.partialorder %v611, 0.0
    %vm628 = vcmp.gt.f32.partialorder %v612, 0.0
    %vm629 = vcmp.gt.f32.partialorder %v613, 0.0
    %vm630 = vcmp.gt.f32.partialorder %v614, 0.0
    %vm631 = vcmp.gt.f32.partialorder %v615, 0.0
    %vm632 = vcmp.gt.f32.partialorder %v616, 0.0
    %vm633 = vcmp.gt.f32.partialorder %v617, 0.0
    %vm634 = vcmp.gt.f32.partialorder %v618, 0.0
    %vm635 = vcmp.gt.f32.partialorder %v619, 0.0
    %v636 = vmul.f32 %v604, 0.2
    %v637 = vmul.f32 %v605, 0.2
    %v638 = vmul.f32 %v606, 0.2
    %v639 = vmul.f32 %v607, 0.2
    %v640 = vmul.f32 %v608, 0.2
    %v641 = vmul.f32 %v609, 0.2
    %v642 = vmul.f32 %v610, 0.2
    %v643 = vmul.f32 %v611, 0.2
    %v644 = vmul.f32 %v612, 0.2
    %v645 = vmul.f32 %v613, 0.2
    %v646 = vmul.f32 %v614, 0.2
    %v647 = vmul.f32 %v615, 0.2
    %v648 = vmul.f32 %v616, 0.2
    %v649 = vmul.f32 %v617, 0.2
    %v650 = vmul.f32 %v618, 0.2
    %v651 = vmul.f32 %v619, 0.2
    %v652 = vsel %vm620, %v604, %v636
    %v653 = vsel %vm621, %v605, %v637
    %v654 = vsel %vm622, %v606, %v638
    %v655 = vsel %vm623, %v607, %v639
    %v656 = vsel %vm624, %v608, %v640
    %v657 = vsel %vm625, %v609, %v641
    %v658 = vsel %vm626, %v610, %v642
    %v659 = vsel %vm627, %v611, %v643
    %v660 = vsel %vm628, %v612, %v644
    %v661 = vsel %vm629, %v613, %v645
    %v662 = vsel %vm630, %v614, %v646
    %v663 = vsel %vm631, %v615, %v647
    %v664 = vsel %vm632, %v616, %v648
    %v665 = vsel %vm633, %v617, %v649
    %v666 = vsel %vm634, %v618, %v650
    %v667 = vsel %vm635, %v619, %v651
    %v668 = vpack.c.bf16 %v652, %v652
    %v669 = vpack.c.bf16 %v653, %v653
    %v670 = vpack.c.bf16 %v654, %v654
    %v671 = vpack.c.bf16 %v655, %v655
    %v672 = vpack.c.bf16 %v656, %v656
    %v673 = vpack.c.bf16 %v657, %v657
    %v674 = vpack.c.bf16 %v658, %v658
    %v675 = vpack.c.bf16 %v659, %v659
    %v676 = vpack.c.bf16 %v660, %v660
    %v677 = vpack.c.bf16 %v661, %v661
    %v678 = vpack.c.bf16 %v662, %v662
    %v679 = vpack.c.bf16 %v663, %v663
    %v680 = vpack.c.bf16 %v664, %v664
    %v681 = vpack.c.bf16 %v665, %v665
    %v682 = vpack.c.bf16 %v666, %v666
    %v683 = vpack.c.bf16 %v667, %v667
    %684 = vst [vmem:[%s3] sm:$0xf] %v668
    %685 = vst [vmem:[%s3 + $0x4] sm:$0xf] %v669
    %686 = vst [vmem:[%s3 + $0x8] sm:$0xf] %v670
    %687 = vst [vmem:[%s3 + $0xc] sm:$0xf] %v671
    %688 = vst [vmem:[%s3 + $0x10] sm:$0xf] %v672
    %689 = vst [vmem:[%s3 + $0x14] sm:$0xf] %v673
    %690 = vst [vmem:[%s3 + $0x18] sm:$0xf] %v674
    %691 = vst [vmem:[%s3 + $0x1c] sm:$0xf] %v675
    %692 = vst [vmem:[%s3 + $0x20] sm:$0xf] %v676
    %693 = vst [vmem:[%s3 + $0x24] sm:$0xf] %v677
    %694 = vst [vmem:[%s3 + $0x28] sm:$0xf] %v678
    %695 = vst [vmem:[%s3 + $0x2c] sm:$0xf] %v679
    %696 = vst [vmem:[%s3 + $0x30] sm:$0xf] %v680
    %697 = vst [vmem:[%s3 + $0x34] sm:$0xf] %v681
    %698 = vst [vmem:[%s3 + $0x38] sm:$0xf] %v682
    %699 = vst [vmem:[%s3 + $0x3c] sm:$0xf] %v683
  $region21: #{forward.11} parent=0 // pred_fallthru
    _
  // Predicated region
  $region22: #{forward.11} parent=0 // pred_check
    _
  $region23: #{forward.11} parent=0 // pred_check_branch
    %701 = sbr.rel (0) target = $region25
  $region24: #{forward.11} parent=0 // pred_region
    _
  $region25: #{forward.11} parent=0 // pred_fallthru
    _
  // Predicated region
  $region26: #{forward.11} parent=0 // pred_check
    _
  $region27: #{forward.11} parent=0 // pred_check_branch
    %703 = sbr.rel (0) target = $region29
  $region28: #{forward.11} parent=0 // pred_region
    _
  $region29: #{forward.11} parent=0 // pred_fallthru
    _

// kernel: forward.13
$region0: #{forward.13}
  #allocation0 [shape = 'u32[]', space=smem, size = 0x4, offset = 0x4, fixed_abs, tag = 'smem constant byte address 0x4 - core index']
  #allocation1 [shape = 'u32[72,128]{1,0:T(1,128)}', space=vmem, size = 0x9000, scoped, tag = 'internal scratch']
  #allocation2 [shape = 'f32[32,128]{1,0:T(8,128)}', space=vmem, size = 0x4000, scoped, tag = 'scratch operand']
  %s0 = inlined_call_operand.vmem [shape: bf16[32,640], index: 0, kind: input, shape index: {}]
  %s1 = inlined_call_operand.vmem [shape: bf16[640,128], index: 1, kind: input, shape index: {}]
  %s2 = inlined_call_operand.vmem [shape: f32[1,128], index: 2, kind: input, shape index: {}]
  %s3 = inlined_call_operand.vmem [shape: bf16[32,128], index: 3, kind: output, shape index: {}]
  %s4 = sld [smem:[#allocation0]]
  $region30: #{forward.13} parent=0
    _
  %s6 = ssub.s32 1, %s4
  %s7 = scalar_select 0, %s6, %s4
  // Predicated region
  $region2: #{forward.13} parent=0 // pred_check
    _
  $region3: #{forward.13} parent=0 // pred_check_branch
    %9 = sbr.rel (0) target = $region5
  $region4: #{forward.13} parent=0 // pred_region
    _
  $region5: #{forward.13} parent=0 // pred_fallthru
    _
  // Predicated region
  $region6: #{forward.13} parent=0 // pred_check
    _
  $region7: #{forward.13} parent=0 // pred_check_branch
    %11 = sbr.rel (0) target = $region9
  $region8: #{forward.13} parent=0 // pred_region
    _
  $region9: #{forward.13} parent=0 // pred_fallthru
    _
  // Predicated region
  $region10: #{forward.13} parent=0 // pred_check
    _
  $region11: #{forward.13} parent=0 // pred_check_branch
    %13 = sbr.rel (0) target = $region13
  $region12: #{forward.13} parent=0 // pred_region
    _
  $region13: #{forward.13} parent=0 // pred_fallthru
    _
  %p14 = scmp.eq.s32.totalorder 0, 0
  // Predicated region
  $region14: #{forward.13} parent=0 // pred_check
    %p15 = pneg %p14
  $region15: #{forward.13} parent=0 // pred_check_branch
    %17 = sbr.rel (%p15) target = $region17
  $region16: #{forward.13} parent=0 // pred_region
    %18 = vst [vmem:[#allocation2] sm:$0xff] 0.0
    %19 = vst [vmem:[#allocation2 + $0x8] sm:$0xff] 0.0
    %20 = vst [vmem:[#allocation2 + $0x10] sm:$0xff] 0.0
    %21 = vst [vmem:[#allocation2 + $0x18] sm:$0xff] 0.0
  $region17: #{forward.13} parent=0 // pred_fallthru
    _
  %v22 = vld [vmem:[#allocation2] sm:$0xff]
  %v23 = vld [vmem:[#allocation2 + $0x8] sm:$0xff]
  %v24 = vld [vmem:[#allocation2 + $0x10] sm:$0xff]
  %v25 = vld [vmem:[#allocation2 + $0x18] sm:$0xff]
  %v26 = vld [vmem:[%s0] sm:$0xff]
  %v27 = vld [vmem:[%s0 + $0x8] sm:$0xff]
  %v28 = vld [vmem:[%s0 + $0x10] sm:$0xf]
  %v29 = vld [vmem:[%s0 + $0x14] sm:$0xff]
  %v30 = vld [vmem:[%s0 + $0x1c] sm:$0xff]
  %v31 = vld [vmem:[%s0 + $0x24] sm:$0xf]
  %v32 = vld [vmem:[%s0 + $0x28] sm:$0xff]
  %v33 = vld [vmem:[%s0 + $0x30] sm:$0xff]
  %v34 = vld [vmem:[%s0 + $0x38] sm:$0xf]
  %v35 = vld [vmem:[%s0 + $0x3c] sm:$0xff]
  %v36 = vld [vmem:[%s0 + $0x44] sm:$0xff]
  %v37 = vld [vmem:[%s0 + $0x4c] sm:$0xf]
  %v38 = vld [vmem:[%s1] sm:$0xf]
  %v39 = vld [vmem:[%s1 + $0x4] sm:$0xf]
  %v40 = vld [vmem:[%s1 + $0x8] sm:$0xf]
  %v41 = vld [vmem:[%s1 + $0xc] sm:$0xf]
  %v42 = vld [vmem:[%s1 + $0x10] sm:$0xf]
  %v43 = vld [vmem:[%s1 + $0x14] sm:$0xf]
  %v44 = vld [vmem:[%s1 + $0x18] sm:$0xf]
  %v45 = vld [vmem:[%s1 + $0x1c] sm:$0xf]
  %v46 = vld [vmem:[%s1 + $0x20] sm:$0xf]
  %v47 = vld [vmem:[%s1 + $0x24] sm:$0xf]
  %v48 = vld [vmem:[%s1 + $0x28] sm:$0xf]
  %v49 = vld [vmem:[%s1 + $0x2c] sm:$0xf]
  %v50 = vld [vmem:[%s1 + $0x30] sm:$0xf]
  %v51 = vld [vmem:[%s1 + $0x34] sm:$0xf]
  %v52 = vld [vmem:[%s1 + $0x38] sm:$0xf]
  %v53 = vld [vmem:[%s1 + $0x3c] sm:$0xf]
  %v54 = vld [vmem:[%s1 + $0x40] sm:$0xf]
  %v55 = vld [vmem:[%s1 + $0x44] sm:$0xf]
  %v56 = vld [vmem:[%s1 + $0x48] sm:$0xf]
  %v57 = vld [vmem:[%s1 + $0x4c] sm:$0xf]
  %v58 = vld [vmem:[%s1 + $0x50] sm:$0xf]
  %v59 = vld [vmem:[%s1 + $0x54] sm:$0xf]
  %v60 = vld [vmem:[%s1 + $0x58] sm:$0xf]
  %v61 = vld [vmem:[%s1 + $0x5c] sm:$0xf]
  %v62 = vld [vmem:[%s1 + $0x60] sm:$0xf]
  %v63 = vld [vmem:[%s1 + $0x64] sm:$0xf]
  %v64 = vld [vmem:[%s1 + $0x68] sm:$0xf]
  %v65 = vld [vmem:[%s1 + $0x6c] sm:$0xf]
  %v66 = vld [vmem:[%s1 + $0x70] sm:$0xf]
  %v67 = vld [vmem:[%s1 + $0x74] sm:$0xf]
  %v68 = vld [vmem:[%s1 + $0x78] sm:$0xf]
  %v69 = vld [vmem:[%s1 + $0x7c] sm:$0xf]
  %v70 = vld [vmem:[%s1 + $0x80] sm:$0xf]
  %v71 = vld [vmem:[%s1 + $0x84] sm:$0xf]
  %v72 = vld [vmem:[%s1 + $0x88] sm:$0xf]
  %v73 = vld [vmem:[%s1 + $0x8c] sm:$0xf]
  %v74 = vld [vmem:[%s1 + $0x90] sm:$0xf]
  %v75 = vld [vmem:[%s1 + $0x94] sm:$0xf]
  %v76 = vld [vmem:[%s1 + $0x98] sm:$0xf]
  %v77 = vld [vmem:[%s1 + $0x9c] sm:$0xf]
  %v78 = vld [vmem:[%s1 + $0xa0] sm:$0xf]
  %v79 = vld [vmem:[%s1 + $0xa4] sm:$0xf]
  %v80 = vld [vmem:[%s1 + $0xa8] sm:$0xf]
  %v81 = vld [vmem:[%s1 + $0xac] sm:$0xf]
  %v82 = vld [vmem:[%s1 + $0xb0] sm:$0xf]
  %v83 = vld [vmem:[%s1 + $0xb4] sm:$0xf]
  %v84 = vld [vmem:[%s1 + $0xb8] sm:$0xf]
  %v85 = vld [vmem:[%s1 + $0xbc] sm:$0xf]
  %v86 = vld [vmem:[%s1 + $0xc0] sm:$0xf]
  %v87 = vld [vmem:[%s1 + $0xc4] sm:$0xf]
  %v88 = vld [vmem:[%s1 + $0xc8] sm:$0xf]
  %v89 = vld [vmem:[%s1 + $0xcc] sm:$0xf]
  %v90 = vld [vmem:[%s1 + $0xd0] sm:$0xf]
  %v91 = vld [vmem:[%s1 + $0xd4] sm:$0xf]
  %v92 = vld [vmem:[%s1 + $0xd8] sm:$0xf]
  %v93 = vld [vmem:[%s1 + $0xdc] sm:$0xf]
  %v94 = vld [vmem:[%s1 + $0xe0] sm:$0xf]
  %v95 = vld [vmem:[%s1 + $0xe4] sm:$0xf]
  %v96 = vld [vmem:[%s1 + $0xe8] sm:$0xf]
  %v97 = vld [vmem:[%s1 + $0xec] sm:$0xf]
  %v98 = vld [vmem:[%s1 + $0xf0] sm:$0xf]
  %v99 = vld [vmem:[%s1 + $0xf4] sm:$0xf]
  %v100 = vld [vmem:[%s1 + $0xf8] sm:$0xf]
  %v101 = vld [vmem:[%s1 + $0xfc] sm:$0xf]
  %v102 = vld [vmem:[%s1 + $0x100] sm:$0xf]
  %v103 = vld [vmem:[%s1 + $0x104] sm:$0xf]
  %v104 = vld [vmem:[%s1 + $0x108] sm:$0xf]
  %v105 = vld [vmem:[%s1 + $0x10c] sm:$0xf]
  %v106 = vld [vmem:[%s1 + $0x110] sm:$0xf]
  %v107 = vld [vmem:[%s1 + $0x114] sm:$0xf]
  %v108 = vld [vmem:[%s1 + $0x118] sm:$0xf]
  %v109 = vld [vmem:[%s1 + $0x11c] sm:$0xf]
  %v110 = vld [vmem:[%s1 + $0x120] sm:$0xf]
  %v111 = vld [vmem:[%s1 + $0x124] sm:$0xf]
  %v112 = vld [vmem:[%s1 + $0x128] sm:$0xf]
  %v113 = vld [vmem:[%s1 + $0x12c] sm:$0xf]
  %v114 = vld [vmem:[%s1 + $0x130] sm:$0xf]
  %v115 = vld [vmem:[%s1 + $0x134] sm:$0xf]
  %v116 = vld [vmem:[%s1 + $0x138] sm:$0xf]
  %v117 = vld [vmem:[%s1 + $0x13c] sm:$0xf]
  %v130 = vunpack.c.l.b16 %v26
  %v131 = vunpack.c.h.b16 %v26
  %v132 = vunpack.c.l.b16 %v27
  %v133 = vunpack.c.h.b16 %v27
  %v134 = vunpack.c.l.b16 %v28
  %v135 = vunpack.c.l.b16 %v29
  %v136 = vunpack.c.h.b16 %v29
  %v137 = vunpack.c.l.b16 %v30
  %v138 = vunpack.c.h.b16 %v30
  %v139 = vunpack.c.l.b16 %v31
  %v140 = vunpack.c.l.b16 %v32
  %v141 = vunpack.c.h.b16 %v32
  %v142 = vunpack.c.l.b16 %v33
  %v143 = vunpack.c.h.b16 %v33
  %v144 = vunpack.c.l.b16 %v34
  %v145 = vunpack.c.l.b16 %v35
  %v146 = vunpack.c.h.b16 %v35
  %v147 = vunpack.c.l.b16 %v36
  %v148 = vunpack.c.h.b16 %v36
  %v149 = vunpack.c.l.b16 %v37
  %v150 = vpack.c.b16 %v135, %v130
  %v151 = vpack.c.b16 %v136, %v131
  %v152 = vpack.c.b16 %v137, %v132
  %v153 = vpack.c.b16 %v138, %v133
  %v154 = vpack.c.b16 %v139, %v134
  %v155 = vpack.c.b16 %v145, %v140
  %v156 = vpack.c.b16 %v146, %v141
  %v157 = vpack.c.b16 %v147, %v142
  %v158 = vpack.c.b16 %v148, %v143
  %v159 = vpack.c.b16 %v149, %v144
  %v250 = vunpack.c.l.b16 %v38
  %v251 = vunpack.c.l.b16 %v39
  %v252 = vunpack.c.l.b16 %v40
  %v253 = vunpack.c.l.b16 %v41
  %v254 = vunpack.c.l.b16 %v42
  %v255 = vunpack.c.l.b16 %v43
  %v256 = vunpack.c.l.b16 %v44
  %v257 = vunpack.c.l.b16 %v45
  %v258 = vunpack.c.l.b16 %v46
  %v259 = vunpack.c.l.b16 %v47
  %v260 = vunpack.c.l.b16 %v48
  %v261 = vunpack.c.l.b16 %v49
  %v262 = vunpack.c.l.b16 %v50
  %v263 = vunpack.c.l.b16 %v51
  %v264 = vunpack.c.l.b16 %v52
  %v265 = vunpack.c.l.b16 %v53
  %v266 = vunpack.c.l.b16 %v54
  %v267 = vunpack.c.l.b16 %v55
  %v268 = vunpack.c.l.b16 %v56
  %v269 = vunpack.c.l.b16 %v57
  %v270 = vunpack.c.l.b16 %v58
  %v271 = vunpack.c.l.b16 %v59
  %v272 = vunpack.c.l.b16 %v60
  %v273 = vunpack.c.l.b16 %v61
  %v274 = vunpack.c.l.b16 %v62
  %v275 = vunpack.c.l.b16 %v63
  %v276 = vunpack.c.l.b16 %v64
  %v277 = vunpack.c.l.b16 %v65
  %v278 = vunpack.c.l.b16 %v66
  %v279 = vunpack.c.l.b16 %v67
  %v280 = vunpack.c.l.b16 %v68
  %v281 = vunpack.c.l.b16 %v69
  %v282 = vunpack.c.l.b16 %v70
  %v283 = vunpack.c.l.b16 %v71
  %v284 = vunpack.c.l.b16 %v72
  %v285 = vunpack.c.l.b16 %v73
  %v286 = vunpack.c.l.b16 %v74
  %v287 = vunpack.c.l.b16 %v75
  %v288 = vunpack.c.l.b16 %v76
  %v289 = vunpack.c.l.b16 %v77
  %v290 = vunpack.c.l.b16 %v78
  %v291 = vunpack.c.l.b16 %v79
  %v292 = vunpack.c.l.b16 %v80
  %v293 = vunpack.c.l.b16 %v81
  %v294 = vunpack.c.l.b16 %v82
  %v295 = vunpack.c.l.b16 %v83
  %v296 = vunpack.c.l.b16 %v84
  %v297 = vunpack.c.l.b16 %v85
  %v298 = vunpack.c.l.b16 %v86
  %v299 = vunpack.c.l.b16 %v87
  %v300 = vunpack.c.l.b16 %v88
  %v301 = vunpack.c.l.b16 %v89
  %v302 = vunpack.c.l.b16 %v90
  %v303 = vunpack.c.l.b16 %v91
  %v304 = vunpack.c.l.b16 %v92
  %v305 = vunpack.c.l.b16 %v93
  %v306 = vunpack.c.l.b16 %v94
  %v307 = vunpack.c.l.b16 %v95
  %v308 = vunpack.c.l.b16 %v96
  %v309 = vunpack.c.l.b16 %v97
  %v310 = vunpack.c.l.b16 %v98
  %v311 = vunpack.c.l.b16 %v99
  %v312 = vunpack.c.l.b16 %v100
  %v313 = vunpack.c.l.b16 %v101
  %v314 = vunpack.c.l.b16 %v102
  %v315 = vunpack.c.l.b16 %v103
  %v316 = vunpack.c.l.b16 %v104
  %v317 = vunpack.c.l.b16 %v105
  %v318 = vunpack.c.l.b16 %v106
  %v319 = vunpack.c.l.b16 %v107
  %v320 = vunpack.c.l.b16 %v108
  %v321 = vunpack.c.l.b16 %v109
  %v322 = vunpack.c.l.b16 %v110
  %v323 = vunpack.c.l.b16 %v111
  %v324 = vunpack.c.l.b16 %v112
  %v325 = vunpack.c.l.b16 %v113
  %v326 = vunpack.c.l.b16 %v114
  %v327 = vunpack.c.l.b16 %v115
  %v328 = vunpack.c.l.b16 %v116
  %v329 = vunpack.c.l.b16 %v117
  %v330 = vpack.c.b16 %v251, %v250
  %v331 = vpack.c.b16 %v253, %v252
  %v332 = vpack.c.b16 %v255, %v254
  %v333 = vpack.c.b16 %v257, %v256
  %v334 = vpack.c.b16 %v259, %v258
  %v335 = vpack.c.b16 %v261, %v260
  %v336 = vpack.c.b16 %v263, %v262
  %v337 = vpack.c.b16 %v265, %v264
  %v338 = vpack.c.b16 %v267, %v266
  %v339 = vpack.c.b16 %v269, %v268
  %v340 = vpack.c.b16 %v271, %v270
  %v341 = vpack.c.b16 %v273, %v272
  %v342 = vpack.c.b16 %v275, %v274
  %v343 = vpack.c.b16 %v277, %v276
  %v344 = vpack.c.b16 %v279, %v278
  %v345 = vpack.c.b16 %v281, %v280
  %v346 = vpack.c.b16 %v283, %v282
  %v347 = vpack.c.b16 %v285, %v284
  %v348 = vpack.c.b16 %v287, %v286
  %v349 = vpack.c.b16 %v289, %v288
  %v350 = vpack.c.b16 %v291, %v290
  %v351 = vpack.c.b16 %v293, %v292
  %v352 = vpack.c.b16 %v295, %v294
  %v353 = vpack.c.b16 %v297, %v296
  %v354 = vpack.c.b16 %v299, %v298
  %v355 = vpack.c.b16 %v301, %v300
  %v356 = vpack.c.b16 %v303, %v302
  %v357 = vpack.c.b16 %v305, %v304
  %v358 = vpack.c.b16 %v307, %v306
  %v359 = vpack.c.b16 %v309, %v308
  %v360 = vpack.c.b16 %v311, %v310
  %v361 = vpack.c.b16 %v313, %v312
  %v362 = vpack.c.b16 %v315, %v314
  %v363 = vpack.c.b16 %v317, %v316
  %v364 = vpack.c.b16 %v319, %v318
  %v365 = vpack.c.b16 %v321, %v320
  %v366 = vpack.c.b16 %v323, %v322
  %v367 = vpack.c.b16 %v325, %v324
  %v368 = vpack.c.b16 %v327, %v326
  %v369 = vpack.c.b16 %v329, %v328
  %410 = vmatpush.bf16.msra.mxu0 %v337
  %411 = vmatpush.bf16.msra.mxu0 %v336
  %412 = vmatpush.bf16.msra.mxu0 %v335
  %413 = vmatpush.bf16.msra.mxu0 %v334
  %414 = vmatpush.bf16.msra.mxu0 %v333
  %415 = vmatpush.bf16.msra.mxu0 %v332
  %416 = vmatpush.bf16.msra.mxu0 %v331
  %417 = vmatpush.bf16.msra.mxu0 %v330
  %418 = vmatmul.bf16.gmra.mxu0 %v150
  %v419 = vpop.f32.mrf.mxu0
  %v420 = vadd.f32 0.0, %v419
  %v421 = vpop.f32.mrf.mxu0
  %v422 = vadd.f32 0.0, %v421
  %423 = vmatmul.bf16.gmra.mxu0 %v155
  %v424 = vpop.f32.mrf.mxu0
  %v425 = vadd.f32 0.0, %v424
  %v426 = vpop.f32.mrf.mxu0
  %v427 = vadd.f32 0.0, %v426
  %428 = vdwg.mxu0
  %429 = vmatpush.bf16.msra.mxu0 %v345
  %430 = vmatpush.bf16.msra.mxu0 %v344
  %431 = vmatpush.bf16.msra.mxu0 %v343
  %432 = vmatpush.bf16.msra.mxu0 %v342
  %433 = vmatpush.bf16.msra.mxu0 %v341
  %434 = vmatpush.bf16.msra.mxu0 %v340
  %435 = vmatpush.bf16.msra.mxu0 %v339
  %436 = vmatpush.bf16.msra.mxu0 %v338
  %437 = vmatmul.bf16.gmra.mxu0 %v151
  %v438 = vpop.f32.mrf.mxu0
  %v439 = vadd.f32 %v420, %v438
  %v440 = vpop.f32.mrf.mxu0
  %v441 = vadd.f32 %v422, %v440
  %442 = vmatmul.bf16.gmra.mxu0 %v156
  %v443 = vpop.f32.mrf.mxu0
  %v444 = vadd.f32 %v425, %v443
  %v445 = vpop.f32.mrf.mxu0
  %v446 = vadd.f32 %v427, %v445
  %447 = vdwg.mxu0
  %448 = vmatpush.bf16.msra.mxu0 %v353
  %449 = vmatpush.bf16.msra.mxu0 %v352
  %450 = vmatpush.bf16.msra.mxu0 %v351
  %451 = vmatpush.bf16.msra.mxu0 %v350
  %452 = vmatpush.bf16.msra.mxu0 %v349
  %453 = vmatpush.bf16.msra.mxu0 %v348
  %454 = vmatpush.bf16.msra.mxu0 %v347
  %455 = vmatpush.bf16.msra.mxu0 %v346
  %456 = vmatmul.bf16.gmra.mxu0 %v152
  %v457 = vpop.f32.mrf.mxu0
  %v458 = vadd.f32 %v439, %v457
  %v459 = vpop.f32.mrf.mxu0
  %v460 = vadd.f32 %v441, %v459
  %461 = vmatmul.bf16.gmra.mxu0 %v157
  %v462 = vpop.f32.mrf.mxu0
  %v463 = vadd.f32 %v444, %v462
  %v464 = vpop.f32.mrf.mxu0
  %v465 = vadd.f32 %v446, %v464
  %466 = vdwg.mxu0
  %467 = vmatpush.bf16.msra.mxu0 %v361
  %468 = vmatpush.bf16.msra.mxu0 %v360
  %469 = vmatpush.bf16.msra.mxu0 %v359
  %470 = vmatpush.bf16.msra.mxu0 %v358
  %471 = vmatpush.bf16.msra.mxu0 %v357
  %472 = vmatpush.bf16.msra.mxu0 %v356
  %473 = vmatpush.bf16.msra.mxu0 %v355
  %474 = vmatpush.bf16.msra.mxu0 %v354
  %475 = vmatmul.bf16.gmra.mxu0 %v153
  %v476 = vpop.f32.mrf.mxu0
  %v477 = vadd.f32 %v458, %v476
  %v478 = vpop.f32.mrf.mxu0
  %v479 = vadd.f32 %v460, %v478
  %480 = vmatmul.bf16.gmra.mxu0 %v158
  %v481 = vpop.f32.mrf.mxu0
  %v482 = vadd.f32 %v463, %v481
  %v483 = vpop.f32.mrf.mxu0
  %v484 = vadd.f32 %v465, %v483
  %485 = vdwg.mxu0
  %486 = vmatpush.bf16.msra.mxu0 %v369
  %487 = vmatpush.bf16.msra.mxu0 %v368
  %488 = vmatpush.bf16.msra.mxu0 %v367
  %489 = vmatpush.bf16.msra.mxu0 %v366
  %490 = vmatpush.bf16.msra.mxu0 %v365
  %491 = vmatpush.bf16.msra.mxu0 %v364
  %492 = vmatpush.bf16.msra.mxu0 %v363
  %493 = vmatpush.bf16.msra.mxu0 %v362
  %494 = vmatmul.bf16.gmra.mxu0 %v154
  %v495 = vpop.f32.mrf.mxu0
  %v496 = vadd.f32 %v477, %v495
  %v497 = vpop.f32.mrf.mxu0
  %v498 = vadd.f32 %v479, %v497
  %499 = vmatmul.bf16.gmra.mxu0 %v159
  %v500 = vpop.f32.mrf.mxu0
  %v501 = vadd.f32 %v482, %v500
  %v502 = vpop.f32.mrf.mxu0
  %v503 = vadd.f32 %v484, %v502
  %504 = vdwg.mxu0
  %v505 = vadd.f32 %v22, %v496
  %v506 = vadd.f32 %v23, %v498
  %v507 = vadd.f32 %v24, %v501
  %v508 = vadd.f32 %v25, %v503
  %509 = vst [vmem:[#allocation2] sm:$0xff] %v505
  %510 = vst [vmem:[#allocation2 + $0x8] sm:$0xff] %v506
  %511 = vst [vmem:[#allocation2 + $0x10] sm:$0xff] %v507
  %512 = vst [vmem:[#allocation2 + $0x18] sm:$0xff] %v508
  // Predicated region
  $region18: #{forward.13} parent=0 // pred_check
    %p513 = pneg %p14
  $region19: #{forward.13} parent=0 // pred_check_branch
    %515 = sbr.rel (%p513) target = $region21
  $region20: #{forward.13} parent=0 // pred_region
    %v516 = vld [vmem:[#allocation2] sm:$0xff]
    %v517 = vld [vmem:[#allocation2 + $0x8] sm:$0xff]
    %v518 = vld [vmem:[#allocation2 + $0x10] sm:$0xff]
    %v519 = vld [vmem:[#allocation2 + $0x18] sm:$0xff]
    %v520 = vld [vmem:[%s2] sm:$0x1]
    %v522 = vperm.slane %v520, 0
    %v524 = vadd.f32 %v516, %v522
    %v525 = vadd.f32 %v517, %v522
    %v526 = vadd.f32 %v518, %v522
    %v527 = vadd.f32 %v519, %v522
    %vm528 = vcmp.gt.f32.partialorder %v524, 0.0
    %vm529 = vcmp.gt.f32.partialorder %v525, 0.0
    %vm530 = vcmp.gt.f32.partialorder %v526, 0.0
    %vm531 = vcmp.gt.f32.partialorder %v527, 0.0
    %v532 = vmul.f32 %v524, 0.2
    %v533 = vmul.f32 %v525, 0.2
    %v534 = vmul.f32 %v526, 0.2
    %v535 = vmul.f32 %v527, 0.2
    %v536 = vsel %vm528, %v524, %v532
    %v537 = vsel %vm529, %v525, %v533
    %v538 = vsel %vm530, %v526, %v534
    %v539 = vsel %vm531, %v527, %v535
    %v540 = vpack.c.bf16 %v536, %v536
    %v541 = vpack.c.bf16 %v537, %v537
    %v542 = vpack.c.bf16 %v538, %v538
    %v543 = vpack.c.bf16 %v539, %v539
    %544 = vst [vmem:[%s3] sm:$0xf] %v540
    %545 = vst [vmem:[%s3 + $0x4] sm:$0xf] %v541
    %546 = vst [vmem:[%s3 + $0x8] sm:$0xf] %v542
    %547 = vst [vmem:[%s3 + $0xc] sm:$0xf] %v543
  $region21: #{forward.13} parent=0 // pred_fallthru
    _
  // Predicated region
  $region22: #{forward.13} parent=0 // pred_check
    _
  $region23: #{forward.13} parent=0 // pred_check_branch
    %549 = sbr.rel (0) target = $region25
  $region24: #{forward.13} parent=0 // pred_region
    _
  $region25: #{forward.13} parent=0 // pred_fallthru
    _
  // Predicated region
  $region26: #{forward.13} parent=0 // pred_check
    _
  $region27: #{forward.13} parent=0 // pred_check_branch
    %551 = sbr.rel (0) target = $region29
  $region28: #{forward.13} parent=0 // pred_region
    _
  $region29: #{forward.13} parent=0 // pred_fallthru
    _

// kernel: forward.15
$region0: #{forward.15}
  #allocation0 [shape = 'u32[]', space=smem, size = 0x4, offset = 0x4, fixed_abs, tag = 'smem constant byte address 0x4 - core index']
  #allocation1 [shape = 'u32[72,128]{1,0:T(1,128)}', space=vmem, size = 0x9000, scoped, tag = 'internal scratch']
  #allocation2 [shape = 'f32[8,128]{1,0:T(8,128)}', space=vmem, size = 0x1000, scoped, tag = 'scratch operand']
  %s0 = inlined_call_operand.vmem [shape: bf16[8,1152], index: 0, kind: input, shape index: {}]
  %s1 = inlined_call_operand.vmem [shape: bf16[1152,128], index: 1, kind: input, shape index: {}]
  %s2 = inlined_call_operand.vmem [shape: f32[1,128], index: 2, kind: input, shape index: {}]
  %s3 = inlined_call_operand.vmem [shape: bf16[8,128], index: 3, kind: output, shape index: {}]
  %s4 = sld [smem:[#allocation0]]
  $region53: #{forward.15} parent=0
    _
  %s6 = ssub.s32 1, %s4
  %s7 = scalar_select 0, %s6, %s4
  loop: start=0, step=1, limit=5
  $region2: #{forward.15} parent=0 // loop_pre_header
    _
  $region3: #{forward.15} parent=0 // loop_header
    %s9 = sphi 0, %s13
    %p10 = scmp.ge.s32.totalorder %s9, 5
    %s16 = sphi 0, %s35
    %s17 = sphi 0, %s31
    %s18 = sphi 0, %s27
    %s19 = sphi 0, %s16
    %s20 = sphi 0, %s17
    %s21 = sphi 0, %s18
    %s22 = sphi 0, %s19
    %s23 = sphi 0, %s20
    %s24 = sphi 0, %s21
    %s40 = sphi 0, %s42
    %s43 = sphi 0, %s40
    %s44 = sphi 0, %s43
    %s60 = sphi 0, %s44
    %s68 = sphi 0, %s70
    %s71 = sphi 0, %s68
    %s72 = sphi 0, %s71
    %s88 = sphi 0, %s72
    %s94 = sphi 0, %s96
    %s97 = sphi 0, %s94
    %s98 = sphi 0, %s97
    %s114 = sphi 0, %s98
    %s122 = sphi 0, %s124
    %s125 = sphi 0, %s122
    %s126 = sphi 0, %s125
    %s142 = sphi 0, %s126
  $region4: #{forward.15} parent=0 // loop_header_branch
    %12 = sbr.rel (%p10) target = $region8
  $region5: #{forward.15} parent=0 // loop_body
    %s14 = ssub.s32 %s9, 1
    %s15 = ssub.s32 %s9, 2
    %s25 = sadd.s32 1, %s18
    %p26 = scmp.ge.s32.totalorder %s25, 3
    %s27 = scalar_select %p26, 0, %s25
    %s28 = sadd.s32 1, %s17
    %s29 = scalar_select %p26, %s28, %s17
    %p30 = scmp.ge.s32.totalorder %s29, 1
    %s31 = scalar_select %p30, 0, %s29
    %s32 = sadd.s32 1, %s16
    %s33 = scalar_select %p30, %s32, %s16
    %p34 = scmp.ge.s32.totalorder %s33, 1
    %s35 = scalar_select %p34, 0, %s33
    %s36 = ssub.s32 %s16, %s35
    %s37 = ssub.s32 %s18, %s27
    %s38 = sor.u32 %s36, %s37
    %p39 = scmp.eq.s32.totalorder %s38, 0
    %s41 = sadd.s32 %s40, 1
    %s42 = scalar_select %p39, %s40, %s41
    %p45 = pneg %p39
    %p46 = scmp.eq.s32.totalorder %s9, 2
    %p47 = por %p45, %p46
    %p48 = scmp.ne.s32.totalorder %s40, %s43
    %p49 = scmp.eq.s32.totalorder %s9, 0
    %p50 = por %p48, %p49
    %p51 = scmp.ne.s32.totalorder %s40, %s43
    %p52 = scmp.eq.s32.totalorder %s14, 2
    %p53 = por %p51, %p52
    %p54 = scmp.ne.s32.totalorder %s43, %s44
    %p55 = scmp.eq.s32.totalorder %s14, 0
    %p56 = por %p54, %p55
    %p57 = scmp.ne.s32.totalorder %s43, %s44
    %p58 = scmp.eq.s32.totalorder %s15, 2
    %p59 = por %p57, %p58
    %p61 = scmp.ne.s32.totalorder %s44, %s60
    %p62 = scmp.eq.s32.totalorder %s15, 0
    %p63 = por %p61, %p62
    %s64 = ssub.s32 %s18, %s27
    %s65 = ssub.s32 %s17, %s31
    %s66 = sor.u32 %s64, %s65
    %p67 = scmp.eq.s32.totalorder %s66, 0
    %s69 = sadd.s32 %s68, 1
    %s70 = scalar_select %p67, %s68, %s69
    %p73 = pneg %p67
    %p74 = scmp.eq.s32.totalorder %s9, 2
    %p75 = por %p73, %p74
    %p76 = scmp.ne.s32.totalorder %s68, %s71
    %p77 = scmp.eq.s32.totalorder %s9, 0
    %p78 = por %p76, %p77
    %p79 = scmp.ne.s32.totalorder %s68, %s71
    %p80 = scmp.eq.s32.totalorder %s14, 2
    %p81 = por %p79, %p80
    %p82 = scmp.ne.s32.totalorder %s71, %s72
    %p83 = scmp.eq.s32.totalorder %s14, 0
    %p84 = por %p82, %p83
    %p85 = scmp.ne.s32.totalorder %s71, %s72
    %p86 = scmp.eq.s32.totalorder %s15, 2
    %p87 = por %p85, %p86
    %p89 = scmp.ne.s32.totalorder %s72, %s88
    %p90 = scmp.eq.s32.totalorder %s15, 0
    %p91 = por %p89, %p90
    %s92 = ssub.s32 %s17, %s31
    %p93 = scmp.eq.s32.totalorder %s92, 0
    %s95 = sadd.s32 %s94, 1
    %s96 = scalar_select %p93, %s94, %s95
    %p99 = pneg %p93
    %p100 = scmp.eq.s32.totalorder %s9, 2
    %p101 = por %p99, %p100
    %p102 = scmp.ne.s32.totalorder %s94, %s97
    %p103 = scmp.eq.s32.totalorder %s9, 0
    %p104 = por %p102, %p103
    %p105 = scmp.ne.s32.totalorder %s94, %s97
    %p106 = scmp.eq.s32.totalorder %s14, 2
    %p107 = por %p105, %p106
    %p108 = scmp.ne.s32.totalorder %s97, %s98
    %p109 = scmp.eq.s32.totalorder %s14, 0
    %p110 = por %p108, %p109
    %p111 = scmp.ne.s32.totalorder %s97, %s98
    %p112 = scmp.eq.s32.totalorder %s15, 2
    %p113 = por %p111, %p112
    %p115 = scmp.ne.s32.totalorder %s98, %s114
    %p116 = scmp.eq.s32.totalorder %s15, 0
    %p117 = por %p115, %p116
    %s118 = ssub.s32 %s16, %s35
    %s119 = ssub.s32 %s17, %s31
    %s120 = sor.u32 %s118, %s119
    %p121 = scmp.eq.s32.totalorder %s120, 0
    %s123 = sadd.s32 %s122, 1
    %s124 = scalar_select %p121, %s122, %s123
    %p127 = pneg %p121
    %p128 = scmp.eq.s32.totalorder %s9, 2
    %p129 = por %p127, %p128
    %p130 = scmp.ne.s32.totalorder %s122, %s125
    %p131 = scmp.eq.s32.totalorder %s9, 0
    %p132 = por %p130, %p131
    %p133 = scmp.ne.s32.totalorder %s122, %s125
    %p134 = scmp.eq.s32.totalorder %s14, 2
    %p135 = por %p133, %p134
    %p136 = scmp.ne.s32.totalorder %s125, %s126
    %p137 = scmp.eq.s32.totalorder %s14, 0
    %p138 = por %p136, %p137
    %p139 = scmp.ne.s32.totalorder %s125, %s126
    %p140 = scmp.eq.s32.totalorder %s15, 2
    %p141 = por %p139, %p140
    %p143 = scmp.ne.s32.totalorder %s126, %s142
    %p144 = scmp.eq.s32.totalorder %s15, 0
    %p145 = por %p143, %p144
    %p146 = scmp.le.s32.totalorder 1, %s9
    %p147 = scmp.lt.s32.totalorder %s9, 4
    %p148 = pnand %p146, %p147
    %p149 = pneg %p148
    // Predicated region
    $region9: #{forward.15} parent=5 // pred_check
      _
    $region10: #{forward.15} parent=5 // pred_check_branch
      %151 = sbr.rel (%p148) target = $region12
    $region11: #{forward.15} parent=5 // pred_region
      %s152 = ssub.s32 %s9, 1
      // Predicated region
      $region13: #{forward.15} parent=11 // pred_check
        %p153 = pneg %p110
      $region14: #{forward.15} parent=11 // pred_check_branch
        %155 = sbr.rel (%p153) target = $region16
      $region15: #{forward.15} parent=11 // pred_region
        %p156 = scmp.lt.s32.totalorder %s20, 0
        %s157 = scalar_select %p156, %s20, 0
        %s158 = scalar_lea.vmem %s2, %s157
      $region16: #{forward.15} parent=11 // pred_fallthru
        _
    $region12: #{forward.15} parent=5 // pred_fallthru
      _
    %p159 = scmp.lt.s32.totalorder %s9, 3
    // Predicated region
    $region17: #{forward.15} parent=5 // pred_check
      %p160 = pneg %p159
    $region18: #{forward.15} parent=5 // pred_check_branch
      %162 = sbr.rel (%p160) target = $region20
    $region19: #{forward.15} parent=5 // pred_region
      // Predicated region
      $region21: #{forward.15} parent=19 // pred_check
        %p163 = pneg %p50
      $region22: #{forward.15} parent=19 // pred_check_branch
        %165 = sbr.rel (%p163) target = $region24
      $region23: #{forward.15} parent=19 // pred_region
        %s166 = smul.u32 3, %s18
        %p167 = scmp.lt.s32.totalorder %s16, 0
        %s168 = scalar_select %p167, %s16, 0
        %p169 = scmp.lt.s32.totalorder %s166, 8
        %s170 = scalar_select %p169, %s166, 8
        %s171 = smul.addr %s168, 9
        %s172 = sadd.s32 %s170, %s171
        %s173 = smul.addr %s172, 4
        %s174 = scalar_lea.vmem %s0, %s173
        %s175 = smul.u32 3, %s18
      $region24: #{forward.15} parent=19 // pred_fallthru
        _
      // Predicated region
      $region25: #{forward.15} parent=19 // pred_check
        %p176 = pneg %p78
      $region26: #{forward.15} parent=19 // pred_check_branch
        %178 = sbr.rel (%p176) target = $region28
      $region27: #{forward.15} parent=19 // pred_region
        %s179 = smul.u32 48, %s18
        %p180 = scmp.lt.s32.totalorder %s179, 143
        %s181 = scalar_select %p180, %s179, 143
        %p182 = scmp.lt.s32.totalorder %s17, 0
        %s183 = scalar_select %p182, %s17, 0
        %s184 = sadd.s32 %s183, %s181
        %s185 = smul.addr %s184, 4
        %s186 = scalar_lea.vmem %s1, %s185
        %s187 = smul.u32 48, %s18
      $region28: #{forward.15} parent=19 // pred_fallthru
        _
    $region20: #{forward.15} parent=5 // pred_fallthru
      _
    %p188 = scmp.le.s32.totalorder 1, %s9
    %p189 = scmp.lt.s32.totalorder %s9, 4
    %p190 = pnand %p188, %p189
    %p191 = pneg %p190
    // Predicated region
    $region29: #{forward.15} parent=5 // pred_check
      _
    $region30: #{forward.15} parent=5 // pred_check_branch
      %193 = sbr.rel (%p190) target = $region32
    $region31: #{forward.15} parent=5 // pred_region
      %s194 = ssub.s32 %s9, 1
      %s195 = smul.u32 3, %s21
      %p196 = scmp.lt.s32.totalorder %s19, 0
      %s197 = scalar_select %p196, %s19, 0
      %p198 = scmp.lt.s32.totalorder %s195, 8
      %s199 = scalar_select %p198, %s195, 8
      %s200 = smul.addr %s197, 9
      %s201 = sadd.s32 %s199, %s200
      %s202 = smul.addr %s201, 4
      %s203 = scalar_lea.vmem %s0, %s202
      %p204 = pneg %p56
      %p205 = pneg %p53
      %s206 = smul.u32 48, %s21
      %p207 = scmp.lt.s32.totalorder %s206, 143
      %s208 = scalar_select %p207, %s206, 143
      %p209 = scmp.lt.s32.totalorder %s20, 0
      %s210 = scalar_select %p209, %s20, 0
      %s211 = sadd.s32 %s210, %s208
      %s212 = smul.addr %s211, 4
      %s213 = scalar_lea.vmem %s1, %s212
      %p214 = pneg %p84
      %p215 = pneg %p81
      %p216 = scmp.lt.s32.totalorder %s20, 0
      %s217 = scalar_select %p216, %s20, 0
      %s218 = scalar_lea.vmem %s2, %s217
      %p219 = pneg %p110
      %p220 = pneg %p107
      %p221 = pneg %p138
      %p222 = pneg %p135
      %p223 = scmp.lt.s32.totalorder %s19, 0
      %s224 = scalar_select %p223, %s19, 0
      %p225 = scmp.lt.s32.totalorder %s20, 0
      %s226 = scalar_select %p225, %s20, 0
      %s227 = sadd.s32 %s226, %s224
      %s228 = smul.addr %s227, 4
      %s229 = scalar_lea.vmem %s3, %s228
      %s230 = smul.u32 3, %s21
      %p231 = scmp.lt.s32.totalorder %s19, 0
      %s232 = scalar_select %p231, %s19, 0
      %p233 = scmp.lt.s32.totalorder %s230, 8
      %s234 = scalar_select %p233, %s230, 8
      %s235 = smul.addr %s232, 9
      %s236 = sadd.s32 %s234, %s235
      %s237 = smul.addr %s236, 4
      %s238 = scalar_lea.vmem %s0, %s237
      %s239 = smul.u32 3, %s21
      %s240 = smul.u32 48, %s21
      %p241 = scmp.lt.s32.totalorder %s240, 143
      %s242 = scalar_select %p241, %s240, 143
      %p243 = scmp.lt.s32.totalorder %s20, 0
      %s244 = scalar_select %p243, %s20, 0
      %s245 = sadd.s32 %s244, %s242
      %s246 = smul.addr %s245, 4
      %s247 = scalar_lea.vmem %s1, %s246
      %s248 = smul.u32 48, %s21
      %p249 = scmp.lt.s32.totalorder %s20, 0
      %s250 = scalar_select %p249, %s20, 0
      %s251 = scalar_lea.vmem %s2, %s250
      %p252 = scmp.lt.s32.totalorder %s19, 0
      %s253 = scalar_select %p252, %s19, 0
      %p254 = scmp.lt.s32.totalorder %s20, 0
      %s255 = scalar_select %p254, %s20, 0
      %s256 = sadd.s32 %s255, %s253
      %s257 = smul.addr %s256, 4
      %s258 = scalar_lea.vmem %s3, %s257
      %p259 = scmp.eq.s32.totalorder %s21, 0
      // Predicated region
      $region33: #{forward.15} parent=31 // pred_check
        %p260 = pneg %p259
      $region34: #{forward.15} parent=31 // pred_check_branch
        %262 = sbr.rel (%p260) target = $region36
      $region35: #{forward.15} parent=31 // pred_region
        %263 = vst [vmem:[#allocation2] sm:$0xff] 0.0
      $region36: #{forward.15} parent=31 // pred_fallthru
        _
      %v264 = vld [vmem:[#allocation2] sm:$0xff]
      %v265 = vld [vmem:[%s238] sm:$0xff]
      %v266 = vld [vmem:[%s238 + $0x8] sm:$0xf]
      %v267 = vld [vmem:[%s247] sm:$0xf]
      %v268 = vld [vmem:[%s247 + $0x4] sm:$0xf]
      %v269 = vld [vmem:[%s247 + $0x8] sm:$0xf]
      %v270 = vld [vmem:[%s247 + $0xc] sm:$0xf]
      %v271 = vld [vmem:[%s247 + $0x10] sm:$0xf]
      %v272 = vld [vmem:[%s247 + $0x14] sm:$0xf]
      %v273 = vld [vmem:[%s247 + $0x18] sm:$0xf]
      %v274 = vld [vmem:[%s247 + $0x1c] sm:$0xf]
      %v275 = vld [vmem:[%s247 + $0x20] sm:$0xf]
      %v276 = vld [vmem:[%s247 + $0x24] sm:$0xf]
      %v277 = vld [vmem:[%s247 + $0x28] sm:$0xf]
      %v278 = vld [vmem:[%s247 + $0x2c] sm:$0xf]
      %v279 = vld [vmem:[%s247 + $0x30] sm:$0xf]
      %v280 = vld [vmem:[%s247 + $0x34] sm:$0xf]
      %v281 = vld [vmem:[%s247 + $0x38] sm:$0xf]
      %v282 = vld [vmem:[%s247 + $0x3c] sm:$0xf]
      %v283 = vld [vmem:[%s247 + $0x40] sm:$0xf]
      %v284 = vld [vmem:[%s247 + $0x44] sm:$0xf]
      %v285 = vld [vmem:[%s247 + $0x48] sm:$0xf]
      %v286 = vld [vmem:[%s247 + $0x4c] sm:$0xf]
      %v287 = vld [vmem:[%s247 + $0x50] sm:$0xf]
      %v288 = vld [vmem:[%s247 + $0x54] sm:$0xf]
      %v289 = vld [vmem:[%s247 + $0x58] sm:$0xf]
      %v290 = vld [vmem:[%s247 + $0x5c] sm:$0xf]
      %v291 = vld [vmem:[%s247 + $0x60] sm:$0xf]
      %v292 = vld [vmem:[%s247 + $0x64] sm:$0xf]
      %v293 = vld [vmem:[%s247 + $0x68] sm:$0xf]
      %v294 = vld [vmem:[%s247 + $0x6c] sm:$0xf]
      %v295 = vld [vmem:[%s247 + $0x70] sm:$0xf]
      %v296 = vld [vmem:[%s247 + $0x74] sm:$0xf]
      %v297 = vld [vmem:[%s247 + $0x78] sm:$0xf]
      %v298 = vld [vmem:[%s247 + $0x7c] sm:$0xf]
      %v299 = vld [vmem:[%s247 + $0x80] sm:$0xf]
      %v300 = vld [vmem:[%s247 + $0x84] sm:$0xf]
      %v301 = vld [vmem:[%s247 + $0x88] sm:$0xf]
      %v302 = vld [vmem:[%s247 + $0x8c] sm:$0xf]
      %v303 = vld [vmem:[%s247 + $0x90] sm:$0xf]
      %v304 = vld [vmem:[%s247 + $0x94] sm:$0xf]
      %v305 = vld [vmem:[%s247 + $0x98] sm:$0xf]
      %v306 = vld [vmem:[%s247 + $0x9c] sm:$0xf]
      %v307 = vld [vmem:[%s247 + $0xa0] sm:$0xf]
      %v308 = vld [vmem:[%s247 + $0xa4] sm:$0xf]
      %v309 = vld [vmem:[%s247 + $0xa8] sm:$0xf]
      %v310 = vld [vmem:[%s247 + $0xac] sm:$0xf]
      %v311 = vld [vmem:[%s247 + $0xb0] sm:$0xf]
      %v312 = vld [vmem:[%s247 + $0xb4] sm:$0xf]
      %v313 = vld [vmem:[%s247 + $0xb8] sm:$0xf]
      %v314 = vld [vmem:[%s247 + $0xbc] sm:$0xf]
      %v317 = vunpack.c.l.b16 %v265
      %v318 = vunpack.c.h.b16 %v265
      %v319 = vunpack.c.l.b16 %v266
      %v320 = vpack.c.b16 %v317, %v317
      %v321 = vpack.c.b16 %v318, %v318
      %v322 = vpack.c.b16 %v319, %v319
      %v374 = vunpack.c.l.b16 %v267
      %v375 = vunpack.c.l.b16 %v268
      %v376 = vunpack.c.l.b16 %v269
      %v377 = vunpack.c.l.b16 %v270
      %v378 = vunpack.c.l.b16 %v271
      %v379 = vunpack.c.l.b16 %v272
      %v380 = vunpack.c.l.b16 %v273
      %v381 = vunpack.c.l.b16 %v274
      %v382 = vunpack.c.l.b16 %v275
      %v383 = vunpack.c.l.b16 %v276
      %v384 = vunpack.c.l.b16 %v277
      %v385 = vunpack.c.l.b16 %v278
      %v386 = vunpack.c.l.b16 %v279
      %v387 = vunpack.c.l.b16 %v280
      %v388 = vunpack.c.l.b16 %v281
      %v389 = vunpack.c.l.b16 %v282
      %v390 = vunpack.c.l.b16 %v283
      %v391 = vunpack.c.l.b16 %v284
      %v392 = vunpack.c.l.b16 %v285
      %v393 = vunpack.c.l.b16 %v286
      %v394 = vunpack.c.l.b16 %v287
      %v395 = vunpack.c.l.b16 %v288
      %v396 = vunpack.c.l.b16 %v289
      %v397 = vunpack.c.l.b16 %v290
      %v398 = vunpack.c.l.b16 %v291
      %v399 = vunpack.c.l.b16 %v292
      %v400 = vunpack.c.l.b16 %v293
      %v401 = vunpack.c.l.b16 %v294
      %v402 = vunpack.c.l.b16 %v295
      %v403 = vunpack.c.l.b16 %v296
      %v404 = vunpack.c.l.b16 %v297
      %v405 = vunpack.c.l.b16 %v298
      %v406 = vunpack.c.l.b16 %v299
      %v407 = vunpack.c.l.b16 %v300
      %v408 = vunpack.c.l.b16 %v301
      %v409 = vunpack.c.l.b16 %v302
      %v410 = vunpack.c.l.b16 %v303
      %v411 = vunpack.c.l.b16 %v304
      %v412 = vunpack.c.l.b16 %v305
      %v413 = vunpack.c.l.b16 %v306
      %v414 = vunpack.c.l.b16 %v307
      %v415 = vunpack.c.l.b16 %v308
      %v416 = vunpack.c.l.b16 %v309
      %v417 = vunpack.c.l.b16 %v310
      %v418 = vunpack.c.l.b16 %v311
      %v419 = vunpack.c.l.b16 %v312
      %v420 = vunpack.c.l.b16 %v313
      %v421 = vunpack.c.l.b16 %v314
      %v422 = vpack.c.b16 %v375, %v374
      %v423 = vpack.c.b16 %v377, %v376
      %v424 = vpack.c.b16 %v379, %v378
      %v425 = vpack.c.b16 %v381, %v380
      %v426 = vpack.c.b16 %v383, %v382
      %v427 = vpack.c.b16 %v385, %v384
      %v428 = vpack.c.b16 %v387, %v386
      %v429 = vpack.c.b16 %v389, %v388
      %v430 = vpack.c.b16 %v391, %v390
      %v431 = vpack.c.b16 %v393, %v392
      %v432 = vpack.c.b16 %v395, %v394
      %v433 = vpack.c.b16 %v397, %v396
      %v434 = vpack.c.b16 %v399, %v398
      %v435 = vpack.c.b16 %v401, %v400
      %v436 = vpack.c.b16 %v403, %v402
      %v437 = vpack.c.b16 %v405, %v404
      %v438 = vpack.c.b16 %v407, %v406
      %v439 = vpack.c.b16 %v409, %v408
      %v440 = vpack.c.b16 %v411, %v410
      %v441 = vpack.c.b16 %v413, %v412
      %v442 = vpack.c.b16 %v415, %v414
      %v443 = vpack.c.b16 %v417, %v416
      %v444 = vpack.c.b16 %v419, %v418
      %v445 = vpack.c.b16 %v421, %v420
      %470 = vmatpush.bf16.msra.mxu0 %v429
      %471 = vmatpush.bf16.msra.mxu0 %v428
      %472 = vmatpush.bf16.msra.mxu0 %v427
      %473 = vmatpush.bf16.msra.mxu0 %v426
      %474 = vmatpush.bf16.msra.mxu0 %v425
      %475 = vmatpush.bf16.msra.mxu0 %v424
      %476 = vmatpush.bf16.msra.mxu0 %v423
      %477 = vmatpush.bf16.msra.mxu0 %v422
      %478 = vmatmul.bf16.gmra.mxu0 %v320
      %v479 = vpop.f32.mrf.mxu0
      %v480 = vadd.f32 0.0, %v479
      %v481 = vpop.f32.mrf.mxu0
      %482 = vdwg.mxu0
      %483 = vmatpush.bf16.msra.mxu0 %v437
      %484 = vmatpush.bf16.msra.mxu0 %v436
      %485 = vmatpush.bf16.msra.mxu0 %v435
      %486 = vmatpush.bf16.msra.mxu0 %v434
      %487 = vmatpush.bf16.msra.mxu0 %v433
      %488 = vmatpush.bf16.msra.mxu0 %v432
      %489 = vmatpush.bf16.msra.mxu0 %v431
      %490 = vmatpush.bf16.msra.mxu0 %v430
      %491 = vmatmul.bf16.gmra.mxu0 %v321
      %v492 = vpop.f32.mrf.mxu0
      %v493 = vadd.f32 %v480, %v492
      %v494 = vpop.f32.mrf.mxu0
      %495 = vdwg.mxu0
      %496 = vmatpush.bf16.msra.mxu0 %v445
      %497 = vmatpush.bf16.msra.mxu0 %v444
      %498 = vmatpush.bf16.msra.mxu0 %v443
      %499 = vmatpush.bf16.msra.mxu0 %v442
      %500 = vmatpush.bf16.msra.mxu0 %v441
      %501 = vmatpush.bf16.msra.mxu0 %v440
      %502 = vmatpush.bf16.msra.mxu0 %v439
      %503 = vmatpush.bf16.msra.mxu0 %v438
      %504 = vmatmul.bf16.gmra.mxu0 %v322
      %v505 = vpop.f32.mrf.mxu0
      %v506 = vadd.f32 %v493, %v505
      %v507 = vpop.f32.mrf.mxu0
      %508 = vdwg.mxu0
      %v509 = vadd.f32 %v264, %v506
      %510 = vst [vmem:[#allocation2] sm:$0xff] %v509
      %p511 = scmp.eq.s32.totalorder %s21, 2
      // Predicated region
      $region37: #{forward.15} parent=31 // pred_check
        %p512 = pneg %p511
      $region38: #{forward.15} parent=31 // pred_check_branch
        %514 = sbr.rel (%p512) target = $region40
      $region39: #{forward.15} parent=31 // pred_region
        %v515 = vld [vmem:[#allocation2] sm:$0xff]
        %v516 = vld [vmem:[%s251] sm:$0x1]
        %v518 = vperm.slane %v516, 0
        %v520 = vadd.f32 %v515, %v518
        %vm521 = vcmp.gt.f32.partialorder %v520, 0.0
        %v522 = vmul.f32 %v520, 0.2
        %v523 = vsel %vm521, %v520, %v522
        %v524 = vpack.c.bf16 %v523, %v523
        %525 = vst [vmem:[%s258] sm:$0xf] %v524
      $region40: #{forward.15} parent=31 // pred_fallthru
        _
      %p526 = scmp.lt.s32.totalorder %s19, 0
      %s527 = scalar_select %p526, %s19, 0
      %p528 = scmp.lt.s32.totalorder %s20, 0
      %s529 = scalar_select %p528, %s20, 0
      %s530 = sadd.s32 %s529, %s527
      %s531 = smul.addr %s530, 4
      %s532 = scalar_lea.vmem %s3, %s531
      // Predicated region
      $region41: #{forward.15} parent=31 // pred_check
        %p533 = pneg %p135
      $region42: #{forward.15} parent=31 // pred_check_branch
        %535 = sbr.rel (%p533) target = $region44
      $region43: #{forward.15} parent=31 // pred_region
        _
      $region44: #{forward.15} parent=31 // pred_fallthru
        _
      // Predicated region
      $region45: #{forward.15} parent=31 // pred_check
        %p536 = pneg %p135
      $region46: #{forward.15} parent=31 // pred_check_branch
        %538 = sbr.rel (%p536) target = $region48
      $region47: #{forward.15} parent=31 // pred_region
        %p539 = scmp.lt.s32.totalorder %s19, 0
        %s540 = scalar_select %p539, %s19, 0
        %p541 = scmp.lt.s32.totalorder %s20, 0
        %s542 = scalar_select %p541, %s20, 0
        %s543 = sadd.s32 %s542, %s540
        %s544 = smul.addr %s543, 4
        %s545 = scalar_lea.vmem %s3, %s544
      $region48: #{forward.15} parent=31 // pred_fallthru
        _
    $region32: #{forward.15} parent=5 // pred_fallthru
      _
    %p546 = scmp.le.s32.totalorder 2, %s9
    // Predicated region
    $region49: #{forward.15} parent=5 // pred_check
      %p547 = pneg %p546
    $region50: #{forward.15} parent=5 // pred_check_branch
      %549 = sbr.rel (%p547) target = $region52
    $region51: #{forward.15} parent=5 // pred_region
      %s550 = ssub.s32 %s9, 2
    $region52: #{forward.15} parent=5 // pred_fallthru
      _
  $region6: #{forward.15} parent=0 // loop_footer
    %s13 = sadd.s32 1, %s9
  $region7: #{forward.15} parent=0 // loop_footer_branch
    %8 = sbr.rel target = $region3
  $region8: #{forward.15} parent=0 // loop_exit
    _

// kernel: forward.16
$region0: #{forward.16}
  #allocation0 [shape = 'u32[]', space=smem, size = 0x4, offset = 0x4, fixed_abs, tag = 'smem constant byte address 0x4 - core index']
  #allocation1 [shape = 'u32[72,128]{1,0:T(1,128)}', space=vmem, size = 0x9000, scoped, tag = 'internal scratch']
  #allocation2 [shape = 'f32[8,256]{1,0:T(8,128)}', space=vmem, size = 0x2000, scoped, tag = 'scratch operand']
  %s0 = inlined_call_operand.vmem [shape: bf16[8,1152], index: 0, kind: input, shape index: {}]
  %s1 = inlined_call_operand.vmem [shape: bf16[1152,256], index: 1, kind: input, shape index: {}]
  %s2 = inlined_call_operand.vmem [shape: f32[1,256], index: 2, kind: input, shape index: {}]
  %s3 = inlined_call_operand.vmem [shape: bf16[8,256], index: 3, kind: output, shape index: {}]
  %s4 = sld [smem:[#allocation0]]
  $region53: #{forward.16} parent=0
    _
  %s6 = ssub.s32 1, %s4
  %s7 = scalar_select 0, %s6, %s4
  loop: start=0, step=1, limit=5
  $region2: #{forward.16} parent=0 // loop_pre_header
    _
  $region3: #{forward.16} parent=0 // loop_header
    %s9 = sphi 0, %s13
    %p10 = scmp.ge.s32.totalorder %s9, 5
    %s16 = sphi 0, %s35
    %s17 = sphi 0, %s31
    %s18 = sphi 0, %s27
    %s19 = sphi 0, %s16
    %s20 = sphi 0, %s17
    %s21 = sphi 0, %s18
    %s22 = sphi 0, %s19
    %s23 = sphi 0, %s20
    %s24 = sphi 0, %s21
    %s40 = sphi 0, %s42
    %s43 = sphi 0, %s40
    %s44 = sphi 0, %s43
    %s60 = sphi 0, %s44
    %s68 = sphi 0, %s70
    %s71 = sphi 0, %s68
    %s72 = sphi 0, %s71
    %s88 = sphi 0, %s72
    %s94 = sphi 0, %s96
    %s97 = sphi 0, %s94
    %s98 = sphi 0, %s97
    %s114 = sphi 0, %s98
    %s122 = sphi 0, %s124
    %s125 = sphi 0, %s122
    %s126 = sphi 0, %s125
    %s142 = sphi 0, %s126
  $region4: #{forward.16} parent=0 // loop_header_branch
    %12 = sbr.rel (%p10) target = $region8
  $region5: #{forward.16} parent=0 // loop_body
    %s14 = ssub.s32 %s9, 1
    %s15 = ssub.s32 %s9, 2
    %s25 = sadd.s32 1, %s18
    %p26 = scmp.ge.s32.totalorder %s25, 3
    %s27 = scalar_select %p26, 0, %s25
    %s28 = sadd.s32 1, %s17
    %s29 = scalar_select %p26, %s28, %s17
    %p30 = scmp.ge.s32.totalorder %s29, 1
    %s31 = scalar_select %p30, 0, %s29
    %s32 = sadd.s32 1, %s16
    %s33 = scalar_select %p30, %s32, %s16
    %p34 = scmp.ge.s32.totalorder %s33, 1
    %s35 = scalar_select %p34, 0, %s33
    %s36 = ssub.s32 %s16, %s35
    %s37 = ssub.s32 %s18, %s27
    %s38 = sor.u32 %s36, %s37
    %p39 = scmp.eq.s32.totalorder %s38, 0
    %s41 = sadd.s32 %s40, 1
    %s42 = scalar_select %p39, %s40, %s41
    %p45 = pneg %p39
    %p46 = scmp.eq.s32.totalorder %s9, 2
    %p47 = por %p45, %p46
    %p48 = scmp.ne.s32.totalorder %s40, %s43
    %p49 = scmp.eq.s32.totalorder %s9, 0
    %p50 = por %p48, %p49
    %p51 = scmp.ne.s32.totalorder %s40, %s43
    %p52 = scmp.eq.s32.totalorder %s14, 2
    %p53 = por %p51, %p52
    %p54 = scmp.ne.s32.totalorder %s43, %s44
    %p55 = scmp.eq.s32.totalorder %s14, 0
    %p56 = por %p54, %p55
    %p57 = scmp.ne.s32.totalorder %s43, %s44
    %p58 = scmp.eq.s32.totalorder %s15, 2
    %p59 = por %p57, %p58
    %p61 = scmp.ne.s32.totalorder %s44, %s60
    %p62 = scmp.eq.s32.totalorder %s15, 0
    %p63 = por %p61, %p62
    %s64 = ssub.s32 %s18, %s27
    %s65 = ssub.s32 %s17, %s31
    %s66 = sor.u32 %s64, %s65
    %p67 = scmp.eq.s32.totalorder %s66, 0
    %s69 = sadd.s32 %s68, 1
    %s70 = scalar_select %p67, %s68, %s69
    %p73 = pneg %p67
    %p74 = scmp.eq.s32.totalorder %s9, 2
    %p75 = por %p73, %p74
    %p76 = scmp.ne.s32.totalorder %s68, %s71
    %p77 = scmp.eq.s32.totalorder %s9, 0
    %p78 = por %p76, %p77
    %p79 = scmp.ne.s32.totalorder %s68, %s71
    %p80 = scmp.eq.s32.totalorder %s14, 2
    %p81 = por %p79, %p80
    %p82 = scmp.ne.s32.totalorder %s71, %s72
    %p83 = scmp.eq.s32.totalorder %s14, 0
    %p84 = por %p82, %p83
    %p85 = scmp.ne.s32.totalorder %s71, %s72
    %p86 = scmp.eq.s32.totalorder %s15, 2
    %p87 = por %p85, %p86
    %p89 = scmp.ne.s32.totalorder %s72, %s88
    %p90 = scmp.eq.s32.totalorder %s15, 0
    %p91 = por %p89, %p90
    %s92 = ssub.s32 %s17, %s31
    %p93 = scmp.eq.s32.totalorder %s92, 0
    %s95 = sadd.s32 %s94, 1
    %s96 = scalar_select %p93, %s94, %s95
    %p99 = pneg %p93
    %p100 = scmp.eq.s32.totalorder %s9, 2
    %p101 = por %p99, %p100
    %p102 = scmp.ne.s32.totalorder %s94, %s97
    %p103 = scmp.eq.s32.totalorder %s9, 0
    %p104 = por %p102, %p103
    %p105 = scmp.ne.s32.totalorder %s94, %s97
    %p106 = scmp.eq.s32.totalorder %s14, 2
    %p107 = por %p105, %p106
    %p108 = scmp.ne.s32.totalorder %s97, %s98
    %p109 = scmp.eq.s32.totalorder %s14, 0
    %p110 = por %p108, %p109
    %p111 = scmp.ne.s32.totalorder %s97, %s98
    %p112 = scmp.eq.s32.totalorder %s15, 2
    %p113 = por %p111, %p112
    %p115 = scmp.ne.s32.totalorder %s98, %s114
    %p116 = scmp.eq.s32.totalorder %s15, 0
    %p117 = por %p115, %p116
    %s118 = ssub.s32 %s16, %s35
    %s119 = ssub.s32 %s17, %s31
    %s120 = sor.u32 %s118, %s119
    %p121 = scmp.eq.s32.totalorder %s120, 0
    %s123 = sadd.s32 %s122, 1
    %s124 = scalar_select %p121, %s122, %s123
    %p127 = pneg %p121
    %p128 = scmp.eq.s32.totalorder %s9, 2
    %p129 = por %p127, %p128
    %p130 = scmp.ne.s32.totalorder %s122, %s125
    %p131 = scmp.eq.s32.totalorder %s9, 0
    %p132 = por %p130, %p131
    %p133 = scmp.ne.s32.totalorder %s122, %s125
    %p134 = scmp.eq.s32.totalorder %s14, 2
    %p135 = por %p133, %p134
    %p136 = scmp.ne.s32.totalorder %s125, %s126
    %p137 = scmp.eq.s32.totalorder %s14, 0
    %p138 = por %p136, %p137
    %p139 = scmp.ne.s32.totalorder %s125, %s126
    %p140 = scmp.eq.s32.totalorder %s15, 2
    %p141 = por %p139, %p140
    %p143 = scmp.ne.s32.totalorder %s126, %s142
    %p144 = scmp.eq.s32.totalorder %s15, 0
    %p145 = por %p143, %p144
    %p146 = scmp.le.s32.totalorder 1, %s9
    %p147 = scmp.lt.s32.totalorder %s9, 4
    %p148 = pnand %p146, %p147
    %p149 = pneg %p148
    // Predicated region
    $region9: #{forward.16} parent=5 // pred_check
      _
    $region10: #{forward.16} parent=5 // pred_check_branch
      %151 = sbr.rel (%p148) target = $region12
    $region11: #{forward.16} parent=5 // pred_region
      %s152 = ssub.s32 %s9, 1
      // Predicated region
      $region13: #{forward.16} parent=11 // pred_check
        %p153 = pneg %p110
      $region14: #{forward.16} parent=11 // pred_check_branch
        %155 = sbr.rel (%p153) target = $region16
      $region15: #{forward.16} parent=11 // pred_region
        %s156 = smul.u32 2, %s20
        %p157 = scmp.lt.s32.totalorder %s156, 1
        %s158 = scalar_select %p157, %s156, 1
        %s159 = scalar_lea.vmem %s2, %s158
        %s160 = smul.u32 2, %s20
      $region16: #{forward.16} parent=11 // pred_fallthru
        _
    $region12: #{forward.16} parent=5 // pred_fallthru
      _
    %p161 = scmp.lt.s32.totalorder %s9, 3
    // Predicated region
    $region17: #{forward.16} parent=5 // pred_check
      %p162 = pneg %p161
    $region18: #{forward.16} parent=5 // pred_check_branch
      %164 = sbr.rel (%p162) target = $region20
    $region19: #{forward.16} parent=5 // pred_region
      // Predicated region
      $region21: #{forward.16} parent=19 // pred_check
        %p165 = pneg %p50
      $region22: #{forward.16} parent=19 // pred_check_branch
        %167 = sbr.rel (%p165) target = $region24
      $region23: #{forward.16} parent=19 // pred_region
        %s168 = smul.u32 3, %s18
        %p169 = scmp.lt.s32.totalorder %s16, 0
        %s170 = scalar_select %p169, %s16, 0
        %p171 = scmp.lt.s32.totalorder %s168, 8
        %s172 = scalar_select %p171, %s168, 8
        %s173 = smul.addr %s170, 9
        %s174 = sadd.s32 %s172, %s173
        %s175 = smul.addr %s174, 4
        %s176 = scalar_lea.vmem %s0, %s175
        %s177 = smul.u32 3, %s18
      $region24: #{forward.16} parent=19 // pred_fallthru
        _
      // Predicated region
      $region25: #{forward.16} parent=19 // pred_check
        %p178 = pneg %p78
      $region26: #{forward.16} parent=19 // pred_check_branch
        %180 = sbr.rel (%p178) target = $region28
      $region27: #{forward.16} parent=19 // pred_region
        %s181 = smul.u32 48, %s18
        %s182 = smul.u32 2, %s17
        %p183 = scmp.lt.s32.totalorder %s181, 143
        %s184 = scalar_select %p183, %s181, 143
        %p185 = scmp.lt.s32.totalorder %s182, 1
        %s186 = scalar_select %p185, %s182, 1
        %s187 = smul.addr %s184, 2
        %s188 = sadd.s32 %s186, %s187
        %s189 = smul.addr %s188, 4
        %s190 = scalar_lea.vmem %s1, %s189
        %s191 = smul.u32 48, %s18
        %s192 = smul.u32 2, %s17
      $region28: #{forward.16} parent=19 // pred_fallthru
        _
    $region20: #{forward.16} parent=5 // pred_fallthru
      _
    %p193 = scmp.le.s32.totalorder 1, %s9
    %p194 = scmp.lt.s32.totalorder %s9, 4
    %p195 = pnand %p193, %p194
    %p196 = pneg %p195
    // Predicated region
    $region29: #{forward.16} parent=5 // pred_check
      _
    $region30: #{forward.16} parent=5 // pred_check_branch
      %198 = sbr.rel (%p195) target = $region32
    $region31: #{forward.16} parent=5 // pred_region
      %s199 = ssub.s32 %s9, 1
      %s200 = smul.u32 3, %s21
      %p201 = scmp.lt.s32.totalorder %s19, 0
      %s202 = scalar_select %p201, %s19, 0
      %p203 = scmp.lt.s32.totalorder %s200, 8
      %s204 = scalar_select %p203, %s200, 8
      %s205 = smul.addr %s202, 9
      %s206 = sadd.s32 %s204, %s205
      %s207 = smul.addr %s206, 4
      %s208 = scalar_lea.vmem %s0, %s207
      %p209 = pneg %p56
      %p210 = pneg %p53
      %s211 = smul.u32 48, %s21
      %s212 = smul.u32 2, %s20
      %p213 = scmp.lt.s32.totalorder %s211, 143
      %s214 = scalar_select %p213, %s211, 143
      %p215 = scmp.lt.s32.totalorder %s212, 1
      %s216 = scalar_select %p215, %s212, 1
      %s217 = smul.addr %s214, 2
      %s218 = sadd.s32 %s216, %s217
      %s219 = smul.addr %s218, 4
      %s220 = scalar_lea.vmem %s1, %s219
      %p221 = pneg %p84
      %p222 = pneg %p81
      %s223 = smul.u32 2, %s20
      %p224 = scmp.lt.s32.totalorder %s223, 1
      %s225 = scalar_select %p224, %s223, 1
      %s226 = scalar_lea.vmem %s2, %s225
      %p227 = pneg %p110
      %p228 = pneg %p107
      %p229 = pneg %p138
      %p230 = pneg %p135
      %s231 = smul.u32 2, %s20
      %p232 = scmp.lt.s32.totalorder %s19, 0
      %s233 = scalar_select %p232, %s19, 0
      %p234 = scmp.lt.s32.totalorder %s231, 1
      %s235 = scalar_select %p234, %s231, 1
      %s236 = smul.addr %s233, 2
      %s237 = sadd.s32 %s235, %s236
      %s238 = smul.addr %s237, 4
      %s239 = scalar_lea.vmem %s3, %s238
      %s240 = smul.u32 3, %s21
      %p241 = scmp.lt.s32.totalorder %s19, 0
      %s242 = scalar_select %p241, %s19, 0
      %p243 = scmp.lt.s32.totalorder %s240, 8
      %s244 = scalar_select %p243, %s240, 8
      %s245 = smul.addr %s242, 9
      %s246 = sadd.s32 %s244, %s245
      %s247 = smul.addr %s246, 4
      %s248 = scalar_lea.vmem %s0, %s247
      %s249 = smul.u32 3, %s21
      %s250 = smul.u32 48, %s21
      %s251 = smul.u32 2, %s20
      %p252 = scmp.lt.s32.totalorder %s250, 143
      %s253 = scalar_select %p252, %s250, 143
      %p254 = scmp.lt.s32.totalorder %s251, 1
      %s255 = scalar_select %p254, %s251, 1
      %s256 = smul.addr %s253, 2
      %s257 = sadd.s32 %s255, %s256
      %s258 = smul.addr %s257, 4
      %s259 = scalar_lea.vmem %s1, %s258
      %s260 = smul.u32 48, %s21
      %s261 = smul.u32 2, %s20
      %s262 = smul.u32 2, %s20
      %p263 = scmp.lt.s32.totalorder %s262, 1
      %s264 = scalar_select %p263, %s262, 1
      %s265 = scalar_lea.vmem %s2, %s264
      %s266 = smul.u32 2, %s20
      %s267 = smul.u32 2, %s20
      %p268 = scmp.lt.s32.totalorder %s19, 0
      %s269 = scalar_select %p268, %s19, 0
      %p270 = scmp.lt.s32.totalorder %s267, 1
      %s271 = scalar_select %p270, %s267, 1
      %s272 = smul.addr %s269, 2
      %s273 = sadd.s32 %s271, %s272
      %s274 = smul.addr %s273, 4
      %s275 = scalar_lea.vmem %s3, %s274
      %s276 = smul.u32 2, %s20
      %p277 = scmp.eq.s32.totalorder %s21, 0
      // Predicated region
      $region33: #{forward.16} parent=31 // pred_check
        %p278 = pneg %p277
      $region34: #{forward.16} parent=31 // pred_check_branch
        %280 = sbr.rel (%p278) target = $region36
      $region35: #{forward.16} parent=31 // pred_region
        %281 = vst [vmem:[#allocation2] sm:$0xff] 0.0
        %282 = vst [vmem:[#allocation2 + $0x8] sm:$0xff] 0.0
      $region36: #{forward.16} parent=31 // pred_fallthru
        _
      %v283 = vld [vmem:[#allocation2] sm:$0xff]
      %v284 = vld [vmem:[#allocation2 + $0x8] sm:$0xff]
      %v285 = vld [vmem:[%s248] sm:$0xff]
      %v286 = vld [vmem:[%s248 + $0x8] sm:$0xf]
      %v287 = vld [vmem:[%s259] sm:$0xff]
      %v288 = vld [vmem:[%s259 + $0x8] sm:$0xff]
      %v289 = vld [vmem:[%s259 + $0x10] sm:$0xff]
      %v290 = vld [vmem:[%s259 + $0x18] sm:$0xff]
      %v291 = vld [vmem:[%s259 + $0x20] sm:$0xff]
      %v292 = vld [vmem:[%s259 + $0x28] sm:$0xff]
      %v293 = vld [vmem:[%s259 + $0x30] sm:$0xff]
      %v294 = vld [vmem:[%s259 + $0x38] sm:$0xff]
      %v295 = vld [vmem:[%s259 + $0x40] sm:$0xff]
      %v296 = vld [vmem:[%s259 + $0x48] sm:$0xff]
      %v297 = vld [vmem:[%s259 + $0x50] sm:$0xff]
      %v298 = vld [vmem:[%s259 + $0x58] sm:$0xff]
      %v299 = vld [vmem:[%s259 + $0x60] sm:$0xff]
      %v300 = vld [vmem:[%s259 + $0x68] sm:$0xff]
      %v301 = vld [vmem:[%s259 + $0x70] sm:$0xff]
      %v302 = vld [vmem:[%s259 + $0x78] sm:$0xff]
      %v303 = vld [vmem:[%s259 + $0x80] sm:$0xff]
      %v304 = vld [vmem:[%s259 + $0x88] sm:$0xff]
      %v305 = vld [vmem:[%s259 + $0x90] sm:$0xff]
      %v306 = vld [vmem:[%s259 + $0x98] sm:$0xff]
      %v307 = vld [vmem:[%s259 + $0xa0] sm:$0xff]
      %v308 = vld [vmem:[%s259 + $0xa8] sm:$0xff]
      %v309 = vld [vmem:[%s259 + $0xb0] sm:$0xff]
      %v310 = vld [vmem:[%s259 + $0xb8] sm:$0xff]
      %v311 = vld [vmem:[%s259 + $0xc0] sm:$0xff]
      %v312 = vld [vmem:[%s259 + $0xc8] sm:$0xff]
      %v313 = vld [vmem:[%s259 + $0xd0] sm:$0xff]
      %v314 = vld [vmem:[%s259 + $0xd8] sm:$0xff]
      %v315 = vld [vmem:[%s259 + $0xe0] sm:$0xff]
      %v316 = vld [vmem:[%s259 + $0xe8] sm:$0xff]
      %v317 = vld [vmem:[%s259 + $0xf0] sm:$0xff]
      %v318 = vld [vmem:[%s259 + $0xf8] sm:$0xff]
      %v319 = vld [vmem:[%s259 + $0x100] sm:$0xff]
      %v320 = vld [vmem:[%s259 + $0x108] sm:$0xff]
      %v321 = vld [vmem:[%s259 + $0x110] sm:$0xff]
      %v322 = vld [vmem:[%s259 + $0x118] sm:$0xff]
      %v323 = vld [vmem:[%s259 + $0x120] sm:$0xff]
      %v324 = vld [vmem:[%s259 + $0x128] sm:$0xff]
      %v325 = vld [vmem:[%s259 + $0x130] sm:$0xff]
      %v326 = vld [vmem:[%s259 + $0x138] sm:$0xff]
      %v327 = vld [vmem:[%s259 + $0x140] sm:$0xff]
      %v328 = vld [vmem:[%s259 + $0x148] sm:$0xff]
      %v329 = vld [vmem:[%s259 + $0x150] sm:$0xff]
      %v330 = vld [vmem:[%s259 + $0x158] sm:$0xff]
      %v331 = vld [vmem:[%s259 + $0x160] sm:$0xff]
      %v332 = vld [vmem:[%s259 + $0x168] sm:$0xff]
      %v333 = vld [vmem:[%s259 + $0x170] sm:$0xff]
      %v334 = vld [vmem:[%s259 + $0x178] sm:$0xff]
      %v337 = vunpack.c.l.b16 %v285
      %v338 = vunpack.c.h.b16 %v285
      %v339 = vunpack.c.l.b16 %v286
      %v340 = vpack.c.b16 %v337, %v337
      %v341 = vpack.c.b16 %v338, %v338
      %v342 = vpack.c.b16 %v339, %v339
      %v394 = vunpack.c.l.b16 %v287
      %v395 = vunpack.c.h.b16 %v287
      %v396 = vunpack.c.l.b16 %v288
      %v397 = vunpack.c.h.b16 %v288
      %v398 = vunpack.c.l.b16 %v289
      %v399 = vunpack.c.h.b16 %v289
      %v400 = vunpack.c.l.b16 %v290
      %v401 = vunpack.c.h.b16 %v290
      %v402 = vunpack.c.l.b16 %v291
      %v403 = vunpack.c.h.b16 %v291
      %v404 = vunpack.c.l.b16 %v292
      %v405 = vunpack.c.h.b16 %v292
      %v406 = vunpack.c.l.b16 %v293
      %v407 = vunpack.c.h.b16 %v293
      %v408 = vunpack.c.l.b16 %v294
      %v409 = vunpack.c.h.b16 %v294
      %v410 = vunpack.c.l.b16 %v295
      %v411 = vunpack.c.h.b16 %v295
      %v412 = vunpack.c.l.b16 %v296
      %v413 = vunpack.c.h.b16 %v296
      %v414 = vunpack.c.l.b16 %v297
      %v415 = vunpack.c.h.b16 %v297
      %v416 = vunpack.c.l.b16 %v298
      %v417 = vunpack.c.h.b16 %v298
      %v418 = vunpack.c.l.b16 %v299
      %v419 = vunpack.c.h.b16 %v299
      %v420 = vunpack.c.l.b16 %v300
      %v421 = vunpack.c.h.b16 %v300
      %v422 = vunpack.c.l.b16 %v301
      %v423 = vunpack.c.h.b16 %v301
      %v424 = vunpack.c.l.b16 %v302
      %v425 = vunpack.c.h.b16 %v302
      %v426 = vunpack.c.l.b16 %v303
      %v427 = vunpack.c.h.b16 %v303
      %v428 = vunpack.c.l.b16 %v304
      %v429 = vunpack.c.h.b16 %v304
      %v430 = vunpack.c.l.b16 %v305
      %v431 = vunpack.c.h.b16 %v305
      %v432 = vunpack.c.l.b16 %v306
      %v433 = vunpack.c.h.b16 %v306
      %v434 = vunpack.c.l.b16 %v307
      %v435 = vunpack.c.h.b16 %v307
      %v436 = vunpack.c.l.b16 %v308
      %v437 = vunpack.c.h.b16 %v308
      %v438 = vunpack.c.l.b16 %v309
      %v439 = vunpack.c.h.b16 %v309
      %v440 = vunpack.c.l.b16 %v310
      %v441 = vunpack.c.h.b16 %v310
      %v442 = vunpack.c.l.b16 %v311
      %v443 = vunpack.c.h.b16 %v311
      %v444 = vunpack.c.l.b16 %v312
      %v445 = vunpack.c.h.b16 %v312
      %v446 = vunpack.c.l.b16 %v313
      %v447 = vunpack.c.h.b16 %v313
      %v448 = vunpack.c.l.b16 %v314
      %v449 = vunpack.c.h.b16 %v314
      %v450 = vunpack.c.l.b16 %v315
      %v451 = vunpack.c.h.b16 %v315
      %v452 = vunpack.c.l.b16 %v316
      %v453 = vunpack.c.h.b16 %v316
      %v454 = vunpack.c.l.b16 %v317
      %v455 = vunpack.c.h.b16 %v317
      %v456 = vunpack.c.l.b16 %v318
      %v457 = vunpack.c.h.b16 %v318
      %v458 = vunpack.c.l.b16 %v319
      %v459 = vunpack.c.h.b16 %v319
      %v460 = vunpack.c.l.b16 %v320
      %v461 = vunpack.c.h.b16 %v320
      %v462 = vunpack.c.l.b16 %v321
      %v463 = vunpack.c.h.b16 %v321
      %v464 = vunpack.c.l.b16 %v322
      %v465 = vunpack.c.h.b16 %v322
      %v466 = vunpack.c.l.b16 %v323
      %v467 = vunpack.c.h.b16 %v323
      %v468 = vunpack.c.l.b16 %v324
      %v469 = vunpack.c.h.b16 %v324
      %v470 = vunpack.c.l.b16 %v325
      %v471 = vunpack.c.h.b16 %v325
      %v472 = vunpack.c.l.b16 %v326
      %v473 = vunpack.c.h.b16 %v326
      %v474 = vunpack.c.l.b16 %v327
      %v475 = vunpack.c.h.b16 %v327
      %v476 = vunpack.c.l.b16 %v328
      %v477 = vunpack.c.h.b16 %v328
      %v478 = vunpack.c.l.b16 %v329
      %v479 = vunpack.c.h.b16 %v329
      %v480 = vunpack.c.l.b16 %v330
      %v481 = vunpack.c.h.b16 %v330
      %v482 = vunpack.c.l.b16 %v331
      %v483 = vunpack.c.h.b16 %v331
      %v484 = vunpack.c.l.b16 %v332
      %v485 = vunpack.c.h.b16 %v332
      %v486 = vunpack.c.l.b16 %v333
      %v487 = vunpack.c.h.b16 %v333
      %v488 = vunpack.c.l.b16 %v334
      %v489 = vunpack.c.h.b16 %v334
      %v490 = vpack.c.b16 %v396, %v394
      %v491 = vpack.c.b16 %v397, %v395
      %v492 = vpack.c.b16 %v400, %v398
      %v493 = vpack.c.b16 %v401, %v399
      %v494 = vpack.c.b16 %v404, %v402
      %v495 = vpack.c.b16 %v405, %v403
      %v496 = vpack.c.b16 %v408, %v406
      %v497 = vpack.c.b16 %v409, %v407
      %v498 = vpack.c.b16 %v412, %v410
      %v499 = vpack.c.b16 %v413, %v411
      %v500 = vpack.c.b16 %v416, %v414
      %v501 = vpack.c.b16 %v417, %v415
      %v502 = vpack.c.b16 %v420, %v418
      %v503 = vpack.c.b16 %v421, %v419
      %v504 = vpack.c.b16 %v424, %v422
      %v505 = vpack.c.b16 %v425, %v423
      %v506 = vpack.c.b16 %v428, %v426
      %v507 = vpack.c.b16 %v429, %v427
      %v508 = vpack.c.b16 %v432, %v430
      %v509 = vpack.c.b16 %v433, %v431
      %v510 = vpack.c.b16 %v436, %v434
      %v511 = vpack.c.b16 %v437, %v435
      %v512 = vpack.c.b16 %v440, %v438
      %v513 = vpack.c.b16 %v441, %v439
      %v514 = vpack.c.b16 %v444, %v442
      %v515 = vpack.c.b16 %v445, %v443
      %v516 = vpack.c.b16 %v448, %v446
      %v517 = vpack.c.b16 %v449, %v447
      %v518 = vpack.c.b16 %v452, %v450
      %v519 = vpack.c.b16 %v453, %v451
      %v520 = vpack.c.b16 %v456, %v454
      %v521 = vpack.c.b16 %v457, %v455
      %v522 = vpack.c.b16 %v460, %v458
      %v523 = vpack.c.b16 %v461, %v459
      %v524 = vpack.c.b16 %v464, %v462
      %v525 = vpack.c.b16 %v465, %v463
      %v526 = vpack.c.b16 %v468, %v466
      %v527 = vpack.c.b16 %v469, %v467
      %v528 = vpack.c.b16 %v472, %v470
      %v529 = vpack.c.b16 %v473, %v471
      %v530 = vpack.c.b16 %v476, %v474
      %v531 = vpack.c.b16 %v477, %v475
      %v532 = vpack.c.b16 %v480, %v478
      %v533 = vpack.c.b16 %v481, %v479
      %v534 = vpack.c.b16 %v484, %v482
      %v535 = vpack.c.b16 %v485, %v483
      %v536 = vpack.c.b16 %v488, %v486
      %v537 = vpack.c.b16 %v489, %v487
      %586 = vmatpush.bf16.msra.mxu0 %v504
      %587 = vmatpush.bf16.msra.mxu0 %v502
      %588 = vmatpush.bf16.msra.mxu0 %v500
      %589 = vmatpush.bf16.msra.mxu0 %v498
      %590 = vmatpush.bf16.msra.mxu0 %v496
      %591 = vmatpush.bf16.msra.mxu0 %v494
      %592 = vmatpush.bf16.msra.mxu0 %v492
      %593 = vmatpush.bf16.msra.mxu0 %v490
      %594 = vmatmul.bf16.gmra.mxu0 %v340
      %v595 = vpop.f32.mrf.mxu0
      %v596 = vadd.f32 0.0, %v595
      %v597 = vpop.f32.mrf.mxu0
      %598 = vdwg.mxu0
      %599 = vmatpush.bf16.msra.mxu0 %v520
      %600 = vmatpush.bf16.msra.mxu0 %v518
      %601 = vmatpush.bf16.msra.mxu0 %v516
      %602 = vmatpush.bf16.msra.mxu0 %v514
      %603 = vmatpush.bf16.msra.mxu0 %v512
      %604 = vmatpush.bf16.msra.mxu0 %v510
      %605 = vmatpush.bf16.msra.mxu0 %v508
      %606 = vmatpush.bf16.msra.mxu0 %v506
      %607 = vmatmul.bf16.gmra.mxu0 %v341
      %v608 = vpop.f32.mrf.mxu0
      %v609 = vadd.f32 %v596, %v608
      %v610 = vpop.f32.mrf.mxu0
      %611 = vdwg.mxu0
      %612 = vmatpush.bf16.msra.mxu0 %v536
      %613 = vmatpush.bf16.msra.mxu0 %v534
      %614 = vmatpush.bf16.msra.mxu0 %v532
      %615 = vmatpush.bf16.msra.mxu0 %v530
      %616 = vmatpush.bf16.msra.mxu0 %v528
      %617 = vmatpush.bf16.msra.mxu0 %v526
      %618 = vmatpush.bf16.msra.mxu0 %v524
      %619 = vmatpush.bf16.msra.mxu0 %v522
      %620 = vmatmul.bf16.gmra.mxu0 %v342
      %v621 = vpop.f32.mrf.mxu0
      %v622 = vadd.f32 %v609, %v621
      %v623 = vpop.f32.mrf.mxu0
      %624 = vdwg.mxu0
      %625 = vmatpush.bf16.msra.mxu0 %v505
      %626 = vmatpush.bf16.msra.mxu0 %v503
      %627 = vmatpush.bf16.msra.mxu0 %v501
      %628 = vmatpush.bf16.msra.mxu0 %v499
      %629 = vmatpush.bf16.msra.mxu0 %v497
      %630 = vmatpush.bf16.msra.mxu0 %v495
      %631 = vmatpush.bf16.msra.mxu0 %v493
      %632 = vmatpush.bf16.msra.mxu0 %v491
      %633 = vmatmul.bf16.gmra.mxu0 %v340
      %v634 = vpop.f32.mrf.mxu0
      %v635 = vadd.f32 0.0, %v634
      %v636 = vpop.f32.mrf.mxu0
      %637 = vdwg.mxu0
      %638 = vmatpush.bf16.msra.mxu0 %v521
      %639 = vmatpush.bf16.msra.mxu0 %v519
      %640 = vmatpush.bf16.msra.mxu0 %v517
      %641 = vmatpush.bf16.msra.mxu0 %v515
      %642 = vmatpush.bf16.msra.mxu0 %v513
      %643 = vmatpush.bf16.msra.mxu0 %v511
      %644 = vmatpush.bf16.msra.mxu0 %v509
      %645 = vmatpush.bf16.msra.mxu0 %v507
      %646 = vmatmul.bf16.gmra.mxu0 %v341
      %v647 = vpop.f32.mrf.mxu0
      %v648 = vadd.f32 %v635, %v647
      %v649 = vpop.f32.mrf.mxu0
      %650 = vdwg.mxu0
      %651 = vmatpush.bf16.msra.mxu0 %v537
      %652 = vmatpush.bf16.msra.mxu0 %v535
      %653 = vmatpush.bf16.msra.mxu0 %v533
      %654 = vmatpush.bf16.msra.mxu0 %v531
      %655 = vmatpush.bf16.msra.mxu0 %v529
      %656 = vmatpush.bf16.msra.mxu0 %v527
      %657 = vmatpush.bf16.msra.mxu0 %v525
      %658 = vmatpush.bf16.msra.mxu0 %v523
      %659 = vmatmul.bf16.gmra.mxu0 %v342
      %v660 = vpop.f32.mrf.mxu0
      %v661 = vadd.f32 %v648, %v660
      %v662 = vpop.f32.mrf.mxu0
      %663 = vdwg.mxu0
      %v664 = vadd.f32 %v283, %v622
      %v665 = vadd.f32 %v284, %v661
      %666 = vst [vmem:[#allocation2] sm:$0xff] %v664
      %667 = vst [vmem:[#allocation2 + $0x8] sm:$0xff] %v665
      %p668 = scmp.eq.s32.totalorder %s21, 2
      // Predicated region
      $region37: #{forward.16} parent=31 // pred_check
        %p669 = pneg %p668
      $region38: #{forward.16} parent=31 // pred_check_branch
        %671 = sbr.rel (%p669) target = $region40
      $region39: #{forward.16} parent=31 // pred_region
        %v672 = vld [vmem:[#allocation2] sm:$0xff]
        %v673 = vld [vmem:[#allocation2 + $0x8] sm:$0xff]
        %v674 = vld [vmem:[%s265] sm:$0x3]
        %v676 = vperm.slane %v674, 0
        %v677 = vperm.slane %v674, 1
        %v680 = vadd.f32 %v672, %v676
        %v681 = vadd.f32 %v673, %v677
        %vm682 = vcmp.gt.f32.partialorder %v680, 0.0
        %vm683 = vcmp.gt.f32.partialorder %v681, 0.0
        %v684 = vmul.f32 %v680, 0.2
        %v685 = vmul.f32 %v681, 0.2
        %v686 = vsel %vm682, %v680, %v684
        %v687 = vsel %vm683, %v681, %v685
        %v688 = vpack.c.bf16 %v687, %v686
        %689 = vst [vmem:[%s275] sm:$0xff] %v688
      $region40: #{forward.16} parent=31 // pred_fallthru
        _
      %s690 = smul.u32 2, %s20
      %p691 = scmp.lt.s32.totalorder %s19, 0
      %s692 = scalar_select %p691, %s19, 0
      %p693 = scmp.lt.s32.totalorder %s690, 1
      %s694 = scalar_select %p693, %s690, 1
      %s695 = smul.addr %s692, 2
      %s696 = sadd.s32 %s694, %s695
      %s697 = smul.addr %s696, 4
      %s698 = scalar_lea.vmem %s3, %s697
      // Predicated region
      $region41: #{forward.16} parent=31 // pred_check
        %p699 = pneg %p135
      $region42: #{forward.16} parent=31 // pred_check_branch
        %701 = sbr.rel (%p699) target = $region44
      $region43: #{forward.16} parent=31 // pred_region
        %s702 = smul.u32 2, %s20
      $region44: #{forward.16} parent=31 // pred_fallthru
        _
      // Predicated region
      $region45: #{forward.16} parent=31 // pred_check
        %p703 = pneg %p135
      $region46: #{forward.16} parent=31 // pred_check_branch
        %705 = sbr.rel (%p703) target = $region48
      $region47: #{forward.16} parent=31 // pred_region
        %s706 = smul.u32 2, %s20
        %p707 = scmp.lt.s32.totalorder %s19, 0
        %s708 = scalar_select %p707, %s19, 0
        %p709 = scmp.lt.s32.totalorder %s706, 1
        %s710 = scalar_select %p709, %s706, 1
        %s711 = smul.addr %s708, 2
        %s712 = sadd.s32 %s710, %s711
        %s713 = smul.addr %s712, 4
        %s714 = scalar_lea.vmem %s3, %s713
      $region48: #{forward.16} parent=31 // pred_fallthru
        _
    $region32: #{forward.16} parent=5 // pred_fallthru
      _
    %p715 = scmp.le.s32.totalorder 2, %s9
    // Predicated region
    $region49: #{forward.16} parent=5 // pred_check
      %p716 = pneg %p715
    $region50: #{forward.16} parent=5 // pred_check_branch
      %718 = sbr.rel (%p716) target = $region52
    $region51: #{forward.16} parent=5 // pred_region
      %s719 = ssub.s32 %s9, 2
    $region52: #{forward.16} parent=5 // pred_fallthru
      _
  $region6: #{forward.16} parent=0 // loop_footer
    %s13 = sadd.s32 1, %s9
  $region7: #{forward.16} parent=0 // loop_footer_branch
    %8 = sbr.rel target = $region3
  $region8: #{forward.16} parent=0 // loop_exit
    _

// kernel: forward.17
$region0: #{forward.17}
  #allocation0 [shape = 'u32[]', space=smem, size = 0x4, offset = 0x4, fixed_abs, tag = 'smem constant byte address 0x4 - core index']
  #allocation1 [shape = 'u32[72,128]{1,0:T(1,128)}', space=vmem, size = 0x9000, scoped, tag = 'internal scratch']
  #allocation2 [shape = 'f32[8,256]{1,0:T(8,128)}', space=vmem, size = 0x2000, scoped, tag = 'scratch operand']
  %s0 = inlined_call_operand.vmem [shape: bf16[8,2304], index: 0, kind: input, shape index: {}]
  %s1 = inlined_call_operand.vmem [shape: bf16[2304,256], index: 1, kind: input, shape index: {}]
  %s2 = inlined_call_operand.vmem [shape: f32[1,256], index: 2, kind: input, shape index: {}]
  %s3 = inlined_call_operand.vmem [shape: bf16[8,256], index: 3, kind: output, shape index: {}]
  %s4 = sld [smem:[#allocation0]]
  $region53: #{forward.17} parent=0
    _
  %s6 = ssub.s32 1, %s4
  %s7 = scalar_select 0, %s6, %s4
  loop: start=0, step=1, limit=5
  $region2: #{forward.17} parent=0 // loop_pre_header
    _
  $region3: #{forward.17} parent=0 // loop_header
    %s9 = sphi 0, %s13
    %p10 = scmp.ge.s32.totalorder %s9, 5
    %s16 = sphi 0, %s35
    %s17 = sphi 0, %s31
    %s18 = sphi 0, %s27
    %s19 = sphi 0, %s16
    %s20 = sphi 0, %s17
    %s21 = sphi 0, %s18
    %s22 = sphi 0, %s19
    %s23 = sphi 0, %s20
    %s24 = sphi 0, %s21
    %s40 = sphi 0, %s42
    %s43 = sphi 0, %s40
    %s44 = sphi 0, %s43
    %s60 = sphi 0, %s44
    %s68 = sphi 0, %s70
    %s71 = sphi 0, %s68
    %s72 = sphi 0, %s71
    %s88 = sphi 0, %s72
    %s94 = sphi 0, %s96
    %s97 = sphi 0, %s94
    %s98 = sphi 0, %s97
    %s114 = sphi 0, %s98
    %s122 = sphi 0, %s124
    %s125 = sphi 0, %s122
    %s126 = sphi 0, %s125
    %s142 = sphi 0, %s126
  $region4: #{forward.17} parent=0 // loop_header_branch
    %12 = sbr.rel (%p10) target = $region8
  $region5: #{forward.17} parent=0 // loop_body
    %s14 = ssub.s32 %s9, 1
    %s15 = ssub.s32 %s9, 2
    %s25 = sadd.s32 1, %s18
    %p26 = scmp.ge.s32.totalorder %s25, 3
    %s27 = scalar_select %p26, 0, %s25
    %s28 = sadd.s32 1, %s17
    %s29 = scalar_select %p26, %s28, %s17
    %p30 = scmp.ge.s32.totalorder %s29, 1
    %s31 = scalar_select %p30, 0, %s29
    %s32 = sadd.s32 1, %s16
    %s33 = scalar_select %p30, %s32, %s16
    %p34 = scmp.ge.s32.totalorder %s33, 1
    %s35 = scalar_select %p34, 0, %s33
    %s36 = ssub.s32 %s16, %s35
    %s37 = ssub.s32 %s18, %s27
    %s38 = sor.u32 %s36, %s37
    %p39 = scmp.eq.s32.totalorder %s38, 0
    %s41 = sadd.s32 %s40, 1
    %s42 = scalar_select %p39, %s40, %s41
    %p45 = pneg %p39
    %p46 = scmp.eq.s32.totalorder %s9, 2
    %p47 = por %p45, %p46
    %p48 = scmp.ne.s32.totalorder %s40, %s43
    %p49 = scmp.eq.s32.totalorder %s9, 0
    %p50 = por %p48, %p49
    %p51 = scmp.ne.s32.totalorder %s40, %s43
    %p52 = scmp.eq.s32.totalorder %s14, 2
    %p53 = por %p51, %p52
    %p54 = scmp.ne.s32.totalorder %s43, %s44
    %p55 = scmp.eq.s32.totalorder %s14, 0
    %p56 = por %p54, %p55
    %p57 = scmp.ne.s32.totalorder %s43, %s44
    %p58 = scmp.eq.s32.totalorder %s15, 2
    %p59 = por %p57, %p58
    %p61 = scmp.ne.s32.totalorder %s44, %s60
    %p62 = scmp.eq.s32.totalorder %s15, 0
    %p63 = por %p61, %p62
    %s64 = ssub.s32 %s18, %s27
    %s65 = ssub.s32 %s17, %s31
    %s66 = sor.u32 %s64, %s65
    %p67 = scmp.eq.s32.totalorder %s66, 0
    %s69 = sadd.s32 %s68, 1
    %s70 = scalar_select %p67, %s68, %s69
    %p73 = pneg %p67
    %p74 = scmp.eq.s32.totalorder %s9, 2
    %p75 = por %p73, %p74
    %p76 = scmp.ne.s32.totalorder %s68, %s71
    %p77 = scmp.eq.s32.totalorder %s9, 0
    %p78 = por %p76, %p77
    %p79 = scmp.ne.s32.totalorder %s68, %s71
    %p80 = scmp.eq.s32.totalorder %s14, 2
    %p81 = por %p79, %p80
    %p82 = scmp.ne.s32.totalorder %s71, %s72
    %p83 = scmp.eq.s32.totalorder %s14, 0
    %p84 = por %p82, %p83
    %p85 = scmp.ne.s32.totalorder %s71, %s72
    %p86 = scmp.eq.s32.totalorder %s15, 2
    %p87 = por %p85, %p86
    %p89 = scmp.ne.s32.totalorder %s72, %s88
    %p90 = scmp.eq.s32.totalorder %s15, 0
    %p91 = por %p89, %p90
    %s92 = ssub.s32 %s17, %s31
    %p93 = scmp.eq.s32.totalorder %s92, 0
    %s95 = sadd.s32 %s94, 1
    %s96 = scalar_select %p93, %s94, %s95
    %p99 = pneg %p93
    %p100 = scmp.eq.s32.totalorder %s9, 2
    %p101 = por %p99, %p100
    %p102 = scmp.ne.s32.totalorder %s94, %s97
    %p103 = scmp.eq.s32.totalorder %s9, 0
    %p104 = por %p102, %p103
    %p105 = scmp.ne.s32.totalorder %s94, %s97
    %p106 = scmp.eq.s32.totalorder %s14, 2
    %p107 = por %p105, %p106
    %p108 = scmp.ne.s32.totalorder %s97, %s98
    %p109 = scmp.eq.s32.totalorder %s14, 0
    %p110 = por %p108, %p109
    %p111 = scmp.ne.s32.totalorder %s97, %s98
    %p112 = scmp.eq.s32.totalorder %s15, 2
    %p113 = por %p111, %p112
    %p115 = scmp.ne.s32.totalorder %s98, %s114
    %p116 = scmp.eq.s32.totalorder %s15, 0
    %p117 = por %p115, %p116
    %s118 = ssub.s32 %s16, %s35
    %s119 = ssub.s32 %s17, %s31
    %s120 = sor.u32 %s118, %s119
    %p121 = scmp.eq.s32.totalorder %s120, 0
    %s123 = sadd.s32 %s122, 1
    %s124 = scalar_select %p121, %s122, %s123
    %p127 = pneg %p121
    %p128 = scmp.eq.s32.totalorder %s9, 2
    %p129 = por %p127, %p128
    %p130 = scmp.ne.s32.totalorder %s122, %s125
    %p131 = scmp.eq.s32.totalorder %s9, 0
    %p132 = por %p130, %p131
    %p133 = scmp.ne.s32.totalorder %s122, %s125
    %p134 = scmp.eq.s32.totalorder %s14, 2
    %p135 = por %p133, %p134
    %p136 = scmp.ne.s32.totalorder %s125, %s126
    %p137 = scmp.eq.s32.totalorder %s14, 0
    %p138 = por %p136, %p137
    %p139 = scmp.ne.s32.totalorder %s125, %s126
    %p140 = scmp.eq.s32.totalorder %s15, 2
    %p141 = por %p139, %p140
    %p143 = scmp.ne.s32.totalorder %s126, %s142
    %p144 = scmp.eq.s32.totalorder %s15, 0
    %p145 = por %p143, %p144
    %p146 = scmp.le.s32.totalorder 1, %s9
    %p147 = scmp.lt.s32.totalorder %s9, 4
    %p148 = pnand %p146, %p147
    %p149 = pneg %p148
    // Predicated region
    $region9: #{forward.17} parent=5 // pred_check
      _
    $region10: #{forward.17} parent=5 // pred_check_branch
      %151 = sbr.rel (%p148) target = $region12
    $region11: #{forward.17} parent=5 // pred_region
      %s152 = ssub.s32 %s9, 1
      // Predicated region
      $region13: #{forward.17} parent=11 // pred_check
        %p153 = pneg %p110
      $region14: #{forward.17} parent=11 // pred_check_branch
        %155 = sbr.rel (%p153) target = $region16
      $region15: #{forward.17} parent=11 // pred_region
        %s156 = smul.u32 2, %s20
        %p157 = scmp.lt.s32.totalorder %s156, 1
        %s158 = scalar_select %p157, %s156, 1
        %s159 = scalar_lea.vmem %s2, %s158
        %s160 = smul.u32 2, %s20
      $region16: #{forward.17} parent=11 // pred_fallthru
        _
    $region12: #{forward.17} parent=5 // pred_fallthru
      _
    %p161 = scmp.lt.s32.totalorder %s9, 3
    // Predicated region
    $region17: #{forward.17} parent=5 // pred_check
      %p162 = pneg %p161
    $region18: #{forward.17} parent=5 // pred_check_branch
      %164 = sbr.rel (%p162) target = $region20
    $region19: #{forward.17} parent=5 // pred_region
      // Predicated region
      $region21: #{forward.17} parent=19 // pred_check
        %p165 = pneg %p50
      $region22: #{forward.17} parent=19 // pred_check_branch
        %167 = sbr.rel (%p165) target = $region24
      $region23: #{forward.17} parent=19 // pred_region
        %s168 = smul.u32 6, %s18
        %p169 = scmp.lt.s32.totalorder %s16, 0
        %s170 = scalar_select %p169, %s16, 0
        %p171 = scmp.lt.s32.totalorder %s168, 17
        %s172 = scalar_select %p171, %s168, 17
        %s173 = smul.addr %s170, 18
        %s174 = sadd.s32 %s172, %s173
        %s175 = smul.addr %s174, 4
        %s176 = scalar_lea.vmem %s0, %s175
        %s177 = smul.u32 6, %s18
      $region24: #{forward.17} parent=19 // pred_fallthru
        _
      // Predicated region
      $region25: #{forward.17} parent=19 // pred_check
        %p178 = pneg %p78
      $region26: #{forward.17} parent=19 // pred_check_branch
        %180 = sbr.rel (%p178) target = $region28
      $region27: #{forward.17} parent=19 // pred_region
        %s181 = smul.u32 96, %s18
        %s182 = smul.u32 2, %s17
        %p183 = scmp.lt.s32.totalorder %s181, 287
        %s184 = scalar_select %p183, %s181, 287
        %p185 = scmp.lt.s32.totalorder %s182, 1
        %s186 = scalar_select %p185, %s182, 1
        %s187 = smul.addr %s184, 2
        %s188 = sadd.s32 %s186, %s187
        %s189 = smul.addr %s188, 4
        %s190 = scalar_lea.vmem %s1, %s189
        %s191 = smul.u32 96, %s18
        %s192 = smul.u32 2, %s17
      $region28: #{forward.17} parent=19 // pred_fallthru
        _
    $region20: #{forward.17} parent=5 // pred_fallthru
      _
    %p193 = scmp.le.s32.totalorder 1, %s9
    %p194 = scmp.lt.s32.totalorder %s9, 4
    %p195 = pnand %p193, %p194
    %p196 = pneg %p195
    // Predicated region
    $region29: #{forward.17} parent=5 // pred_check
      _
    $region30: #{forward.17} parent=5 // pred_check_branch
      %198 = sbr.rel (%p195) target = $region32
    $region31: #{forward.17} parent=5 // pred_region
      %s199 = ssub.s32 %s9, 1
      %s200 = smul.u32 6, %s21
      %p201 = scmp.lt.s32.totalorder %s19, 0
      %s202 = scalar_select %p201, %s19, 0
      %p203 = scmp.lt.s32.totalorder %s200, 17
      %s204 = scalar_select %p203, %s200, 17
      %s205 = smul.addr %s202, 18
      %s206 = sadd.s32 %s204, %s205
      %s207 = smul.addr %s206, 4
      %s208 = scalar_lea.vmem %s0, %s207
      %p209 = pneg %p56
      %p210 = pneg %p53
      %s211 = smul.u32 96, %s21
      %s212 = smul.u32 2, %s20
      %p213 = scmp.lt.s32.totalorder %s211, 287
      %s214 = scalar_select %p213, %s211, 287
      %p215 = scmp.lt.s32.totalorder %s212, 1
      %s216 = scalar_select %p215, %s212, 1
      %s217 = smul.addr %s214, 2
      %s218 = sadd.s32 %s216, %s217
      %s219 = smul.addr %s218, 4
      %s220 = scalar_lea.vmem %s1, %s219
      %p221 = pneg %p84
      %p222 = pneg %p81
      %s223 = smul.u32 2, %s20
      %p224 = scmp.lt.s32.totalorder %s223, 1
      %s225 = scalar_select %p224, %s223, 1
      %s226 = scalar_lea.vmem %s2, %s225
      %p227 = pneg %p110
      %p228 = pneg %p107
      %p229 = pneg %p138
      %p230 = pneg %p135
      %s231 = smul.u32 2, %s20
      %p232 = scmp.lt.s32.totalorder %s19, 0
      %s233 = scalar_select %p232, %s19, 0
      %p234 = scmp.lt.s32.totalorder %s231, 1
      %s235 = scalar_select %p234, %s231, 1
      %s236 = smul.addr %s233, 2
      %s237 = sadd.s32 %s235, %s236
      %s238 = smul.addr %s237, 4
      %s239 = scalar_lea.vmem %s3, %s238
      %s240 = smul.u32 6, %s21
      %p241 = scmp.lt.s32.totalorder %s19, 0
      %s242 = scalar_select %p241, %s19, 0
      %p243 = scmp.lt.s32.totalorder %s240, 17
      %s244 = scalar_select %p243, %s240, 17
      %s245 = smul.addr %s242, 18
      %s246 = sadd.s32 %s244, %s245
      %s247 = smul.addr %s246, 4
      %s248 = scalar_lea.vmem %s0, %s247
      %s249 = smul.u32 6, %s21
      %s250 = smul.u32 96, %s21
      %s251 = smul.u32 2, %s20
      %p252 = scmp.lt.s32.totalorder %s250, 287
      %s253 = scalar_select %p252, %s250, 287
      %p254 = scmp.lt.s32.totalorder %s251, 1
      %s255 = scalar_select %p254, %s251, 1
      %s256 = smul.addr %s253, 2
      %s257 = sadd.s32 %s255, %s256
      %s258 = smul.addr %s257, 4
      %s259 = scalar_lea.vmem %s1, %s258
      %s260 = smul.u32 96, %s21
      %s261 = smul.u32 2, %s20
      %s262 = smul.u32 2, %s20
      %p263 = scmp.lt.s32.totalorder %s262, 1
      %s264 = scalar_select %p263, %s262, 1
      %s265 = scalar_lea.vmem %s2, %s264
      %s266 = smul.u32 2, %s20
      %s267 = smul.u32 2, %s20
      %p268 = scmp.lt.s32.totalorder %s19, 0
      %s269 = scalar_select %p268, %s19, 0
      %p270 = scmp.lt.s32.totalorder %s267, 1
      %s271 = scalar_select %p270, %s267, 1
      %s272 = smul.addr %s269, 2
      %s273 = sadd.s32 %s271, %s272
      %s274 = smul.addr %s273, 4
      %s275 = scalar_lea.vmem %s3, %s274
      %s276 = smul.u32 2, %s20
      %p277 = scmp.eq.s32.totalorder %s21, 0
      // Predicated region
      $region33: #{forward.17} parent=31 // pred_check
        %p278 = pneg %p277
      $region34: #{forward.17} parent=31 // pred_check_branch
        %280 = sbr.rel (%p278) target = $region36
      $region35: #{forward.17} parent=31 // pred_region
        %281 = vst [vmem:[#allocation2] sm:$0xff] 0.0
        %282 = vst [vmem:[#allocation2 + $0x8] sm:$0xff] 0.0
      $region36: #{forward.17} parent=31 // pred_fallthru
        _
      %v283 = vld [vmem:[#allocation2] sm:$0xff]
      %v284 = vld [vmem:[#allocation2 + $0x8] sm:$0xff]
      %v285 = vld [vmem:[%s248] sm:$0xff]
      %v286 = vld [vmem:[%s248 + $0x8] sm:$0xff]
      %v287 = vld [vmem:[%s248 + $0x10] sm:$0xff]
      %v288 = vld [vmem:[%s259] sm:$0xff]
      %v289 = vld [vmem:[%s259 + $0x8] sm:$0xff]
      %v290 = vld [vmem:[%s259 + $0x10] sm:$0xff]
      %v291 = vld [vmem:[%s259 + $0x18] sm:$0xff]
      %v292 = vld [vmem:[%s259 + $0x20] sm:$0xff]
      %v293 = vld [vmem:[%s259 + $0x28] sm:$0xff]
      %v294 = vld [vmem:[%s259 + $0x30] sm:$0xff]
      %v295 = vld [vmem:[%s259 + $0x38] sm:$0xff]
      %v296 = vld [vmem:[%s259 + $0x40] sm:$0xff]
      %v297 = vld [vmem:[%s259 + $0x48] sm:$0xff]
      %v298 = vld [vmem:[%s259 + $0x50] sm:$0xff]
      %v299 = vld [vmem:[%s259 + $0x58] sm:$0xff]
      %v300 = vld [vmem:[%s259 + $0x60] sm:$0xff]
      %v301 = vld [vmem:[%s259 + $0x68] sm:$0xff]
      %v302 = vld [vmem:[%s259 + $0x70] sm:$0xff]
      %v303 = vld [vmem:[%s259 + $0x78] sm:$0xff]
      %v304 = vld [vmem:[%s259 + $0x80] sm:$0xff]
      %v305 = vld [vmem:[%s259 + $0x88] sm:$0xff]
      %v306 = vld [vmem:[%s259 + $0x90] sm:$0xff]
      %v307 = vld [vmem:[%s259 + $0x98] sm:$0xff]
      %v308 = vld [vmem:[%s259 + $0xa0] sm:$0xff]
      %v309 = vld [vmem:[%s259 + $0xa8] sm:$0xff]
      %v310 = vld [vmem:[%s259 + $0xb0] sm:$0xff]
      %v311 = vld [vmem:[%s259 + $0xb8] sm:$0xff]
      %v312 = vld [vmem:[%s259 + $0xc0] sm:$0xff]
      %v313 = vld [vmem:[%s259 + $0xc8] sm:$0xff]
      %v314 = vld [vmem:[%s259 + $0xd0] sm:$0xff]
      %v315 = vld [vmem:[%s259 + $0xd8] sm:$0xff]
      %v316 = vld [vmem:[%s259 + $0xe0] sm:$0xff]
      %v317 = vld [vmem:[%s259 + $0xe8] sm:$0xff]
      %v318 = vld [vmem:[%s259 + $0xf0] sm:$0xff]
      %v319 = vld [vmem:[%s259 + $0xf8] sm:$0xff]
      %v320 = vld [vmem:[%s259 + $0x100] sm:$0xff]
      %v321 = vld [vmem:[%s259 + $0x108] sm:$0xff]
      %v322 = vld [vmem:[%s259 + $0x110] sm:$0xff]
      %v323 = vld [vmem:[%s259 + $0x118] sm:$0xff]
      %v324 = vld [vmem:[%s259 + $0x120] sm:$0xff]
      %v325 = vld [vmem:[%s259 + $0x128] sm:$0xff]
      %v326 = vld [vmem:[%s259 + $0x130] sm:$0xff]
      %v327 = vld [vmem:[%s259 + $0x138] sm:$0xff]
      %v328 = vld [vmem:[%s259 + $0x140] sm:$0xff]
      %v329 = vld [vmem:[%s259 + $0x148] sm:$0xff]
      %v330 = vld [vmem:[%s259 + $0x150] sm:$0xff]
      %v331 = vld [vmem:[%s259 + $0x158] sm:$0xff]
      %v332 = vld [vmem:[%s259 + $0x160] sm:$0xff]
      %v333 = vld [vmem:[%s259 + $0x168] sm:$0xff]
      %v334 = vld [vmem:[%s259 + $0x170] sm:$0xff]
      %v335 = vld [vmem:[%s259 + $0x178] sm:$0xff]
      %v336 = vld [vmem:[%s259 + $0x180] sm:$0xff]
      %v337 = vld [vmem:[%s259 + $0x188] sm:$0xff]
      %v338 = vld [vmem:[%s259 + $0x190] sm:$0xff]
      %v339 = vld [vmem:[%s259 + $0x198] sm:$0xff]
      %v340 = vld [vmem:[%s259 + $0x1a0] sm:$0xff]
      %v341 = vld [vmem:[%s259 + $0x1a8] sm:$0xff]
      %v342 = vld [vmem:[%s259 + $0x1b0] sm:$0xff]
      %v343 = vld [vmem:[%s259 + $0x1b8] sm:$0xff]
      %v344 = vld [vmem:[%s259 + $0x1c0] sm:$0xff]
      %v345 = vld [vmem:[%s259 + $0x1c8] sm:$0xff]
      %v346 = vld [vmem:[%s259 + $0x1d0] sm:$0xff]
      %v347 = vld [vmem:[%s259 + $0x1d8] sm:$0xff]
      %v348 = vld [vmem:[%s259 + $0x1e0] sm:$0xff]
      %v349 = vld [vmem:[%s259 + $0x1e8] sm:$0xff]
      %v350 = vld [vmem:[%s259 + $0x1f0] sm:$0xff]
      %v351 = vld [vmem:[%s259 + $0x1f8] sm:$0xff]
      %v352 = vld [vmem:[%s259 + $0x200] sm:$0xff]
      %v353 = vld [vmem:[%s259 + $0x208] sm:$0xff]
      %v354 = vld [vmem:[%s259 + $0x210] sm:$0xff]
      %v355 = vld [vmem:[%s259 + $0x218] sm:$0xff]
      %v356 = vld [vmem:[%s259 + $0x220] sm:$0xff]
      %v357 = vld [vmem:[%s259 + $0x228] sm:$0xff]
      %v358 = vld [vmem:[%s259 + $0x230] sm:$0xff]
      %v359 = vld [vmem:[%s259 + $0x238] sm:$0xff]
      %v360 = vld [vmem:[%s259 + $0x240] sm:$0xff]
      %v361 = vld [vmem:[%s259 + $0x248] sm:$0xff]
      %v362 = vld [vmem:[%s259 + $0x250] sm:$0xff]
      %v363 = vld [vmem:[%s259 + $0x258] sm:$0xff]
      %v364 = vld [vmem:[%s259 + $0x260] sm:$0xff]
      %v365 = vld [vmem:[%s259 + $0x268] sm:$0xff]
      %v366 = vld [vmem:[%s259 + $0x270] sm:$0xff]
      %v367 = vld [vmem:[%s259 + $0x278] sm:$0xff]
      %v368 = vld [vmem:[%s259 + $0x280] sm:$0xff]
      %v369 = vld [vmem:[%s259 + $0x288] sm:$0xff]
      %v370 = vld [vmem:[%s259 + $0x290] sm:$0xff]
      %v371 = vld [vmem:[%s259 + $0x298] sm:$0xff]
      %v372 = vld [vmem:[%s259 + $0x2a0] sm:$0xff]
      %v373 = vld [vmem:[%s259 + $0x2a8] sm:$0xff]
      %v374 = vld [vmem:[%s259 + $0x2b0] sm:$0xff]
      %v375 = vld [vmem:[%s259 + $0x2b8] sm:$0xff]
      %v376 = vld [vmem:[%s259 + $0x2c0] sm:$0xff]
      %v377 = vld [vmem:[%s259 + $0x2c8] sm:$0xff]
      %v378 = vld [vmem:[%s259 + $0x2d0] sm:$0xff]
      %v379 = vld [vmem:[%s259 + $0x2d8] sm:$0xff]
      %v380 = vld [vmem:[%s259 + $0x2e0] sm:$0xff]
      %v381 = vld [vmem:[%s259 + $0x2e8] sm:$0xff]
      %v382 = vld [vmem:[%s259 + $0x2f0] sm:$0xff]
      %v383 = vld [vmem:[%s259 + $0x2f8] sm:$0xff]
      %v387 = vunpack.c.l.b16 %v285
      %v388 = vunpack.c.h.b16 %v285
      %v389 = vunpack.c.l.b16 %v286
      %v390 = vunpack.c.h.b16 %v286
      %v391 = vunpack.c.l.b16 %v287
      %v392 = vunpack.c.h.b16 %v287
      %v393 = vpack.c.b16 %v387, %v387
      %v394 = vpack.c.b16 %v388, %v388
      %v395 = vpack.c.b16 %v389, %v389
      %v396 = vpack.c.b16 %v390, %v390
      %v397 = vpack.c.b16 %v391, %v391
      %v398 = vpack.c.b16 %v392, %v392
      %v501 = vunpack.c.l.b16 %v288
      %v502 = vunpack.c.h.b16 %v288
      %v503 = vunpack.c.l.b16 %v289
      %v504 = vunpack.c.h.b16 %v289
      %v505 = vunpack.c.l.b16 %v290
      %v506 = vunpack.c.h.b16 %v290
      %v507 = vunpack.c.l.b16 %v291
      %v508 = vunpack.c.h.b16 %v291
      %v509 = vunpack.c.l.b16 %v292
      %v510 = vunpack.c.h.b16 %v292
      %v511 = vunpack.c.l.b16 %v293
      %v512 = vunpack.c.h.b16 %v293
      %v513 = vunpack.c.l.b16 %v294
      %v514 = vunpack.c.h.b16 %v294
      %v515 = vunpack.c.l.b16 %v295
      %v516 = vunpack.c.h.b16 %v295
      %v517 = vunpack.c.l.b16 %v296
      %v518 = vunpack.c.h.b16 %v296
      %v519 = vunpack.c.l.b16 %v297
      %v520 = vunpack.c.h.b16 %v297
      %v521 = vunpack.c.l.b16 %v298
      %v522 = vunpack.c.h.b16 %v298
      %v523 = vunpack.c.l.b16 %v299
      %v524 = vunpack.c.h.b16 %v299
      %v525 = vunpack.c.l.b16 %v300
      %v526 = vunpack.c.h.b16 %v300
      %v527 = vunpack.c.l.b16 %v301
      %v528 = vunpack.c.h.b16 %v301
      %v529 = vunpack.c.l.b16 %v302
      %v530 = vunpack.c.h.b16 %v302
      %v531 = vunpack.c.l.b16 %v303
      %v532 = vunpack.c.h.b16 %v303
      %v533 = vunpack.c.l.b16 %v304
      %v534 = vunpack.c.h.b16 %v304
      %v535 = vunpack.c.l.b16 %v305
      %v536 = vunpack.c.h.b16 %v305
      %v537 = vunpack.c.l.b16 %v306
      %v538 = vunpack.c.h.b16 %v306
      %v539 = vunpack.c.l.b16 %v307
      %v540 = vunpack.c.h.b16 %v307
      %v541 = vunpack.c.l.b16 %v308
      %v542 = vunpack.c.h.b16 %v308
      %v543 = vunpack.c.l.b16 %v309
      %v544 = vunpack.c.h.b16 %v309
      %v545 = vunpack.c.l.b16 %v310
      %v546 = vunpack.c.h.b16 %v310
      %v547 = vunpack.c.l.b16 %v311
      %v548 = vunpack.c.h.b16 %v311
      %v549 = vunpack.c.l.b16 %v312
      %v550 = vunpack.c.h.b16 %v312
      %v551 = vunpack.c.l.b16 %v313
      %v552 = vunpack.c.h.b16 %v313
      %v553 = vunpack.c.l.b16 %v314
      %v554 = vunpack.c.h.b16 %v314
      %v555 = vunpack.c.l.b16 %v315
      %v556 = vunpack.c.h.b16 %v315
      %v557 = vunpack.c.l.b16 %v316
      %v558 = vunpack.c.h.b16 %v316
      %v559 = vunpack.c.l.b16 %v317
      %v560 = vunpack.c.h.b16 %v317
      %v561 = vunpack.c.l.b16 %v318
      %v562 = vunpack.c.h.b16 %v318
      %v563 = vunpack.c.l.b16 %v319
      %v564 = vunpack.c.h.b16 %v319
      %v565 = vunpack.c.l.b16 %v320
      %v566 = vunpack.c.h.b16 %v320
      %v567 = vunpack.c.l.b16 %v321
      %v568 = vunpack.c.h.b16 %v321
      %v569 = vunpack.c.l.b16 %v322
      %v570 = vunpack.c.h.b16 %v322
      %v571 = vunpack.c.l.b16 %v323
      %v572 = vunpack.c.h.b16 %v323
      %v573 = vunpack.c.l.b16 %v324
      %v574 = vunpack.c.h.b16 %v324
      %v575 = vunpack.c.l.b16 %v325
      %v576 = vunpack.c.h.b16 %v325
      %v577 = vunpack.c.l.b16 %v326
      %v578 = vunpack.c.h.b16 %v326
      %v579 = vunpack.c.l.b16 %v327
      %v580 = vunpack.c.h.b16 %v327
      %v581 = vunpack.c.l.b16 %v328
      %v582 = vunpack.c.h.b16 %v328
      %v583 = vunpack.c.l.b16 %v329
      %v584 = vunpack.c.h.b16 %v329
      %v585 = vunpack.c.l.b16 %v330
      %v586 = vunpack.c.h.b16 %v330
      %v587 = vunpack.c.l.b16 %v331
      %v588 = vunpack.c.h.b16 %v331
      %v589 = vunpack.c.l.b16 %v332
      %v590 = vunpack.c.h.b16 %v332
      %v591 = vunpack.c.l.b16 %v333
      %v592 = vunpack.c.h.b16 %v333
      %v593 = vunpack.c.l.b16 %v334
      %v594 = vunpack.c.h.b16 %v334
      %v595 = vunpack.c.l.b16 %v335
      %v596 = vunpack.c.h.b16 %v335
      %v597 = vunpack.c.l.b16 %v336
      %v598 = vunpack.c.h.b16 %v336
      %v599 = vunpack.c.l.b16 %v337
      %v600 = vunpack.c.h.b16 %v337
      %v601 = vunpack.c.l.b16 %v338
      %v602 = vunpack.c.h.b16 %v338
      %v603 = vunpack.c.l.b16 %v339
      %v604 = vunpack.c.h.b16 %v339
      %v605 = vunpack.c.l.b16 %v340
      %v606 = vunpack.c.h.b16 %v340
      %v607 = vunpack.c.l.b16 %v341
      %v608 = vunpack.c.h.b16 %v341
      %v609 = vunpack.c.l.b16 %v342
      %v610 = vunpack.c.h.b16 %v342
      %v611 = vunpack.c.l.b16 %v343
      %v612 = vunpack.c.h.b16 %v343
      %v613 = vunpack.c.l.b16 %v344
      %v614 = vunpack.c.h.b16 %v344
      %v615 = vunpack.c.l.b16 %v345
      %v616 = vunpack.c.h.b16 %v345
      %v617 = vunpack.c.l.b16 %v346
      %v618 = vunpack.c.h.b16 %v346
      %v619 = vunpack.c.l.b16 %v347
      %v620 = vunpack.c.h.b16 %v347
      %v621 = vunpack.c.l.b16 %v348
      %v622 = vunpack.c.h.b16 %v348
      %v623 = vunpack.c.l.b16 %v349
      %v624 = vunpack.c.h.b16 %v349
      %v625 = vunpack.c.l.b16 %v350
      %v626 = vunpack.c.h.b16 %v350
      %v627 = vunpack.c.l.b16 %v351
      %v628 = vunpack.c.h.b16 %v351
      %v629 = vunpack.c.l.b16 %v352
      %v630 = vunpack.c.h.b16 %v352
      %v631 = vunpack.c.l.b16 %v353
      %v632 = vunpack.c.h.b16 %v353
      %v633 = vunpack.c.l.b16 %v354
      %v634 = vunpack.c.h.b16 %v354
      %v635 = vunpack.c.l.b16 %v355
      %v636 = vunpack.c.h.b16 %v355
      %v637 = vunpack.c.l.b16 %v356
      %v638 = vunpack.c.h.b16 %v356
      %v639 = vunpack.c.l.b16 %v357
      %v640 = vunpack.c.h.b16 %v357
      %v641 = vunpack.c.l.b16 %v358
      %v642 = vunpack.c.h.b16 %v358
      %v643 = vunpack.c.l.b16 %v359
      %v644 = vunpack.c.h.b16 %v359
      %v645 = vunpack.c.l.b16 %v360
      %v646 = vunpack.c.h.b16 %v360
      %v647 = vunpack.c.l.b16 %v361
      %v648 = vunpack.c.h.b16 %v361
      %v649 = vunpack.c.l.b16 %v362
      %v650 = vunpack.c.h.b16 %v362
      %v651 = vunpack.c.l.b16 %v363
      %v652 = vunpack.c.h.b16 %v363
      %v653 = vunpack.c.l.b16 %v364
      %v654 = vunpack.c.h.b16 %v364
      %v655 = vunpack.c.l.b16 %v365
      %v656 = vunpack.c.h.b16 %v365
      %v657 = vunpack.c.l.b16 %v366
      %v658 = vunpack.c.h.b16 %v366
      %v659 = vunpack.c.l.b16 %v367
      %v660 = vunpack.c.h.b16 %v367
      %v661 = vunpack.c.l.b16 %v368
      %v662 = vunpack.c.h.b16 %v368
      %v663 = vunpack.c.l.b16 %v369
      %v664 = vunpack.c.h.b16 %v369
      %v665 = vunpack.c.l.b16 %v370
      %v666 = vunpack.c.h.b16 %v370
      %v667 = vunpack.c.l.b16 %v371
      %v668 = vunpack.c.h.b16 %v371
      %v669 = vunpack.c.l.b16 %v372
      %v670 = vunpack.c.h.b16 %v372
      %v671 = vunpack.c.l.b16 %v373
      %v672 = vunpack.c.h.b16 %v373
      %v673 = vunpack.c.l.b16 %v374
      %v674 = vunpack.c.h.b16 %v374
      %v675 = vunpack.c.l.b16 %v375
      %v676 = vunpack.c.h.b16 %v375
      %v677 = vunpack.c.l.b16 %v376
      %v678 = vunpack.c.h.b16 %v376
      %v679 = vunpack.c.l.b16 %v377
      %v680 = vunpack.c.h.b16 %v377
      %v681 = vunpack.c.l.b16 %v378
      %v682 = vunpack.c.h.b16 %v378
      %v683 = vunpack.c.l.b16 %v379
      %v684 = vunpack.c.h.b16 %v379
      %v685 = vunpack.c.l.b16 %v380
      %v686 = vunpack.c.h.b16 %v380
      %v687 = vunpack.c.l.b16 %v381
      %v688 = vunpack.c.h.b16 %v381
      %v689 = vunpack.c.l.b16 %v382
      %v690 = vunpack.c.h.b16 %v382
      %v691 = vunpack.c.l.b16 %v383
      %v692 = vunpack.c.h.b16 %v383
      %v693 = vpack.c.b16 %v503, %v501
      %v694 = vpack.c.b16 %v504, %v502
      %v695 = vpack.c.b16 %v507, %v505
      %v696 = vpack.c.b16 %v508, %v506
      %v697 = vpack.c.b16 %v511, %v509
      %v698 = vpack.c.b16 %v512, %v510
      %v699 = vpack.c.b16 %v515, %v513
      %v700 = vpack.c.b16 %v516, %v514
      %v701 = vpack.c.b16 %v519, %v517
      %v702 = vpack.c.b16 %v520, %v518
      %v703 = vpack.c.b16 %v523, %v521
      %v704 = vpack.c.b16 %v524, %v522
      %v705 = vpack.c.b16 %v527, %v525
      %v706 = vpack.c.b16 %v528, %v526
      %v707 = vpack.c.b16 %v531, %v529
      %v708 = vpack.c.b16 %v532, %v530
      %v709 = vpack.c.b16 %v535, %v533
      %v710 = vpack.c.b16 %v536, %v534
      %v711 = vpack.c.b16 %v539, %v537
      %v712 = vpack.c.b16 %v540, %v538
      %v713 = vpack.c.b16 %v543, %v541
      %v714 = vpack.c.b16 %v544, %v542
      %v715 = vpack.c.b16 %v547, %v545
      %v716 = vpack.c.b16 %v548, %v546
      %v717 = vpack.c.b16 %v551, %v549
      %v718 = vpack.c.b16 %v552, %v550
      %v719 = vpack.c.b16 %v555, %v553
      %v720 = vpack.c.b16 %v556, %v554
      %v721 = vpack.c.b16 %v559, %v557
      %v722 = vpack.c.b16 %v560, %v558
      %v723 = vpack.c.b16 %v563, %v561
      %v724 = vpack.c.b16 %v564, %v562
      %v725 = vpack.c.b16 %v567, %v565
      %v726 = vpack.c.b16 %v568, %v566
      %v727 = vpack.c.b16 %v571, %v569
      %v728 = vpack.c.b16 %v572, %v570
      %v729 = vpack.c.b16 %v575, %v573
      %v730 = vpack.c.b16 %v576, %v574
      %v731 = vpack.c.b16 %v579, %v577
      %v732 = vpack.c.b16 %v580, %v578
      %v733 = vpack.c.b16 %v583, %v581
      %v734 = vpack.c.b16 %v584, %v582
      %v735 = vpack.c.b16 %v587, %v585
      %v736 = vpack.c.b16 %v588, %v586
      %v737 = vpack.c.b16 %v591, %v589
      %v738 = vpack.c.b16 %v592, %v590
      %v739 = vpack.c.b16 %v595, %v593
      %v740 = vpack.c.b16 %v596, %v594
      %v741 = vpack.c.b16 %v599, %v597
      %v742 = vpack.c.b16 %v600, %v598
      %v743 = vpack.c.b16 %v603, %v601
      %v744 = vpack.c.b16 %v604, %v602
      %v745 = vpack.c.b16 %v607, %v605
      %v746 = vpack.c.b16 %v608, %v606
      %v747 = vpack.c.b16 %v611, %v609
      %v748 = vpack.c.b16 %v612, %v610
      %v749 = vpack.c.b16 %v615, %v613
      %v750 = vpack.c.b16 %v616, %v614
      %v751 = vpack.c.b16 %v619, %v617
      %v752 = vpack.c.b16 %v620, %v618
      %v753 = vpack.c.b16 %v623, %v621
      %v754 = vpack.c.b16 %v624, %v622
      %v755 = vpack.c.b16 %v627, %v625
      %v756 = vpack.c.b16 %v628, %v626
      %v757 = vpack.c.b16 %v631, %v629
      %v758 = vpack.c.b16 %v632, %v630
      %v759 = vpack.c.b16 %v635, %v633
      %v760 = vpack.c.b16 %v636, %v634
      %v761 = vpack.c.b16 %v639, %v637
      %v762 = vpack.c.b16 %v640, %v638
      %v763 = vpack.c.b16 %v643, %v641
      %v764 = vpack.c.b16 %v644, %v642
      %v765 = vpack.c.b16 %v647, %v645
      %v766 = vpack.c.b16 %v648, %v646
      %v767 = vpack.c.b16 %v651, %v649
      %v768 = vpack.c.b16 %v652, %v650
      %v769 = vpack.c.b16 %v655, %v653
      %v770 = vpack.c.b16 %v656, %v654
      %v771 = vpack.c.b16 %v659, %v657
      %v772 = vpack.c.b16 %v660, %v658
      %v773 = vpack.c.b16 %v663, %v661
      %v774 = vpack.c.b16 %v664, %v662
      %v775 = vpack.c.b16 %v667, %v665
      %v776 = vpack.c.b16 %v668, %v666
      %v777 = vpack.c.b16 %v671, %v669
      %v778 = vpack.c.b16 %v672, %v670
      %v779 = vpack.c.b16 %v675, %v673
      %v780 = vpack.c.b16 %v676, %v674
      %v781 = vpack.c.b16 %v679, %v677
      %v782 = vpack.c.b16 %v680, %v678
      %v783 = vpack.c.b16 %v683, %v681
      %v784 = vpack.c.b16 %v684, %v682
      %v785 = vpack.c.b16 %v687, %v685
      %v786 = vpack.c.b16 %v688, %v686
      %v787 = vpack.c.b16 %v691, %v689
      %v788 = vpack.c.b16 %v692, %v690
      %885 = vmatpush.bf16.msra.mxu0 %v707
      %886 = vmatpush.bf16.msra.mxu0 %v705
      %887 = vmatpush.bf16.msra.mxu0 %v703
      %888 = vmatpush.bf16.msra.mxu0 %v701
      %889 = vmatpush.bf16.msra.mxu0 %v699
      %890 = vmatpush.bf16.msra.mxu0 %v697
      %891 = vmatpush.bf16.msra.mxu0 %v695
      %892 = vmatpush.bf16.msra.mxu0 %v693
      %893 = vmatmul.bf16.gmra.mxu0 %v393
      %v894 = vpop.f32.mrf.mxu0
      %v895 = vadd.f32 0.0, %v894
      %v896 = vpop.f32.mrf.mxu0
      %897 = vdwg.mxu0
      %898 = vmatpush.bf16.msra.mxu0 %v723
      %899 = vmatpush.bf16.msra.mxu0 %v721
      %900 = vmatpush.bf16.msra.mxu0 %v719
      %901 = vmatpush.bf16.msra.mxu0 %v717
      %902 = vmatpush.bf16.msra.mxu0 %v715
      %903 = vmatpush.bf16.msra.mxu0 %v713
      %904 = vmatpush.bf16.msra.mxu0 %v711
      %905 = vmatpush.bf16.msra.mxu0 %v709
      %906 = vmatmul.bf16.gmra.mxu0 %v394
      %v907 = vpop.f32.mrf.mxu0
      %v908 = vadd.f32 %v895, %v907
      %v909 = vpop.f32.mrf.mxu0
      %910 = vdwg.mxu0
      %911 = vmatpush.bf16.msra.mxu0 %v739
      %912 = vmatpush.bf16.msra.mxu0 %v737
      %913 = vmatpush.bf16.msra.mxu0 %v735
      %914 = vmatpush.bf16.msra.mxu0 %v733
      %915 = vmatpush.bf16.msra.mxu0 %v731
      %916 = vmatpush.bf16.msra.mxu0 %v729
      %917 = vmatpush.bf16.msra.mxu0 %v727
      %918 = vmatpush.bf16.msra.mxu0 %v725
      %919 = vmatmul.bf16.gmra.mxu0 %v395
      %v920 = vpop.f32.mrf.mxu0
      %v921 = vadd.f32 %v908, %v920
      %v922 = vpop.f32.mrf.mxu0
      %923 = vdwg.mxu0
      %924 = vmatpush.bf16.msra.mxu0 %v755
      %925 = vmatpush.bf16.msra.mxu0 %v753
      %926 = vmatpush.bf16.msra.mxu0 %v751
      %927 = vmatpush.bf16.msra.mxu0 %v749
      %928 = vmatpush.bf16.msra.mxu0 %v747
      %929 = vmatpush.bf16.msra.mxu0 %v745
      %930 = vmatpush.bf16.msra.mxu0 %v743
      %931 = vmatpush.bf16.msra.mxu0 %v741
      %932 = vmatmul.bf16.gmra.mxu0 %v396
      %v933 = vpop.f32.mrf.mxu0
      %v934 = vadd.f32 %v921, %v933
      %v935 = vpop.f32.mrf.mxu0
      %936 = vdwg.mxu0
      %937 = vmatpush.bf16.msra.mxu0 %v771
      %938 = vmatpush.bf16.msra.mxu0 %v769
      %939 = vmatpush.bf16.msra.mxu0 %v767
      %940 = vmatpush.bf16.msra.mxu0 %v765
      %941 = vmatpush.bf16.msra.mxu0 %v763
      %942 = vmatpush.bf16.msra.mxu0 %v761
      %943 = vmatpush.bf16.msra.mxu0 %v759
      %944 = vmatpush.bf16.msra.mxu0 %v757
      %945 = vmatmul.bf16.gmra.mxu0 %v397
      %v946 = vpop.f32.mrf.mxu0
      %v947 = vadd.f32 %v934, %v946
      %v948 = vpop.f32.mrf.mxu0
      %949 = vdwg.mxu0
      %950 = vmatpush.bf16.msra.mxu0 %v787
      %951 = vmatpush.bf16.msra.mxu0 %v785
      %952 = vmatpush.bf16.msra.mxu0 %v783
      %953 = vmatpush.bf16.msra.mxu0 %v781
      %954 = vmatpush.bf16.msra.mxu0 %v779
      %955 = vmatpush.bf16.msra.mxu0 %v777
      %956 = vmatpush.bf16.msra.mxu0 %v775
      %957 = vmatpush.bf16.msra.mxu0 %v773
      %958 = vmatmul.bf16.gmra.mxu0 %v398
      %v959 = vpop.f32.mrf.mxu0
      %v960 = vadd.f32 %v947, %v959
      %v961 = vpop.f32.mrf.mxu0
      %962 = vdwg.mxu0
      %963 = vmatpush.bf16.msra.mxu0 %v708
      %964 = vmatpush.bf16.msra.mxu0 %v706
      %965 = vmatpush.bf16.msra.mxu0 %v704
      %966 = vmatpush.bf16.msra.mxu0 %v702
      %967 = vmatpush.bf16.msra.mxu0 %v700
      %968 = vmatpush.bf16.msra.mxu0 %v698
      %969 = vmatpush.bf16.msra.mxu0 %v696
      %970 = vmatpush.bf16.msra.mxu0 %v694
      %971 = vmatmul.bf16.gmra.mxu0 %v393
      %v972 = vpop.f32.mrf.mxu0
      %v973 = vadd.f32 0.0, %v972
      %v974 = vpop.f32.mrf.mxu0
      %975 = vdwg.mxu0
      %976 = vmatpush.bf16.msra.mxu0 %v724
      %977 = vmatpush.bf16.msra.mxu0 %v722
      %978 = vmatpush.bf16.msra.mxu0 %v720
      %979 = vmatpush.bf16.msra.mxu0 %v718
      %980 = vmatpush.bf16.msra.mxu0 %v716
      %981 = vmatpush.bf16.msra.mxu0 %v714
      %982 = vmatpush.bf16.msra.mxu0 %v712
      %983 = vmatpush.bf16.msra.mxu0 %v710
      %984 = vmatmul.bf16.gmra.mxu0 %v394
      %v985 = vpop.f32.mrf.mxu0
      %v986 = vadd.f32 %v973, %v985
      %v987 = vpop.f32.mrf.mxu0
      %988 = vdwg.mxu0
      %989 = vmatpush.bf16.msra.mxu0 %v740
      %990 = vmatpush.bf16.msra.mxu0 %v738
      %991 = vmatpush.bf16.msra.mxu0 %v736
      %992 = vmatpush.bf16.msra.mxu0 %v734
      %993 = vmatpush.bf16.msra.mxu0 %v732
      %994 = vmatpush.bf16.msra.mxu0 %v730
      %995 = vmatpush.bf16.msra.mxu0 %v728
      %996 = vmatpush.bf16.msra.mxu0 %v726
      %997 = vmatmul.bf16.gmra.mxu0 %v395
      %v998 = vpop.f32.mrf.mxu0
      %v999 = vadd.f32 %v986, %v998
      %v1000 = vpop.f32.mrf.mxu0
      %1001 = vdwg.mxu0
      %1002 = vmatpush.bf16.msra.mxu0 %v756
      %1003 = vmatpush.bf16.msra.mxu0 %v754
      %1004 = vmatpush.bf16.msra.mxu0 %v752
      %1005 = vmatpush.bf16.msra.mxu0 %v750
      %1006 = vmatpush.bf16.msra.mxu0 %v748
      %1007 = vmatpush.bf16.msra.mxu0 %v746
      %1008 = vmatpush.bf16.msra.mxu0 %v744
      %1009 = vmatpush.bf16.msra.mxu0 %v742
      %1010 = vmatmul.bf16.gmra.mxu0 %v396
      %v1011 = vpop.f32.mrf.mxu0
      %v1012 = vadd.f32 %v999, %v1011
      %v1013 = vpop.f32.mrf.mxu0
      %1014 = vdwg.mxu0
      %1015 = vmatpush.bf16.msra.mxu0 %v772
      %1016 = vmatpush.bf16.msra.mxu0 %v770
      %1017 = vmatpush.bf16.msra.mxu0 %v768
      %1018 = vmatpush.bf16.msra.mxu0 %v766
      %1019 = vmatpush.bf16.msra.mxu0 %v764
      %1020 = vmatpush.bf16.msra.mxu0 %v762
      %1021 = vmatpush.bf16.msra.mxu0 %v760
      %1022 = vmatpush.bf16.msra.mxu0 %v758
      %1023 = vmatmul.bf16.gmra.mxu0 %v397
      %v1024 = vpop.f32.mrf.mxu0
      %v1025 = vadd.f32 %v1012, %v1024
      %v1026 = vpop.f32.mrf.mxu0
      %1027 = vdwg.mxu0
      %1028 = vmatpush.bf16.msra.mxu0 %v788
      %1029 = vmatpush.bf16.msra.mxu0 %v786
      %1030 = vmatpush.bf16.msra.mxu0 %v784
      %1031 = vmatpush.bf16.msra.mxu0 %v782
      %1032 = vmatpush.bf16.msra.mxu0 %v780
      %1033 = vmatpush.bf16.msra.mxu0 %v778
      %1034 = vmatpush.bf16.msra.mxu0 %v776
      %1035 = vmatpush.bf16.msra.mxu0 %v774
      %1036 = vmatmul.bf16.gmra.mxu0 %v398
      %v1037 = vpop.f32.mrf.mxu0
      %v1038 = vadd.f32 %v1025, %v1037
      %v1039 = vpop.f32.mrf.mxu0
      %1040 = vdwg.mxu0
      %v1041 = vadd.f32 %v283, %v960
      %v1042 = vadd.f32 %v284, %v1038
      %1043 = vst [vmem:[#allocation2] sm:$0xff] %v1041
      %1044 = vst [vmem:[#allocation2 + $0x8] sm:$0xff] %v1042
      %p1045 = scmp.eq.s32.totalorder %s21, 2
      // Predicated region
      $region37: #{forward.17} parent=31 // pred_check
        %p1046 = pneg %p1045
      $region38: #{forward.17} parent=31 // pred_check_branch
        %1048 = sbr.rel (%p1046) target = $region40
      $region39: #{forward.17} parent=31 // pred_region
        %v1049 = vld [vmem:[#allocation2] sm:$0xff]
        %v1050 = vld [vmem:[#allocation2 + $0x8] sm:$0xff]
        %v1051 = vld [vmem:[%s265] sm:$0x3]
        %v1053 = vperm.slane %v1051, 0
        %v1054 = vperm.slane %v1051, 1
        %v1057 = vadd.f32 %v1049, %v1053
        %v1058 = vadd.f32 %v1050, %v1054
        %vm1059 = vcmp.gt.f32.partialorder %v1057, 0.0
        %vm1060 = vcmp.gt.f32.partialorder %v1058, 0.0
        %v1061 = vmul.f32 %v1057, 0.2
        %v1062 = vmul.f32 %v1058, 0.2
        %v1063 = vsel %vm1059, %v1057, %v1061
        %v1064 = vsel %vm1060, %v1058, %v1062
        %v1065 = vpack.c.bf16 %v1064, %v1063
        %1066 = vst [vmem:[%s275] sm:$0xff] %v1065
      $region40: #{forward.17} parent=31 // pred_fallthru
        _
      %s1067 = smul.u32 2, %s20
      %p1068 = scmp.lt.s32.totalorder %s19, 0
      %s1069 = scalar_select %p1068, %s19, 0
      %p1070 = scmp.lt.s32.totalorder %s1067, 1
      %s1071 = scalar_select %p1070, %s1067, 1
      %s1072 = smul.addr %s1069, 2
      %s1073 = sadd.s32 %s1071, %s1072
      %s1074 = smul.addr %s1073, 4
      %s1075 = scalar_lea.vmem %s3, %s1074
      // Predicated region
      $region41: #{forward.17} parent=31 // pred_check
        %p1076 = pneg %p135
      $region42: #{forward.17} parent=31 // pred_check_branch
        %1078 = sbr.rel (%p1076) target = $region44
      $region43: #{forward.17} parent=31 // pred_region
        %s1079 = smul.u32 2, %s20
      $region44: #{forward.17} parent=31 // pred_fallthru
        _
      // Predicated region
      $region45: #{forward.17} parent=31 // pred_check
        %p1080 = pneg %p135
      $region46: #{forward.17} parent=31 // pred_check_branch
        %1082 = sbr.rel (%p1080) target = $region48
      $region47: #{forward.17} parent=31 // pred_region
        %s1083 = smul.u32 2, %s20
        %p1084 = scmp.lt.s32.totalorder %s19, 0
        %s1085 = scalar_select %p1084, %s19, 0
        %p1086 = scmp.lt.s32.totalorder %s1083, 1
        %s1087 = scalar_select %p1086, %s1083, 1
        %s1088 = smul.addr %s1085, 2
        %s1089 = sadd.s32 %s1087, %s1088
        %s1090 = smul.addr %s1089, 4
        %s1091 = scalar_lea.vmem %s3, %s1090
      $region48: #{forward.17} parent=31 // pred_fallthru
        _
    $region32: #{forward.17} parent=5 // pred_fallthru
      _
    %p1092 = scmp.le.s32.totalorder 2, %s9
    // Predicated region
    $region49: #{forward.17} parent=5 // pred_check
      %p1093 = pneg %p1092
    $region50: #{forward.17} parent=5 // pred_check_branch
      %1095 = sbr.rel (%p1093) target = $region52
    $region51: #{forward.17} parent=5 // pred_region
      %s1096 = ssub.s32 %s9, 2
    $region52: #{forward.17} parent=5 // pred_fallthru
      _
  $region6: #{forward.17} parent=0 // loop_footer
    %s13 = sadd.s32 1, %s9
  $region7: #{forward.17} parent=0 // loop_footer_branch
    %8 = sbr.rel target = $region3
  $region8: #{forward.17} parent=0 // loop_exit
    _

// kernel: forward.18
$region0: #{forward.18}
  #allocation0 [shape = 'u32[]', space=smem, size = 0x4, offset = 0x4, fixed_abs, tag = 'smem constant byte address 0x4 - core index']
  #allocation1 [shape = 'u32[72,128]{1,0:T(1,128)}', space=vmem, size = 0x9000, scoped, tag = 'internal scratch']
  #allocation2 [shape = 'f32[8,512]{1,0:T(8,128)}', space=vmem, size = 0x4000, scoped, tag = 'scratch operand']
  %s0 = inlined_call_operand.vmem [shape: bf16[8,2304], index: 0, kind: input, shape index: {}]
  %s1 = inlined_call_operand.vmem [shape: bf16[2304,512], index: 1, kind: input, shape index: {}]
  %s2 = inlined_call_operand.vmem [shape: f32[1,512], index: 2, kind: input, shape index: {}]
  %s3 = inlined_call_operand.vmem [shape: bf16[8,512], index: 3, kind: output, shape index: {}]
  %s4 = sld [smem:[#allocation0]]
  $region53: #{forward.18} parent=0
    _
  %s6 = ssub.s32 1, %s4
  %s7 = scalar_select 0, %s6, %s4
  loop: start=0, step=1, limit=5
  $region2: #{forward.18} parent=0 // loop_pre_header
    _
  $region3: #{forward.18} parent=0 // loop_header
    %s9 = sphi 0, %s13
    %p10 = scmp.ge.s32.totalorder %s9, 5
    %s16 = sphi 0, %s35
    %s17 = sphi 0, %s31
    %s18 = sphi 0, %s27
    %s19 = sphi 0, %s16
    %s20 = sphi 0, %s17
    %s21 = sphi 0, %s18
    %s22 = sphi 0, %s19
    %s23 = sphi 0, %s20
    %s24 = sphi 0, %s21
    %s40 = sphi 0, %s42
    %s43 = sphi 0, %s40
    %s44 = sphi 0, %s43
    %s60 = sphi 0, %s44
    %s68 = sphi 0, %s70
    %s71 = sphi 0, %s68
    %s72 = sphi 0, %s71
    %s88 = sphi 0, %s72
    %s94 = sphi 0, %s96
    %s97 = sphi 0, %s94
    %s98 = sphi 0, %s97
    %s114 = sphi 0, %s98
    %s122 = sphi 0, %s124
    %s125 = sphi 0, %s122
    %s126 = sphi 0, %s125
    %s142 = sphi 0, %s126
  $region4: #{forward.18} parent=0 // loop_header_branch
    %12 = sbr.rel (%p10) target = $region8
  $region5: #{forward.18} parent=0 // loop_body
    %s14 = ssub.s32 %s9, 1
    %s15 = ssub.s32 %s9, 2
    %s25 = sadd.s32 1, %s18
    %p26 = scmp.ge.s32.totalorder %s25, 3
    %s27 = scalar_select %p26, 0, %s25
    %s28 = sadd.s32 1, %s17
    %s29 = scalar_select %p26, %s28, %s17
    %p30 = scmp.ge.s32.totalorder %s29, 1
    %s31 = scalar_select %p30, 0, %s29
    %s32 = sadd.s32 1, %s16
    %s33 = scalar_select %p30, %s32, %s16
    %p34 = scmp.ge.s32.totalorder %s33, 1
    %s35 = scalar_select %p34, 0, %s33
    %s36 = ssub.s32 %s16, %s35
    %s37 = ssub.s32 %s18, %s27
    %s38 = sor.u32 %s36, %s37
    %p39 = scmp.eq.s32.totalorder %s38, 0
    %s41 = sadd.s32 %s40, 1
    %s42 = scalar_select %p39, %s40, %s41
    %p45 = pneg %p39
    %p46 = scmp.eq.s32.totalorder %s9, 2
    %p47 = por %p45, %p46
    %p48 = scmp.ne.s32.totalorder %s40, %s43
    %p49 = scmp.eq.s32.totalorder %s9, 0
    %p50 = por %p48, %p49
    %p51 = scmp.ne.s32.totalorder %s40, %s43
    %p52 = scmp.eq.s32.totalorder %s14, 2
    %p53 = por %p51, %p52
    %p54 = scmp.ne.s32.totalorder %s43, %s44
    %p55 = scmp.eq.s32.totalorder %s14, 0
    %p56 = por %p54, %p55
    %p57 = scmp.ne.s32.totalorder %s43, %s44
    %p58 = scmp.eq.s32.totalorder %s15, 2
    %p59 = por %p57, %p58
    %p61 = scmp.ne.s32.totalorder %s44, %s60
    %p62 = scmp.eq.s32.totalorder %s15, 0
    %p63 = por %p61, %p62
    %s64 = ssub.s32 %s18, %s27
    %s65 = ssub.s32 %s17, %s31
    %s66 = sor.u32 %s64, %s65
    %p67 = scmp.eq.s32.totalorder %s66, 0
    %s69 = sadd.s32 %s68, 1
    %s70 = scalar_select %p67, %s68, %s69
    %p73 = pneg %p67
    %p74 = scmp.eq.s32.totalorder %s9, 2
    %p75 = por %p73, %p74
    %p76 = scmp.ne.s32.totalorder %s68, %s71
    %p77 = scmp.eq.s32.totalorder %s9, 0
    %p78 = por %p76, %p77
    %p79 = scmp.ne.s32.totalorder %s68, %s71
    %p80 = scmp.eq.s32.totalorder %s14, 2
    %p81 = por %p79, %p80
    %p82 = scmp.ne.s32.totalorder %s71, %s72
    %p83 = scmp.eq.s32.totalorder %s14, 0
    %p84 = por %p82, %p83
    %p85 = scmp.ne.s32.totalorder %s71, %s72
    %p86 = scmp.eq.s32.totalorder %s15, 2
    %p87 = por %p85, %p86
    %p89 = scmp.ne.s32.totalorder %s72, %s88
    %p90 = scmp.eq.s32.totalorder %s15, 0
    %p91 = por %p89, %p90
    %s92 = ssub.s32 %s17, %s31
    %p93 = scmp.eq.s32.totalorder %s92, 0
    %s95 = sadd.s32 %s94, 1
    %s96 = scalar_select %p93, %s94, %s95
    %p99 = pneg %p93
    %p100 = scmp.eq.s32.totalorder %s9, 2
    %p101 = por %p99, %p100
    %p102 = scmp.ne.s32.totalorder %s94, %s97
    %p103 = scmp.eq.s32.totalorder %s9, 0
    %p104 = por %p102, %p103
    %p105 = scmp.ne.s32.totalorder %s94, %s97
    %p106 = scmp.eq.s32.totalorder %s14, 2
    %p107 = por %p105, %p106
    %p108 = scmp.ne.s32.totalorder %s97, %s98
    %p109 = scmp.eq.s32.totalorder %s14, 0
    %p110 = por %p108, %p109
    %p111 = scmp.ne.s32.totalorder %s97, %s98
    %p112 = scmp.eq.s32.totalorder %s15, 2
    %p113 = por %p111, %p112
    %p115 = scmp.ne.s32.totalorder %s98, %s114
    %p116 = scmp.eq.s32.totalorder %s15, 0
    %p117 = por %p115, %p116
    %s118 = ssub.s32 %s16, %s35
    %s119 = ssub.s32 %s17, %s31
    %s120 = sor.u32 %s118, %s119
    %p121 = scmp.eq.s32.totalorder %s120, 0
    %s123 = sadd.s32 %s122, 1
    %s124 = scalar_select %p121, %s122, %s123
    %p127 = pneg %p121
    %p128 = scmp.eq.s32.totalorder %s9, 2
    %p129 = por %p127, %p128
    %p130 = scmp.ne.s32.totalorder %s122, %s125
    %p131 = scmp.eq.s32.totalorder %s9, 0
    %p132 = por %p130, %p131
    %p133 = scmp.ne.s32.totalorder %s122, %s125
    %p134 = scmp.eq.s32.totalorder %s14, 2
    %p135 = por %p133, %p134
    %p136 = scmp.ne.s32.totalorder %s125, %s126
    %p137 = scmp.eq.s32.totalorder %s14, 0
    %p138 = por %p136, %p137
    %p139 = scmp.ne.s32.totalorder %s125, %s126
    %p140 = scmp.eq.s32.totalorder %s15, 2
    %p141 = por %p139, %p140
    %p143 = scmp.ne.s32.totalorder %s126, %s142
    %p144 = scmp.eq.s32.totalorder %s15, 0
    %p145 = por %p143, %p144
    %p146 = scmp.le.s32.totalorder 1, %s9
    %p147 = scmp.lt.s32.totalorder %s9, 4
    %p148 = pnand %p146, %p147
    %p149 = pneg %p148
    // Predicated region
    $region9: #{forward.18} parent=5 // pred_check
      _
    $region10: #{forward.18} parent=5 // pred_check_branch
      %151 = sbr.rel (%p148) target = $region12
    $region11: #{forward.18} parent=5 // pred_region
      %s152 = ssub.s32 %s9, 1
      // Predicated region
      $region13: #{forward.18} parent=11 // pred_check
        %p153 = pneg %p110
      $region14: #{forward.18} parent=11 // pred_check_branch
        %155 = sbr.rel (%p153) target = $region16
      $region15: #{forward.18} parent=11 // pred_region
        %s156 = smul.u32 4, %s20
        %p157 = scmp.lt.s32.totalorder %s156, 3
        %s158 = scalar_select %p157, %s156, 3
        %s159 = scalar_lea.vmem %s2, %s158
        %s160 = smul.u32 4, %s20
      $region16: #{forward.18} parent=11 // pred_fallthru
        _
    $region12: #{forward.18} parent=5 // pred_fallthru
      _
    %p161 = scmp.lt.s32.totalorder %s9, 3
    // Predicated region
    $region17: #{forward.18} parent=5 // pred_check
      %p162 = pneg %p161
    $region18: #{forward.18} parent=5 // pred_check_branch
      %164 = sbr.rel (%p162) target = $region20
    $region19: #{forward.18} parent=5 // pred_region
      // Predicated region
      $region21: #{forward.18} parent=19 // pred_check
        %p165 = pneg %p50
      $region22: #{forward.18} parent=19 // pred_check_branch
        %167 = sbr.rel (%p165) target = $region24
      $region23: #{forward.18} parent=19 // pred_region
        %s168 = smul.u32 6, %s18
        %p169 = scmp.lt.s32.totalorder %s16, 0
        %s170 = scalar_select %p169, %s16, 0
        %p171 = scmp.lt.s32.totalorder %s168, 17
        %s172 = scalar_select %p171, %s168, 17
        %s173 = smul.addr %s170, 18
        %s174 = sadd.s32 %s172, %s173
        %s175 = smul.addr %s174, 4
        %s176 = scalar_lea.vmem %s0, %s175
        %s177 = smul.u32 6, %s18
      $region24: #{forward.18} parent=19 // pred_fallthru
        _
      // Predicated region
      $region25: #{forward.18} parent=19 // pred_check
        %p178 = pneg %p78
      $region26: #{forward.18} parent=19 // pred_check_branch
        %180 = sbr.rel (%p178) target = $region28
      $region27: #{forward.18} parent=19 // pred_region
        %s181 = smul.u32 96, %s18
        %s182 = smul.u32 4, %s17
        %p183 = scmp.lt.s32.totalorder %s181, 287
        %s184 = scalar_select %p183, %s181, 287
        %p185 = scmp.lt.s32.totalorder %s182, 3
        %s186 = scalar_select %p185, %s182, 3
        %s187 = smul.addr %s184, 4
        %s188 = sadd.s32 %s186, %s187
        %s189 = smul.addr %s188, 4
        %s190 = scalar_lea.vmem %s1, %s189
        %s191 = smul.u32 96, %s18
        %s192 = smul.u32 4, %s17
      $region28: #{forward.18} parent=19 // pred_fallthru
        _
    $region20: #{forward.18} parent=5 // pred_fallthru
      _
    %p193 = scmp.le.s32.totalorder 1, %s9
    %p194 = scmp.lt.s32.totalorder %s9, 4
    %p195 = pnand %p193, %p194
    %p196 = pneg %p195
    // Predicated region
    $region29: #{forward.18} parent=5 // pred_check
      _
    $region30: #{forward.18} parent=5 // pred_check_branch
      %198 = sbr.rel (%p195) target = $region32
    $region31: #{forward.18} parent=5 // pred_region
      %s199 = ssub.s32 %s9, 1
      %s200 = smul.u32 6, %s21
      %p201 = scmp.lt.s32.totalorder %s19, 0
      %s202 = scalar_select %p201, %s19, 0
      %p203 = scmp.lt.s32.totalorder %s200, 17
      %s204 = scalar_select %p203, %s200, 17
      %s205 = smul.addr %s202, 18
      %s206 = sadd.s32 %s204, %s205
      %s207 = smul.addr %s206, 4
      %s208 = scalar_lea.vmem %s0, %s207
      %p209 = pneg %p56
      %p210 = pneg %p53
      %s211 = smul.u32 96, %s21
      %s212 = smul.u32 4, %s20
      %p213 = scmp.lt.s32.totalorder %s211, 287
      %s214 = scalar_select %p213, %s211, 287
      %p215 = scmp.lt.s32.totalorder %s212, 3
      %s216 = scalar_select %p215, %s212, 3
      %s217 = smul.addr %s214, 4
      %s218 = sadd.s32 %s216, %s217
      %s219 = smul.addr %s218, 4
      %s220 = scalar_lea.vmem %s1, %s219
      %p221 = pneg %p84
      %p222 = pneg %p81
      %s223 = smul.u32 4, %s20
      %p224 = scmp.lt.s32.totalorder %s223, 3
      %s225 = scalar_select %p224, %s223, 3
      %s226 = scalar_lea.vmem %s2, %s225
      %p227 = pneg %p110
      %p228 = pneg %p107
      %p229 = pneg %p138
      %p230 = pneg %p135
      %s231 = smul.u32 4, %s20
      %p232 = scmp.lt.s32.totalorder %s19, 0
      %s233 = scalar_select %p232, %s19, 0
      %p234 = scmp.lt.s32.totalorder %s231, 3
      %s235 = scalar_select %p234, %s231, 3
      %s236 = smul.addr %s233, 4
      %s237 = sadd.s32 %s235, %s236
      %s238 = smul.addr %s237, 4
      %s239 = scalar_lea.vmem %s3, %s238
      %s240 = smul.u32 6, %s21
      %p241 = scmp.lt.s32.totalorder %s19, 0
      %s242 = scalar_select %p241, %s19, 0
      %p243 = scmp.lt.s32.totalorder %s240, 17
      %s244 = scalar_select %p243, %s240, 17
      %s245 = smul.addr %s242, 18
      %s246 = sadd.s32 %s244, %s245
      %s247 = smul.addr %s246, 4
      %s248 = scalar_lea.vmem %s0, %s247
      %s249 = smul.u32 6, %s21
      %s250 = smul.u32 96, %s21
      %s251 = smul.u32 4, %s20
      %p252 = scmp.lt.s32.totalorder %s250, 287
      %s253 = scalar_select %p252, %s250, 287
      %p254 = scmp.lt.s32.totalorder %s251, 3
      %s255 = scalar_select %p254, %s251, 3
      %s256 = smul.addr %s253, 4
      %s257 = sadd.s32 %s255, %s256
      %s258 = smul.addr %s257, 4
      %s259 = scalar_lea.vmem %s1, %s258
      %s260 = smul.u32 96, %s21
      %s261 = smul.u32 4, %s20
      %s262 = smul.u32 4, %s20
      %p263 = scmp.lt.s32.totalorder %s262, 3
      %s264 = scalar_select %p263, %s262, 3
      %s265 = scalar_lea.vmem %s2, %s264
      %s266 = smul.u32 4, %s20
      %s267 = smul.u32 4, %s20
      %p268 = scmp.lt.s32.totalorder %s19, 0
      %s269 = scalar_select %p268, %s19, 0
      %p270 = scmp.lt.s32.totalorder %s267, 3
      %s271 = scalar_select %p270, %s267, 3
      %s272 = smul.addr %s269, 4
      %s273 = sadd.s32 %s271, %s272
      %s274 = smul.addr %s273, 4
      %s275 = scalar_lea.vmem %s3, %s274
      %s276 = smul.u32 4, %s20
      %p277 = scmp.eq.s32.totalorder %s21, 0
      // Predicated region
      $region33: #{forward.18} parent=31 // pred_check
        %p278 = pneg %p277
      $region34: #{forward.18} parent=31 // pred_check_branch
        %280 = sbr.rel (%p278) target = $region36
      $region35: #{forward.18} parent=31 // pred_region
        %281 = vst [vmem:[#allocation2] sm:$0xff] 0.0
        %282 = vst [vmem:[#allocation2 + $0x8] sm:$0xff] 0.0
        %283 = vst [vmem:[#allocation2 + $0x10] sm:$0xff] 0.0
        %284 = vst [vmem:[#allocation2 + $0x18] sm:$0xff] 0.0
      $region36: #{forward.18} parent=31 // pred_fallthru
        _
      %v285 = vld [vmem:[#allocation2] sm:$0xff]
      %v286 = vld [vmem:[#allocation2 + $0x8] sm:$0xff]
      %v287 = vld [vmem:[#allocation2 + $0x10] sm:$0xff]
      %v288 = vld [vmem:[#allocation2 + $0x18] sm:$0xff]
      %v289 = vld [vmem:[%s248] sm:$0xff]
      %v290 = vld [vmem:[%s248 + $0x8] sm:$0xff]
      %v291 = vld [vmem:[%s248 + $0x10] sm:$0xff]
      %v292 = vld [vmem:[%s259] sm:$0xff]
      %v293 = vld [vmem:[%s259 + $0x8] sm:$0xff]
      %v294 = vld [vmem:[%s259 + $0x10] sm:$0xff]
      %v295 = vld [vmem:[%s259 + $0x18] sm:$0xff]
      %v296 = vld [vmem:[%s259 + $0x20] sm:$0xff]
      %v297 = vld [vmem:[%s259 + $0x28] sm:$0xff]
      %v298 = vld [vmem:[%s259 + $0x30] sm:$0xff]
      %v299 = vld [vmem:[%s259 + $0x38] sm:$0xff]
      %v300 = vld [vmem:[%s259 + $0x40] sm:$0xff]
      %v301 = vld [vmem:[%s259 + $0x48] sm:$0xff]
      %v302 = vld [vmem:[%s259 + $0x50] sm:$0xff]
      %v303 = vld [vmem:[%s259 + $0x58] sm:$0xff]
      %v304 = vld [vmem:[%s259 + $0x60] sm:$0xff]
      %v305 = vld [vmem:[%s259 + $0x68] sm:$0xff]
      %v306 = vld [vmem:[%s259 + $0x70] sm:$0xff]
      %v307 = vld [vmem:[%s259 + $0x78] sm:$0xff]
      %v308 = vld [vmem:[%s259 + $0x80] sm:$0xff]
      %v309 = vld [vmem:[%s259 + $0x88] sm:$0xff]
      %v310 = vld [vmem:[%s259 + $0x90] sm:$0xff]
      %v311 = vld [vmem:[%s259 + $0x98] sm:$0xff]
      %v312 = vld [vmem:[%s259 + $0xa0] sm:$0xff]
      %v313 = vld [vmem:[%s259 + $0xa8] sm:$0xff]
      %v314 = vld [vmem:[%s259 + $0xb0] sm:$0xff]
      %v315 = vld [vmem:[%s259 + $0xb8] sm:$0xff]
      %v316 = vld [vmem:[%s259 + $0xc0] sm:$0xff]
      %v317 = vld [vmem:[%s259 + $0xc8] sm:$0xff]
      %v318 = vld [vmem:[%s259 + $0xd0] sm:$0xff]
      %v319 = vld [vmem:[%s259 + $0xd8] sm:$0xff]
      %v320 = vld [vmem:[%s259 + $0xe0] sm:$0xff]
      %v321 = vld [vmem:[%s259 + $0xe8] sm:$0xff]
      %v322 = vld [vmem:[%s259 + $0xf0] sm:$0xff]
      %v323 = vld [vmem:[%s259 + $0xf8] sm:$0xff]
      %v324 = vld [vmem:[%s259 + $0x100] sm:$0xff]
      %v325 = vld [vmem:[%s259 + $0x108] sm:$0xff]
      %v326 = vld [vmem:[%s259 + $0x110] sm:$0xff]
      %v327 = vld [vmem:[%s259 + $0x118] sm:$0xff]
      %v328 = vld [vmem:[%s259 + $0x120] sm:$0xff]
      %v329 = vld [vmem:[%s259 + $0x128] sm:$0xff]
      %v330 = vld [vmem:[%s259 + $0x130] sm:$0xff]
      %v331 = vld [vmem:[%s259 + $0x138] sm:$0xff]
      %v332 = vld [vmem:[%s259 + $0x140] sm:$0xff]
      %v333 = vld [vmem:[%s259 + $0x148] sm:$0xff]
      %v334 = vld [vmem:[%s259 + $0x150] sm:$0xff]
      %v335 = vld [vmem:[%s259 + $0x158] sm:$0xff]
      %v336 = vld [vmem:[%s259 + $0x160] sm:$0xff]
      %v337 = vld [vmem:[%s259 + $0x168] sm:$0xff]
      %v338 = vld [vmem:[%s259 + $0x170] sm:$0xff]
      %v339 = vld [vmem:[%s259 + $0x178] sm:$0xff]
      %v340 = vld [vmem:[%s259 + $0x180] sm:$0xff]
      %v341 = vld [vmem:[%s259 + $0x188] sm:$0xff]
      %v342 = vld [vmem:[%s259 + $0x190] sm:$0xff]
      %v343 = vld [vmem:[%s259 + $0x198] sm:$0xff]
      %v344 = vld [vmem:[%s259 + $0x1a0] sm:$0xff]
      %v345 = vld [vmem:[%s259 + $0x1a8] sm:$0xff]
      %v346 = vld [vmem:[%s259 + $0x1b0] sm:$0xff]
      %v347 = vld [vmem:[%s259 + $0x1b8] sm:$0xff]
      %v348 = vld [vmem:[%s259 + $0x1c0] sm:$0xff]
      %v349 = vld [vmem:[%s259 + $0x1c8] sm:$0xff]
      %v350 = vld [vmem:[%s259 + $0x1d0] sm:$0xff]
      %v351 = vld [vmem:[%s259 + $0x1d8] sm:$0xff]
      %v352 = vld [vmem:[%s259 + $0x1e0] sm:$0xff]
      %v353 = vld [vmem:[%s259 + $0x1e8] sm:$0xff]
      %v354 = vld [vmem:[%s259 + $0x1f0] sm:$0xff]
      %v355 = vld [vmem:[%s259 + $0x1f8] sm:$0xff]
      %v356 = vld [vmem:[%s259 + $0x200] sm:$0xff]
      %v357 = vld [vmem:[%s259 + $0x208] sm:$0xff]
      %v358 = vld [vmem:[%s259 + $0x210] sm:$0xff]
      %v359 = vld [vmem:[%s259 + $0x218] sm:$0xff]
      %v360 = vld [vmem:[%s259 + $0x220] sm:$0xff]
      %v361 = vld [vmem:[%s259 + $0x228] sm:$0xff]
      %v362 = vld [vmem:[%s259 + $0x230] sm:$0xff]
      %v363 = vld [vmem:[%s259 + $0x238] sm:$0xff]
      %v364 = vld [vmem:[%s259 + $0x240] sm:$0xff]
      %v365 = vld [vmem:[%s259 + $0x248] sm:$0xff]
      %v366 = vld [vmem:[%s259 + $0x250] sm:$0xff]
      %v367 = vld [vmem:[%s259 + $0x258] sm:$0xff]
      %v368 = vld [vmem:[%s259 + $0x260] sm:$0xff]
      %v369 = vld [vmem:[%s259 + $0x268] sm:$0xff]
      %v370 = vld [vmem:[%s259 + $0x270] sm:$0xff]
      %v371 = vld [vmem:[%s259 + $0x278] sm:$0xff]
      %v372 = vld [vmem:[%s259 + $0x280] sm:$0xff]
      %v373 = vld [vmem:[%s259 + $0x288] sm:$0xff]
      %v374 = vld [vmem:[%s259 + $0x290] sm:$0xff]
      %v375 = vld [vmem:[%s259 + $0x298] sm:$0xff]
      %v376 = vld [vmem:[%s259 + $0x2a0] sm:$0xff]
      %v377 = vld [vmem:[%s259 + $0x2a8] sm:$0xff]
      %v378 = vld [vmem:[%s259 + $0x2b0] sm:$0xff]
      %v379 = vld [vmem:[%s259 + $0x2b8] sm:$0xff]
      %v380 = vld [vmem:[%s259 + $0x2c0] sm:$0xff]
      %v381 = vld [vmem:[%s259 + $0x2c8] sm:$0xff]
      %v382 = vld [vmem:[%s259 + $0x2d0] sm:$0xff]
      %v383 = vld [vmem:[%s259 + $0x2d8] sm:$0xff]
      %v384 = vld [vmem:[%s259 + $0x2e0] sm:$0xff]
      %v385 = vld [vmem:[%s259 + $0x2e8] sm:$0xff]
      %v386 = vld [vmem:[%s259 + $0x2f0] sm:$0xff]
      %v387 = vld [vmem:[%s259 + $0x2f8] sm:$0xff]
      %v388 = vld [vmem:[%s259 + $0x300] sm:$0xff]
      %v389 = vld [vmem:[%s259 + $0x308] sm:$0xff]
      %v390 = vld [vmem:[%s259 + $0x310] sm:$0xff]
      %v391 = vld [vmem:[%s259 + $0x318] sm:$0xff]
      %v392 = vld [vmem:[%s259 + $0x320] sm:$0xff]
      %v393 = vld [vmem:[%s259 + $0x328] sm:$0xff]
      %v394 = vld [vmem:[%s259 + $0x330] sm:$0xff]
      %v395 = vld [vmem:[%s259 + $0x338] sm:$0xff]
      %v396 = vld [vmem:[%s259 + $0x340] sm:$0xff]
      %v397 = vld [vmem:[%s259 + $0x348] sm:$0xff]
      %v398 = vld [vmem:[%s259 + $0x350] sm:$0xff]
      %v399 = vld [vmem:[%s259 + $0x358] sm:$0xff]
      %v400 = vld [vmem:[%s259 + $0x360] sm:$0xff]
      %v401 = vld [vmem:[%s259 + $0x368] sm:$0xff]
      %v402 = vld [vmem:[%s259 + $0x370] sm:$0xff]
      %v403 = vld [vmem:[%s259 + $0x378] sm:$0xff]
      %v404 = vld [vmem:[%s259 + $0x380] sm:$0xff]
      %v405 = vld [vmem:[%s259 + $0x388] sm:$0xff]
      %v406 = vld [vmem:[%s259 + $0x390] sm:$0xff]
      %v407 = vld [vmem:[%s259 + $0x398] sm:$0xff]
      %v408 = vld [vmem:[%s259 + $0x3a0] sm:$0xff]
      %v409 = vld [vmem:[%s259 + $0x3a8] sm:$0xff]
      %v410 = vld [vmem:[%s259 + $0x3b0] sm:$0xff]
      %v411 = vld [vmem:[%s259 + $0x3b8] sm:$0xff]
      %v412 = vld [vmem:[%s259 + $0x3c0] sm:$0xff]
      %v413 = vld [vmem:[%s259 + $0x3c8] sm:$0xff]
      %v414 = vld [vmem:[%s259 + $0x3d0] sm:$0xff]
      %v415 = vld [vmem:[%s259 + $0x3d8] sm:$0xff]
      %v416 = vld [vmem:[%s259 + $0x3e0] sm:$0xff]
      %v417 = vld [vmem:[%s259 + $0x3e8] sm:$0xff]
      %v418 = vld [vmem:[%s259 + $0x3f0] sm:$0xff]
      %v419 = vld [vmem:[%s259 + $0x3f8] sm:$0xff]
      %v420 = vld [vmem:[%s259 + $0x400] sm:$0xff]
      %v421 = vld [vmem:[%s259 + $0x408] sm:$0xff]
      %v422 = vld [vmem:[%s259 + $0x410] sm:$0xff]
      %v423 = vld [vmem:[%s259 + $0x418] sm:$0xff]
      %v424 = vld [vmem:[%s259 + $0x420] sm:$0xff]
      %v425 = vld [vmem:[%s259 + $0x428] sm:$0xff]
      %v426 = vld [vmem:[%s259 + $0x430] sm:$0xff]
      %v427 = vld [vmem:[%s259 + $0x438] sm:$0xff]
      %v428 = vld [vmem:[%s259 + $0x440] sm:$0xff]
      %v429 = vld [vmem:[%s259 + $0x448] sm:$0xff]
      %v430 = vld [vmem:[%s259 + $0x450] sm:$0xff]
      %v431 = vld [vmem:[%s259 + $0x458] sm:$0xff]
      %v432 = vld [vmem:[%s259 + $0x460] sm:$0xff]
      %v433 = vld [vmem:[%s259 + $0x468] sm:$0xff]
      %v434 = vld [vmem:[%s259 + $0x470] sm:$0xff]
      %v435 = vld [vmem:[%s259 + $0x478] sm:$0xff]
      %v436 = vld [vmem:[%s259 + $0x480] sm:$0xff]
      %v437 = vld [vmem:[%s259 + $0x488] sm:$0xff]
      %v438 = vld [vmem:[%s259 + $0x490] sm:$0xff]
      %v439 = vld [vmem:[%s259 + $0x498] sm:$0xff]
      %v440 = vld [vmem:[%s259 + $0x4a0] sm:$0xff]
      %v441 = vld [vmem:[%s259 + $0x4a8] sm:$0xff]
      %v442 = vld [vmem:[%s259 + $0x4b0] sm:$0xff]
      %v443 = vld [vmem:[%s259 + $0x4b8] sm:$0xff]
      %v444 = vld [vmem:[%s259 + $0x4c0] sm:$0xff]
      %v445 = vld [vmem:[%s259 + $0x4c8] sm:$0xff]
      %v446 = vld [vmem:[%s259 + $0x4d0] sm:$0xff]
      %v447 = vld [vmem:[%s259 + $0x4d8] sm:$0xff]
      %v448 = vld [vmem:[%s259 + $0x4e0] sm:$0xff]
      %v449 = vld [vmem:[%s259 + $0x4e8] sm:$0xff]
      %v450 = vld [vmem:[%s259 + $0x4f0] sm:$0xff]
      %v451 = vld [vmem:[%s259 + $0x4f8] sm:$0xff]
      %v452 = vld [vmem:[%s259 + $0x500] sm:$0xff]
      %v453 = vld [vmem:[%s259 + $0x508] sm:$0xff]
      %v454 = vld [vmem:[%s259 + $0x510] sm:$0xff]
      %v455 = vld [vmem:[%s259 + $0x518] sm:$0xff]
      %v456 = vld [vmem:[%s259 + $0x520] sm:$0xff]
      %v457 = vld [vmem:[%s259 + $0x528] sm:$0xff]
      %v458 = vld [vmem:[%s259 + $0x530] sm:$0xff]
      %v459 = vld [vmem:[%s259 + $0x538] sm:$0xff]
      %v460 = vld [vmem:[%s259 + $0x540] sm:$0xff]
      %v461 = vld [vmem:[%s259 + $0x548] sm:$0xff]
      %v462 = vld [vmem:[%s259 + $0x550] sm:$0xff]
      %v463 = vld [vmem:[%s259 + $0x558] sm:$0xff]
      %v464 = vld [vmem:[%s259 + $0x560] sm:$0xff]
      %v465 = vld [vmem:[%s259 + $0x568] sm:$0xff]
      %v466 = vld [vmem:[%s259 + $0x570] sm:$0xff]
      %v467 = vld [vmem:[%s259 + $0x578] sm:$0xff]
      %v468 = vld [vmem:[%s259 + $0x580] sm:$0xff]
      %v469 = vld [vmem:[%s259 + $0x588] sm:$0xff]
      %v470 = vld [vmem:[%s259 + $0x590] sm:$0xff]
      %v471 = vld [vmem:[%s259 + $0x598] sm:$0xff]
      %v472 = vld [vmem:[%s259 + $0x5a0] sm:$0xff]
      %v473 = vld [vmem:[%s259 + $0x5a8] sm:$0xff]
      %v474 = vld [vmem:[%s259 + $0x5b0] sm:$0xff]
      %v475 = vld [vmem:[%s259 + $0x5b8] sm:$0xff]
      %v476 = vld [vmem:[%s259 + $0x5c0] sm:$0xff]
      %v477 = vld [vmem:[%s259 + $0x5c8] sm:$0xff]
      %v478 = vld [vmem:[%s259 + $0x5d0] sm:$0xff]
      %v479 = vld [vmem:[%s259 + $0x5d8] sm:$0xff]
      %v480 = vld [vmem:[%s259 + $0x5e0] sm:$0xff]
      %v481 = vld [vmem:[%s259 + $0x5e8] sm:$0xff]
      %v482 = vld [vmem:[%s259 + $0x5f0] sm:$0xff]
      %v483 = vld [vmem:[%s259 + $0x5f8] sm:$0xff]
      %v487 = vunpack.c.l.b16 %v289
      %v488 = vunpack.c.h.b16 %v289
      %v489 = vunpack.c.l.b16 %v290
      %v490 = vunpack.c.h.b16 %v290
      %v491 = vunpack.c.l.b16 %v291
      %v492 = vunpack.c.h.b16 %v291
      %v493 = vpack.c.b16 %v487, %v487
      %v494 = vpack.c.b16 %v488, %v488
      %v495 = vpack.c.b16 %v489, %v489
      %v496 = vpack.c.b16 %v490, %v490
      %v497 = vpack.c.b16 %v491, %v491
      %v498 = vpack.c.b16 %v492, %v492
      %v697 = vunpack.c.l.b16 %v292
      %v698 = vunpack.c.h.b16 %v292
      %v699 = vunpack.c.l.b16 %v293
      %v700 = vunpack.c.h.b16 %v293
      %v701 = vunpack.c.l.b16 %v294
      %v702 = vunpack.c.h.b16 %v294
      %v703 = vunpack.c.l.b16 %v295
      %v704 = vunpack.c.h.b16 %v295
      %v705 = vunpack.c.l.b16 %v296
      %v706 = vunpack.c.h.b16 %v296
      %v707 = vunpack.c.l.b16 %v297
      %v708 = vunpack.c.h.b16 %v297
      %v709 = vunpack.c.l.b16 %v298
      %v710 = vunpack.c.h.b16 %v298
      %v711 = vunpack.c.l.b16 %v299
      %v712 = vunpack.c.h.b16 %v299
      %v713 = vunpack.c.l.b16 %v300
      %v714 = vunpack.c.h.b16 %v300
      %v715 = vunpack.c.l.b16 %v301
      %v716 = vunpack.c.h.b16 %v301
      %v717 = vunpack.c.l.b16 %v302
      %v718 = vunpack.c.h.b16 %v302
      %v719 = vunpack.c.l.b16 %v303
      %v720 = vunpack.c.h.b16 %v303
      %v721 = vunpack.c.l.b16 %v304
      %v722 = vunpack.c.h.b16 %v304
      %v723 = vunpack.c.l.b16 %v305
      %v724 = vunpack.c.h.b16 %v305
      %v725 = vunpack.c.l.b16 %v306
      %v726 = vunpack.c.h.b16 %v306
      %v727 = vunpack.c.l.b16 %v307
      %v728 = vunpack.c.h.b16 %v307
      %v729 = vunpack.c.l.b16 %v308
      %v730 = vunpack.c.h.b16 %v308
      %v731 = vunpack.c.l.b16 %v309
      %v732 = vunpack.c.h.b16 %v309
      %v733 = vunpack.c.l.b16 %v310
      %v734 = vunpack.c.h.b16 %v310
      %v735 = vunpack.c.l.b16 %v311
      %v736 = vunpack.c.h.b16 %v311
      %v737 = vunpack.c.l.b16 %v312
      %v738 = vunpack.c.h.b16 %v312
      %v739 = vunpack.c.l.b16 %v313
      %v740 = vunpack.c.h.b16 %v313
      %v741 = vunpack.c.l.b16 %v314
      %v742 = vunpack.c.h.b16 %v314
      %v743 = vunpack.c.l.b16 %v315
      %v744 = vunpack.c.h.b16 %v315
      %v745 = vunpack.c.l.b16 %v316
      %v746 = vunpack.c.h.b16 %v316
      %v747 = vunpack.c.l.b16 %v317
      %v748 = vunpack.c.h.b16 %v317
      %v749 = vunpack.c.l.b16 %v318
      %v750 = vunpack.c.h.b16 %v318
      %v751 = vunpack.c.l.b16 %v319
      %v752 = vunpack.c.h.b16 %v319
      %v753 = vunpack.c.l.b16 %v320
      %v754 = vunpack.c.h.b16 %v320
      %v755 = vunpack.c.l.b16 %v321
      %v756 = vunpack.c.h.b16 %v321
      %v757 = vunpack.c.l.b16 %v322
      %v758 = vunpack.c.h.b16 %v322
      %v759 = vunpack.c.l.b16 %v323
      %v760 = vunpack.c.h.b16 %v323
      %v761 = vunpack.c.l.b16 %v324
      %v762 = vunpack.c.h.b16 %v324
      %v763 = vunpack.c.l.b16 %v325
      %v764 = vunpack.c.h.b16 %v325
      %v765 = vunpack.c.l.b16 %v326
      %v766 = vunpack.c.h.b16 %v326
      %v767 = vunpack.c.l.b16 %v327
      %v768 = vunpack.c.h.b16 %v327
      %v769 = vunpack.c.l.b16 %v328
      %v770 = vunpack.c.h.b16 %v328
      %v771 = vunpack.c.l.b16 %v329
      %v772 = vunpack.c.h.b16 %v329
      %v773 = vunpack.c.l.b16 %v330
      %v774 = vunpack.c.h.b16 %v330
      %v775 = vunpack.c.l.b16 %v331
      %v776 = vunpack.c.h.b16 %v331
      %v777 = vunpack.c.l.b16 %v332
      %v778 = vunpack.c.h.b16 %v332
      %v779 = vunpack.c.l.b16 %v333
      %v780 = vunpack.c.h.b16 %v333
      %v781 = vunpack.c.l.b16 %v334
      %v782 = vunpack.c.h.b16 %v334
      %v783 = vunpack.c.l.b16 %v335
      %v784 = vunpack.c.h.b16 %v335
      %v785 = vunpack.c.l.b16 %v336
      %v786 = vunpack.c.h.b16 %v336
      %v787 = vunpack.c.l.b16 %v337
      %v788 = vunpack.c.h.b16 %v337
      %v789 = vunpack.c.l.b16 %v338
      %v790 = vunpack.c.h.b16 %v338
      %v791 = vunpack.c.l.b16 %v339
      %v792 = vunpack.c.h.b16 %v339
      %v793 = vunpack.c.l.b16 %v340
      %v794 = vunpack.c.h.b16 %v340
      %v795 = vunpack.c.l.b16 %v341
      %v796 = vunpack.c.h.b16 %v341
      %v797 = vunpack.c.l.b16 %v342
      %v798 = vunpack.c.h.b16 %v342
      %v799 = vunpack.c.l.b16 %v343
      %v800 = vunpack.c.h.b16 %v343
      %v801 = vunpack.c.l.b16 %v344
      %v802 = vunpack.c.h.b16 %v344
      %v803 = vunpack.c.l.b16 %v345
      %v804 = vunpack.c.h.b16 %v345
      %v805 = vunpack.c.l.b16 %v346
      %v806 = vunpack.c.h.b16 %v346
      %v807 = vunpack.c.l.b16 %v347
      %v808 = vunpack.c.h.b16 %v347
      %v809 = vunpack.c.l.b16 %v348
      %v810 = vunpack.c.h.b16 %v348
      %v811 = vunpack.c.l.b16 %v349
      %v812 = vunpack.c.h.b16 %v349
      %v813 = vunpack.c.l.b16 %v350
      %v814 = vunpack.c.h.b16 %v350
      %v815 = vunpack.c.l.b16 %v351
      %v816 = vunpack.c.h.b16 %v351
      %v817 = vunpack.c.l.b16 %v352
      %v818 = vunpack.c.h.b16 %v352
      %v819 = vunpack.c.l.b16 %v353
      %v820 = vunpack.c.h.b16 %v353
      %v821 = vunpack.c.l.b16 %v354
      %v822 = vunpack.c.h.b16 %v354
      %v823 = vunpack.c.l.b16 %v355
      %v824 = vunpack.c.h.b16 %v355
      %v825 = vunpack.c.l.b16 %v356
      %v826 = vunpack.c.h.b16 %v356
      %v827 = vunpack.c.l.b16 %v357
      %v828 = vunpack.c.h.b16 %v357
      %v829 = vunpack.c.l.b16 %v358
      %v830 = vunpack.c.h.b16 %v358
      %v831 = vunpack.c.l.b16 %v359
      %v832 = vunpack.c.h.b16 %v359
      %v833 = vunpack.c.l.b16 %v360
      %v834 = vunpack.c.h.b16 %v360
      %v835 = vunpack.c.l.b16 %v361
      %v836 = vunpack.c.h.b16 %v361
      %v837 = vunpack.c.l.b16 %v362
      %v838 = vunpack.c.h.b16 %v362
      %v839 = vunpack.c.l.b16 %v363
      %v840 = vunpack.c.h.b16 %v363
      %v841 = vunpack.c.l.b16 %v364
      %v842 = vunpack.c.h.b16 %v364
      %v843 = vunpack.c.l.b16 %v365
      %v844 = vunpack.c.h.b16 %v365
      %v845 = vunpack.c.l.b16 %v366
      %v846 = vunpack.c.h.b16 %v366
      %v847 = vunpack.c.l.b16 %v367
      %v848 = vunpack.c.h.b16 %v367
      %v849 = vunpack.c.l.b16 %v368
      %v850 = vunpack.c.h.b16 %v368
      %v851 = vunpack.c.l.b16 %v369
      %v852 = vunpack.c.h.b16 %v369
      %v853 = vunpack.c.l.b16 %v370
      %v854 = vunpack.c.h.b16 %v370
      %v855 = vunpack.c.l.b16 %v371
      %v856 = vunpack.c.h.b16 %v371
      %v857 = vunpack.c.l.b16 %v372
      %v858 = vunpack.c.h.b16 %v372
      %v859 = vunpack.c.l.b16 %v373
      %v860 = vunpack.c.h.b16 %v373
      %v861 = vunpack.c.l.b16 %v374
      %v862 = vunpack.c.h.b16 %v374
      %v863 = vunpack.c.l.b16 %v375
      %v864 = vunpack.c.h.b16 %v375
      %v865 = vunpack.c.l.b16 %v376
      %v866 = vunpack.c.h.b16 %v376
      %v867 = vunpack.c.l.b16 %v377
      %v868 = vunpack.c.h.b16 %v377
      %v869 = vunpack.c.l.b16 %v378
      %v870 = vunpack.c.h.b16 %v378
      %v871 = vunpack.c.l.b16 %v379
      %v872 = vunpack.c.h.b16 %v379
      %v873 = vunpack.c.l.b16 %v380
      %v874 = vunpack.c.h.b16 %v380
      %v875 = vunpack.c.l.b16 %v381
      %v876 = vunpack.c.h.b16 %v381
      %v877 = vunpack.c.l.b16 %v382
      %v878 = vunpack.c.h.b16 %v382
      %v879 = vunpack.c.l.b16 %v383
      %v880 = vunpack.c.h.b16 %v383
      %v881 = vunpack.c.l.b16 %v384
      %v882 = vunpack.c.h.b16 %v384
      %v883 = vunpack.c.l.b16 %v385
      %v884 = vunpack.c.h.b16 %v385
      %v885 = vunpack.c.l.b16 %v386
      %v886 = vunpack.c.h.b16 %v386
      %v887 = vunpack.c.l.b16 %v387
      %v888 = vunpack.c.h.b16 %v387
      %v889 = vunpack.c.l.b16 %v388
      %v890 = vunpack.c.h.b16 %v388
      %v891 = vunpack.c.l.b16 %v389
      %v892 = vunpack.c.h.b16 %v389
      %v893 = vunpack.c.l.b16 %v390
      %v894 = vunpack.c.h.b16 %v390
      %v895 = vunpack.c.l.b16 %v391
      %v896 = vunpack.c.h.b16 %v391
      %v897 = vunpack.c.l.b16 %v392
      %v898 = vunpack.c.h.b16 %v392
      %v899 = vunpack.c.l.b16 %v393
      %v900 = vunpack.c.h.b16 %v393
      %v901 = vunpack.c.l.b16 %v394
      %v902 = vunpack.c.h.b16 %v394
      %v903 = vunpack.c.l.b16 %v395
      %v904 = vunpack.c.h.b16 %v395
      %v905 = vunpack.c.l.b16 %v396
      %v906 = vunpack.c.h.b16 %v396
      %v907 = vunpack.c.l.b16 %v397
      %v908 = vunpack.c.h.b16 %v397
      %v909 = vunpack.c.l.b16 %v398
      %v910 = vunpack.c.h.b16 %v398
      %v911 = vunpack.c.l.b16 %v399
      %v912 = vunpack.c.h.b16 %v399
      %v913 = vunpack.c.l.b16 %v400
      %v914 = vunpack.c.h.b16 %v400
      %v915 = vunpack.c.l.b16 %v401
      %v916 = vunpack.c.h.b16 %v401
      %v917 = vunpack.c.l.b16 %v402
      %v918 = vunpack.c.h.b16 %v402
      %v919 = vunpack.c.l.b16 %v403
      %v920 = vunpack.c.h.b16 %v403
      %v921 = vunpack.c.l.b16 %v404
      %v922 = vunpack.c.h.b16 %v404
      %v923 = vunpack.c.l.b16 %v405
      %v924 = vunpack.c.h.b16 %v405
      %v925 = vunpack.c.l.b16 %v406
      %v926 = vunpack.c.h.b16 %v406
      %v927 = vunpack.c.l.b16 %v407
      %v928 = vunpack.c.h.b16 %v407
      %v929 = vunpack.c.l.b16 %v408
      %v930 = vunpack.c.h.b16 %v408
      %v931 = vunpack.c.l.b16 %v409
      %v932 = vunpack.c.h.b16 %v409
      %v933 = vunpack.c.l.b16 %v410
      %v934 = vunpack.c.h.b16 %v410
      %v935 = vunpack.c.l.b16 %v411
      %v936 = vunpack.c.h.b16 %v411
      %v937 = vunpack.c.l.b16 %v412
      %v938 = vunpack.c.h.b16 %v412
      %v939 = vunpack.c.l.b16 %v413
      %v940 = vunpack.c.h.b16 %v413
      %v941 = vunpack.c.l.b16 %v414
      %v942 = vunpack.c.h.b16 %v414
      %v943 = vunpack.c.l.b16 %v415
      %v944 = vunpack.c.h.b16 %v415
      %v945 = vunpack.c.l.b16 %v416
      %v946 = vunpack.c.h.b16 %v416
      %v947 = vunpack.c.l.b16 %v417
      %v948 = vunpack.c.h.b16 %v417
      %v949 = vunpack.c.l.b16 %v418
      %v950 = vunpack.c.h.b16 %v418
      %v951 = vunpack.c.l.b16 %v419
      %v952 = vunpack.c.h.b16 %v419
      %v953 = vunpack.c.l.b16 %v420
      %v954 = vunpack.c.h.b16 %v420
      %v955 = vunpack.c.l.b16 %v421
      %v956 = vunpack.c.h.b16 %v421
      %v957 = vunpack.c.l.b16 %v422
      %v958 = vunpack.c.h.b16 %v422
      %v959 = vunpack.c.l.b16 %v423
      %v960 = vunpack.c.h.b16 %v423
      %v961 = vunpack.c.l.b16 %v424
      %v962 = vunpack.c.h.b16 %v424
      %v963 = vunpack.c.l.b16 %v425
      %v964 = vunpack.c.h.b16 %v425
      %v965 = vunpack.c.l.b16 %v426
      %v966 = vunpack.c.h.b16 %v426
      %v967 = vunpack.c.l.b16 %v427
      %v968 = vunpack.c.h.b16 %v427
      %v969 = vunpack.c.l.b16 %v428
      %v970 = vunpack.c.h.b16 %v428
      %v971 = vunpack.c.l.b16 %v429
      %v972 = vunpack.c.h.b16 %v429
      %v973 = vunpack.c.l.b16 %v430
      %v974 = vunpack.c.h.b16 %v430
      %v975 = vunpack.c.l.b16 %v431
      %v976 = vunpack.c.h.b16 %v431
      %v977 = vunpack.c.l.b16 %v432
      %v978 = vunpack.c.h.b16 %v432
      %v979 = vunpack.c.l.b16 %v433
      %v980 = vunpack.c.h.b16 %v433
      %v981 = vunpack.c.l.b16 %v434
      %v982 = vunpack.c.h.b16 %v434
      %v983 = vunpack.c.l.b16 %v435
      %v984 = vunpack.c.h.b16 %v435
      %v985 = vunpack.c.l.b16 %v436
      %v986 = vunpack.c.h.b16 %v436
      %v987 = vunpack.c.l.b16 %v437
      %v988 = vunpack.c.h.b16 %v437
      %v989 = vunpack.c.l.b16 %v438
      %v990 = vunpack.c.h.b16 %v438
      %v991 = vunpack.c.l.b16 %v439
      %v992 = vunpack.c.h.b16 %v439
      %v993 = vunpack.c.l.b16 %v440
      %v994 = vunpack.c.h.b16 %v440
      %v995 = vunpack.c.l.b16 %v441
      %v996 = vunpack.c.h.b16 %v441
      %v997 = vunpack.c.l.b16 %v442
      %v998 = vunpack.c.h.b16 %v442
      %v999 = vunpack.c.l.b16 %v443
      %v1000 = vunpack.c.h.b16 %v443
      %v1001 = vunpack.c.l.b16 %v444
      %v1002 = vunpack.c.h.b16 %v444
      %v1003 = vunpack.c.l.b16 %v445
      %v1004 = vunpack.c.h.b16 %v445
      %v1005 = vunpack.c.l.b16 %v446
      %v1006 = vunpack.c.h.b16 %v446
      %v1007 = vunpack.c.l.b16 %v447
      %v1008 = vunpack.c.h.b16 %v447
      %v1009 = vunpack.c.l.b16 %v448
      %v1010 = vunpack.c.h.b16 %v448
      %v1011 = vunpack.c.l.b16 %v449
      %v1012 = vunpack.c.h.b16 %v449
      %v1013 = vunpack.c.l.b16 %v450
      %v1014 = vunpack.c.h.b16 %v450
      %v1015 = vunpack.c.l.b16 %v451
      %v1016 = vunpack.c.h.b16 %v451
      %v1017 = vunpack.c.l.b16 %v452
      %v1018 = vunpack.c.h.b16 %v452
      %v1019 = vunpack.c.l.b16 %v453
      %v1020 = vunpack.c.h.b16 %v453
      %v1021 = vunpack.c.l.b16 %v454
      %v1022 = vunpack.c.h.b16 %v454
      %v1023 = vunpack.c.l.b16 %v455
      %v1024 = vunpack.c.h.b16 %v455
      %v1025 = vunpack.c.l.b16 %v456
      %v1026 = vunpack.c.h.b16 %v456
      %v1027 = vunpack.c.l.b16 %v457
      %v1028 = vunpack.c.h.b16 %v457
      %v1029 = vunpack.c.l.b16 %v458
      %v1030 = vunpack.c.h.b16 %v458
      %v1031 = vunpack.c.l.b16 %v459
      %v1032 = vunpack.c.h.b16 %v459
      %v1033 = vunpack.c.l.b16 %v460
      %v1034 = vunpack.c.h.b16 %v460
      %v1035 = vunpack.c.l.b16 %v461
      %v1036 = vunpack.c.h.b16 %v461
      %v1037 = vunpack.c.l.b16 %v462
      %v1038 = vunpack.c.h.b16 %v462
      %v1039 = vunpack.c.l.b16 %v463
      %v1040 = vunpack.c.h.b16 %v463
      %v1041 = vunpack.c.l.b16 %v464
      %v1042 = vunpack.c.h.b16 %v464
      %v1043 = vunpack.c.l.b16 %v465
      %v1044 = vunpack.c.h.b16 %v465
      %v1045 = vunpack.c.l.b16 %v466
      %v1046 = vunpack.c.h.b16 %v466
      %v1047 = vunpack.c.l.b16 %v467
      %v1048 = vunpack.c.h.b16 %v467
      %v1049 = vunpack.c.l.b16 %v468
      %v1050 = vunpack.c.h.b16 %v468
      %v1051 = vunpack.c.l.b16 %v469
      %v1052 = vunpack.c.h.b16 %v469
      %v1053 = vunpack.c.l.b16 %v470
      %v1054 = vunpack.c.h.b16 %v470
      %v1055 = vunpack.c.l.b16 %v471
      %v1056 = vunpack.c.h.b16 %v471
      %v1057 = vunpack.c.l.b16 %v472
      %v1058 = vunpack.c.h.b16 %v472
      %v1059 = vunpack.c.l.b16 %v473
      %v1060 = vunpack.c.h.b16 %v473
      %v1061 = vunpack.c.l.b16 %v474
      %v1062 = vunpack.c.h.b16 %v474
      %v1063 = vunpack.c.l.b16 %v475
      %v1064 = vunpack.c.h.b16 %v475
      %v1065 = vunpack.c.l.b16 %v476
      %v1066 = vunpack.c.h.b16 %v476
      %v1067 = vunpack.c.l.b16 %v477
      %v1068 = vunpack.c.h.b16 %v477
      %v1069 = vunpack.c.l.b16 %v478
      %v1070 = vunpack.c.h.b16 %v478
      %v1071 = vunpack.c.l.b16 %v479
      %v1072 = vunpack.c.h.b16 %v479
      %v1073 = vunpack.c.l.b16 %v480
      %v1074 = vunpack.c.h.b16 %v480
      %v1075 = vunpack.c.l.b16 %v481
      %v1076 = vunpack.c.h.b16 %v481
      %v1077 = vunpack.c.l.b16 %v482
      %v1078 = vunpack.c.h.b16 %v482
      %v1079 = vunpack.c.l.b16 %v483
      %v1080 = vunpack.c.h.b16 %v483
      %v1081 = vpack.c.b16 %v701, %v697
      %v1082 = vpack.c.b16 %v702, %v698
      %v1083 = vpack.c.b16 %v703, %v699
      %v1084 = vpack.c.b16 %v704, %v700
      %v1085 = vpack.c.b16 %v709, %v705
      %v1086 = vpack.c.b16 %v710, %v706
      %v1087 = vpack.c.b16 %v711, %v707
      %v1088 = vpack.c.b16 %v712, %v708
      %v1089 = vpack.c.b16 %v717, %v713
      %v1090 = vpack.c.b16 %v718, %v714
      %v1091 = vpack.c.b16 %v719, %v715
      %v1092 = vpack.c.b16 %v720, %v716
      %v1093 = vpack.c.b16 %v725, %v721
      %v1094 = vpack.c.b16 %v726, %v722
      %v1095 = vpack.c.b16 %v727, %v723
      %v1096 = vpack.c.b16 %v728, %v724
      %v1097 = vpack.c.b16 %v733, %v729
      %v1098 = vpack.c.b16 %v734, %v730
      %v1099 = vpack.c.b16 %v735, %v731
      %v1100 = vpack.c.b16 %v736, %v732
      %v1101 = vpack.c.b16 %v741, %v737
      %v1102 = vpack.c.b16 %v742, %v738
      %v1103 = vpack.c.b16 %v743, %v739
      %v1104 = vpack.c.b16 %v744, %v740
      %v1105 = vpack.c.b16 %v749, %v745
      %v1106 = vpack.c.b16 %v750, %v746
      %v1107 = vpack.c.b16 %v751, %v747
      %v1108 = vpack.c.b16 %v752, %v748
      %v1109 = vpack.c.b16 %v757, %v753
      %v1110 = vpack.c.b16 %v758, %v754
      %v1111 = vpack.c.b16 %v759, %v755
      %v1112 = vpack.c.b16 %v760, %v756
      %v1113 = vpack.c.b16 %v765, %v761
      %v1114 = vpack.c.b16 %v766, %v762
      %v1115 = vpack.c.b16 %v767, %v763
      %v1116 = vpack.c.b16 %v768, %v764
      %v1117 = vpack.c.b16 %v773, %v769
      %v1118 = vpack.c.b16 %v774, %v770
      %v1119 = vpack.c.b16 %v775, %v771
      %v1120 = vpack.c.b16 %v776, %v772
      %v1121 = vpack.c.b16 %v781, %v777
      %v1122 = vpack.c.b16 %v782, %v778
      %v1123 = vpack.c.b16 %v783, %v779
      %v1124 = vpack.c.b16 %v784, %v780
      %v1125 = vpack.c.b16 %v789, %v785
      %v1126 = vpack.c.b16 %v790, %v786
      %v1127 = vpack.c.b16 %v791, %v787
      %v1128 = vpack.c.b16 %v792, %v788
      %v1129 = vpack.c.b16 %v797, %v793
      %v1130 = vpack.c.b16 %v798, %v794
      %v1131 = vpack.c.b16 %v799, %v795
      %v1132 = vpack.c.b16 %v800, %v796
      %v1133 = vpack.c.b16 %v805, %v801
      %v1134 = vpack.c.b16 %v806, %v802
      %v1135 = vpack.c.b16 %v807, %v803
      %v1136 = vpack.c.b16 %v808, %v804
      %v1137 = vpack.c.b16 %v813, %v809
      %v1138 = vpack.c.b16 %v814, %v810
      %v1139 = vpack.c.b16 %v815, %v811
      %v1140 = vpack.c.b16 %v816, %v812
      %v1141 = vpack.c.b16 %v821, %v817
      %v1142 = vpack.c.b16 %v822, %v818
      %v1143 = vpack.c.b16 %v823, %v819
      %v1144 = vpack.c.b16 %v824, %v820
      %v1145 = vpack.c.b16 %v829, %v825
      %v1146 = vpack.c.b16 %v830, %v826
      %v1147 = vpack.c.b16 %v831, %v827
      %v1148 = vpack.c.b16 %v832, %v828
      %v1149 = vpack.c.b16 %v837, %v833
      %v1150 = vpack.c.b16 %v838, %v834
      %v1151 = vpack.c.b16 %v839, %v835
      %v1152 = vpack.c.b16 %v840, %v836
      %v1153 = vpack.c.b16 %v845, %v841
      %v1154 = vpack.c.b16 %v846, %v842
      %v1155 = vpack.c.b16 %v847, %v843
      %v1156 = vpack.c.b16 %v848, %v844
      %v1157 = vpack.c.b16 %v853, %v849
      %v1158 = vpack.c.b16 %v854, %v850
      %v1159 = vpack.c.b16 %v855, %v851
      %v1160 = vpack.c.b16 %v856, %v852
      %v1161 = vpack.c.b16 %v861, %v857
      %v1162 = vpack.c.b16 %v862, %v858
      %v1163 = vpack.c.b16 %v863, %v859
      %v1164 = vpack.c.b16 %v864, %v860
      %v1165 = vpack.c.b16 %v869, %v865
      %v1166 = vpack.c.b16 %v870, %v866
      %v1167 = vpack.c.b16 %v871, %v867
      %v1168 = vpack.c.b16 %v872, %v868
      %v1169 = vpack.c.b16 %v877, %v873
      %v1170 = vpack.c.b16 %v878, %v874
      %v1171 = vpack.c.b16 %v879, %v875
      %v1172 = vpack.c.b16 %v880, %v876
      %v1173 = vpack.c.b16 %v885, %v881
      %v1174 = vpack.c.b16 %v886, %v882
      %v1175 = vpack.c.b16 %v887, %v883
      %v1176 = vpack.c.b16 %v888, %v884
      %v1177 = vpack.c.b16 %v893, %v889
      %v1178 = vpack.c.b16 %v894, %v890
      %v1179 = vpack.c.b16 %v895, %v891
      %v1180 = vpack.c.b16 %v896, %v892
      %v1181 = vpack.c.b16 %v901, %v897
      %v1182 = vpack.c.b16 %v902, %v898
      %v1183 = vpack.c.b16 %v903, %v899
      %v1184 = vpack.c.b16 %v904, %v900
      %v1185 = vpack.c.b16 %v909, %v905
      %v1186 = vpack.c.b16 %v910, %v906
      %v1187 = vpack.c.b16 %v911, %v907
      %v1188 = vpack.c.b16 %v912, %v908
      %v1189 = vpack.c.b16 %v917, %v913
      %v1190 = vpack.c.b16 %v918, %v914
      %v1191 = vpack.c.b16 %v919, %v915
      %v1192 = vpack.c.b16 %v920, %v916
      %v1193 = vpack.c.b16 %v925, %v921
      %v1194 = vpack.c.b16 %v926, %v922
      %v1195 = vpack.c.b16 %v927, %v923
      %v1196 = vpack.c.b16 %v928, %v924
      %v1197 = vpack.c.b16 %v933, %v929
      %v1198 = vpack.c.b16 %v934, %v930
      %v1199 = vpack.c.b16 %v935, %v931
      %v1200 = vpack.c.b16 %v936, %v932
      %v1201 = vpack.c.b16 %v941, %v937
      %v1202 = vpack.c.b16 %v942, %v938
      %v1203 = vpack.c.b16 %v943, %v939
      %v1204 = vpack.c.b16 %v944, %v940
      %v1205 = vpack.c.b16 %v949, %v945
      %v1206 = vpack.c.b16 %v950, %v946
      %v1207 = vpack.c.b16 %v951, %v947
      %v1208 = vpack.c.b16 %v952, %v948
      %v1209 = vpack.c.b16 %v957, %v953
      %v1210 = vpack.c.b16 %v958, %v954
      %v1211 = vpack.c.b16 %v959, %v955
      %v1212 = vpack.c.b16 %v960, %v956
      %v1213 = vpack.c.b16 %v965, %v961
      %v1214 = vpack.c.b16 %v966, %v962
      %v1215 = vpack.c.b16 %v967, %v963
      %v1216 = vpack.c.b16 %v968, %v964
      %v1217 = vpack.c.b16 %v973, %v969
      %v1218 = vpack.c.b16 %v974, %v970
      %v1219 = vpack.c.b16 %v975, %v971
      %v1220 = vpack.c.b16 %v976, %v972
      %v1221 = vpack.c.b16 %v981, %v977
      %v1222 = vpack.c.b16 %v982, %v978
      %v1223 = vpack.c.b16 %v983, %v979
      %v1224 = vpack.c.b16 %v984, %v980
      %v1225 = vpack.c.b16 %v989, %v985
      %v1226 = vpack.c.b16 %v990, %v986
      %v1227 = vpack.c.b16 %v991, %v987
      %v1228 = vpack.c.b16 %v992, %v988
      %v1229 = vpack.c.b16 %v997, %v993
      %v1230 = vpack.c.b16 %v998, %v994
      %v1231 = vpack.c.b16 %v999, %v995
      %v1232 = vpack.c.b16 %v1000, %v996
      %v1233 = vpack.c.b16 %v1005, %v1001
      %v1234 = vpack.c.b16 %v1006, %v1002
      %v1235 = vpack.c.b16 %v1007, %v1003
      %v1236 = vpack.c.b16 %v1008, %v1004
      %v1237 = vpack.c.b16 %v1013, %v1009
      %v1238 = vpack.c.b16 %v1014, %v1010
      %v1239 = vpack.c.b16 %v1015, %v1011
      %v1240 = vpack.c.b16 %v1016, %v1012
      %v1241 = vpack.c.b16 %v1021, %v1017
      %v1242 = vpack.c.b16 %v1022, %v1018
      %v1243 = vpack.c.b16 %v1023, %v1019
      %v1244 = vpack.c.b16 %v1024, %v1020
      %v1245 = vpack.c.b16 %v1029, %v1025
      %v1246 = vpack.c.b16 %v1030, %v1026
      %v1247 = vpack.c.b16 %v1031, %v1027
      %v1248 = vpack.c.b16 %v1032, %v1028
      %v1249 = vpack.c.b16 %v1037, %v1033
      %v1250 = vpack.c.b16 %v1038, %v1034
      %v1251 = vpack.c.b16 %v1039, %v1035
      %v1252 = vpack.c.b16 %v1040, %v1036
      %v1253 = vpack.c.b16 %v1045, %v1041
      %v1254 = vpack.c.b16 %v1046, %v1042
      %v1255 = vpack.c.b16 %v1047, %v1043
      %v1256 = vpack.c.b16 %v1048, %v1044
      %v1257 = vpack.c.b16 %v1053, %v1049
      %v1258 = vpack.c.b16 %v1054, %v1050
      %v1259 = vpack.c.b16 %v1055, %v1051
      %v1260 = vpack.c.b16 %v1056, %v1052
      %v1261 = vpack.c.b16 %v1061, %v1057
      %v1262 = vpack.c.b16 %v1062, %v1058
      %v1263 = vpack.c.b16 %v1063, %v1059
      %v1264 = vpack.c.b16 %v1064, %v1060
      %v1265 = vpack.c.b16 %v1069, %v1065
      %v1266 = vpack.c.b16 %v1070, %v1066
      %v1267 = vpack.c.b16 %v1071, %v1067
      %v1268 = vpack.c.b16 %v1072, %v1068
      %v1269 = vpack.c.b16 %v1077, %v1073
      %v1270 = vpack.c.b16 %v1078, %v1074
      %v1271 = vpack.c.b16 %v1079, %v1075
      %v1272 = vpack.c.b16 %v1080, %v1076
      %1465 = vmatpush.bf16.msra.mxu0 %v1109
      %1466 = vmatpush.bf16.msra.mxu0 %v1105
      %1467 = vmatpush.bf16.msra.mxu0 %v1101
      %1468 = vmatpush.bf16.msra.mxu0 %v1097
      %1469 = vmatpush.bf16.msra.mxu0 %v1093
      %1470 = vmatpush.bf16.msra.mxu0 %v1089
      %1471 = vmatpush.bf16.msra.mxu0 %v1085
      %1472 = vmatpush.bf16.msra.mxu0 %v1081
      %1473 = vmatmul.bf16.gmra.mxu0 %v493
      %v1474 = vpop.f32.mrf.mxu0
      %v1475 = vadd.f32 0.0, %v1474
      %v1476 = vpop.f32.mrf.mxu0
      %1477 = vdwg.mxu0
      %1478 = vmatpush.bf16.msra.mxu0 %v1141
      %1479 = vmatpush.bf16.msra.mxu0 %v1137
      %1480 = vmatpush.bf16.msra.mxu0 %v1133
      %1481 = vmatpush.bf16.msra.mxu0 %v1129
      %1482 = vmatpush.bf16.msra.mxu0 %v1125
      %1483 = vmatpush.bf16.msra.mxu0 %v1121
      %1484 = vmatpush.bf16.msra.mxu0 %v1117
      %1485 = vmatpush.bf16.msra.mxu0 %v1113
      %1486 = vmatmul.bf16.gmra.mxu0 %v494
      %v1487 = vpop.f32.mrf.mxu0
      %v1488 = vadd.f32 %v1475, %v1487
      %v1489 = vpop.f32.mrf.mxu0
      %1490 = vdwg.mxu0
      %1491 = vmatpush.bf16.msra.mxu0 %v1173
      %1492 = vmatpush.bf16.msra.mxu0 %v1169
      %1493 = vmatpush.bf16.msra.mxu0 %v1165
      %1494 = vmatpush.bf16.msra.mxu0 %v1161
      %1495 = vmatpush.bf16.msra.mxu0 %v1157
      %1496 = vmatpush.bf16.msra.mxu0 %v1153
      %1497 = vmatpush.bf16.msra.mxu0 %v1149
      %1498 = vmatpush.bf16.msra.mxu0 %v1145
      %1499 = vmatmul.bf16.gmra.mxu0 %v495
      %v1500 = vpop.f32.mrf.mxu0
      %v1501 = vadd.f32 %v1488, %v1500
      %v1502 = vpop.f32.mrf.mxu0
      %1503 = vdwg.mxu0
      %1504 = vmatpush.bf16.msra.mxu0 %v1205
      %1505 = vmatpush.bf16.msra.mxu0 %v1201
      %1506 = vmatpush.bf16.msra.mxu0 %v1197
      %1507 = vmatpush.bf16.msra.mxu0 %v1193
      %1508 = vmatpush.bf16.msra.mxu0 %v1189
      %1509 = vmatpush.bf16.msra.mxu0 %v1185
      %1510 = vmatpush.bf16.msra.mxu0 %v1181
      %1511 = vmatpush.bf16.msra.mxu0 %v1177
      %1512 = vmatmul.bf16.gmra.mxu0 %v496
      %v1513 = vpop.f32.mrf.mxu0
      %v1514 = vadd.f32 %v1501, %v1513
      %v1515 = vpop.f32.mrf.mxu0
      %1516 = vdwg.mxu0
      %1517 = vmatpush.bf16.msra.mxu0 %v1237
      %1518 = vmatpush.bf16.msra.mxu0 %v1233
      %1519 = vmatpush.bf16.msra.mxu0 %v1229
      %1520 = vmatpush.bf16.msra.mxu0 %v1225
      %1521 = vmatpush.bf16.msra.mxu0 %v1221
      %1522 = vmatpush.bf16.msra.mxu0 %v1217
      %1523 = vmatpush.bf16.msra.mxu0 %v1213
      %1524 = vmatpush.bf16.msra.mxu0 %v1209
      %1525 = vmatmul.bf16.gmra.mxu0 %v497
      %v1526 = vpop.f32.mrf.mxu0
      %v1527 = vadd.f32 %v1514, %v1526
      %v1528 = vpop.f32.mrf.mxu0
      %1529 = vdwg.mxu0
      %1530 = vmatpush.bf16.msra.mxu0 %v1269
      %1531 = vmatpush.bf16.msra.mxu0 %v1265
      %1532 = vmatpush.bf16.msra.mxu0 %v1261
      %1533 = vmatpush.bf16.msra.mxu0 %v1257
      %1534 = vmatpush.bf16.msra.mxu0 %v1253
      %1535 = vmatpush.bf16.msra.mxu0 %v1249
      %1536 = vmatpush.bf16.msra.mxu0 %v1245
      %1537 = vmatpush.bf16.msra.mxu0 %v1241
      %1538 = vmatmul.bf16.gmra.mxu0 %v498
      %v1539 = vpop.f32.mrf.mxu0
      %v1540 = vadd.f32 %v1527, %v1539
      %v1541 = vpop.f32.mrf.mxu0
      %1542 = vdwg.mxu0
      %1543 = vmatpush.bf16.msra.mxu0 %v1110
      %1544 = vmatpush.bf16.msra.mxu0 %v1106
      %1545 = vmatpush.bf16.msra.mxu0 %v1102
      %1546 = vmatpush.bf16.msra.mxu0 %v1098
      %1547 = vmatpush.bf16.msra.mxu0 %v1094
      %1548 = vmatpush.bf16.msra.mxu0 %v1090
      %1549 = vmatpush.bf16.msra.mxu0 %v1086
      %1550 = vmatpush.bf16.msra.mxu0 %v1082
      %1551 = vmatmul.bf16.gmra.mxu0 %v493
      %v1552 = vpop.f32.mrf.mxu0
      %v1553 = vadd.f32 0.0, %v1552
      %v1554 = vpop.f32.mrf.mxu0
      %1555 = vdwg.mxu0
      %1556 = vmatpush.bf16.msra.mxu0 %v1142
      %1557 = vmatpush.bf16.msra.mxu0 %v1138
      %1558 = vmatpush.bf16.msra.mxu0 %v1134
      %1559 = vmatpush.bf16.msra.mxu0 %v1130
      %1560 = vmatpush.bf16.msra.mxu0 %v1126
      %1561 = vmatpush.bf16.msra.mxu0 %v1122
      %1562 = vmatpush.bf16.msra.mxu0 %v1118
      %1563 = vmatpush.bf16.msra.mxu0 %v1114
      %1564 = vmatmul.bf16.gmra.mxu0 %v494
      %v1565 = vpop.f32.mrf.mxu0
      %v1566 = vadd.f32 %v1553, %v1565
      %v1567 = vpop.f32.mrf.mxu0
      %1568 = vdwg.mxu0
      %1569 = vmatpush.bf16.msra.mxu0 %v1174
      %1570 = vmatpush.bf16.msra.mxu0 %v1170
      %1571 = vmatpush.bf16.msra.mxu0 %v1166
      %1572 = vmatpush.bf16.msra.mxu0 %v1162
      %1573 = vmatpush.bf16.msra.mxu0 %v1158
      %1574 = vmatpush.bf16.msra.mxu0 %v1154
      %1575 = vmatpush.bf16.msra.mxu0 %v1150
      %1576 = vmatpush.bf16.msra.mxu0 %v1146
      %1577 = vmatmul.bf16.gmra.mxu0 %v495
      %v1578 = vpop.f32.mrf.mxu0
      %v1579 = vadd.f32 %v1566, %v1578
      %v1580 = vpop.f32.mrf.mxu0
      %1581 = vdwg.mxu0
      %1582 = vmatpush.bf16.msra.mxu0 %v1206
      %1583 = vmatpush.bf16.msra.mxu0 %v1202
      %1584 = vmatpush.bf16.msra.mxu0 %v1198
      %1585 = vmatpush.bf16.msra.mxu0 %v1194
      %1586 = vmatpush.bf16.msra.mxu0 %v1190
      %1587 = vmatpush.bf16.msra.mxu0 %v1186
      %1588 = vmatpush.bf16.msra.mxu0 %v1182
      %1589 = vmatpush.bf16.msra.mxu0 %v1178
      %1590 = vmatmul.bf16.gmra.mxu0 %v496
      %v1591 = vpop.f32.mrf.mxu0
      %v1592 = vadd.f32 %v1579, %v1591
      %v1593 = vpop.f32.mrf.mxu0
      %1594 = vdwg.mxu0
      %1595 = vmatpush.bf16.msra.mxu0 %v1238
      %1596 = vmatpush.bf16.msra.mxu0 %v1234
      %1597 = vmatpush.bf16.msra.mxu0 %v1230
      %1598 = vmatpush.bf16.msra.mxu0 %v1226
      %1599 = vmatpush.bf16.msra.mxu0 %v1222
      %1600 = vmatpush.bf16.msra.mxu0 %v1218
      %1601 = vmatpush.bf16.msra.mxu0 %v1214
      %1602 = vmatpush.bf16.msra.mxu0 %v1210
      %1603 = vmatmul.bf16.gmra.mxu0 %v497
      %v1604 = vpop.f32.mrf.mxu0
      %v1605 = vadd.f32 %v1592, %v1604
      %v1606 = vpop.f32.mrf.mxu0
      %1607 = vdwg.mxu0
      %1608 = vmatpush.bf16.msra.mxu0 %v1270
      %1609 = vmatpush.bf16.msra.mxu0 %v1266
      %1610 = vmatpush.bf16.msra.mxu0 %v1262
      %1611 = vmatpush.bf16.msra.mxu0 %v1258
      %1612 = vmatpush.bf16.msra.mxu0 %v1254
      %1613 = vmatpush.bf16.msra.mxu0 %v1250
      %1614 = vmatpush.bf16.msra.mxu0 %v1246
      %1615 = vmatpush.bf16.msra.mxu0 %v1242
      %1616 = vmatmul.bf16.gmra.mxu0 %v498
      %v1617 = vpop.f32.mrf.mxu0
      %v1618 = vadd.f32 %v1605, %v1617
      %v1619 = vpop.f32.mrf.mxu0
      %1620 = vdwg.mxu0
      %1621 = vmatpush.bf16.msra.mxu0 %v1111
      %1622 = vmatpush.bf16.msra.mxu0 %v1107
      %1623 = vmatpush.bf16.msra.mxu0 %v1103
      %1624 = vmatpush.bf16.msra.mxu0 %v1099
      %1625 = vmatpush.bf16.msra.mxu0 %v1095
      %1626 = vmatpush.bf16.msra.mxu0 %v1091
      %1627 = vmatpush.bf16.msra.mxu0 %v1087
      %1628 = vmatpush.bf16.msra.mxu0 %v1083
      %1629 = vmatmul.bf16.gmra.mxu0 %v493
      %v1630 = vpop.f32.mrf.mxu0
      %v1631 = vadd.f32 0.0, %v1630
      %v1632 = vpop.f32.mrf.mxu0
      %1633 = vdwg.mxu0
      %1634 = vmatpush.bf16.msra.mxu0 %v1143
      %1635 = vmatpush.bf16.msra.mxu0 %v1139
      %1636 = vmatpush.bf16.msra.mxu0 %v1135
      %1637 = vmatpush.bf16.msra.mxu0 %v1131
      %1638 = vmatpush.bf16.msra.mxu0 %v1127
      %1639 = vmatpush.bf16.msra.mxu0 %v1123
      %1640 = vmatpush.bf16.msra.mxu0 %v1119
      %1641 = vmatpush.bf16.msra.mxu0 %v1115
      %1642 = vmatmul.bf16.gmra.mxu0 %v494
      %v1643 = vpop.f32.mrf.mxu0
      %v1644 = vadd.f32 %v1631, %v1643
      %v1645 = vpop.f32.mrf.mxu0
      %1646 = vdwg.mxu0
      %1647 = vmatpush.bf16.msra.mxu0 %v1175
      %1648 = vmatpush.bf16.msra.mxu0 %v1171
      %1649 = vmatpush.bf16.msra.mxu0 %v1167
      %1650 = vmatpush.bf16.msra.mxu0 %v1163
      %1651 = vmatpush.bf16.msra.mxu0 %v1159
      %1652 = vmatpush.bf16.msra.mxu0 %v1155
      %1653 = vmatpush.bf16.msra.mxu0 %v1151
      %1654 = vmatpush.bf16.msra.mxu0 %v1147
      %1655 = vmatmul.bf16.gmra.mxu0 %v495
      %v1656 = vpop.f32.mrf.mxu0
      %v1657 = vadd.f32 %v1644, %v1656
      %v1658 = vpop.f32.mrf.mxu0
      %1659 = vdwg.mxu0
      %1660 = vmatpush.bf16.msra.mxu0 %v1207
      %1661 = vmatpush.bf16.msra.mxu0 %v1203
      %1662 = vmatpush.bf16.msra.mxu0 %v1199
      %1663 = vmatpush.bf16.msra.mxu0 %v1195
      %1664 = vmatpush.bf16.msra.mxu0 %v1191
      %1665 = vmatpush.bf16.msra.mxu0 %v1187
      %1666 = vmatpush.bf16.msra.mxu0 %v1183
      %1667 = vmatpush.bf16.msra.mxu0 %v1179
      %1668 = vmatmul.bf16.gmra.mxu0 %v496
      %v1669 = vpop.f32.mrf.mxu0
      %v1670 = vadd.f32 %v1657, %v1669
      %v1671 = vpop.f32.mrf.mxu0
      %1672 = vdwg.mxu0
      %1673 = vmatpush.bf16.msra.mxu0 %v1239
      %1674 = vmatpush.bf16.msra.mxu0 %v1235
      %1675 = vmatpush.bf16.msra.mxu0 %v1231
      %1676 = vmatpush.bf16.msra.mxu0 %v1227
      %1677 = vmatpush.bf16.msra.mxu0 %v1223
      %1678 = vmatpush.bf16.msra.mxu0 %v1219
      %1679 = vmatpush.bf16.msra.mxu0 %v1215
      %1680 = vmatpush.bf16.msra.mxu0 %v1211
      %1681 = vmatmul.bf16.gmra.mxu0 %v497
      %v1682 = vpop.f32.mrf.mxu0
      %v1683 = vadd.f32 %v1670, %v1682
      %v1684 = vpop.f32.mrf.mxu0
      %1685 = vdwg.mxu0
      %1686 = vmatpush.bf16.msra.mxu0 %v1271
      %1687 = vmatpush.bf16.msra.mxu0 %v1267
      %1688 = vmatpush.bf16.msra.mxu0 %v1263
      %1689 = vmatpush.bf16.msra.mxu0 %v1259
      %1690 = vmatpush.bf16.msra.mxu0 %v1255
      %1691 = vmatpush.bf16.msra.mxu0 %v1251
      %1692 = vmatpush.bf16.msra.mxu0 %v1247
      %1693 = vmatpush.bf16.msra.mxu0 %v1243
      %1694 = vmatmul.bf16.gmra.mxu0 %v498
      %v1695 = vpop.f32.mrf.mxu0
      %v1696 = vadd.f32 %v1683, %v1695
      %v1697 = vpop.f32.mrf.mxu0
      %1698 = vdwg.mxu0
      %1699 = vmatpush.bf16.msra.mxu0 %v1112
      %1700 = vmatpush.bf16.msra.mxu0 %v1108
      %1701 = vmatpush.bf16.msra.mxu0 %v1104
      %1702 = vmatpush.bf16.msra.mxu0 %v1100
      %1703 = vmatpush.bf16.msra.mxu0 %v1096
      %1704 = vmatpush.bf16.msra.mxu0 %v1092
      %1705 = vmatpush.bf16.msra.mxu0 %v1088
      %1706 = vmatpush.bf16.msra.mxu0 %v1084
      %1707 = vmatmul.bf16.gmra.mxu0 %v493
      %v1708 = vpop.f32.mrf.mxu0
      %v1709 = vadd.f32 0.0, %v1708
      %v1710 = vpop.f32.mrf.mxu0
      %1711 = vdwg.mxu0
      %1712 = vmatpush.bf16.msra.mxu0 %v1144
      %1713 = vmatpush.bf16.msra.mxu0 %v1140
      %1714 = vmatpush.bf16.msra.mxu0 %v1136
      %1715 = vmatpush.bf16.msra.mxu0 %v1132
      %1716 = vmatpush.bf16.msra.mxu0 %v1128
      %1717 = vmatpush.bf16.msra.mxu0 %v1124
      %1718 = vmatpush.bf16.msra.mxu0 %v1120
      %1719 = vmatpush.bf16.msra.mxu0 %v1116
      %1720 = vmatmul.bf16.gmra.mxu0 %v494
      %v1721 = vpop.f32.mrf.mxu0
      %v1722 = vadd.f32 %v1709, %v1721
      %v1723 = vpop.f32.mrf.mxu0
      %1724 = vdwg.mxu0
      %1725 = vmatpush.bf16.msra.mxu0 %v1176
      %1726 = vmatpush.bf16.msra.mxu0 %v1172
      %1727 = vmatpush.bf16.msra.mxu0 %v1168
      %1728 = vmatpush.bf16.msra.mxu0 %v1164
      %1729 = vmatpush.bf16.msra.mxu0 %v1160
      %1730 = vmatpush.bf16.msra.mxu0 %v1156
      %1731 = vmatpush.bf16.msra.mxu0 %v1152
      %1732 = vmatpush.bf16.msra.mxu0 %v1148
      %1733 = vmatmul.bf16.gmra.mxu0 %v495
      %v1734 = vpop.f32.mrf.mxu0
      %v1735 = vadd.f32 %v1722, %v1734
      %v1736 = vpop.f32.mrf.mxu0
      %1737 = vdwg.mxu0
      %1738 = vmatpush.bf16.msra.mxu0 %v1208
      %1739 = vmatpush.bf16.msra.mxu0 %v1204
      %1740 = vmatpush.bf16.msra.mxu0 %v1200
      %1741 = vmatpush.bf16.msra.mxu0 %v1196
      %1742 = vmatpush.bf16.msra.mxu0 %v1192
      %1743 = vmatpush.bf16.msra.mxu0 %v1188
      %1744 = vmatpush.bf16.msra.mxu0 %v1184
      %1745 = vmatpush.bf16.msra.mxu0 %v1180
      %1746 = vmatmul.bf16.gmra.mxu0 %v496
      %v1747 = vpop.f32.mrf.mxu0
      %v1748 = vadd.f32 %v1735, %v1747
      %v1749 = vpop.f32.mrf.mxu0
      %1750 = vdwg.mxu0
      %1751 = vmatpush.bf16.msra.mxu0 %v1240
      %1752 = vmatpush.bf16.msra.mxu0 %v1236
      %1753 = vmatpush.bf16.msra.mxu0 %v1232
      %1754 = vmatpush.bf16.msra.mxu0 %v1228
      %1755 = vmatpush.bf16.msra.mxu0 %v1224
      %1756 = vmatpush.bf16.msra.mxu0 %v1220
      %1757 = vmatpush.bf16.msra.mxu0 %v1216
      %1758 = vmatpush.bf16.msra.mxu0 %v1212
      %1759 = vmatmul.bf16.gmra.mxu0 %v497
      %v1760 = vpop.f32.mrf.mxu0
      %v1761 = vadd.f32 %v1748, %v1760
      %v1762 = vpop.f32.mrf.mxu0
      %1763 = vdwg.mxu0
      %1764 = vmatpush.bf16.msra.mxu0 %v1272
      %1765 = vmatpush.bf16.msra.mxu0 %v1268
      %1766 = vmatpush.bf16.msra.mxu0 %v1264
      %1767 = vmatpush.bf16.msra.mxu0 %v1260
      %1768 = vmatpush.bf16.msra.mxu0 %v1256
      %1769 = vmatpush.bf16.msra.mxu0 %v1252
      %1770 = vmatpush.bf16.msra.mxu0 %v1248
      %1771 = vmatpush.bf16.msra.mxu0 %v1244
      %1772 = vmatmul.bf16.gmra.mxu0 %v498
      %v1773 = vpop.f32.mrf.mxu0
      %v1774 = vadd.f32 %v1761, %v1773
      %v1775 = vpop.f32.mrf.mxu0
      %1776 = vdwg.mxu0
      %v1777 = vadd.f32 %v285, %v1540
      %v1778 = vadd.f32 %v286, %v1618
      %v1779 = vadd.f32 %v287, %v1696
      %v1780 = vadd.f32 %v288, %v1774
      %1781 = vst [vmem:[#allocation2] sm:$0xff] %v1777
      %1782 = vst [vmem:[#allocation2 + $0x8] sm:$0xff] %v1778
      %1783 = vst [vmem:[#allocation2 + $0x10] sm:$0xff] %v1779
      %1784 = vst [vmem:[#allocation2 + $0x18] sm:$0xff] %v1780
      %p1785 = scmp.eq.s32.totalorder %s21, 2
      // Predicated region
      $region37: #{forward.18} parent=31 // pred_check
        %p1786 = pneg %p1785
      $region38: #{forward.18} parent=31 // pred_check_branch
        %1788 = sbr.rel (%p1786) target = $region40
      $region39: #{forward.18} parent=31 // pred_region
        %v1789 = vld [vmem:[#allocation2] sm:$0xff]
        %v1790 = vld [vmem:[#allocation2 + $0x8] sm:$0xff]
        %v1791 = vld [vmem:[#allocation2 + $0x10] sm:$0xff]
        %v1792 = vld [vmem:[#allocation2 + $0x18] sm:$0xff]
        %v1793 = vld [vmem:[%s265] sm:$0xf]
        %v1795 = vperm.slane %v1793, 0
        %v1796 = vperm.slane %v1793, 1
        %v1797 = vperm.slane %v1793, 2
        %v1798 = vperm.slane %v1793, 3
        %v1803 = vadd.f32 %v1789, %v1795
        %v1804 = vadd.f32 %v1790, %v1796
        %v1805 = vadd.f32 %v1791, %v1797
        %v1806 = vadd.f32 %v1792, %v1798
        %vm1807 = vcmp.gt.f32.partialorder %v1803, 0.0
        %vm1808 = vcmp.gt.f32.partialorder %v1804, 0.0
        %vm1809 = vcmp.gt.f32.partialorder %v1805, 0.0
        %vm1810 = vcmp.gt.f32.partialorder %v1806, 0.0
        %v1811 = vmul.f32 %v1803, 0.2
        %v1812 = vmul.f32 %v1804, 0.2
        %v1813 = vmul.f32 %v1805, 0.2
        %v1814 = vmul.f32 %v1806, 0.2
        %v1815 = vsel %vm1807, %v1803, %v1811
        %v1816 = vsel %vm1808, %v1804, %v1812
        %v1817 = vsel %vm1809, %v1805, %v1813
        %v1818 = vsel %vm1810, %v1806, %v1814
        %v1819 = vpack.c.bf16 %v1816, %v1815
        %v1820 = vpack.c.bf16 %v1818, %v1817
        %1821 = vst [vmem:[%s275] sm:$0xff] %v1819
        %1822 = vst [vmem:[%s275 + $0x8] sm:$0xff] %v1820
      $region40: #{forward.18} parent=31 // pred_fallthru
        _
      %s1823 = smul.u32 4, %s20
      %p1824 = scmp.lt.s32.totalorder %s19, 0
      %s1825 = scalar_select %p1824, %s19, 0
      %p1826 = scmp.lt.s32.totalorder %s1823, 3
      %s1827 = scalar_select %p1826, %s1823, 3
      %s1828 = smul.addr %s1825, 4
      %s1829 = sadd.s32 %s1827, %s1828
      %s1830 = smul.addr %s1829, 4
      %s1831 = scalar_lea.vmem %s3, %s1830
      // Predicated region
      $region41: #{forward.18} parent=31 // pred_check
        %p1832 = pneg %p135
      $region42: #{forward.18} parent=31 // pred_check_branch
        %1834 = sbr.rel (%p1832) target = $region44
      $region43: #{forward.18} parent=31 // pred_region
        %s1835 = smul.u32 4, %s20
      $region44: #{forward.18} parent=31 // pred_fallthru
        _
      // Predicated region
      $region45: #{forward.18} parent=31 // pred_check
        %p1836 = pneg %p135
      $region46: #{forward.18} parent=31 // pred_check_branch
        %1838 = sbr.rel (%p1836) target = $region48
      $region47: #{forward.18} parent=31 // pred_region
        %s1839 = smul.u32 4, %s20
        %p1840 = scmp.lt.s32.totalorder %s19, 0
        %s1841 = scalar_select %p1840, %s19, 0
        %p1842 = scmp.lt.s32.totalorder %s1839, 3
        %s1843 = scalar_select %p1842, %s1839, 3
        %s1844 = smul.addr %s1841, 4
        %s1845 = sadd.s32 %s1843, %s1844
        %s1846 = smul.addr %s1845, 4
        %s1847 = scalar_lea.vmem %s3, %s1846
      $region48: #{forward.18} parent=31 // pred_fallthru
        _
    $region32: #{forward.18} parent=5 // pred_fallthru
      _
    %p1848 = scmp.le.s32.totalorder 2, %s9
    // Predicated region
    $region49: #{forward.18} parent=5 // pred_check
      %p1849 = pneg %p1848
    $region50: #{forward.18} parent=5 // pred_check_branch
      %1851 = sbr.rel (%p1849) target = $region52
    $region51: #{forward.18} parent=5 // pred_region
      %s1852 = ssub.s32 %s9, 2
    $region52: #{forward.18} parent=5 // pred_fallthru
      _
  $region6: #{forward.18} parent=0 // loop_footer
    %s13 = sadd.s32 1, %s9
  $region7: #{forward.18} parent=0 // loop_footer_branch
    %8 = sbr.rel target = $region3
  $region8: #{forward.18} parent=0 // loop_exit
    _

// kernel: forward.19
$region0: #{forward.19}
  #allocation0 [shape = 'u32[]', space=smem, size = 0x4, offset = 0x4, fixed_abs, tag = 'smem constant byte address 0x4 - core index']
  #allocation1 [shape = 'u32[72,128]{1,0:T(1,128)}', space=vmem, size = 0x9000, scoped, tag = 'internal scratch']
  #allocation2 [shape = 'f32[8,1024]{1,0:T(8,128)}', space=vmem, size = 0x8000, scoped, tag = 'scratch operand']
  %s0 = inlined_call_operand.vmem [shape: bf16[8,512], index: 0, kind: input, shape index: {}]
  %s1 = inlined_call_operand.vmem [shape: bf16[512,1024], index: 1, kind: input, shape index: {}]
  %s2 = inlined_call_operand.vmem [shape: f32[1,1024], index: 2, kind: input, shape index: {}]
  %s3 = inlined_call_operand.vmem [shape: bf16[1024,128], index: 3, kind: input, shape index: {}]
  %s4 = inlined_call_operand.vmem [shape: f32[1,128], index: 4, kind: input, shape index: {}]
  %s5 = inlined_call_operand.vmem [shape: f32[8,128], index: 5, kind: output, shape index: {}]
  %s6 = sld [smem:[#allocation0]]
  $region38: #{forward.19} parent=0
    _
  %s8 = ssub.s32 1, %s6
  %s9 = scalar_select 0, %s8, %s6
  // Predicated region
  $region2: #{forward.19} parent=0 // pred_check
    _
  $region3: #{forward.19} parent=0 // pred_check_branch
    %11 = sbr.rel (0) target = $region5
  $region4: #{forward.19} parent=0 // pred_region
    _
  $region5: #{forward.19} parent=0 // pred_fallthru
    _
  // Predicated region
  $region6: #{forward.19} parent=0 // pred_check
    _
  $region7: #{forward.19} parent=0 // pred_check_branch
    %13 = sbr.rel (0) target = $region9
  $region8: #{forward.19} parent=0 // pred_region
    _
  $region9: #{forward.19} parent=0 // pred_fallthru
    _
  // Predicated region
  $region10: #{forward.19} parent=0 // pred_check
    _
  $region11: #{forward.19} parent=0 // pred_check_branch
    %15 = sbr.rel (0) target = $region13
  $region12: #{forward.19} parent=0 // pred_region
    _
  $region13: #{forward.19} parent=0 // pred_fallthru
    _
  // Predicated region
  $region14: #{forward.19} parent=0 // pred_check
    _
  $region15: #{forward.19} parent=0 // pred_check_branch
    %17 = sbr.rel (0) target = $region17
  $region16: #{forward.19} parent=0 // pred_region
    _
  $region17: #{forward.19} parent=0 // pred_fallthru
    _
  // Predicated region
  $region18: #{forward.19} parent=0 // pred_check
    _
  $region19: #{forward.19} parent=0 // pred_check_branch
    %19 = sbr.rel (0) target = $region21
  $region20: #{forward.19} parent=0 // pred_region
    _
  $region21: #{forward.19} parent=0 // pred_fallthru
    _
  %p20 = scmp.eq.s32.totalorder 0, 0
  // Predicated region
  $region22: #{forward.19} parent=0 // pred_check
    %p21 = pneg %p20
  $region23: #{forward.19} parent=0 // pred_check_branch
    %23 = sbr.rel (%p21) target = $region25
  $region24: #{forward.19} parent=0 // pred_region
    %24 = vst [vmem:[#allocation2] sm:$0xff] 0.0
    %25 = vst [vmem:[#allocation2 + $0x8] sm:$0xff] 0.0
    %26 = vst [vmem:[#allocation2 + $0x10] sm:$0xff] 0.0
    %27 = vst [vmem:[#allocation2 + $0x18] sm:$0xff] 0.0
    %28 = vst [vmem:[#allocation2 + $0x20] sm:$0xff] 0.0
    %29 = vst [vmem:[#allocation2 + $0x28] sm:$0xff] 0.0
    %30 = vst [vmem:[#allocation2 + $0x30] sm:$0xff] 0.0
    %31 = vst [vmem:[#allocation2 + $0x38] sm:$0xff] 0.0
  $region25: #{forward.19} parent=0 // pred_fallthru
    _
  %v32 = vld [vmem:[#allocation2] sm:$0xff]
  %v33 = vld [vmem:[#allocation2 + $0x8] sm:$0xff]
  %v34 = vld [vmem:[#allocation2 + $0x10] sm:$0xff]
  %v35 = vld [vmem:[#allocation2 + $0x18] sm:$0xff]
  %v36 = vld [vmem:[#allocation2 + $0x20] sm:$0xff]
  %v37 = vld [vmem:[#allocation2 + $0x28] sm:$0xff]
  %v38 = vld [vmem:[#allocation2 + $0x30] sm:$0xff]
  %v39 = vld [vmem:[#allocation2 + $0x38] sm:$0xff]
  %v40 = vld [vmem:[%s0] sm:$0xff]
  %v41 = vld [vmem:[%s0 + $0x8] sm:$0xff]
  %v42 = vld [vmem:[%s1] sm:$0xff]
  %v43 = vld [vmem:[%s1 + $0x8] sm:$0xff]
  %v44 = vld [vmem:[%s1 + $0x10] sm:$0xff]
  %v45 = vld [vmem:[%s1 + $0x18] sm:$0xff]
  %v46 = vld [vmem:[%s1 + $0x20] sm:$0xff]
  %v47 = vld [vmem:[%s1 + $0x28] sm:$0xff]
  %v48 = vld [vmem:[%s1 + $0x30] sm:$0xff]
  %v49 = vld [vmem:[%s1 + $0x38] sm:$0xff]
  %v50 = vld [vmem:[%s1 + $0x40] sm:$0xff]
  %v51 = vld [vmem:[%s1 + $0x48] sm:$0xff]
  %v52 = vld [vmem:[%s1 + $0x50] sm:$0xff]
  %v53 = vld [vmem:[%s1 + $0x58] sm:$0xff]
  %v54 = vld [vmem:[%s1 + $0x60] sm:$0xff]
  %v55 = vld [vmem:[%s1 + $0x68] sm:$0xff]
  %v56 = vld [vmem:[%s1 + $0x70] sm:$0xff]
  %v57 = vld [vmem:[%s1 + $0x78] sm:$0xff]
  %v58 = vld [vmem:[%s1 + $0x80] sm:$0xff]
  %v59 = vld [vmem:[%s1 + $0x88] sm:$0xff]
  %v60 = vld [vmem:[%s1 + $0x90] sm:$0xff]
  %v61 = vld [vmem:[%s1 + $0x98] sm:$0xff]
  %v62 = vld [vmem:[%s1 + $0xa0] sm:$0xff]
  %v63 = vld [vmem:[%s1 + $0xa8] sm:$0xff]
  %v64 = vld [vmem:[%s1 + $0xb0] sm:$0xff]
  %v65 = vld [vmem:[%s1 + $0xb8] sm:$0xff]
  %v66 = vld [vmem:[%s1 + $0xc0] sm:$0xff]
  %v67 = vld [vmem:[%s1 + $0xc8] sm:$0xff]
  %v68 = vld [vmem:[%s1 + $0xd0] sm:$0xff]
  %v69 = vld [vmem:[%s1 + $0xd8] sm:$0xff]
  %v70 = vld [vmem:[%s1 + $0xe0] sm:$0xff]
  %v71 = vld [vmem:[%s1 + $0xe8] sm:$0xff]
  %v72 = vld [vmem:[%s1 + $0xf0] sm:$0xff]
  %v73 = vld [vmem:[%s1 + $0xf8] sm:$0xff]
  %v74 = vld [vmem:[%s1 + $0x100] sm:$0xff]
  %v75 = vld [vmem:[%s1 + $0x108] sm:$0xff]
  %v76 = vld [vmem:[%s1 + $0x110] sm:$0xff]
  %v77 = vld [vmem:[%s1 + $0x118] sm:$0xff]
  %v78 = vld [vmem:[%s1 + $0x120] sm:$0xff]
  %v79 = vld [vmem:[%s1 + $0x128] sm:$0xff]
  %v80 = vld [vmem:[%s1 + $0x130] sm:$0xff]
  %v81 = vld [vmem:[%s1 + $0x138] sm:$0xff]
  %v82 = vld [vmem:[%s1 + $0x140] sm:$0xff]
  %v83 = vld [vmem:[%s1 + $0x148] sm:$0xff]
  %v84 = vld [vmem:[%s1 + $0x150] sm:$0xff]
  %v85 = vld [vmem:[%s1 + $0x158] sm:$0xff]
  %v86 = vld [vmem:[%s1 + $0x160] sm:$0xff]
  %v87 = vld [vmem:[%s1 + $0x168] sm:$0xff]
  %v88 = vld [vmem:[%s1 + $0x170] sm:$0xff]
  %v89 = vld [vmem:[%s1 + $0x178] sm:$0xff]
  %v90 = vld [vmem:[%s1 + $0x180] sm:$0xff]
  %v91 = vld [vmem:[%s1 + $0x188] sm:$0xff]
  %v92 = vld [vmem:[%s1 + $0x190] sm:$0xff]
  %v93 = vld [vmem:[%s1 + $0x198] sm:$0xff]
  %v94 = vld [vmem:[%s1 + $0x1a0] sm:$0xff]
  %v95 = vld [vmem:[%s1 + $0x1a8] sm:$0xff]
  %v96 = vld [vmem:[%s1 + $0x1b0] sm:$0xff]
  %v97 = vld [vmem:[%s1 + $0x1b8] sm:$0xff]
  %v98 = vld [vmem:[%s1 + $0x1c0] sm:$0xff]
  %v99 = vld [vmem:[%s1 + $0x1c8] sm:$0xff]
  %v100 = vld [vmem:[%s1 + $0x1d0] sm:$0xff]
  %v101 = vld [vmem:[%s1 + $0x1d8] sm:$0xff]
  %v102 = vld [vmem:[%s1 + $0x1e0] sm:$0xff]
  %v103 = vld [vmem:[%s1 + $0x1e8] sm:$0xff]
  %v104 = vld [vmem:[%s1 + $0x1f0] sm:$0xff]
  %v105 = vld [vmem:[%s1 + $0x1f8] sm:$0xff]
  %v106 = vld [vmem:[%s1 + $0x200] sm:$0xff]
  %v107 = vld [vmem:[%s1 + $0x208] sm:$0xff]
  %v108 = vld [vmem:[%s1 + $0x210] sm:$0xff]
  %v109 = vld [vmem:[%s1 + $0x218] sm:$0xff]
  %v110 = vld [vmem:[%s1 + $0x220] sm:$0xff]
  %v111 = vld [vmem:[%s1 + $0x228] sm:$0xff]
  %v112 = vld [vmem:[%s1 + $0x230] sm:$0xff]
  %v113 = vld [vmem:[%s1 + $0x238] sm:$0xff]
  %v114 = vld [vmem:[%s1 + $0x240] sm:$0xff]
  %v115 = vld [vmem:[%s1 + $0x248] sm:$0xff]
  %v116 = vld [vmem:[%s1 + $0x250] sm:$0xff]
  %v117 = vld [vmem:[%s1 + $0x258] sm:$0xff]
  %v118 = vld [vmem:[%s1 + $0x260] sm:$0xff]
  %v119 = vld [vmem:[%s1 + $0x268] sm:$0xff]
  %v120 = vld [vmem:[%s1 + $0x270] sm:$0xff]
  %v121 = vld [vmem:[%s1 + $0x278] sm:$0xff]
  %v122 = vld [vmem:[%s1 + $0x280] sm:$0xff]
  %v123 = vld [vmem:[%s1 + $0x288] sm:$0xff]
  %v124 = vld [vmem:[%s1 + $0x290] sm:$0xff]
  %v125 = vld [vmem:[%s1 + $0x298] sm:$0xff]
  %v126 = vld [vmem:[%s1 + $0x2a0] sm:$0xff]
  %v127 = vld [vmem:[%s1 + $0x2a8] sm:$0xff]
  %v128 = vld [vmem:[%s1 + $0x2b0] sm:$0xff]
  %v129 = vld [vmem:[%s1 + $0x2b8] sm:$0xff]
  %v130 = vld [vmem:[%s1 + $0x2c0] sm:$0xff]
  %v131 = vld [vmem:[%s1 + $0x2c8] sm:$0xff]
  %v132 = vld [vmem:[%s1 + $0x2d0] sm:$0xff]
  %v133 = vld [vmem:[%s1 + $0x2d8] sm:$0xff]
  %v134 = vld [vmem:[%s1 + $0x2e0] sm:$0xff]
  %v135 = vld [vmem:[%s1 + $0x2e8] sm:$0xff]
  %v136 = vld [vmem:[%s1 + $0x2f0] sm:$0xff]
  %v137 = vld [vmem:[%s1 + $0x2f8] sm:$0xff]
  %v138 = vld [vmem:[%s1 + $0x300] sm:$0xff]
  %v139 = vld [vmem:[%s1 + $0x308] sm:$0xff]
  %v140 = vld [vmem:[%s1 + $0x310] sm:$0xff]
  %v141 = vld [vmem:[%s1 + $0x318] sm:$0xff]
  %v142 = vld [vmem:[%s1 + $0x320] sm:$0xff]
  %v143 = vld [vmem:[%s1 + $0x328] sm:$0xff]
  %v144 = vld [vmem:[%s1 + $0x330] sm:$0xff]
  %v145 = vld [vmem:[%s1 + $0x338] sm:$0xff]
  %v146 = vld [vmem:[%s1 + $0x340] sm:$0xff]
  %v147 = vld [vmem:[%s1 + $0x348] sm:$0xff]
  %v148 = vld [vmem:[%s1 + $0x350] sm:$0xff]
  %v149 = vld [vmem:[%s1 + $0x358] sm:$0xff]
  %v150 = vld [vmem:[%s1 + $0x360] sm:$0xff]
  %v151 = vld [vmem:[%s1 + $0x368] sm:$0xff]
  %v152 = vld [vmem:[%s1 + $0x370] sm:$0xff]
  %v153 = vld [vmem:[%s1 + $0x378] sm:$0xff]
  %v154 = vld [vmem:[%s1 + $0x380] sm:$0xff]
  %v155 = vld [vmem:[%s1 + $0x388] sm:$0xff]
  %v156 = vld [vmem:[%s1 + $0x390] sm:$0xff]
  %v157 = vld [vmem:[%s1 + $0x398] sm:$0xff]
  %v158 = vld [vmem:[%s1 + $0x3a0] sm:$0xff]
  %v159 = vld [vmem:[%s1 + $0x3a8] sm:$0xff]
  %v160 = vld [vmem:[%s1 + $0x3b0] sm:$0xff]
  %v161 = vld [vmem:[%s1 + $0x3b8] sm:$0xff]
  %v162 = vld [vmem:[%s1 + $0x3c0] sm:$0xff]
  %v163 = vld [vmem:[%s1 + $0x3c8] sm:$0xff]
  %v164 = vld [vmem:[%s1 + $0x3d0] sm:$0xff]
  %v165 = vld [vmem:[%s1 + $0x3d8] sm:$0xff]
  %v166 = vld [vmem:[%s1 + $0x3e0] sm:$0xff]
  %v167 = vld [vmem:[%s1 + $0x3e8] sm:$0xff]
  %v168 = vld [vmem:[%s1 + $0x3f0] sm:$0xff]
  %v169 = vld [vmem:[%s1 + $0x3f8] sm:$0xff]
  %v170 = vld [vmem:[%s1 + $0x400] sm:$0xff]
  %v171 = vld [vmem:[%s1 + $0x408] sm:$0xff]
  %v172 = vld [vmem:[%s1 + $0x410] sm:$0xff]
  %v173 = vld [vmem:[%s1 + $0x418] sm:$0xff]
  %v174 = vld [vmem:[%s1 + $0x420] sm:$0xff]
  %v175 = vld [vmem:[%s1 + $0x428] sm:$0xff]
  %v176 = vld [vmem:[%s1 + $0x430] sm:$0xff]
  %v177 = vld [vmem:[%s1 + $0x438] sm:$0xff]
  %v178 = vld [vmem:[%s1 + $0x440] sm:$0xff]
  %v179 = vld [vmem:[%s1 + $0x448] sm:$0xff]
  %v180 = vld [vmem:[%s1 + $0x450] sm:$0xff]
  %v181 = vld [vmem:[%s1 + $0x458] sm:$0xff]
  %v182 = vld [vmem:[%s1 + $0x460] sm:$0xff]
  %v183 = vld [vmem:[%s1 + $0x468] sm:$0xff]
  %v184 = vld [vmem:[%s1 + $0x470] sm:$0xff]
  %v185 = vld [vmem:[%s1 + $0x478] sm:$0xff]
  %v186 = vld [vmem:[%s1 + $0x480] sm:$0xff]
  %v187 = vld [vmem:[%s1 + $0x488] sm:$0xff]
  %v188 = vld [vmem:[%s1 + $0x490] sm:$0xff]
  %v189 = vld [vmem:[%s1 + $0x498] sm:$0xff]
  %v190 = vld [vmem:[%s1 + $0x4a0] sm:$0xff]
  %v191 = vld [vmem:[%s1 + $0x4a8] sm:$0xff]
  %v192 = vld [vmem:[%s1 + $0x4b0] sm:$0xff]
  %v193 = vld [vmem:[%s1 + $0x4b8] sm:$0xff]
  %v194 = vld [vmem:[%s1 + $0x4c0] sm:$0xff]
  %v195 = vld [vmem:[%s1 + $0x4c8] sm:$0xff]
  %v196 = vld [vmem:[%s1 + $0x4d0] sm:$0xff]
  %v197 = vld [vmem:[%s1 + $0x4d8] sm:$0xff]
  %v198 = vld [vmem:[%s1 + $0x4e0] sm:$0xff]
  %v199 = vld [vmem:[%s1 + $0x4e8] sm:$0xff]
  %v200 = vld [vmem:[%s1 + $0x4f0] sm:$0xff]
  %v201 = vld [vmem:[%s1 + $0x4f8] sm:$0xff]
  %v202 = vld [vmem:[%s1 + $0x500] sm:$0xff]
  %v203 = vld [vmem:[%s1 + $0x508] sm:$0xff]
  %v204 = vld [vmem:[%s1 + $0x510] sm:$0xff]
  %v205 = vld [vmem:[%s1 + $0x518] sm:$0xff]
  %v206 = vld [vmem:[%s1 + $0x520] sm:$0xff]
  %v207 = vld [vmem:[%s1 + $0x528] sm:$0xff]
  %v208 = vld [vmem:[%s1 + $0x530] sm:$0xff]
  %v209 = vld [vmem:[%s1 + $0x538] sm:$0xff]
  %v210 = vld [vmem:[%s1 + $0x540] sm:$0xff]
  %v211 = vld [vmem:[%s1 + $0x548] sm:$0xff]
  %v212 = vld [vmem:[%s1 + $0x550] sm:$0xff]
  %v213 = vld [vmem:[%s1 + $0x558] sm:$0xff]
  %v214 = vld [vmem:[%s1 + $0x560] sm:$0xff]
  %v215 = vld [vmem:[%s1 + $0x568] sm:$0xff]
  %v216 = vld [vmem:[%s1 + $0x570] sm:$0xff]
  %v217 = vld [vmem:[%s1 + $0x578] sm:$0xff]
  %v218 = vld [vmem:[%s1 + $0x580] sm:$0xff]
  %v219 = vld [vmem:[%s1 + $0x588] sm:$0xff]
  %v220 = vld [vmem:[%s1 + $0x590] sm:$0xff]
  %v221 = vld [vmem:[%s1 + $0x598] sm:$0xff]
  %v222 = vld [vmem:[%s1 + $0x5a0] sm:$0xff]
  %v223 = vld [vmem:[%s1 + $0x5a8] sm:$0xff]
  %v224 = vld [vmem:[%s1 + $0x5b0] sm:$0xff]
  %v225 = vld [vmem:[%s1 + $0x5b8] sm:$0xff]
  %v226 = vld [vmem:[%s1 + $0x5c0] sm:$0xff]
  %v227 = vld [vmem:[%s1 + $0x5c8] sm:$0xff]
  %v228 = vld [vmem:[%s1 + $0x5d0] sm:$0xff]
  %v229 = vld [vmem:[%s1 + $0x5d8] sm:$0xff]
  %v230 = vld [vmem:[%s1 + $0x5e0] sm:$0xff]
  %v231 = vld [vmem:[%s1 + $0x5e8] sm:$0xff]
  %v232 = vld [vmem:[%s1 + $0x5f0] sm:$0xff]
  %v233 = vld [vmem:[%s1 + $0x5f8] sm:$0xff]
  %v234 = vld [vmem:[%s1 + $0x600] sm:$0xff]
  %v235 = vld [vmem:[%s1 + $0x608] sm:$0xff]
  %v236 = vld [vmem:[%s1 + $0x610] sm:$0xff]
  %v237 = vld [vmem:[%s1 + $0x618] sm:$0xff]
  %v238 = vld [vmem:[%s1 + $0x620] sm:$0xff]
  %v239 = vld [vmem:[%s1 + $0x628] sm:$0xff]
  %v240 = vld [vmem:[%s1 + $0x630] sm:$0xff]
  %v241 = vld [vmem:[%s1 + $0x638] sm:$0xff]
  %v242 = vld [vmem:[%s1 + $0x640] sm:$0xff]
  %v243 = vld [vmem:[%s1 + $0x648] sm:$0xff]
  %v244 = vld [vmem:[%s1 + $0x650] sm:$0xff]
  %v245 = vld [vmem:[%s1 + $0x658] sm:$0xff]
  %v246 = vld [vmem:[%s1 + $0x660] sm:$0xff]
  %v247 = vld [vmem:[%s1 + $0x668] sm:$0xff]
  %v248 = vld [vmem:[%s1 + $0x670] sm:$0xff]
  %v249 = vld [vmem:[%s1 + $0x678] sm:$0xff]
  %v250 = vld [vmem:[%s1 + $0x680] sm:$0xff]
  %v251 = vld [vmem:[%s1 + $0x688] sm:$0xff]
  %v252 = vld [vmem:[%s1 + $0x690] sm:$0xff]
  %v253 = vld [vmem:[%s1 + $0x698] sm:$0xff]
  %v254 = vld [vmem:[%s1 + $0x6a0] sm:$0xff]
  %v255 = vld [vmem:[%s1 + $0x6a8] sm:$0xff]
  %v256 = vld [vmem:[%s1 + $0x6b0] sm:$0xff]
  %v257 = vld [vmem:[%s1 + $0x6b8] sm:$0xff]
  %v258 = vld [vmem:[%s1 + $0x6c0] sm:$0xff]
  %v259 = vld [vmem:[%s1 + $0x6c8] sm:$0xff]
  %v260 = vld [vmem:[%s1 + $0x6d0] sm:$0xff]
  %v261 = vld [vmem:[%s1 + $0x6d8] sm:$0xff]
  %v262 = vld [vmem:[%s1 + $0x6e0] sm:$0xff]
  %v263 = vld [vmem:[%s1 + $0x6e8] sm:$0xff]
  %v264 = vld [vmem:[%s1 + $0x6f0] sm:$0xff]
  %v265 = vld [vmem:[%s1 + $0x6f8] sm:$0xff]
  %v266 = vld [vmem:[%s1 + $0x700] sm:$0xff]
  %v267 = vld [vmem:[%s1 + $0x708] sm:$0xff]
  %v268 = vld [vmem:[%s1 + $0x710] sm:$0xff]
  %v269 = vld [vmem:[%s1 + $0x718] sm:$0xff]
  %v270 = vld [vmem:[%s1 + $0x720] sm:$0xff]
  %v271 = vld [vmem:[%s1 + $0x728] sm:$0xff]
  %v272 = vld [vmem:[%s1 + $0x730] sm:$0xff]
  %v273 = vld [vmem:[%s1 + $0x738] sm:$0xff]
  %v274 = vld [vmem:[%s1 + $0x740] sm:$0xff]
  %v275 = vld [vmem:[%s1 + $0x748] sm:$0xff]
  %v276 = vld [vmem:[%s1 + $0x750] sm:$0xff]
  %v277 = vld [vmem:[%s1 + $0x758] sm:$0xff]
  %v278 = vld [vmem:[%s1 + $0x760] sm:$0xff]
  %v279 = vld [vmem:[%s1 + $0x768] sm:$0xff]
  %v280 = vld [vmem:[%s1 + $0x770] sm:$0xff]
  %v281 = vld [vmem:[%s1 + $0x778] sm:$0xff]
  %v282 = vld [vmem:[%s1 + $0x780] sm:$0xff]
  %v283 = vld [vmem:[%s1 + $0x788] sm:$0xff]
  %v284 = vld [vmem:[%s1 + $0x790] sm:$0xff]
  %v285 = vld [vmem:[%s1 + $0x798] sm:$0xff]
  %v286 = vld [vmem:[%s1 + $0x7a0] sm:$0xff]
  %v287 = vld [vmem:[%s1 + $0x7a8] sm:$0xff]
  %v288 = vld [vmem:[%s1 + $0x7b0] sm:$0xff]
  %v289 = vld [vmem:[%s1 + $0x7b8] sm:$0xff]
  %v290 = vld [vmem:[%s1 + $0x7c0] sm:$0xff]
  %v291 = vld [vmem:[%s1 + $0x7c8] sm:$0xff]
  %v292 = vld [vmem:[%s1 + $0x7d0] sm:$0xff]
  %v293 = vld [vmem:[%s1 + $0x7d8] sm:$0xff]
  %v294 = vld [vmem:[%s1 + $0x7e0] sm:$0xff]
  %v295 = vld [vmem:[%s1 + $0x7e8] sm:$0xff]
  %v296 = vld [vmem:[%s1 + $0x7f0] sm:$0xff]
  %v297 = vld [vmem:[%s1 + $0x7f8] sm:$0xff]
  %v300 = vunpack.c.l.b16 %v40
  %v301 = vunpack.c.h.b16 %v40
  %v302 = vunpack.c.l.b16 %v41
  %v303 = vunpack.c.h.b16 %v41
  %v304 = vpack.c.b16 %v300, %v300
  %v305 = vpack.c.b16 %v301, %v301
  %v306 = vpack.c.b16 %v302, %v302
  %v307 = vpack.c.b16 %v303, %v303
  %v568 = vunpack.c.l.b16 %v42
  %v569 = vunpack.c.h.b16 %v42
  %v570 = vunpack.c.l.b16 %v43
  %v571 = vunpack.c.h.b16 %v43
  %v572 = vunpack.c.l.b16 %v44
  %v573 = vunpack.c.h.b16 %v44
  %v574 = vunpack.c.l.b16 %v45
  %v575 = vunpack.c.h.b16 %v45
  %v576 = vunpack.c.l.b16 %v46
  %v577 = vunpack.c.h.b16 %v46
  %v578 = vunpack.c.l.b16 %v47
  %v579 = vunpack.c.h.b16 %v47
  %v580 = vunpack.c.l.b16 %v48
  %v581 = vunpack.c.h.b16 %v48
  %v582 = vunpack.c.l.b16 %v49
  %v583 = vunpack.c.h.b16 %v49
  %v584 = vunpack.c.l.b16 %v50
  %v585 = vunpack.c.h.b16 %v50
  %v586 = vunpack.c.l.b16 %v51
  %v587 = vunpack.c.h.b16 %v51
  %v588 = vunpack.c.l.b16 %v52
  %v589 = vunpack.c.h.b16 %v52
  %v590 = vunpack.c.l.b16 %v53
  %v591 = vunpack.c.h.b16 %v53
  %v592 = vunpack.c.l.b16 %v54
  %v593 = vunpack.c.h.b16 %v54
  %v594 = vunpack.c.l.b16 %v55
  %v595 = vunpack.c.h.b16 %v55
  %v596 = vunpack.c.l.b16 %v56
  %v597 = vunpack.c.h.b16 %v56
  %v598 = vunpack.c.l.b16 %v57
  %v599 = vunpack.c.h.b16 %v57
  %v600 = vunpack.c.l.b16 %v58
  %v601 = vunpack.c.h.b16 %v58
  %v602 = vunpack.c.l.b16 %v59
  %v603 = vunpack.c.h.b16 %v59
  %v604 = vunpack.c.l.b16 %v60
  %v605 = vunpack.c.h.b16 %v60
  %v606 = vunpack.c.l.b16 %v61
  %v607 = vunpack.c.h.b16 %v61
  %v608 = vunpack.c.l.b16 %v62
  %v609 = vunpack.c.h.b16 %v62
  %v610 = vunpack.c.l.b16 %v63
  %v611 = vunpack.c.h.b16 %v63
  %v612 = vunpack.c.l.b16 %v64
  %v613 = vunpack.c.h.b16 %v64
  %v614 = vunpack.c.l.b16 %v65
  %v615 = vunpack.c.h.b16 %v65
  %v616 = vunpack.c.l.b16 %v66
  %v617 = vunpack.c.h.b16 %v66
  %v618 = vunpack.c.l.b16 %v67
  %v619 = vunpack.c.h.b16 %v67
  %v620 = vunpack.c.l.b16 %v68
  %v621 = vunpack.c.h.b16 %v68
  %v622 = vunpack.c.l.b16 %v69
  %v623 = vunpack.c.h.b16 %v69
  %v624 = vunpack.c.l.b16 %v70
  %v625 = vunpack.c.h.b16 %v70
  %v626 = vunpack.c.l.b16 %v71
  %v627 = vunpack.c.h.b16 %v71
  %v628 = vunpack.c.l.b16 %v72
  %v629 = vunpack.c.h.b16 %v72
  %v630 = vunpack.c.l.b16 %v73
  %v631 = vunpack.c.h.b16 %v73
  %v632 = vunpack.c.l.b16 %v74
  %v633 = vunpack.c.h.b16 %v74
  %v634 = vunpack.c.l.b16 %v75
  %v635 = vunpack.c.h.b16 %v75
  %v636 = vunpack.c.l.b16 %v76
  %v637 = vunpack.c.h.b16 %v76
  %v638 = vunpack.c.l.b16 %v77
  %v639 = vunpack.c.h.b16 %v77
  %v640 = vunpack.c.l.b16 %v78
  %v641 = vunpack.c.h.b16 %v78
  %v642 = vunpack.c.l.b16 %v79
  %v643 = vunpack.c.h.b16 %v79
  %v644 = vunpack.c.l.b16 %v80
  %v645 = vunpack.c.h.b16 %v80
  %v646 = vunpack.c.l.b16 %v81
  %v647 = vunpack.c.h.b16 %v81
  %v648 = vunpack.c.l.b16 %v82
  %v649 = vunpack.c.h.b16 %v82
  %v650 = vunpack.c.l.b16 %v83
  %v651 = vunpack.c.h.b16 %v83
  %v652 = vunpack.c.l.b16 %v84
  %v653 = vunpack.c.h.b16 %v84
  %v654 = vunpack.c.l.b16 %v85
  %v655 = vunpack.c.h.b16 %v85
  %v656 = vunpack.c.l.b16 %v86
  %v657 = vunpack.c.h.b16 %v86
  %v658 = vunpack.c.l.b16 %v87
  %v659 = vunpack.c.h.b16 %v87
  %v660 = vunpack.c.l.b16 %v88
  %v661 = vunpack.c.h.b16 %v88
  %v662 = vunpack.c.l.b16 %v89
  %v663 = vunpack.c.h.b16 %v89
  %v664 = vunpack.c.l.b16 %v90
  %v665 = vunpack.c.h.b16 %v90
  %v666 = vunpack.c.l.b16 %v91
  %v667 = vunpack.c.h.b16 %v91
  %v668 = vunpack.c.l.b16 %v92
  %v669 = vunpack.c.h.b16 %v92
  %v670 = vunpack.c.l.b16 %v93
  %v671 = vunpack.c.h.b16 %v93
  %v672 = vunpack.c.l.b16 %v94
  %v673 = vunpack.c.h.b16 %v94
  %v674 = vunpack.c.l.b16 %v95
  %v675 = vunpack.c.h.b16 %v95
  %v676 = vunpack.c.l.b16 %v96
  %v677 = vunpack.c.h.b16 %v96
  %v678 = vunpack.c.l.b16 %v97
  %v679 = vunpack.c.h.b16 %v97
  %v680 = vunpack.c.l.b16 %v98
  %v681 = vunpack.c.h.b16 %v98
  %v682 = vunpack.c.l.b16 %v99
  %v683 = vunpack.c.h.b16 %v99
  %v684 = vunpack.c.l.b16 %v100
  %v685 = vunpack.c.h.b16 %v100
  %v686 = vunpack.c.l.b16 %v101
  %v687 = vunpack.c.h.b16 %v101
  %v688 = vunpack.c.l.b16 %v102
  %v689 = vunpack.c.h.b16 %v102
  %v690 = vunpack.c.l.b16 %v103
  %v691 = vunpack.c.h.b16 %v103
  %v692 = vunpack.c.l.b16 %v104
  %v693 = vunpack.c.h.b16 %v104
  %v694 = vunpack.c.l.b16 %v105
  %v695 = vunpack.c.h.b16 %v105
  %v696 = vunpack.c.l.b16 %v106
  %v697 = vunpack.c.h.b16 %v106
  %v698 = vunpack.c.l.b16 %v107
  %v699 = vunpack.c.h.b16 %v107
  %v700 = vunpack.c.l.b16 %v108
  %v701 = vunpack.c.h.b16 %v108
  %v702 = vunpack.c.l.b16 %v109
  %v703 = vunpack.c.h.b16 %v109
  %v704 = vunpack.c.l.b16 %v110
  %v705 = vunpack.c.h.b16 %v110
  %v706 = vunpack.c.l.b16 %v111
  %v707 = vunpack.c.h.b16 %v111
  %v708 = vunpack.c.l.b16 %v112
  %v709 = vunpack.c.h.b16 %v112
  %v710 = vunpack.c.l.b16 %v113
  %v711 = vunpack.c.h.b16 %v113
  %v712 = vunpack.c.l.b16 %v114
  %v713 = vunpack.c.h.b16 %v114
  %v714 = vunpack.c.l.b16 %v115
  %v715 = vunpack.c.h.b16 %v115
  %v716 = vunpack.c.l.b16 %v116
  %v717 = vunpack.c.h.b16 %v116
  %v718 = vunpack.c.l.b16 %v117
  %v719 = vunpack.c.h.b16 %v117
  %v720 = vunpack.c.l.b16 %v118
  %v721 = vunpack.c.h.b16 %v118
  %v722 = vunpack.c.l.b16 %v119
  %v723 = vunpack.c.h.b16 %v119
  %v724 = vunpack.c.l.b16 %v120
  %v725 = vunpack.c.h.b16 %v120
  %v726 = vunpack.c.l.b16 %v121
  %v727 = vunpack.c.h.b16 %v121
  %v728 = vunpack.c.l.b16 %v122
  %v729 = vunpack.c.h.b16 %v122
  %v730 = vunpack.c.l.b16 %v123
  %v731 = vunpack.c.h.b16 %v123
  %v732 = vunpack.c.l.b16 %v124
  %v733 = vunpack.c.h.b16 %v124
  %v734 = vunpack.c.l.b16 %v125
  %v735 = vunpack.c.h.b16 %v125
  %v736 = vunpack.c.l.b16 %v126
  %v737 = vunpack.c.h.b16 %v126
  %v738 = vunpack.c.l.b16 %v127
  %v739 = vunpack.c.h.b16 %v127
  %v740 = vunpack.c.l.b16 %v128
  %v741 = vunpack.c.h.b16 %v128
  %v742 = vunpack.c.l.b16 %v129
  %v743 = vunpack.c.h.b16 %v129
  %v744 = vunpack.c.l.b16 %v130
  %v745 = vunpack.c.h.b16 %v130
  %v746 = vunpack.c.l.b16 %v131
  %v747 = vunpack.c.h.b16 %v131
  %v748 = vunpack.c.l.b16 %v132
  %v749 = vunpack.c.h.b16 %v132
  %v750 = vunpack.c.l.b16 %v133
  %v751 = vunpack.c.h.b16 %v133
  %v752 = vunpack.c.l.b16 %v134
  %v753 = vunpack.c.h.b16 %v134
  %v754 = vunpack.c.l.b16 %v135
  %v755 = vunpack.c.h.b16 %v135
  %v756 = vunpack.c.l.b16 %v136
  %v757 = vunpack.c.h.b16 %v136
  %v758 = vunpack.c.l.b16 %v137
  %v759 = vunpack.c.h.b16 %v137
  %v760 = vunpack.c.l.b16 %v138
  %v761 = vunpack.c.h.b16 %v138
  %v762 = vunpack.c.l.b16 %v139
  %v763 = vunpack.c.h.b16 %v139
  %v764 = vunpack.c.l.b16 %v140
  %v765 = vunpack.c.h.b16 %v140
  %v766 = vunpack.c.l.b16 %v141
  %v767 = vunpack.c.h.b16 %v141
  %v768 = vunpack.c.l.b16 %v142
  %v769 = vunpack.c.h.b16 %v142
  %v770 = vunpack.c.l.b16 %v143
  %v771 = vunpack.c.h.b16 %v143
  %v772 = vunpack.c.l.b16 %v144
  %v773 = vunpack.c.h.b16 %v144
  %v774 = vunpack.c.l.b16 %v145
  %v775 = vunpack.c.h.b16 %v145
  %v776 = vunpack.c.l.b16 %v146
  %v777 = vunpack.c.h.b16 %v146
  %v778 = vunpack.c.l.b16 %v147
  %v779 = vunpack.c.h.b16 %v147
  %v780 = vunpack.c.l.b16 %v148
  %v781 = vunpack.c.h.b16 %v148
  %v782 = vunpack.c.l.b16 %v149
  %v783 = vunpack.c.h.b16 %v149
  %v784 = vunpack.c.l.b16 %v150
  %v785 = vunpack.c.h.b16 %v150
  %v786 = vunpack.c.l.b16 %v151
  %v787 = vunpack.c.h.b16 %v151
  %v788 = vunpack.c.l.b16 %v152
  %v789 = vunpack.c.h.b16 %v152
  %v790 = vunpack.c.l.b16 %v153
  %v791 = vunpack.c.h.b16 %v153
  %v792 = vunpack.c.l.b16 %v154
  %v793 = vunpack.c.h.b16 %v154
  %v794 = vunpack.c.l.b16 %v155
  %v795 = vunpack.c.h.b16 %v155
  %v796 = vunpack.c.l.b16 %v156
  %v797 = vunpack.c.h.b16 %v156
  %v798 = vunpack.c.l.b16 %v157
  %v799 = vunpack.c.h.b16 %v157
  %v800 = vunpack.c.l.b16 %v158
  %v801 = vunpack.c.h.b16 %v158
  %v802 = vunpack.c.l.b16 %v159
  %v803 = vunpack.c.h.b16 %v159
  %v804 = vunpack.c.l.b16 %v160
  %v805 = vunpack.c.h.b16 %v160
  %v806 = vunpack.c.l.b16 %v161
  %v807 = vunpack.c.h.b16 %v161
  %v808 = vunpack.c.l.b16 %v162
  %v809 = vunpack.c.h.b16 %v162
  %v810 = vunpack.c.l.b16 %v163
  %v811 = vunpack.c.h.b16 %v163
  %v812 = vunpack.c.l.b16 %v164
  %v813 = vunpack.c.h.b16 %v164
  %v814 = vunpack.c.l.b16 %v165
  %v815 = vunpack.c.h.b16 %v165
  %v816 = vunpack.c.l.b16 %v166
  %v817 = vunpack.c.h.b16 %v166
  %v818 = vunpack.c.l.b16 %v167
  %v819 = vunpack.c.h.b16 %v167
  %v820 = vunpack.c.l.b16 %v168
  %v821 = vunpack.c.h.b16 %v168
  %v822 = vunpack.c.l.b16 %v169
  %v823 = vunpack.c.h.b16 %v169
  %v824 = vunpack.c.l.b16 %v170
  %v825 = vunpack.c.h.b16 %v170
  %v826 = vunpack.c.l.b16 %v171
  %v827 = vunpack.c.h.b16 %v171
  %v828 = vunpack.c.l.b16 %v172
  %v829 = vunpack.c.h.b16 %v172
  %v830 = vunpack.c.l.b16 %v173
  %v831 = vunpack.c.h.b16 %v173
  %v832 = vunpack.c.l.b16 %v174
  %v833 = vunpack.c.h.b16 %v174
  %v834 = vunpack.c.l.b16 %v175
  %v835 = vunpack.c.h.b16 %v175
  %v836 = vunpack.c.l.b16 %v176
  %v837 = vunpack.c.h.b16 %v176
  %v838 = vunpack.c.l.b16 %v177
  %v839 = vunpack.c.h.b16 %v177
  %v840 = vunpack.c.l.b16 %v178
  %v841 = vunpack.c.h.b16 %v178
  %v842 = vunpack.c.l.b16 %v179
  %v843 = vunpack.c.h.b16 %v179
  %v844 = vunpack.c.l.b16 %v180
  %v845 = vunpack.c.h.b16 %v180
  %v846 = vunpack.c.l.b16 %v181
  %v847 = vunpack.c.h.b16 %v181
  %v848 = vunpack.c.l.b16 %v182
  %v849 = vunpack.c.h.b16 %v182
  %v850 = vunpack.c.l.b16 %v183
  %v851 = vunpack.c.h.b16 %v183
  %v852 = vunpack.c.l.b16 %v184
  %v853 = vunpack.c.h.b16 %v184
  %v854 = vunpack.c.l.b16 %v185
  %v855 = vunpack.c.h.b16 %v185
  %v856 = vunpack.c.l.b16 %v186
  %v857 = vunpack.c.h.b16 %v186
  %v858 = vunpack.c.l.b16 %v187
  %v859 = vunpack.c.h.b16 %v187
  %v860 = vunpack.c.l.b16 %v188
  %v861 = vunpack.c.h.b16 %v188
  %v862 = vunpack.c.l.b16 %v189
  %v863 = vunpack.c.h.b16 %v189
  %v864 = vunpack.c.l.b16 %v190
  %v865 = vunpack.c.h.b16 %v190
  %v866 = vunpack.c.l.b16 %v191
  %v867 = vunpack.c.h.b16 %v191
  %v868 = vunpack.c.l.b16 %v192
  %v869 = vunpack.c.h.b16 %v192
  %v870 = vunpack.c.l.b16 %v193
  %v871 = vunpack.c.h.b16 %v193
  %v872 = vunpack.c.l.b16 %v194
  %v873 = vunpack.c.h.b16 %v194
  %v874 = vunpack.c.l.b16 %v195
  %v875 = vunpack.c.h.b16 %v195
  %v876 = vunpack.c.l.b16 %v196
  %v877 = vunpack.c.h.b16 %v196
  %v878 = vunpack.c.l.b16 %v197
  %v879 = vunpack.c.h.b16 %v197
  %v880 = vunpack.c.l.b16 %v198
  %v881 = vunpack.c.h.b16 %v198
  %v882 = vunpack.c.l.b16 %v199
  %v883 = vunpack.c.h.b16 %v199
  %v884 = vunpack.c.l.b16 %v200
  %v885 = vunpack.c.h.b16 %v200
  %v886 = vunpack.c.l.b16 %v201
  %v887 = vunpack.c.h.b16 %v201
  %v888 = vunpack.c.l.b16 %v202
  %v889 = vunpack.c.h.b16 %v202
  %v890 = vunpack.c.l.b16 %v203
  %v891 = vunpack.c.h.b16 %v203
  %v892 = vunpack.c.l.b16 %v204
  %v893 = vunpack.c.h.b16 %v204
  %v894 = vunpack.c.l.b16 %v205
  %v895 = vunpack.c.h.b16 %v205
  %v896 = vunpack.c.l.b16 %v206
  %v897 = vunpack.c.h.b16 %v206
  %v898 = vunpack.c.l.b16 %v207
  %v899 = vunpack.c.h.b16 %v207
  %v900 = vunpack.c.l.b16 %v208
  %v901 = vunpack.c.h.b16 %v208
  %v902 = vunpack.c.l.b16 %v209
  %v903 = vunpack.c.h.b16 %v209
  %v904 = vunpack.c.l.b16 %v210
  %v905 = vunpack.c.h.b16 %v210
  %v906 = vunpack.c.l.b16 %v211
  %v907 = vunpack.c.h.b16 %v211
  %v908 = vunpack.c.l.b16 %v212
  %v909 = vunpack.c.h.b16 %v212
  %v910 = vunpack.c.l.b16 %v213
  %v911 = vunpack.c.h.b16 %v213
  %v912 = vunpack.c.l.b16 %v214
  %v913 = vunpack.c.h.b16 %v214
  %v914 = vunpack.c.l.b16 %v215
  %v915 = vunpack.c.h.b16 %v215
  %v916 = vunpack.c.l.b16 %v216
  %v917 = vunpack.c.h.b16 %v216
  %v918 = vunpack.c.l.b16 %v217
  %v919 = vunpack.c.h.b16 %v217
  %v920 = vunpack.c.l.b16 %v218
  %v921 = vunpack.c.h.b16 %v218
  %v922 = vunpack.c.l.b16 %v219
  %v923 = vunpack.c.h.b16 %v219
  %v924 = vunpack.c.l.b16 %v220
  %v925 = vunpack.c.h.b16 %v220
  %v926 = vunpack.c.l.b16 %v221
  %v927 = vunpack.c.h.b16 %v221
  %v928 = vunpack.c.l.b16 %v222
  %v929 = vunpack.c.h.b16 %v222
  %v930 = vunpack.c.l.b16 %v223
  %v931 = vunpack.c.h.b16 %v223
  %v932 = vunpack.c.l.b16 %v224
  %v933 = vunpack.c.h.b16 %v224
  %v934 = vunpack.c.l.b16 %v225
  %v935 = vunpack.c.h.b16 %v225
  %v936 = vunpack.c.l.b16 %v226
  %v937 = vunpack.c.h.b16 %v226
  %v938 = vunpack.c.l.b16 %v227
  %v939 = vunpack.c.h.b16 %v227
  %v940 = vunpack.c.l.b16 %v228
  %v941 = vunpack.c.h.b16 %v228
  %v942 = vunpack.c.l.b16 %v229
  %v943 = vunpack.c.h.b16 %v229
  %v944 = vunpack.c.l.b16 %v230
  %v945 = vunpack.c.h.b16 %v230
  %v946 = vunpack.c.l.b16 %v231
  %v947 = vunpack.c.h.b16 %v231
  %v948 = vunpack.c.l.b16 %v232
  %v949 = vunpack.c.h.b16 %v232
  %v950 = vunpack.c.l.b16 %v233
  %v951 = vunpack.c.h.b16 %v233
  %v952 = vunpack.c.l.b16 %v234
  %v953 = vunpack.c.h.b16 %v234
  %v954 = vunpack.c.l.b16 %v235
  %v955 = vunpack.c.h.b16 %v235
  %v956 = vunpack.c.l.b16 %v236
  %v957 = vunpack.c.h.b16 %v236
  %v958 = vunpack.c.l.b16 %v237
  %v959 = vunpack.c.h.b16 %v237
  %v960 = vunpack.c.l.b16 %v238
  %v961 = vunpack.c.h.b16 %v238
  %v962 = vunpack.c.l.b16 %v239
  %v963 = vunpack.c.h.b16 %v239
  %v964 = vunpack.c.l.b16 %v240
  %v965 = vunpack.c.h.b16 %v240
  %v966 = vunpack.c.l.b16 %v241
  %v967 = vunpack.c.h.b16 %v241
  %v968 = vunpack.c.l.b16 %v242
  %v969 = vunpack.c.h.b16 %v242
  %v970 = vunpack.c.l.b16 %v243
  %v971 = vunpack.c.h.b16 %v243
  %v972 = vunpack.c.l.b16 %v244
  %v973 = vunpack.c.h.b16 %v244
  %v974 = vunpack.c.l.b16 %v245
  %v975 = vunpack.c.h.b16 %v245
  %v976 = vunpack.c.l.b16 %v246
  %v977 = vunpack.c.h.b16 %v246
  %v978 = vunpack.c.l.b16 %v247
  %v979 = vunpack.c.h.b16 %v247
  %v980 = vunpack.c.l.b16 %v248
  %v981 = vunpack.c.h.b16 %v248
  %v982 = vunpack.c.l.b16 %v249
  %v983 = vunpack.c.h.b16 %v249
  %v984 = vunpack.c.l.b16 %v250
  %v985 = vunpack.c.h.b16 %v250
  %v986 = vunpack.c.l.b16 %v251
  %v987 = vunpack.c.h.b16 %v251
  %v988 = vunpack.c.l.b16 %v252
  %v989 = vunpack.c.h.b16 %v252
  %v990 = vunpack.c.l.b16 %v253
  %v991 = vunpack.c.h.b16 %v253
  %v992 = vunpack.c.l.b16 %v254
  %v993 = vunpack.c.h.b16 %v254
  %v994 = vunpack.c.l.b16 %v255
  %v995 = vunpack.c.h.b16 %v255
  %v996 = vunpack.c.l.b16 %v256
  %v997 = vunpack.c.h.b16 %v256
  %v998 = vunpack.c.l.b16 %v257
  %v999 = vunpack.c.h.b16 %v257
  %v1000 = vunpack.c.l.b16 %v258
  %v1001 = vunpack.c.h.b16 %v258
  %v1002 = vunpack.c.l.b16 %v259
  %v1003 = vunpack.c.h.b16 %v259
  %v1004 = vunpack.c.l.b16 %v260
  %v1005 = vunpack.c.h.b16 %v260
  %v1006 = vunpack.c.l.b16 %v261
  %v1007 = vunpack.c.h.b16 %v261
  %v1008 = vunpack.c.l.b16 %v262
  %v1009 = vunpack.c.h.b16 %v262
  %v1010 = vunpack.c.l.b16 %v263
  %v1011 = vunpack.c.h.b16 %v263
  %v1012 = vunpack.c.l.b16 %v264
  %v1013 = vunpack.c.h.b16 %v264
  %v1014 = vunpack.c.l.b16 %v265
  %v1015 = vunpack.c.h.b16 %v265
  %v1016 = vunpack.c.l.b16 %v266
  %v1017 = vunpack.c.h.b16 %v266
  %v1018 = vunpack.c.l.b16 %v267
  %v1019 = vunpack.c.h.b16 %v267
  %v1020 = vunpack.c.l.b16 %v268
  %v1021 = vunpack.c.h.b16 %v268
  %v1022 = vunpack.c.l.b16 %v269
  %v1023 = vunpack.c.h.b16 %v269
  %v1024 = vunpack.c.l.b16 %v270
  %v1025 = vunpack.c.h.b16 %v270
  %v1026 = vunpack.c.l.b16 %v271
  %v1027 = vunpack.c.h.b16 %v271
  %v1028 = vunpack.c.l.b16 %v272
  %v1029 = vunpack.c.h.b16 %v272
  %v1030 = vunpack.c.l.b16 %v273
  %v1031 = vunpack.c.h.b16 %v273
  %v1032 = vunpack.c.l.b16 %v274
  %v1033 = vunpack.c.h.b16 %v274
  %v1034 = vunpack.c.l.b16 %v275
  %v1035 = vunpack.c.h.b16 %v275
  %v1036 = vunpack.c.l.b16 %v276
  %v1037 = vunpack.c.h.b16 %v276
  %v1038 = vunpack.c.l.b16 %v277
  %v1039 = vunpack.c.h.b16 %v277
  %v1040 = vunpack.c.l.b16 %v278
  %v1041 = vunpack.c.h.b16 %v278
  %v1042 = vunpack.c.l.b16 %v279
  %v1043 = vunpack.c.h.b16 %v279
  %v1044 = vunpack.c.l.b16 %v280
  %v1045 = vunpack.c.h.b16 %v280
  %v1046 = vunpack.c.l.b16 %v281
  %v1047 = vunpack.c.h.b16 %v281
  %v1048 = vunpack.c.l.b16 %v282
  %v1049 = vunpack.c.h.b16 %v282
  %v1050 = vunpack.c.l.b16 %v283
  %v1051 = vunpack.c.h.b16 %v283
  %v1052 = vunpack.c.l.b16 %v284
  %v1053 = vunpack.c.h.b16 %v284
  %v1054 = vunpack.c.l.b16 %v285
  %v1055 = vunpack.c.h.b16 %v285
  %v1056 = vunpack.c.l.b16 %v286
  %v1057 = vunpack.c.h.b16 %v286
  %v1058 = vunpack.c.l.b16 %v287
  %v1059 = vunpack.c.h.b16 %v287
  %v1060 = vunpack.c.l.b16 %v288
  %v1061 = vunpack.c.h.b16 %v288
  %v1062 = vunpack.c.l.b16 %v289
  %v1063 = vunpack.c.h.b16 %v289
  %v1064 = vunpack.c.l.b16 %v290
  %v1065 = vunpack.c.h.b16 %v290
  %v1066 = vunpack.c.l.b16 %v291
  %v1067 = vunpack.c.h.b16 %v291
  %v1068 = vunpack.c.l.b16 %v292
  %v1069 = vunpack.c.h.b16 %v292
  %v1070 = vunpack.c.l.b16 %v293
  %v1071 = vunpack.c.h.b16 %v293
  %v1072 = vunpack.c.l.b16 %v294
  %v1073 = vunpack.c.h.b16 %v294
  %v1074 = vunpack.c.l.b16 %v295
  %v1075 = vunpack.c.h.b16 %v295
  %v1076 = vunpack.c.l.b16 %v296
  %v1077 = vunpack.c.h.b16 %v296
  %v1078 = vunpack.c.l.b16 %v297
  %v1079 = vunpack.c.h.b16 %v297
  %v1080 = vpack.c.b16 %v576, %v568
  %v1081 = vpack.c.b16 %v577, %v569
  %v1082 = vpack.c.b16 %v578, %v570
  %v1083 = vpack.c.b16 %v579, %v571
  %v1084 = vpack.c.b16 %v580, %v572
  %v1085 = vpack.c.b16 %v581, %v573
  %v1086 = vpack.c.b16 %v582, %v574
  %v1087 = vpack.c.b16 %v583, %v575
  %v1088 = vpack.c.b16 %v592, %v584
  %v1089 = vpack.c.b16 %v593, %v585
  %v1090 = vpack.c.b16 %v594, %v586
  %v1091 = vpack.c.b16 %v595, %v587
  %v1092 = vpack.c.b16 %v596, %v588
  %v1093 = vpack.c.b16 %v597, %v589
  %v1094 = vpack.c.b16 %v598, %v590
  %v1095 = vpack.c.b16 %v599, %v591
  %v1096 = vpack.c.b16 %v608, %v600
  %v1097 = vpack.c.b16 %v609, %v601
  %v1098 = vpack.c.b16 %v610, %v602
  %v1099 = vpack.c.b16 %v611, %v603
  %v1100 = vpack.c.b16 %v612, %v604
  %v1101 = vpack.c.b16 %v613, %v605
  %v1102 = vpack.c.b16 %v614, %v606
  %v1103 = vpack.c.b16 %v615, %v607
  %v1104 = vpack.c.b16 %v624, %v616
  %v1105 = vpack.c.b16 %v625, %v617
  %v1106 = vpack.c.b16 %v626, %v618
  %v1107 = vpack.c.b16 %v627, %v619
  %v1108 = vpack.c.b16 %v628, %v620
  %v1109 = vpack.c.b16 %v629, %v621
  %v1110 = vpack.c.b16 %v630, %v622
  %v1111 = vpack.c.b16 %v631, %v623
  %v1112 = vpack.c.b16 %v640, %v632
  %v1113 = vpack.c.b16 %v641, %v633
  %v1114 = vpack.c.b16 %v642, %v634
  %v1115 = vpack.c.b16 %v643, %v635
  %v1116 = vpack.c.b16 %v644, %v636
  %v1117 = vpack.c.b16 %v645, %v637
  %v1118 = vpack.c.b16 %v646, %v638
  %v1119 = vpack.c.b16 %v647, %v639
  %v1120 = vpack.c.b16 %v656, %v648
  %v1121 = vpack.c.b16 %v657, %v649
  %v1122 = vpack.c.b16 %v658, %v650
  %v1123 = vpack.c.b16 %v659, %v651
  %v1124 = vpack.c.b16 %v660, %v652
  %v1125 = vpack.c.b16 %v661, %v653
  %v1126 = vpack.c.b16 %v662, %v654
  %v1127 = vpack.c.b16 %v663, %v655
  %v1128 = vpack.c.b16 %v672, %v664
  %v1129 = vpack.c.b16 %v673, %v665
  %v1130 = vpack.c.b16 %v674, %v666
  %v1131 = vpack.c.b16 %v675, %v667
  %v1132 = vpack.c.b16 %v676, %v668
  %v1133 = vpack.c.b16 %v677, %v669
  %v1134 = vpack.c.b16 %v678, %v670
  %v1135 = vpack.c.b16 %v679, %v671
  %v1136 = vpack.c.b16 %v688, %v680
  %v1137 = vpack.c.b16 %v689, %v681
  %v1138 = vpack.c.b16 %v690, %v682
  %v1139 = vpack.c.b16 %v691, %v683
  %v1140 = vpack.c.b16 %v692, %v684
  %v1141 = vpack.c.b16 %v693, %v685
  %v1142 = vpack.c.b16 %v694, %v686
  %v1143 = vpack.c.b16 %v695, %v687
  %v1144 = vpack.c.b16 %v704, %v696
  %v1145 = vpack.c.b16 %v705, %v697
  %v1146 = vpack.c.b16 %v706, %v698
  %v1147 = vpack.c.b16 %v707, %v699
  %v1148 = vpack.c.b16 %v708, %v700
  %v1149 = vpack.c.b16 %v709, %v701
  %v1150 = vpack.c.b16 %v710, %v702
  %v1151 = vpack.c.b16 %v711, %v703
  %v1152 = vpack.c.b16 %v720, %v712
  %v1153 = vpack.c.b16 %v721, %v713
  %v1154 = vpack.c.b16 %v722, %v714
  %v1155 = vpack.c.b16 %v723, %v715
  %v1156 = vpack.c.b16 %v724, %v716
  %v1157 = vpack.c.b16 %v725, %v717
  %v1158 = vpack.c.b16 %v726, %v718
  %v1159 = vpack.c.b16 %v727, %v719
  %v1160 = vpack.c.b16 %v736, %v728
  %v1161 = vpack.c.b16 %v737, %v729
  %v1162 = vpack.c.b16 %v738, %v730
  %v1163 = vpack.c.b16 %v739, %v731
  %v1164 = vpack.c.b16 %v740, %v732
  %v1165 = vpack.c.b16 %v741, %v733
  %v1166 = vpack.c.b16 %v742, %v734
  %v1167 = vpack.c.b16 %v743, %v735
  %v1168 = vpack.c.b16 %v752, %v744
  %v1169 = vpack.c.b16 %v753, %v745
  %v1170 = vpack.c.b16 %v754, %v746
  %v1171 = vpack.c.b16 %v755, %v747
  %v1172 = vpack.c.b16 %v756, %v748
  %v1173 = vpack.c.b16 %v757, %v749
  %v1174 = vpack.c.b16 %v758, %v750
  %v1175 = vpack.c.b16 %v759, %v751
  %v1176 = vpack.c.b16 %v768, %v760
  %v1177 = vpack.c.b16 %v769, %v761
  %v1178 = vpack.c.b16 %v770, %v762
  %v1179 = vpack.c.b16 %v771, %v763
  %v1180 = vpack.c.b16 %v772, %v764
  %v1181 = vpack.c.b16 %v773, %v765
  %v1182 = vpack.c.b16 %v774, %v766
  %v1183 = vpack.c.b16 %v775, %v767
  %v1184 = vpack.c.b16 %v784, %v776
  %v1185 = vpack.c.b16 %v785, %v777
  %v1186 = vpack.c.b16 %v786, %v778
  %v1187 = vpack.c.b16 %v787, %v779
  %v1188 = vpack.c.b16 %v788, %v780
  %v1189 = vpack.c.b16 %v789, %v781
  %v1190 = vpack.c.b16 %v790, %v782
  %v1191 = vpack.c.b16 %v791, %v783
  %v1192 = vpack.c.b16 %v800, %v792
  %v1193 = vpack.c.b16 %v801, %v793
  %v1194 = vpack.c.b16 %v802, %v794
  %v1195 = vpack.c.b16 %v803, %v795
  %v1196 = vpack.c.b16 %v804, %v796
  %v1197 = vpack.c.b16 %v805, %v797
  %v1198 = vpack.c.b16 %v806, %v798
  %v1199 = vpack.c.b16 %v807, %v799
  %v1200 = vpack.c.b16 %v816, %v808
  %v1201 = vpack.c.b16 %v817, %v809
  %v1202 = vpack.c.b16 %v818, %v810
  %v1203 = vpack.c.b16 %v819, %v811
  %v1204 = vpack.c.b16 %v820, %v812
  %v1205 = vpack.c.b16 %v821, %v813
  %v1206 = vpack.c.b16 %v822, %v814
  %v1207 = vpack.c.b16 %v823, %v815
  %v1208 = vpack.c.b16 %v832, %v824
  %v1209 = vpack.c.b16 %v833, %v825
  %v1210 = vpack.c.b16 %v834, %v826
  %v1211 = vpack.c.b16 %v835, %v827
  %v1212 = vpack.c.b16 %v836, %v828
  %v1213 = vpack.c.b16 %v837, %v829
  %v1214 = vpack.c.b16 %v838, %v830
  %v1215 = vpack.c.b16 %v839, %v831
  %v1216 = vpack.c.b16 %v848, %v840
  %v1217 = vpack.c.b16 %v849, %v841
  %v1218 = vpack.c.b16 %v850, %v842
  %v1219 = vpack.c.b16 %v851, %v843
  %v1220 = vpack.c.b16 %v852, %v844
  %v1221 = vpack.c.b16 %v853, %v845
  %v1222 = vpack.c.b16 %v854, %v846
  %v1223 = vpack.c.b16 %v855, %v847
  %v1224 = vpack.c.b16 %v864, %v856
  %v1225 = vpack.c.b16 %v865, %v857
  %v1226 = vpack.c.b16 %v866, %v858
  %v1227 = vpack.c.b16 %v867, %v859
  %v1228 = vpack.c.b16 %v868, %v860
  %v1229 = vpack.c.b16 %v869, %v861
  %v1230 = vpack.c.b16 %v870, %v862
  %v1231 = vpack.c.b16 %v871, %v863
  %v1232 = vpack.c.b16 %v880, %v872
  %v1233 = vpack.c.b16 %v881, %v873
  %v1234 = vpack.c.b16 %v882, %v874
  %v1235 = vpack.c.b16 %v883, %v875
  %v1236 = vpack.c.b16 %v884, %v876
  %v1237 = vpack.c.b16 %v885, %v877
  %v1238 = vpack.c.b16 %v886, %v878
  %v1239 = vpack.c.b16 %v887, %v879
  %v1240 = vpack.c.b16 %v896, %v888
  %v1241 = vpack.c.b16 %v897, %v889
  %v1242 = vpack.c.b16 %v898, %v890
  %v1243 = vpack.c.b16 %v899, %v891
  %v1244 = vpack.c.b16 %v900, %v892
  %v1245 = vpack.c.b16 %v901, %v893
  %v1246 = vpack.c.b16 %v902, %v894
  %v1247 = vpack.c.b16 %v903, %v895
  %v1248 = vpack.c.b16 %v912, %v904
  %v1249 = vpack.c.b16 %v913, %v905
  %v1250 = vpack.c.b16 %v914, %v906
  %v1251 = vpack.c.b16 %v915, %v907
  %v1252 = vpack.c.b16 %v916, %v908
  %v1253 = vpack.c.b16 %v917, %v909
  %v1254 = vpack.c.b16 %v918, %v910
  %v1255 = vpack.c.b16 %v919, %v911
  %v1256 = vpack.c.b16 %v928, %v920
  %v1257 = vpack.c.b16 %v929, %v921
  %v1258 = vpack.c.b16 %v930, %v922
  %v1259 = vpack.c.b16 %v931, %v923
  %v1260 = vpack.c.b16 %v932, %v924
  %v1261 = vpack.c.b16 %v933, %v925
  %v1262 = vpack.c.b16 %v934, %v926
  %v1263 = vpack.c.b16 %v935, %v927
  %v1264 = vpack.c.b16 %v944, %v936
  %v1265 = vpack.c.b16 %v945, %v937
  %v1266 = vpack.c.b16 %v946, %v938
  %v1267 = vpack.c.b16 %v947, %v939
  %v1268 = vpack.c.b16 %v948, %v940
  %v1269 = vpack.c.b16 %v949, %v941
  %v1270 = vpack.c.b16 %v950, %v942
  %v1271 = vpack.c.b16 %v951, %v943
  %v1272 = vpack.c.b16 %v960, %v952
  %v1273 = vpack.c.b16 %v961, %v953
  %v1274 = vpack.c.b16 %v962, %v954
  %v1275 = vpack.c.b16 %v963, %v955
  %v1276 = vpack.c.b16 %v964, %v956
  %v1277 = vpack.c.b16 %v965, %v957
  %v1278 = vpack.c.b16 %v966, %v958
  %v1279 = vpack.c.b16 %v967, %v959
  %v1280 = vpack.c.b16 %v976, %v968
  %v1281 = vpack.c.b16 %v977, %v969
  %v1282 = vpack.c.b16 %v978, %v970
  %v1283 = vpack.c.b16 %v979, %v971
  %v1284 = vpack.c.b16 %v980, %v972
  %v1285 = vpack.c.b16 %v981, %v973
  %v1286 = vpack.c.b16 %v982, %v974
  %v1287 = vpack.c.b16 %v983, %v975
  %v1288 = vpack.c.b16 %v992, %v984
  %v1289 = vpack.c.b16 %v993, %v985
  %v1290 = vpack.c.b16 %v994, %v986
  %v1291 = vpack.c.b16 %v995, %v987
  %v1292 = vpack.c.b16 %v996, %v988
  %v1293 = vpack.c.b16 %v997, %v989
  %v1294 = vpack.c.b16 %v998, %v990
  %v1295 = vpack.c.b16 %v999, %v991
  %v1296 = vpack.c.b16 %v1008, %v1000
  %v1297 = vpack.c.b16 %v1009, %v1001
  %v1298 = vpack.c.b16 %v1010, %v1002
  %v1299 = vpack.c.b16 %v1011, %v1003
  %v1300 = vpack.c.b16 %v1012, %v1004
  %v1301 = vpack.c.b16 %v1013, %v1005
  %v1302 = vpack.c.b16 %v1014, %v1006
  %v1303 = vpack.c.b16 %v1015, %v1007
  %v1304 = vpack.c.b16 %v1024, %v1016
  %v1305 = vpack.c.b16 %v1025, %v1017
  %v1306 = vpack.c.b16 %v1026, %v1018
  %v1307 = vpack.c.b16 %v1027, %v1019
  %v1308 = vpack.c.b16 %v1028, %v1020
  %v1309 = vpack.c.b16 %v1029, %v1021
  %v1310 = vpack.c.b16 %v1030, %v1022
  %v1311 = vpack.c.b16 %v1031, %v1023
  %v1312 = vpack.c.b16 %v1040, %v1032
  %v1313 = vpack.c.b16 %v1041, %v1033
  %v1314 = vpack.c.b16 %v1042, %v1034
  %v1315 = vpack.c.b16 %v1043, %v1035
  %v1316 = vpack.c.b16 %v1044, %v1036
  %v1317 = vpack.c.b16 %v1045, %v1037
  %v1318 = vpack.c.b16 %v1046, %v1038
  %v1319 = vpack.c.b16 %v1047, %v1039
  %v1320 = vpack.c.b16 %v1056, %v1048
  %v1321 = vpack.c.b16 %v1057, %v1049
  %v1322 = vpack.c.b16 %v1058, %v1050
  %v1323 = vpack.c.b16 %v1059, %v1051
  %v1324 = vpack.c.b16 %v1060, %v1052
  %v1325 = vpack.c.b16 %v1061, %v1053
  %v1326 = vpack.c.b16 %v1062, %v1054
  %v1327 = vpack.c.b16 %v1063, %v1055
  %v1328 = vpack.c.b16 %v1072, %v1064
  %v1329 = vpack.c.b16 %v1073, %v1065
  %v1330 = vpack.c.b16 %v1074, %v1066
  %v1331 = vpack.c.b16 %v1075, %v1067
  %v1332 = vpack.c.b16 %v1076, %v1068
  %v1333 = vpack.c.b16 %v1077, %v1069
  %v1334 = vpack.c.b16 %v1078, %v1070
  %v1335 = vpack.c.b16 %v1079, %v1071
  %1592 = vmatpush.bf16.msra.mxu0 %v1136
  %1593 = vmatpush.bf16.msra.mxu0 %v1128
  %1594 = vmatpush.bf16.msra.mxu0 %v1120
  %1595 = vmatpush.bf16.msra.mxu0 %v1112
  %1596 = vmatpush.bf16.msra.mxu0 %v1104
  %1597 = vmatpush.bf16.msra.mxu0 %v1096
  %1598 = vmatpush.bf16.msra.mxu0 %v1088
  %1599 = vmatpush.bf16.msra.mxu0 %v1080
  %1600 = vmatmul.bf16.gmra.mxu0 %v304
  %v1601 = vpop.f32.mrf.mxu0
  %v1602 = vadd.f32 0.0, %v1601
  %v1603 = vpop.f32.mrf.mxu0
  %1604 = vdwg.mxu0
  %1605 = vmatpush.bf16.msra.mxu0 %v1200
  %1606 = vmatpush.bf16.msra.mxu0 %v1192
  %1607 = vmatpush.bf16.msra.mxu0 %v1184
  %1608 = vmatpush.bf16.msra.mxu0 %v1176
  %1609 = vmatpush.bf16.msra.mxu0 %v1168
  %1610 = vmatpush.bf16.msra.mxu0 %v1160
  %1611 = vmatpush.bf16.msra.mxu0 %v1152
  %1612 = vmatpush.bf16.msra.mxu0 %v1144
  %1613 = vmatmul.bf16.gmra.mxu0 %v305
  %v1614 = vpop.f32.mrf.mxu0
  %v1615 = vadd.f32 %v1602, %v1614
  %v1616 = vpop.f32.mrf.mxu0
  %1617 = vdwg.mxu0
  %1618 = vmatpush.bf16.msra.mxu0 %v1264
  %1619 = vmatpush.bf16.msra.mxu0 %v1256
  %1620 = vmatpush.bf16.msra.mxu0 %v1248
  %1621 = vmatpush.bf16.msra.mxu0 %v1240
  %1622 = vmatpush.bf16.msra.mxu0 %v1232
  %1623 = vmatpush.bf16.msra.mxu0 %v1224
  %1624 = vmatpush.bf16.msra.mxu0 %v1216
  %1625 = vmatpush.bf16.msra.mxu0 %v1208
  %1626 = vmatmul.bf16.gmra.mxu0 %v306
  %v1627 = vpop.f32.mrf.mxu0
  %v1628 = vadd.f32 %v1615, %v1627
  %v1629 = vpop.f32.mrf.mxu0
  %1630 = vdwg.mxu0
  %1631 = vmatpush.bf16.msra.mxu0 %v1328
  %1632 = vmatpush.bf16.msra.mxu0 %v1320
  %1633 = vmatpush.bf16.msra.mxu0 %v1312
  %1634 = vmatpush.bf16.msra.mxu0 %v1304
  %1635 = vmatpush.bf16.msra.mxu0 %v1296
  %1636 = vmatpush.bf16.msra.mxu0 %v1288
  %1637 = vmatpush.bf16.msra.mxu0 %v1280
  %1638 = vmatpush.bf16.msra.mxu0 %v1272
  %1639 = vmatmul.bf16.gmra.mxu0 %v307
  %v1640 = vpop.f32.mrf.mxu0
  %v1641 = vadd.f32 %v1628, %v1640
  %v1642 = vpop.f32.mrf.mxu0
  %1643 = vdwg.mxu0
  %1644 = vmatpush.bf16.msra.mxu0 %v1137
  %1645 = vmatpush.bf16.msra.mxu0 %v1129
  %1646 = vmatpush.bf16.msra.mxu0 %v1121
  %1647 = vmatpush.bf16.msra.mxu0 %v1113
  %1648 = vmatpush.bf16.msra.mxu0 %v1105
  %1649 = vmatpush.bf16.msra.mxu0 %v1097
  %1650 = vmatpush.bf16.msra.mxu0 %v1089
  %1651 = vmatpush.bf16.msra.mxu0 %v1081
  %1652 = vmatmul.bf16.gmra.mxu0 %v304
  %v1653 = vpop.f32.mrf.mxu0
  %v1654 = vadd.f32 0.0, %v1653
  %v1655 = vpop.f32.mrf.mxu0
  %1656 = vdwg.mxu0
  %1657 = vmatpush.bf16.msra.mxu0 %v1201
  %1658 = vmatpush.bf16.msra.mxu0 %v1193
  %1659 = vmatpush.bf16.msra.mxu0 %v1185
  %1660 = vmatpush.bf16.msra.mxu0 %v1177
  %1661 = vmatpush.bf16.msra.mxu0 %v1169
  %1662 = vmatpush.bf16.msra.mxu0 %v1161
  %1663 = vmatpush.bf16.msra.mxu0 %v1153
  %1664 = vmatpush.bf16.msra.mxu0 %v1145
  %1665 = vmatmul.bf16.gmra.mxu0 %v305
  %v1666 = vpop.f32.mrf.mxu0
  %v1667 = vadd.f32 %v1654, %v1666
  %v1668 = vpop.f32.mrf.mxu0
  %1669 = vdwg.mxu0
  %1670 = vmatpush.bf16.msra.mxu0 %v1265
  %1671 = vmatpush.bf16.msra.mxu0 %v1257
  %1672 = vmatpush.bf16.msra.mxu0 %v1249
  %1673 = vmatpush.bf16.msra.mxu0 %v1241
  %1674 = vmatpush.bf16.msra.mxu0 %v1233
  %1675 = vmatpush.bf16.msra.mxu0 %v1225
  %1676 = vmatpush.bf16.msra.mxu0 %v1217
  %1677 = vmatpush.bf16.msra.mxu0 %v1209
  %1678 = vmatmul.bf16.gmra.mxu0 %v306
  %v1679 = vpop.f32.mrf.mxu0
  %v1680 = vadd.f32 %v1667, %v1679
  %v1681 = vpop.f32.mrf.mxu0
  %1682 = vdwg.mxu0
  %1683 = vmatpush.bf16.msra.mxu0 %v1329
  %1684 = vmatpush.bf16.msra.mxu0 %v1321
  %1685 = vmatpush.bf16.msra.mxu0 %v1313
  %1686 = vmatpush.bf16.msra.mxu0 %v1305
  %1687 = vmatpush.bf16.msra.mxu0 %v1297
  %1688 = vmatpush.bf16.msra.mxu0 %v1289
  %1689 = vmatpush.bf16.msra.mxu0 %v1281
  %1690 = vmatpush.bf16.msra.mxu0 %v1273
  %1691 = vmatmul.bf16.gmra.mxu0 %v307
  %v1692 = vpop.f32.mrf.mxu0
  %v1693 = vadd.f32 %v1680, %v1692
  %v1694 = vpop.f32.mrf.mxu0
  %1695 = vdwg.mxu0
  %1696 = vmatpush.bf16.msra.mxu0 %v1138
  %1697 = vmatpush.bf16.msra.mxu0 %v1130
  %1698 = vmatpush.bf16.msra.mxu0 %v1122
  %1699 = vmatpush.bf16.msra.mxu0 %v1114
  %1700 = vmatpush.bf16.msra.mxu0 %v1106
  %1701 = vmatpush.bf16.msra.mxu0 %v1098
  %1702 = vmatpush.bf16.msra.mxu0 %v1090
  %1703 = vmatpush.bf16.msra.mxu0 %v1082
  %1704 = vmatmul.bf16.gmra.mxu0 %v304
  %v1705 = vpop.f32.mrf.mxu0
  %v1706 = vadd.f32 0.0, %v1705
  %v1707 = vpop.f32.mrf.mxu0
  %1708 = vdwg.mxu0
  %1709 = vmatpush.bf16.msra.mxu0 %v1202
  %1710 = vmatpush.bf16.msra.mxu0 %v1194
  %1711 = vmatpush.bf16.msra.mxu0 %v1186
  %1712 = vmatpush.bf16.msra.mxu0 %v1178
  %1713 = vmatpush.bf16.msra.mxu0 %v1170
  %1714 = vmatpush.bf16.msra.mxu0 %v1162
  %1715 = vmatpush.bf16.msra.mxu0 %v1154
  %1716 = vmatpush.bf16.msra.mxu0 %v1146
  %1717 = vmatmul.bf16.gmra.mxu0 %v305
  %v1718 = vpop.f32.mrf.mxu0
  %v1719 = vadd.f32 %v1706, %v1718
  %v1720 = vpop.f32.mrf.mxu0
  %1721 = vdwg.mxu0
  %1722 = vmatpush.bf16.msra.mxu0 %v1266
  %1723 = vmatpush.bf16.msra.mxu0 %v1258
  %1724 = vmatpush.bf16.msra.mxu0 %v1250
  %1725 = vmatpush.bf16.msra.mxu0 %v1242
  %1726 = vmatpush.bf16.msra.mxu0 %v1234
  %1727 = vmatpush.bf16.msra.mxu0 %v1226
  %1728 = vmatpush.bf16.msra.mxu0 %v1218
  %1729 = vmatpush.bf16.msra.mxu0 %v1210
  %1730 = vmatmul.bf16.gmra.mxu0 %v306
  %v1731 = vpop.f32.mrf.mxu0
  %v1732 = vadd.f32 %v1719, %v1731
  %v1733 = vpop.f32.mrf.mxu0
  %1734 = vdwg.mxu0
  %1735 = vmatpush.bf16.msra.mxu0 %v1330
  %1736 = vmatpush.bf16.msra.mxu0 %v1322
  %1737 = vmatpush.bf16.msra.mxu0 %v1314
  %1738 = vmatpush.bf16.msra.mxu0 %v1306
  %1739 = vmatpush.bf16.msra.mxu0 %v1298
  %1740 = vmatpush.bf16.msra.mxu0 %v1290
  %1741 = vmatpush.bf16.msra.mxu0 %v1282
  %1742 = vmatpush.bf16.msra.mxu0 %v1274
  %1743 = vmatmul.bf16.gmra.mxu0 %v307
  %v1744 = vpop.f32.mrf.mxu0
  %v1745 = vadd.f32 %v1732, %v1744
  %v1746 = vpop.f32.mrf.mxu0
  %1747 = vdwg.mxu0
  %1748 = vmatpush.bf16.msra.mxu0 %v1139
  %1749 = vmatpush.bf16.msra.mxu0 %v1131
  %1750 = vmatpush.bf16.msra.mxu0 %v1123
  %1751 = vmatpush.bf16.msra.mxu0 %v1115
  %1752 = vmatpush.bf16.msra.mxu0 %v1107
  %1753 = vmatpush.bf16.msra.mxu0 %v1099
  %1754 = vmatpush.bf16.msra.mxu0 %v1091
  %1755 = vmatpush.bf16.msra.mxu0 %v1083
  %1756 = vmatmul.bf16.gmra.mxu0 %v304
  %v1757 = vpop.f32.mrf.mxu0
  %v1758 = vadd.f32 0.0, %v1757
  %v1759 = vpop.f32.mrf.mxu0
  %1760 = vdwg.mxu0
  %1761 = vmatpush.bf16.msra.mxu0 %v1203
  %1762 = vmatpush.bf16.msra.mxu0 %v1195
  %1763 = vmatpush.bf16.msra.mxu0 %v1187
  %1764 = vmatpush.bf16.msra.mxu0 %v1179
  %1765 = vmatpush.bf16.msra.mxu0 %v1171
  %1766 = vmatpush.bf16.msra.mxu0 %v1163
  %1767 = vmatpush.bf16.msra.mxu0 %v1155
  %1768 = vmatpush.bf16.msra.mxu0 %v1147
  %1769 = vmatmul.bf16.gmra.mxu0 %v305
  %v1770 = vpop.f32.mrf.mxu0
  %v1771 = vadd.f32 %v1758, %v1770
  %v1772 = vpop.f32.mrf.mxu0
  %1773 = vdwg.mxu0
  %1774 = vmatpush.bf16.msra.mxu0 %v1267
  %1775 = vmatpush.bf16.msra.mxu0 %v1259
  %1776 = vmatpush.bf16.msra.mxu0 %v1251
  %1777 = vmatpush.bf16.msra.mxu0 %v1243
  %1778 = vmatpush.bf16.msra.mxu0 %v1235
  %1779 = vmatpush.bf16.msra.mxu0 %v1227
  %1780 = vmatpush.bf16.msra.mxu0 %v1219
  %1781 = vmatpush.bf16.msra.mxu0 %v1211
  %1782 = vmatmul.bf16.gmra.mxu0 %v306
  %v1783 = vpop.f32.mrf.mxu0
  %v1784 = vadd.f32 %v1771, %v1783
  %v1785 = vpop.f32.mrf.mxu0
  %1786 = vdwg.mxu0
  %1787 = vmatpush.bf16.msra.mxu0 %v1331
  %1788 = vmatpush.bf16.msra.mxu0 %v1323
  %1789 = vmatpush.bf16.msra.mxu0 %v1315
  %1790 = vmatpush.bf16.msra.mxu0 %v1307
  %1791 = vmatpush.bf16.msra.mxu0 %v1299
  %1792 = vmatpush.bf16.msra.mxu0 %v1291
  %1793 = vmatpush.bf16.msra.mxu0 %v1283
  %1794 = vmatpush.bf16.msra.mxu0 %v1275
  %1795 = vmatmul.bf16.gmra.mxu0 %v307
  %v1796 = vpop.f32.mrf.mxu0
  %v1797 = vadd.f32 %v1784, %v1796
  %v1798 = vpop.f32.mrf.mxu0
  %1799 = vdwg.mxu0
  %1800 = vmatpush.bf16.msra.mxu0 %v1140
  %1801 = vmatpush.bf16.msra.mxu0 %v1132
  %1802 = vmatpush.bf16.msra.mxu0 %v1124
  %1803 = vmatpush.bf16.msra.mxu0 %v1116
  %1804 = vmatpush.bf16.msra.mxu0 %v1108
  %1805 = vmatpush.bf16.msra.mxu0 %v1100
  %1806 = vmatpush.bf16.msra.mxu0 %v1092
  %1807 = vmatpush.bf16.msra.mxu0 %v1084
  %1808 = vmatmul.bf16.gmra.mxu0 %v304
  %v1809 = vpop.f32.mrf.mxu0
  %v1810 = vadd.f32 0.0, %v1809
  %v1811 = vpop.f32.mrf.mxu0
  %1812 = vdwg.mxu0
  %1813 = vmatpush.bf16.msra.mxu0 %v1204
  %1814 = vmatpush.bf16.msra.mxu0 %v1196
  %1815 = vmatpush.bf16.msra.mxu0 %v1188
  %1816 = vmatpush.bf16.msra.mxu0 %v1180
  %1817 = vmatpush.bf16.msra.mxu0 %v1172
  %1818 = vmatpush.bf16.msra.mxu0 %v1164
  %1819 = vmatpush.bf16.msra.mxu0 %v1156
  %1820 = vmatpush.bf16.msra.mxu0 %v1148
  %1821 = vmatmul.bf16.gmra.mxu0 %v305
  %v1822 = vpop.f32.mrf.mxu0
  %v1823 = vadd.f32 %v1810, %v1822
  %v1824 = vpop.f32.mrf.mxu0
  %1825 = vdwg.mxu0
  %1826 = vmatpush.bf16.msra.mxu0 %v1268
  %1827 = vmatpush.bf16.msra.mxu0 %v1260
  %1828 = vmatpush.bf16.msra.mxu0 %v1252
  %1829 = vmatpush.bf16.msra.mxu0 %v1244
  %1830 = vmatpush.bf16.msra.mxu0 %v1236
  %1831 = vmatpush.bf16.msra.mxu0 %v1228
  %1832 = vmatpush.bf16.msra.mxu0 %v1220
  %1833 = vmatpush.bf16.msra.mxu0 %v1212
  %1834 = vmatmul.bf16.gmra.mxu0 %v306
  %v1835 = vpop.f32.mrf.mxu0
  %v1836 = vadd.f32 %v1823, %v1835
  %v1837 = vpop.f32.mrf.mxu0
  %1838 = vdwg.mxu0
  %1839 = vmatpush.bf16.msra.mxu0 %v1332
  %1840 = vmatpush.bf16.msra.mxu0 %v1324
  %1841 = vmatpush.bf16.msra.mxu0 %v1316
  %1842 = vmatpush.bf16.msra.mxu0 %v1308
  %1843 = vmatpush.bf16.msra.mxu0 %v1300
  %1844 = vmatpush.bf16.msra.mxu0 %v1292
  %1845 = vmatpush.bf16.msra.mxu0 %v1284
  %1846 = vmatpush.bf16.msra.mxu0 %v1276
  %1847 = vmatmul.bf16.gmra.mxu0 %v307
  %v1848 = vpop.f32.mrf.mxu0
  %v1849 = vadd.f32 %v1836, %v1848
  %v1850 = vpop.f32.mrf.mxu0
  %1851 = vdwg.mxu0
  %1852 = vmatpush.bf16.msra.mxu0 %v1141
  %1853 = vmatpush.bf16.msra.mxu0 %v1133
  %1854 = vmatpush.bf16.msra.mxu0 %v1125
  %1855 = vmatpush.bf16.msra.mxu0 %v1117
  %1856 = vmatpush.bf16.msra.mxu0 %v1109
  %1857 = vmatpush.bf16.msra.mxu0 %v1101
  %1858 = vmatpush.bf16.msra.mxu0 %v1093
  %1859 = vmatpush.bf16.msra.mxu0 %v1085
  %1860 = vmatmul.bf16.gmra.mxu0 %v304
  %v1861 = vpop.f32.mrf.mxu0
  %v1862 = vadd.f32 0.0, %v1861
  %v1863 = vpop.f32.mrf.mxu0
  %1864 = vdwg.mxu0
  %1865 = vmatpush.bf16.msra.mxu0 %v1205
  %1866 = vmatpush.bf16.msra.mxu0 %v1197
  %1867 = vmatpush.bf16.msra.mxu0 %v1189
  %1868 = vmatpush.bf16.msra.mxu0 %v1181
  %1869 = vmatpush.bf16.msra.mxu0 %v1173
  %1870 = vmatpush.bf16.msra.mxu0 %v1165
  %1871 = vmatpush.bf16.msra.mxu0 %v1157
  %1872 = vmatpush.bf16.msra.mxu0 %v1149
  %1873 = vmatmul.bf16.gmra.mxu0 %v305
  %v1874 = vpop.f32.mrf.mxu0
  %v1875 = vadd.f32 %v1862, %v1874
  %v1876 = vpop.f32.mrf.mxu0
  %1877 = vdwg.mxu0
  %1878 = vmatpush.bf16.msra.mxu0 %v1269
  %1879 = vmatpush.bf16.msra.mxu0 %v1261
  %1880 = vmatpush.bf16.msra.mxu0 %v1253
  %1881 = vmatpush.bf16.msra.mxu0 %v1245
  %1882 = vmatpush.bf16.msra.mxu0 %v1237
  %1883 = vmatpush.bf16.msra.mxu0 %v1229
  %1884 = vmatpush.bf16.msra.mxu0 %v1221
  %1885 = vmatpush.bf16.msra.mxu0 %v1213
  %1886 = vmatmul.bf16.gmra.mxu0 %v306
  %v1887 = vpop.f32.mrf.mxu0
  %v1888 = vadd.f32 %v1875, %v1887
  %v1889 = vpop.f32.mrf.mxu0
  %1890 = vdwg.mxu0
  %1891 = vmatpush.bf16.msra.mxu0 %v1333
  %1892 = vmatpush.bf16.msra.mxu0 %v1325
  %1893 = vmatpush.bf16.msra.mxu0 %v1317
  %1894 = vmatpush.bf16.msra.mxu0 %v1309
  %1895 = vmatpush.bf16.msra.mxu0 %v1301
  %1896 = vmatpush.bf16.msra.mxu0 %v1293
  %1897 = vmatpush.bf16.msra.mxu0 %v1285
  %1898 = vmatpush.bf16.msra.mxu0 %v1277
  %1899 = vmatmul.bf16.gmra.mxu0 %v307
  %v1900 = vpop.f32.mrf.mxu0
  %v1901 = vadd.f32 %v1888, %v1900
  %v1902 = vpop.f32.mrf.mxu0
  %1903 = vdwg.mxu0
  %1904 = vmatpush.bf16.msra.mxu0 %v1142
  %1905 = vmatpush.bf16.msra.mxu0 %v1134
  %1906 = vmatpush.bf16.msra.mxu0 %v1126
  %1907 = vmatpush.bf16.msra.mxu0 %v1118
  %1908 = vmatpush.bf16.msra.mxu0 %v1110
  %1909 = vmatpush.bf16.msra.mxu0 %v1102
  %1910 = vmatpush.bf16.msra.mxu0 %v1094
  %1911 = vmatpush.bf16.msra.mxu0 %v1086
  %1912 = vmatmul.bf16.gmra.mxu0 %v304
  %v1913 = vpop.f32.mrf.mxu0
  %v1914 = vadd.f32 0.0, %v1913
  %v1915 = vpop.f32.mrf.mxu0
  %1916 = vdwg.mxu0
  %1917 = vmatpush.bf16.msra.mxu0 %v1206
  %1918 = vmatpush.bf16.msra.mxu0 %v1198
  %1919 = vmatpush.bf16.msra.mxu0 %v1190
  %1920 = vmatpush.bf16.msra.mxu0 %v1182
  %1921 = vmatpush.bf16.msra.mxu0 %v1174
  %1922 = vmatpush.bf16.msra.mxu0 %v1166
  %1923 = vmatpush.bf16.msra.mxu0 %v1158
  %1924 = vmatpush.bf16.msra.mxu0 %v1150
  %1925 = vmatmul.bf16.gmra.mxu0 %v305
  %v1926 = vpop.f32.mrf.mxu0
  %v1927 = vadd.f32 %v1914, %v1926
  %v1928 = vpop.f32.mrf.mxu0
  %1929 = vdwg.mxu0
  %1930 = vmatpush.bf16.msra.mxu0 %v1270
  %1931 = vmatpush.bf16.msra.mxu0 %v1262
  %1932 = vmatpush.bf16.msra.mxu0 %v1254
  %1933 = vmatpush.bf16.msra.mxu0 %v1246
  %1934 = vmatpush.bf16.msra.mxu0 %v1238
  %1935 = vmatpush.bf16.msra.mxu0 %v1230
  %1936 = vmatpush.bf16.msra.mxu0 %v1222
  %1937 = vmatpush.bf16.msra.mxu0 %v1214
  %1938 = vmatmul.bf16.gmra.mxu0 %v306
  %v1939 = vpop.f32.mrf.mxu0
  %v1940 = vadd.f32 %v1927, %v1939
  %v1941 = vpop.f32.mrf.mxu0
  %1942 = vdwg.mxu0
  %1943 = vmatpush.bf16.msra.mxu0 %v1334
  %1944 = vmatpush.bf16.msra.mxu0 %v1326
  %1945 = vmatpush.bf16.msra.mxu0 %v1318
  %1946 = vmatpush.bf16.msra.mxu0 %v1310
  %1947 = vmatpush.bf16.msra.mxu0 %v1302
  %1948 = vmatpush.bf16.msra.mxu0 %v1294
  %1949 = vmatpush.bf16.msra.mxu0 %v1286
  %1950 = vmatpush.bf16.msra.mxu0 %v1278
  %1951 = vmatmul.bf16.gmra.mxu0 %v307
  %v1952 = vpop.f32.mrf.mxu0
  %v1953 = vadd.f32 %v1940, %v1952
  %v1954 = vpop.f32.mrf.mxu0
  %1955 = vdwg.mxu0
  %1956 = vmatpush.bf16.msra.mxu0 %v1143
  %1957 = vmatpush.bf16.msra.mxu0 %v1135
  %1958 = vmatpush.bf16.msra.mxu0 %v1127
  %1959 = vmatpush.bf16.msra.mxu0 %v1119
  %1960 = vmatpush.bf16.msra.mxu0 %v1111
  %1961 = vmatpush.bf16.msra.mxu0 %v1103
  %1962 = vmatpush.bf16.msra.mxu0 %v1095
  %1963 = vmatpush.bf16.msra.mxu0 %v1087
  %1964 = vmatmul.bf16.gmra.mxu0 %v304
  %v1965 = vpop.f32.mrf.mxu0
  %v1966 = vadd.f32 0.0, %v1965
  %v1967 = vpop.f32.mrf.mxu0
  %1968 = vdwg.mxu0
  %1969 = vmatpush.bf16.msra.mxu0 %v1207
  %1970 = vmatpush.bf16.msra.mxu0 %v1199
  %1971 = vmatpush.bf16.msra.mxu0 %v1191
  %1972 = vmatpush.bf16.msra.mxu0 %v1183
  %1973 = vmatpush.bf16.msra.mxu0 %v1175
  %1974 = vmatpush.bf16.msra.mxu0 %v1167
  %1975 = vmatpush.bf16.msra.mxu0 %v1159
  %1976 = vmatpush.bf16.msra.mxu0 %v1151
  %1977 = vmatmul.bf16.gmra.mxu0 %v305
  %v1978 = vpop.f32.mrf.mxu0
  %v1979 = vadd.f32 %v1966, %v1978
  %v1980 = vpop.f32.mrf.mxu0
  %1981 = vdwg.mxu0
  %1982 = vmatpush.bf16.msra.mxu0 %v1271
  %1983 = vmatpush.bf16.msra.mxu0 %v1263
  %1984 = vmatpush.bf16.msra.mxu0 %v1255
  %1985 = vmatpush.bf16.msra.mxu0 %v1247
  %1986 = vmatpush.bf16.msra.mxu0 %v1239
  %1987 = vmatpush.bf16.msra.mxu0 %v1231
  %1988 = vmatpush.bf16.msra.mxu0 %v1223
  %1989 = vmatpush.bf16.msra.mxu0 %v1215
  %1990 = vmatmul.bf16.gmra.mxu0 %v306
  %v1991 = vpop.f32.mrf.mxu0
  %v1992 = vadd.f32 %v1979, %v1991
  %v1993 = vpop.f32.mrf.mxu0
  %1994 = vdwg.mxu0
  %1995 = vmatpush.bf16.msra.mxu0 %v1335
  %1996 = vmatpush.bf16.msra.mxu0 %v1327
  %1997 = vmatpush.bf16.msra.mxu0 %v1319
  %1998 = vmatpush.bf16.msra.mxu0 %v1311
  %1999 = vmatpush.bf16.msra.mxu0 %v1303
  %2000 = vmatpush.bf16.msra.mxu0 %v1295
  %2001 = vmatpush.bf16.msra.mxu0 %v1287
  %2002 = vmatpush.bf16.msra.mxu0 %v1279
  %2003 = vmatmul.bf16.gmra.mxu0 %v307
  %v2004 = vpop.f32.mrf.mxu0
  %v2005 = vadd.f32 %v1992, %v2004
  %v2006 = vpop.f32.mrf.mxu0
  %2007 = vdwg.mxu0
  %v2008 = vadd.f32 %v32, %v1641
  %v2009 = vadd.f32 %v33, %v1693
  %v2010 = vadd.f32 %v34, %v1745
  %v2011 = vadd.f32 %v35, %v1797
  %v2012 = vadd.f32 %v36, %v1849
  %v2013 = vadd.f32 %v37, %v1901
  %v2014 = vadd.f32 %v38, %v1953
  %v2015 = vadd.f32 %v39, %v2005
  %2016 = vst [vmem:[#allocation2] sm:$0xff] %v2008
  %2017 = vst [vmem:[#allocation2 + $0x8] sm:$0xff] %v2009
  %2018 = vst [vmem:[#allocation2 + $0x10] sm:$0xff] %v2010
  %2019 = vst [vmem:[#allocation2 + $0x18] sm:$0xff] %v2011
  %2020 = vst [vmem:[#allocation2 + $0x20] sm:$0xff] %v2012
  %2021 = vst [vmem:[#allocation2 + $0x28] sm:$0xff] %v2013
  %2022 = vst [vmem:[#allocation2 + $0x30] sm:$0xff] %v2014
  %2023 = vst [vmem:[#allocation2 + $0x38] sm:$0xff] %v2015
  // Predicated region
  $region26: #{forward.19} parent=0 // pred_check
    %p2024 = pneg %p20
  $region27: #{forward.19} parent=0 // pred_check_branch
    %2026 = sbr.rel (%p2024) target = $region29
  $region28: #{forward.19} parent=0 // pred_region
    %v2027 = vld [vmem:[#allocation2] sm:$0xff]
    %v2028 = vld [vmem:[#allocation2 + $0x8] sm:$0xff]
    %v2029 = vld [vmem:[#allocation2 + $0x10] sm:$0xff]
    %v2030 = vld [vmem:[#allocation2 + $0x18] sm:$0xff]
    %v2031 = vld [vmem:[#allocation2 + $0x20] sm:$0xff]
    %v2032 = vld [vmem:[#allocation2 + $0x28] sm:$0xff]
    %v2033 = vld [vmem:[#allocation2 + $0x30] sm:$0xff]
    %v2034 = vld [vmem:[#allocation2 + $0x38] sm:$0xff]
    %v2035 = vld [vmem:[%s2] sm:$0xff]
    %v2037 = vperm.slane %v2035, 0
    %v2038 = vperm.slane %v2035, 1
    %v2039 = vperm.slane %v2035, 2
    %v2040 = vperm.slane %v2035, 3
    %v2041 = vperm.slane %v2035, 4
    %v2042 = vperm.slane %v2035, 5
    %v2043 = vperm.slane %v2035, 6
    %v2044 = vperm.slane %v2035, 7
    %v2053 = vadd.f32 %v2027, %v2037
    %v2054 = vadd.f32 %v2028, %v2038
    %v2055 = vadd.f32 %v2029, %v2039
    %v2056 = vadd.f32 %v2030, %v2040
    %v2057 = vadd.f32 %v2031, %v2041
    %v2058 = vadd.f32 %v2032, %v2042
    %v2059 = vadd.f32 %v2033, %v2043
    %v2060 = vadd.f32 %v2034, %v2044
    %vm2061 = vcmp.gt.f32.partialorder %v2053, 0.0
    %vm2062 = vcmp.gt.f32.partialorder %v2054, 0.0
    %vm2063 = vcmp.gt.f32.partialorder %v2055, 0.0
    %vm2064 = vcmp.gt.f32.partialorder %v2056, 0.0
    %vm2065 = vcmp.gt.f32.partialorder %v2057, 0.0
    %vm2066 = vcmp.gt.f32.partialorder %v2058, 0.0
    %vm2067 = vcmp.gt.f32.partialorder %v2059, 0.0
    %vm2068 = vcmp.gt.f32.partialorder %v2060, 0.0
    %v2069 = vmul.f32 %v2053, 0.2
    %v2070 = vmul.f32 %v2054, 0.2
    %v2071 = vmul.f32 %v2055, 0.2
    %v2072 = vmul.f32 %v2056, 0.2
    %v2073 = vmul.f32 %v2057, 0.2
    %v2074 = vmul.f32 %v2058, 0.2
    %v2075 = vmul.f32 %v2059, 0.2
    %v2076 = vmul.f32 %v2060, 0.2
    %v2077 = vsel %vm2061, %v2053, %v2069
    %v2078 = vsel %vm2062, %v2054, %v2070
    %v2079 = vsel %vm2063, %v2055, %v2071
    %v2080 = vsel %vm2064, %v2056, %v2072
    %v2081 = vsel %vm2065, %v2057, %v2073
    %v2082 = vsel %vm2066, %v2058, %v2074
    %v2083 = vsel %vm2067, %v2059, %v2075
    %v2084 = vsel %vm2068, %v2060, %v2076
    %v2085 = vpack.c.bf16 %v2077, %v2077
    %v2086 = vpack.c.bf16 %v2078, %v2078
    %v2087 = vpack.c.bf16 %v2079, %v2079
    %v2088 = vpack.c.bf16 %v2080, %v2080
    %v2089 = vpack.c.bf16 %v2081, %v2081
    %v2090 = vpack.c.bf16 %v2082, %v2082
    %v2091 = vpack.c.bf16 %v2083, %v2083
    %v2092 = vpack.c.bf16 %v2084, %v2084
    %v2093 = vld [vmem:[%s3] sm:$0xf]
    %v2094 = vld [vmem:[%s3 + $0x4] sm:$0xf]
    %v2095 = vld [vmem:[%s3 + $0x8] sm:$0xf]
    %v2096 = vld [vmem:[%s3 + $0xc] sm:$0xf]
    %v2097 = vld [vmem:[%s3 + $0x10] sm:$0xf]
    %v2098 = vld [vmem:[%s3 + $0x14] sm:$0xf]
    %v2099 = vld [vmem:[%s3 + $0x18] sm:$0xf]
    %v2100 = vld [vmem:[%s3 + $0x1c] sm:$0xf]
    %v2101 = vld [vmem:[%s3 + $0x20] sm:$0xf]
    %v2102 = vld [vmem:[%s3 + $0x24] sm:$0xf]
    %v2103 = vld [vmem:[%s3 + $0x28] sm:$0xf]
    %v2104 = vld [vmem:[%s3 + $0x2c] sm:$0xf]
    %v2105 = vld [vmem:[%s3 + $0x30] sm:$0xf]
    %v2106 = vld [vmem:[%s3 + $0x34] sm:$0xf]
    %v2107 = vld [vmem:[%s3 + $0x38] sm:$0xf]
    %v2108 = vld [vmem:[%s3 + $0x3c] sm:$0xf]
    %v2109 = vld [vmem:[%s3 + $0x40] sm:$0xf]
    %v2110 = vld [vmem:[%s3 + $0x44] sm:$0xf]
    %v2111 = vld [vmem:[%s3 + $0x48] sm:$0xf]
    %v2112 = vld [vmem:[%s3 + $0x4c] sm:$0xf]
    %v2113 = vld [vmem:[%s3 + $0x50] sm:$0xf]
    %v2114 = vld [vmem:[%s3 + $0x54] sm:$0xf]
    %v2115 = vld [vmem:[%s3 + $0x58] sm:$0xf]
    %v2116 = vld [vmem:[%s3 + $0x5c] sm:$0xf]
    %v2117 = vld [vmem:[%s3 + $0x60] sm:$0xf]
    %v2118 = vld [vmem:[%s3 + $0x64] sm:$0xf]
    %v2119 = vld [vmem:[%s3 + $0x68] sm:$0xf]
    %v2120 = vld [vmem:[%s3 + $0x6c] sm:$0xf]
    %v2121 = vld [vmem:[%s3 + $0x70] sm:$0xf]
    %v2122 = vld [vmem:[%s3 + $0x74] sm:$0xf]
    %v2123 = vld [vmem:[%s3 + $0x78] sm:$0xf]
    %v2124 = vld [vmem:[%s3 + $0x7c] sm:$0xf]
    %v2125 = vld [vmem:[%s3 + $0x80] sm:$0xf]
    %v2126 = vld [vmem:[%s3 + $0x84] sm:$0xf]
    %v2127 = vld [vmem:[%s3 + $0x88] sm:$0xf]
    %v2128 = vld [vmem:[%s3 + $0x8c] sm:$0xf]
    %v2129 = vld [vmem:[%s3 + $0x90] sm:$0xf]
    %v2130 = vld [vmem:[%s3 + $0x94] sm:$0xf]
    %v2131 = vld [vmem:[%s3 + $0x98] sm:$0xf]
    %v2132 = vld [vmem:[%s3 + $0x9c] sm:$0xf]
    %v2133 = vld [vmem:[%s3 + $0xa0] sm:$0xf]
    %v2134 = vld [vmem:[%s3 + $0xa4] sm:$0xf]
    %v2135 = vld [vmem:[%s3 + $0xa8] sm:$0xf]
    %v2136 = vld [vmem:[%s3 + $0xac] sm:$0xf]
    %v2137 = vld [vmem:[%s3 + $0xb0] sm:$0xf]
    %v2138 = vld [vmem:[%s3 + $0xb4] sm:$0xf]
    %v2139 = vld [vmem:[%s3 + $0xb8] sm:$0xf]
    %v2140 = vld [vmem:[%s3 + $0xbc] sm:$0xf]
    %v2141 = vld [vmem:[%s3 + $0xc0] sm:$0xf]
    %v2142 = vld [vmem:[%s3 + $0xc4] sm:$0xf]
    %v2143 = vld [vmem:[%s3 + $0xc8] sm:$0xf]
    %v2144 = vld [vmem:[%s3 + $0xcc] sm:$0xf]
    %v2145 = vld [vmem:[%s3 + $0xd0] sm:$0xf]
    %v2146 = vld [vmem:[%s3 + $0xd4] sm:$0xf]
    %v2147 = vld [vmem:[%s3 + $0xd8] sm:$0xf]
    %v2148 = vld [vmem:[%s3 + $0xdc] sm:$0xf]
    %v2149 = vld [vmem:[%s3 + $0xe0] sm:$0xf]
    %v2150 = vld [vmem:[%s3 + $0xe4] sm:$0xf]
    %v2151 = vld [vmem:[%s3 + $0xe8] sm:$0xf]
    %v2152 = vld [vmem:[%s3 + $0xec] sm:$0xf]
    %v2153 = vld [vmem:[%s3 + $0xf0] sm:$0xf]
    %v2154 = vld [vmem:[%s3 + $0xf4] sm:$0xf]
    %v2155 = vld [vmem:[%s3 + $0xf8] sm:$0xf]
    %v2156 = vld [vmem:[%s3 + $0xfc] sm:$0xf]
    %v2157 = vld [vmem:[%s3 + $0x100] sm:$0xf]
    %v2158 = vld [vmem:[%s3 + $0x104] sm:$0xf]
    %v2159 = vld [vmem:[%s3 + $0x108] sm:$0xf]
    %v2160 = vld [vmem:[%s3 + $0x10c] sm:$0xf]
    %v2161 = vld [vmem:[%s3 + $0x110] sm:$0xf]
    %v2162 = vld [vmem:[%s3 + $0x114] sm:$0xf]
    %v2163 = vld [vmem:[%s3 + $0x118] sm:$0xf]
    %v2164 = vld [vmem:[%s3 + $0x11c] sm:$0xf]
    %v2165 = vld [vmem:[%s3 + $0x120] sm:$0xf]
    %v2166 = vld [vmem:[%s3 + $0x124] sm:$0xf]
    %v2167 = vld [vmem:[%s3 + $0x128] sm:$0xf]
    %v2168 = vld [vmem:[%s3 + $0x12c] sm:$0xf]
    %v2169 = vld [vmem:[%s3 + $0x130] sm:$0xf]
    %v2170 = vld [vmem:[%s3 + $0x134] sm:$0xf]
    %v2171 = vld [vmem:[%s3 + $0x138] sm:$0xf]
    %v2172 = vld [vmem:[%s3 + $0x13c] sm:$0xf]
    %v2173 = vld [vmem:[%s3 + $0x140] sm:$0xf]
    %v2174 = vld [vmem:[%s3 + $0x144] sm:$0xf]
    %v2175 = vld [vmem:[%s3 + $0x148] sm:$0xf]
    %v2176 = vld [vmem:[%s3 + $0x14c] sm:$0xf]
    %v2177 = vld [vmem:[%s3 + $0x150] sm:$0xf]
    %v2178 = vld [vmem:[%s3 + $0x154] sm:$0xf]
    %v2179 = vld [vmem:[%s3 + $0x158] sm:$0xf]
    %v2180 = vld [vmem:[%s3 + $0x15c] sm:$0xf]
    %v2181 = vld [vmem:[%s3 + $0x160] sm:$0xf]
    %v2182 = vld [vmem:[%s3 + $0x164] sm:$0xf]
    %v2183 = vld [vmem:[%s3 + $0x168] sm:$0xf]
    %v2184 = vld [vmem:[%s3 + $0x16c] sm:$0xf]
    %v2185 = vld [vmem:[%s3 + $0x170] sm:$0xf]
    %v2186 = vld [vmem:[%s3 + $0x174] sm:$0xf]
    %v2187 = vld [vmem:[%s3 + $0x178] sm:$0xf]
    %v2188 = vld [vmem:[%s3 + $0x17c] sm:$0xf]
    %v2189 = vld [vmem:[%s3 + $0x180] sm:$0xf]
    %v2190 = vld [vmem:[%s3 + $0x184] sm:$0xf]
    %v2191 = vld [vmem:[%s3 + $0x188] sm:$0xf]
    %v2192 = vld [vmem:[%s3 + $0x18c] sm:$0xf]
    %v2193 = vld [vmem:[%s3 + $0x190] sm:$0xf]
    %v2194 = vld [vmem:[%s3 + $0x194] sm:$0xf]
    %v2195 = vld [vmem:[%s3 + $0x198] sm:$0xf]
    %v2196 = vld [vmem:[%s3 + $0x19c] sm:$0xf]
    %v2197 = vld [vmem:[%s3 + $0x1a0] sm:$0xf]
    %v2198 = vld [vmem:[%s3 + $0x1a4] sm:$0xf]
    %v2199 = vld [vmem:[%s3 + $0x1a8] sm:$0xf]
    %v2200 = vld [vmem:[%s3 + $0x1ac] sm:$0xf]
    %v2201 = vld [vmem:[%s3 + $0x1b0] sm:$0xf]
    %v2202 = vld [vmem:[%s3 + $0x1b4] sm:$0xf]
    %v2203 = vld [vmem:[%s3 + $0x1b8] sm:$0xf]
    %v2204 = vld [vmem:[%s3 + $0x1bc] sm:$0xf]
    %v2205 = vld [vmem:[%s3 + $0x1c0] sm:$0xf]
    %v2206 = vld [vmem:[%s3 + $0x1c4] sm:$0xf]
    %v2207 = vld [vmem:[%s3 + $0x1c8] sm:$0xf]
    %v2208 = vld [vmem:[%s3 + $0x1cc] sm:$0xf]
    %v2209 = vld [vmem:[%s3 + $0x1d0] sm:$0xf]
    %v2210 = vld [vmem:[%s3 + $0x1d4] sm:$0xf]
    %v2211 = vld [vmem:[%s3 + $0x1d8] sm:$0xf]
    %v2212 = vld [vmem:[%s3 + $0x1dc] sm:$0xf]
    %v2213 = vld [vmem:[%s3 + $0x1e0] sm:$0xf]
    %v2214 = vld [vmem:[%s3 + $0x1e4] sm:$0xf]
    %v2215 = vld [vmem:[%s3 + $0x1e8] sm:$0xf]
    %v2216 = vld [vmem:[%s3 + $0x1ec] sm:$0xf]
    %v2217 = vld [vmem:[%s3 + $0x1f0] sm:$0xf]
    %v2218 = vld [vmem:[%s3 + $0x1f4] sm:$0xf]
    %v2219 = vld [vmem:[%s3 + $0x1f8] sm:$0xf]
    %v2220 = vld [vmem:[%s3 + $0x1fc] sm:$0xf]
    %v2221 = vld [vmem:[%s4] sm:$0x1]
    %v2223 = vperm.slane %v2221, 0
    %v2353 = vunpack.c.l.b16 %v2093
    %v2354 = vunpack.c.l.b16 %v2094
    %v2355 = vunpack.c.l.b16 %v2095
    %v2356 = vunpack.c.l.b16 %v2096
    %v2357 = vunpack.c.l.b16 %v2097
    %v2358 = vunpack.c.l.b16 %v2098
    %v2359 = vunpack.c.l.b16 %v2099
    %v2360 = vunpack.c.l.b16 %v2100
    %v2361 = vunpack.c.l.b16 %v2101
    %v2362 = vunpack.c.l.b16 %v2102
    %v2363 = vunpack.c.l.b16 %v2103
    %v2364 = vunpack.c.l.b16 %v2104
    %v2365 = vunpack.c.l.b16 %v2105
    %v2366 = vunpack.c.l.b16 %v2106
    %v2367 = vunpack.c.l.b16 %v2107
    %v2368 = vunpack.c.l.b16 %v2108
    %v2369 = vunpack.c.l.b16 %v2109
    %v2370 = vunpack.c.l.b16 %v2110
    %v2371 = vunpack.c.l.b16 %v2111
    %v2372 = vunpack.c.l.b16 %v2112
    %v2373 = vunpack.c.l.b16 %v2113
    %v2374 = vunpack.c.l.b16 %v2114
    %v2375 = vunpack.c.l.b16 %v2115
    %v2376 = vunpack.c.l.b16 %v2116
    %v2377 = vunpack.c.l.b16 %v2117
    %v2378 = vunpack.c.l.b16 %v2118
    %v2379 = vunpack.c.l.b16 %v2119
    %v2380 = vunpack.c.l.b16 %v2120
    %v2381 = vunpack.c.l.b16 %v2121
    %v2382 = vunpack.c.l.b16 %v2122
    %v2383 = vunpack.c.l.b16 %v2123
    %v2384 = vunpack.c.l.b16 %v2124
    %v2385 = vunpack.c.l.b16 %v2125
    %v2386 = vunpack.c.l.b16 %v2126
    %v2387 = vunpack.c.l.b16 %v2127
    %v2388 = vunpack.c.l.b16 %v2128
    %v2389 = vunpack.c.l.b16 %v2129
    %v2390 = vunpack.c.l.b16 %v2130
    %v2391 = vunpack.c.l.b16 %v2131
    %v2392 = vunpack.c.l.b16 %v2132
    %v2393 = vunpack.c.l.b16 %v2133
    %v2394 = vunpack.c.l.b16 %v2134
    %v2395 = vunpack.c.l.b16 %v2135
    %v2396 = vunpack.c.l.b16 %v2136
    %v2397 = vunpack.c.l.b16 %v2137
    %v2398 = vunpack.c.l.b16 %v2138
    %v2399 = vunpack.c.l.b16 %v2139
    %v2400 = vunpack.c.l.b16 %v2140
    %v2401 = vunpack.c.l.b16 %v2141
    %v2402 = vunpack.c.l.b16 %v2142
    %v2403 = vunpack.c.l.b16 %v2143
    %v2404 = vunpack.c.l.b16 %v2144
    %v2405 = vunpack.c.l.b16 %v2145
    %v2406 = vunpack.c.l.b16 %v2146
    %v2407 = vunpack.c.l.b16 %v2147
    %v2408 = vunpack.c.l.b16 %v2148
    %v2409 = vunpack.c.l.b16 %v2149
    %v2410 = vunpack.c.l.b16 %v2150
    %v2411 = vunpack.c.l.b16 %v2151
    %v2412 = vunpack.c.l.b16 %v2152
    %v2413 = vunpack.c.l.b16 %v2153
    %v2414 = vunpack.c.l.b16 %v2154
    %v2415 = vunpack.c.l.b16 %v2155
    %v2416 = vunpack.c.l.b16 %v2156
    %v2417 = vunpack.c.l.b16 %v2157
    %v2418 = vunpack.c.l.b16 %v2158
    %v2419 = vunpack.c.l.b16 %v2159
    %v2420 = vunpack.c.l.b16 %v2160
    %v2421 = vunpack.c.l.b16 %v2161
    %v2422 = vunpack.c.l.b16 %v2162
    %v2423 = vunpack.c.l.b16 %v2163
    %v2424 = vunpack.c.l.b16 %v2164
    %v2425 = vunpack.c.l.b16 %v2165
    %v2426 = vunpack.c.l.b16 %v2166
    %v2427 = vunpack.c.l.b16 %v2167
    %v2428 = vunpack.c.l.b16 %v2168
    %v2429 = vunpack.c.l.b16 %v2169
    %v2430 = vunpack.c.l.b16 %v2170
    %v2431 = vunpack.c.l.b16 %v2171
    %v2432 = vunpack.c.l.b16 %v2172
    %v2433 = vunpack.c.l.b16 %v2173
    %v2434 = vunpack.c.l.b16 %v2174
    %v2435 = vunpack.c.l.b16 %v2175
    %v2436 = vunpack.c.l.b16 %v2176
    %v2437 = vunpack.c.l.b16 %v2177
    %v2438 = vunpack.c.l.b16 %v2178
    %v2439 = vunpack.c.l.b16 %v2179
    %v2440 = vunpack.c.l.b16 %v2180
    %v2441 = vunpack.c.l.b16 %v2181
    %v2442 = vunpack.c.l.b16 %v2182
    %v2443 = vunpack.c.l.b16 %v2183
    %v2444 = vunpack.c.l.b16 %v2184
    %v2445 = vunpack.c.l.b16 %v2185
    %v2446 = vunpack.c.l.b16 %v2186
    %v2447 = vunpack.c.l.b16 %v2187
    %v2448 = vunpack.c.l.b16 %v2188
    %v2449 = vunpack.c.l.b16 %v2189
    %v2450 = vunpack.c.l.b16 %v2190
    %v2451 = vunpack.c.l.b16 %v2191
    %v2452 = vunpack.c.l.b16 %v2192
    %v2453 = vunpack.c.l.b16 %v2193
    %v2454 = vunpack.c.l.b16 %v2194
    %v2455 = vunpack.c.l.b16 %v2195
    %v2456 = vunpack.c.l.b16 %v2196
    %v2457 = vunpack.c.l.b16 %v2197
    %v2458 = vunpack.c.l.b16 %v2198
    %v2459 = vunpack.c.l.b16 %v2199
    %v2460 = vunpack.c.l.b16 %v2200
    %v2461 = vunpack.c.l.b16 %v2201
    %v2462 = vunpack.c.l.b16 %v2202
    %v2463 = vunpack.c.l.b16 %v2203
    %v2464 = vunpack.c.l.b16 %v2204
    %v2465 = vunpack.c.l.b16 %v2205
    %v2466 = vunpack.c.l.b16 %v2206
    %v2467 = vunpack.c.l.b16 %v2207
    %v2468 = vunpack.c.l.b16 %v2208
    %v2469 = vunpack.c.l.b16 %v2209
    %v2470 = vunpack.c.l.b16 %v2210
    %v2471 = vunpack.c.l.b16 %v2211
    %v2472 = vunpack.c.l.b16 %v2212
    %v2473 = vunpack.c.l.b16 %v2213
    %v2474 = vunpack.c.l.b16 %v2214
    %v2475 = vunpack.c.l.b16 %v2215
    %v2476 = vunpack.c.l.b16 %v2216
    %v2477 = vunpack.c.l.b16 %v2217
    %v2478 = vunpack.c.l.b16 %v2218
    %v2479 = vunpack.c.l.b16 %v2219
    %v2480 = vunpack.c.l.b16 %v2220
    %v2481 = vpack.c.b16 %v2354, %v2353
    %v2482 = vpack.c.b16 %v2356, %v2355
    %v2483 = vpack.c.b16 %v2358, %v2357
    %v2484 = vpack.c.b16 %v2360, %v2359
    %v2485 = vpack.c.b16 %v2362, %v2361
    %v2486 = vpack.c.b16 %v2364, %v2363
    %v2487 = vpack.c.b16 %v2366, %v2365
    %v2488 = vpack.c.b16 %v2368, %v2367
    %v2489 = vpack.c.b16 %v2370, %v2369
    %v2490 = vpack.c.b16 %v2372, %v2371
    %v2491 = vpack.c.b16 %v2374, %v2373
    %v2492 = vpack.c.b16 %v2376, %v2375
    %v2493 = vpack.c.b16 %v2378, %v2377
    %v2494 = vpack.c.b16 %v2380, %v2379
    %v2495 = vpack.c.b16 %v2382, %v2381
    %v2496 = vpack.c.b16 %v2384, %v2383
    %v2497 = vpack.c.b16 %v2386, %v2385
    %v2498 = vpack.c.b16 %v2388, %v2387
    %v2499 = vpack.c.b16 %v2390, %v2389
    %v2500 = vpack.c.b16 %v2392, %v2391
    %v2501 = vpack.c.b16 %v2394, %v2393
    %v2502 = vpack.c.b16 %v2396, %v2395
    %v2503 = vpack.c.b16 %v2398, %v2397
    %v2504 = vpack.c.b16 %v2400, %v2399
    %v2505 = vpack.c.b16 %v2402, %v2401
    %v2506 = vpack.c.b16 %v2404, %v2403
    %v2507 = vpack.c.b16 %v2406, %v2405
    %v2508 = vpack.c.b16 %v2408, %v2407
    %v2509 = vpack.c.b16 %v2410, %v2409
    %v2510 = vpack.c.b16 %v2412, %v2411
    %v2511 = vpack.c.b16 %v2414, %v2413
    %v2512 = vpack.c.b16 %v2416, %v2415
    %v2513 = vpack.c.b16 %v2418, %v2417
    %v2514 = vpack.c.b16 %v2420, %v2419
    %v2515 = vpack.c.b16 %v2422, %v2421
    %v2516 = vpack.c.b16 %v2424, %v2423
    %v2517 = vpack.c.b16 %v2426, %v2425
    %v2518 = vpack.c.b16 %v2428, %v2427
    %v2519 = vpack.c.b16 %v2430, %v2429
    %v2520 = vpack.c.b16 %v2432, %v2431
    %v2521 = vpack.c.b16 %v2434, %v2433
    %v2522 = vpack.c.b16 %v2436, %v2435
    %v2523 = vpack.c.b16 %v2438, %v2437
    %v2524 = vpack.c.b16 %v2440, %v2439
    %v2525 = vpack.c.b16 %v2442, %v2441
    %v2526 = vpack.c.b16 %v2444, %v2443
    %v2527 = vpack.c.b16 %v2446, %v2445
    %v2528 = vpack.c.b16 %v2448, %v2447
    %v2529 = vpack.c.b16 %v2450, %v2449
    %v2530 = vpack.c.b16 %v2452, %v2451
    %v2531 = vpack.c.b16 %v2454, %v2453
    %v2532 = vpack.c.b16 %v2456, %v2455
    %v2533 = vpack.c.b16 %v2458, %v2457
    %v2534 = vpack.c.b16 %v2460, %v2459
    %v2535 = vpack.c.b16 %v2462, %v2461
    %v2536 = vpack.c.b16 %v2464, %v2463
    %v2537 = vpack.c.b16 %v2466, %v2465
    %v2538 = vpack.c.b16 %v2468, %v2467
    %v2539 = vpack.c.b16 %v2470, %v2469
    %v2540 = vpack.c.b16 %v2472, %v2471
    %v2541 = vpack.c.b16 %v2474, %v2473
    %v2542 = vpack.c.b16 %v2476, %v2475
    %v2543 = vpack.c.b16 %v2478, %v2477
    %v2544 = vpack.c.b16 %v2480, %v2479
    %2609 = vmatpush.bf16.msra.mxu0 %v2488
    %2610 = vmatpush.bf16.msra.mxu0 %v2487
    %2611 = vmatpush.bf16.msra.mxu0 %v2486
    %2612 = vmatpush.bf16.msra.mxu0 %v2485
    %2613 = vmatpush.bf16.msra.mxu0 %v2484
    %2614 = vmatpush.bf16.msra.mxu0 %v2483
    %2615 = vmatpush.bf16.msra.mxu0 %v2482
    %2616 = vmatpush.bf16.msra.mxu0 %v2481
    %2617 = vmatmul.bf16.gmra.mxu0 %v2085
    %v2618 = vpop.f32.mrf.mxu0
    %v2619 = vadd.f32 %v2223, %v2618
    %v2620 = vpop.f32.mrf.mxu0
    %2621 = vdwg.mxu0
    %2622 = vmatpush.bf16.msra.mxu0 %v2496
    %2623 = vmatpush.bf16.msra.mxu0 %v2495
    %2624 = vmatpush.bf16.msra.mxu0 %v2494
    %2625 = vmatpush.bf16.msra.mxu0 %v2493
    %2626 = vmatpush.bf16.msra.mxu0 %v2492
    %2627 = vmatpush.bf16.msra.mxu0 %v2491
    %2628 = vmatpush.bf16.msra.mxu0 %v2490
    %2629 = vmatpush.bf16.msra.mxu0 %v2489
    %2630 = vmatmul.bf16.gmra.mxu0 %v2086
    %v2631 = vpop.f32.mrf.mxu0
    %v2632 = vadd.f32 %v2619, %v2631
    %v2633 = vpop.f32.mrf.mxu0
    %2634 = vdwg.mxu0
    %2635 = vmatpush.bf16.msra.mxu0 %v2504
    %2636 = vmatpush.bf16.msra.mxu0 %v2503
    %2637 = vmatpush.bf16.msra.mxu0 %v2502
    %2638 = vmatpush.bf16.msra.mxu0 %v2501
    %2639 = vmatpush.bf16.msra.mxu0 %v2500
    %2640 = vmatpush.bf16.msra.mxu0 %v2499
    %2641 = vmatpush.bf16.msra.mxu0 %v2498
    %2642 = vmatpush.bf16.msra.mxu0 %v2497
    %2643 = vmatmul.bf16.gmra.mxu0 %v2087
    %v2644 = vpop.f32.mrf.mxu0
    %v2645 = vadd.f32 %v2632, %v2644
    %v2646 = vpop.f32.mrf.mxu0
    %2647 = vdwg.mxu0
    %2648 = vmatpush.bf16.msra.mxu0 %v2512
    %2649 = vmatpush.bf16.msra.mxu0 %v2511
    %2650 = vmatpush.bf16.msra.mxu0 %v2510
    %2651 = vmatpush.bf16.msra.mxu0 %v2509
    %2652 = vmatpush.bf16.msra.mxu0 %v2508
    %2653 = vmatpush.bf16.msra.mxu0 %v2507
    %2654 = vmatpush.bf16.msra.mxu0 %v2506
    %2655 = vmatpush.bf16.msra.mxu0 %v2505
    %2656 = vmatmul.bf16.gmra.mxu0 %v2088
    %v2657 = vpop.f32.mrf.mxu0
    %v2658 = vadd.f32 %v2645, %v2657
    %v2659 = vpop.f32.mrf.mxu0
    %2660 = vdwg.mxu0
    %2661 = vmatpush.bf16.msra.mxu0 %v2520
    %2662 = vmatpush.bf16.msra.mxu0 %v2519
    %2663 = vmatpush.bf16.msra.mxu0 %v2518
    %2664 = vmatpush.bf16.msra.mxu0 %v2517
    %2665 = vmatpush.bf16.msra.mxu0 %v2516
    %2666 = vmatpush.bf16.msra.mxu0 %v2515
    %2667 = vmatpush.bf16.msra.mxu0 %v2514
    %2668 = vmatpush.bf16.msra.mxu0 %v2513
    %2669 = vmatmul.bf16.gmra.mxu0 %v2089
    %v2670 = vpop.f32.mrf.mxu0
    %v2671 = vadd.f32 %v2658, %v2670
    %v2672 = vpop.f32.mrf.mxu0
    %2673 = vdwg.mxu0
    %2674 = vmatpush.bf16.msra.mxu0 %v2528
    %2675 = vmatpush.bf16.msra.mxu0 %v2527
    %2676 = vmatpush.bf16.msra.mxu0 %v2526
    %2677 = vmatpush.bf16.msra.mxu0 %v2525
    %2678 = vmatpush.bf16.msra.mxu0 %v2524
    %2679 = vmatpush.bf16.msra.mxu0 %v2523
    %2680 = vmatpush.bf16.msra.mxu0 %v2522
    %2681 = vmatpush.bf16.msra.mxu0 %v2521
    %2682 = vmatmul.bf16.gmra.mxu0 %v2090
    %v2683 = vpop.f32.mrf.mxu0
    %v2684 = vadd.f32 %v2671, %v2683
    %v2685 = vpop.f32.mrf.mxu0
    %2686 = vdwg.mxu0
    %2687 = vmatpush.bf16.msra.mxu0 %v2536
    %2688 = vmatpush.bf16.msra.mxu0 %v2535
    %2689 = vmatpush.bf16.msra.mxu0 %v2534
    %2690 = vmatpush.bf16.msra.mxu0 %v2533
    %2691 = vmatpush.bf16.msra.mxu0 %v2532
    %2692 = vmatpush.bf16.msra.mxu0 %v2531
    %2693 = vmatpush.bf16.msra.mxu0 %v2530
    %2694 = vmatpush.bf16.msra.mxu0 %v2529
    %2695 = vmatmul.bf16.gmra.mxu0 %v2091
    %v2696 = vpop.f32.mrf.mxu0
    %v2697 = vadd.f32 %v2684, %v2696
    %v2698 = vpop.f32.mrf.mxu0
    %2699 = vdwg.mxu0
    %2700 = vmatpush.bf16.msra.mxu0 %v2544
    %2701 = vmatpush.bf16.msra.mxu0 %v2543
    %2702 = vmatpush.bf16.msra.mxu0 %v2542
    %2703 = vmatpush.bf16.msra.mxu0 %v2541
    %2704 = vmatpush.bf16.msra.mxu0 %v2540
    %2705 = vmatpush.bf16.msra.mxu0 %v2539
    %2706 = vmatpush.bf16.msra.mxu0 %v2538
    %2707 = vmatpush.bf16.msra.mxu0 %v2537
    %2708 = vmatmul.bf16.gmra.mxu0 %v2092
    %v2709 = vpop.f32.mrf.mxu0
    %v2710 = vadd.f32 %v2697, %v2709
    %v2711 = vpop.f32.mrf.mxu0
    %2712 = vdwg.mxu0
    %2713 = vst [vmem:[%s5] sm:$0xff] %v2710
  $region29: #{forward.19} parent=0 // pred_fallthru
    _
  // Predicated region
  $region30: #{forward.19} parent=0 // pred_check
    _
  $region31: #{forward.19} parent=0 // pred_check_branch
    %2715 = sbr.rel (0) target = $region33
  $region32: #{forward.19} parent=0 // pred_region
    _
  $region33: #{forward.19} parent=0 // pred_fallthru
    _
  // Predicated region
  $region34: #{forward.19} parent=0 // pred_check
    _
  $region35: #{forward.19} parent=0 // pred_check_branch
    %2717 = sbr.rel (0) target = $region37
  $region36: #{forward.19} parent=0 // pred_region
    _
  $region37: #{forward.19} parent=0 // pred_fallthru
    _

</llo_original>
